<compile_context>
chip_gen: v7x
topology: tpu7x:2x2x1
jax: 0.10.0
libtpu: 0.0.40
codegen_flags: <defaults>
</compile_context>

<pallas_src>
import jax
import jax.numpy as jnp
import numpy as np
from jax.experimental import pallas as pl
from jax.experimental.pallas import tpu as pltpu


# ----------------------------------------------------------------------------
# In-kernel vectorized MaxPool2d(P) on an NHWC value (proven lowering path).
# ----------------------------------------------------------------------------
def _maxpool_nhwc(v, P):
    N, H, W, C = v.shape
    Ho, Wo = H // P, W // P                      # floor, matches MaxPool2d(P)
    if (H != Ho * P) or (W != Wo * P):
        v = v[:, :Ho * P, :Wo * P, :]
    # pool along W: merge leading dims, split W -> (Wo, P), reduce the P axis.
    v = v.reshape(N * Ho * P, Wo * P, C)
    v = v.reshape(N * Ho * P, Wo, P, C)
    v = jnp.max(v, axis=2)                       # (N*Ho*P, Wo, C)
    # pool along H: split rows -> (N*Ho, P) (leading-dims-only reshape).
    v = v.reshape(N * Ho, P, Wo, C)
    m = v[:, 0]
    for di in range(1, P):
        m = jnp.maximum(m, v[:, di])             # (N*Ho, Wo, C)
    return m.reshape(N, Ho, Wo, C)


# ----------------------------------------------------------------------------
# Fused forward kernel factory (runs once per batch tile of size NB).
# ----------------------------------------------------------------------------
def _make_fused_kernel(conv_cfg, pool_positions, pool_k, K, NB, num_classes,
                       matmul_dtype):
    """conv_cfg: tuple of (H_in, W_in, C_in, C_out) per conv layer."""
    n_conv = len(conv_cfg)
    pad = (K - 1) // 2

    def kernel(*refs):
        x_ref = refs[0]                              # (NB, H, W, C0) NHWC
        conv_refs = refs[1:1 + 2 * n_conv]           # (w2d, bias) per conv
        fcw_ref = refs[1 + 2 * n_conv]               # (Ho*Wo*Cl, classes)
        fcb_ref = refs[2 + 2 * n_conv]               # (1, classes)
        o_ref = refs[3 + 2 * n_conv]                 # (1, NB, classes)
        scratch = refs[4 + 2 * n_conv:]
        pad_refs = scratch[0:n_conv]                 # halo scratch / conv
        col_refs = scratch[n_conv:2 * n_conv]        # im2col scratch / conv
        flat_ref = scratch[2 * n_conv]               # (NB, Ho*Wo*Cl) head input

        act = x_ref[...]                             # f32, stays in VMEM
        for li, (Hc, Wc, Cin, Cout) in enumerate(conv_cfg):
            w_ref = conv_refs[2 * li]                # (K*K*Cin, Cout) matmul_dtype
            b_ref = conv_refs[2 * li + 1]            # (1, Cout) f32
            pad_ref = pad_refs[li]                   # (NB, Hc+2p, Wc+2p, Cin)
            col_ref = col_refs[li]                   # (NB, Hc, Wc, K*K*Cin)
            Hp, Wp = Hc + 2 * pad, Wc + 2 * pad

            # 'same' padding in VMEM: zero only the halo ring (interior is
            # fully overwritten below; scratch persists stale data otherwise).
            if pad > 0:
                pad_ref[:, 0:pad, :, :] = jnp.zeros((NB, pad, Wp, Cin), jnp.float32)
                pad_ref[:, Hc + pad:Hp, :, :] = jnp.zeros((NB, pad, Wp, Cin), jnp.float32)
                pad_ref[:, :, 0:pad, :] = jnp.zeros((NB, Hp, pad, Cin), jnp.float32)
                pad_ref[:, :, Wc + pad:Wp, :] = jnp.zeros((NB, Hp, pad, Cin), jnp.float32)
            pad_ref[:, pad:pad + Hc, pad:pad + Wc, :] = act

            # im2col: one lane-offset Ref store per tap (no value-level concat,
            # no per-tap sublane repack).  Offsets t*Cin never straddle a
            # 128-lane tile for Cin in {3, 8, 16}.
            for dh in range(K):
                for dw in range(K):
                    t = dh * K + dw
                    col_ref[:, :, :, t * Cin:(t + 1) * Cin] = \
                        pad_ref[:, dh:dh + Hc, dw:dw + Wc, :]

            # ONE wide-K matmul per layer (single repack: 4D -> 2D).
            M = NB * Hc * Wc
            col = col_ref[...].reshape(M, K * K * Cin)
            acc = jnp.dot(col.astype(matmul_dtype), w_ref[...],
                          preferred_element_type=jnp.float32)
            acc = acc + b_ref[...]                   # bias add in f32
            act = acc.reshape(NB, Hc, Wc, Cout)

            if li in pool_positions:
                act = _maxpool_nhwc(act, pool_k)

        # Head: pack (h, w, c)-major into a lane-dense VMEM buffer, then ONE
        # K = Ho*Wo*C matmul (torch NCHW flatten order is folded into fcw).
        _, Ho, Wo, C = act.shape
        HW = Ho * Wo
        act3 = act.reshape(NB, HW, C)
        for q in range(HW):
            flat_ref[:, q * C:(q + 1) * C] = act3[:, q, :]
        logits = fcb_ref[...] + jnp.dot(flat_ref[...].astype(matmul_dtype),
                                        fcw_ref[...],
                                        preferred_element_type=jnp.float32)
        o_ref[...] = logits[None].astype(o_ref.dtype)

    return kernel


# ----------------------------------------------------------------------------
# Wrapper: weight-layout prep (one-time, weight-only) + single pallas_call.
# ----------------------------------------------------------------------------
def vbcnn_forward(params, x_nchw, *, pooling_positions, pool_k,
                  matmul_dtype=jnp.float32, batch_tile=None):
    N, C0, H, W = x_nchw.shape
    if batch_tile is None:
        # NB=1 maximizes cross-TensorCore parallelism (v7x) and batch-tile DMA
        # pipelining; raise it to amortize per-step overhead for large N.
        batch_tile = 1
    assert N % batch_tile == 0, "batch must be divisible by batch_tile"
    NB = batch_tile
    nb = N // NB

    x_nhwc = jnp.transpose(x_nchw, (0, 2, 3, 1)).astype(jnp.float32)

    pooling_positions = tuple(pooling_positions)
    K = params["conv"][0][0].shape[-1]
    pad = (K - 1) // 2

    conv_cfg = []
    inputs = [x_nhwc]
    h, w, cin = H, W, C0
    for i, (wt, b) in enumerate(params["conv"]):
        cout = wt.shape[0]
        assert wt.shape == (cout, cin, K, K), "uniform square kernels assumed"
        conv_cfg.append((h, w, cin, cout))
        # torch Conv2d weight (Cout, Cin, K, K) -> im2col-major (K*K*Cin, Cout)
        # row index = (dh*K + dw)*Cin + ci ; pre-cast to matmul_dtype here.
        w2d = jnp.transpose(wt, (2, 3, 1, 0)).reshape(K * K * cin, cout)
        inputs += [w2d.astype(matmul_dtype),
                   b.reshape(1, cout).astype(jnp.float32)]
        cin = cout
        if i in pooling_positions:
            h, w = h // pool_k, w // pool_k
    Ho, Wo, Cl = h, w, cin

    num_classes = params["fc_w"].shape[0]          # torch Linear layout (O, F)
    # Fold torch's NCHW flatten + (x @ W.T) into one (Ho*Wo*Cl, classes) block:
    #   fcw2[(h*Wo + w)*Cl + c, o] == fc_w[o, c*Ho*Wo + h*Wo + w]
    fcw2 = params["fc_w"].T.reshape(Cl, Ho, Wo, num_classes)
    fcw2 = jnp.transpose(fcw2, (1, 2, 0, 3)).reshape(Ho * Wo * Cl, num_classes)
    inputs += [fcw2.astype(matmul_dtype),
               params["fc_b"].reshape(1, num_classes).astype(jnp.float32)]

    # Per-batch-tile VMEM scratch (lane-padded; bounded for v7x's 64 MiB VMEM).
    scratch = []
    for (hc, wc, ci, _) in conv_cfg:
        scratch.append(pltpu.VMEM((NB, hc + 2 * pad, wc + 2 * pad, ci),
                                  jnp.float32))
    for (hc, wc, ci, _) in conv_cfg:
        scratch.append(pltpu.VMEM((NB, hc, wc, K * K * ci), jnp.float32))
    scratch.append(pltpu.VMEM((NB, Ho * Wo * Cl), jnp.float32))

    kernel = _make_fused_kernel(tuple(conv_cfg), pooling_positions, pool_k, K,
                                NB, num_classes, matmul_dtype)

    def _weight_spec(arr):
        nd = arr.ndim
        return pl.BlockSpec(arr.shape, lambda b, nd=nd: (0,) * nd)

    in_specs = [pl.BlockSpec((NB, H, W, C0), lambda b: (b, 0, 0, 0))]
    in_specs += [_weight_spec(a) for a in inputs[1:]]

    out = pl.pallas_call(
        kernel,
        # 3D output so the last two block dims equal the full array dims
        # (keeps the (8,128) block constraint trivially satisfied).
        out_shape=jax.ShapeDtypeStruct((nb, NB, num_classes), jnp.float32),
        grid_spec=pltpu.PrefetchScalarGridSpec(
            num_scalar_prefetch=0,
            grid=(nb,),                            # batch tiles
            in_specs=in_specs,
            out_specs=pl.BlockSpec((1, NB, num_classes), lambda b: (b, 0, 0)),
            scratch_shapes=scratch,
        ),
        compiler_params=pltpu.CompilerParams(
            dimension_semantics=("parallel",),     # 2nd TC on v7x; pipelining
            vmem_limit_bytes=64 * 1024 * 1024,
        ),
    )(*inputs)
    return out.reshape(N, num_classes)


# ----------------------------------------------------------------------------
# Parameters (PyTorch layouts) and a pure-JAX reference for verification.
# ----------------------------------------------------------------------------
def init_params(key, *, data_shape, channels, kernels, num_classes,
                pooling_positions, pool_k):
    C0, H, W = data_shape
    params = {"conv": []}
    cin, h, w = C0, H, W
    for i, (cout, k) in enumerate(zip(channels, kernels)):
        key, kw_, kb_ = jax.random.split(key, 3)
        wt = jax.random.normal(kw_, (cout, cin, k, k), jnp.float32) * 0.1
        b = jax.random.normal(kb_, (cout,), jnp.float32) * 0.01
        params["conv"].append((wt, b))
        cin = cout
        if i in pooling_positions:
            h, w = h // pool_k, w // pool_k
    num_features = cin * h * w
    key, kw_, kb_ = jax.random.split(key, 3)
    params["fc_w"] = jax.random.normal(
        kw_, (num_classes, num_features), jnp.float32) * 0.1
    params["fc_b"] = jax.random.normal(kb_, (num_classes,), jnp.float32) * 0.01
    return params


def reference_forward(params, x_nchw, *, pooling_positions, pool_k):
    x = x_nchw
    for i, (wt, b) in enumerate(params["conv"]):
        x = jax.lax.conv_general_dilated(
            x, wt, window_strides=(1, 1), padding="SAME",
            dimension_numbers=("NCHW", "OIHW", "NCHW"))
        x = x + b[None, :, None, None]
        if i in pooling_positions:
            x = jax.lax.reduce_window(
                x, -jnp.inf, jax.lax.max,
                window_dimensions=(1, 1, pool_k, pool_k),
                window_strides=(1, 1, pool_k, pool_k),
                padding="VALID")
    x = x.reshape(x.shape[0], -1)
    return x @ params["fc_w"].T + params["fc_b"]


if __name__ == "__main__":
    # Small synthetic VBCNN config (consistent with the module's constructor):
    #   data_shape=(3, 12, 12), channels=[8, 16, 16], kernels=[3, 3, 3],
    #   stride=1, padding='same', widths=[], num_classes=10,
    #   pooling_layer=MaxPool2d(3), pooling_positions=[1],
    #   no activations / regularization, VB positions empty (identity).
    data_shape = (3, 12, 12)
    channels = [8, 16, 16]
    kernels = [3, 3, 3]
    num_classes = 10
    pooling_positions = [1]
    pool_k = 3
    batch = 2

    key = jax.random.PRNGKey(0)
    key, kx = jax.random.split(key)
    x = jax.random.normal(kx, (batch, *data_shape), jnp.float32)  # NCHW like torch

    params = init_params(
        key, data_shape=data_shape, channels=channels, kernels=kernels,
        num_classes=num_classes, pooling_positions=pooling_positions,
        pool_k=pool_k)

    out = vbcnn_forward(params, x, pooling_positions=pooling_positions,
                        pool_k=pool_k)
    out = jax.block_until_ready(out)
    assert out.shape == (batch, num_classes), out.shape

    ref = jax.block_until_ready(
        reference_forward(params, x, pooling_positions=pooling_positions,
                          pool_k=pool_k))
    np.testing.assert_allclose(np.asarray(out), np.asarray(ref),
                               rtol=1e-3, atol=1e-3)
    print("KERNEL_OK")
</pallas_src>

<mosaic_0001>
module attributes {stable_mosaic.version = 11 : i64} {
  func.func @kernel(%arg0: i32, %arg1: memref<1x12x12x3xf32, #tpu.memory_space<vmem>>, %arg2: memref<27x8xf32, #tpu.memory_space<vmem>>, %arg3: memref<1x8xf32, #tpu.memory_space<vmem>>, %arg4: memref<72x16xf32, #tpu.memory_space<vmem>>, %arg5: memref<1x16xf32, #tpu.memory_space<vmem>>, %arg6: memref<144x16xf32, #tpu.memory_space<vmem>>, %arg7: memref<1x16xf32, #tpu.memory_space<vmem>>, %arg8: memref<256x10xf32, #tpu.memory_space<vmem>>, %arg9: memref<1x10xf32, #tpu.memory_space<vmem>>, %arg10: memref<1x1x10xf32, #tpu.memory_space<vmem>>, %arg11: memref<1x14x14x3xf32, #tpu.memory_space<vmem>>, %arg12: memref<1x14x14x8xf32, #tpu.memory_space<vmem>>, %arg13: memref<1x6x6x16xf32, #tpu.memory_space<vmem>>, %arg14: memref<1x12x12x27xf32, #tpu.memory_space<vmem>>, %arg15: memref<1x12x12x72xf32, #tpu.memory_space<vmem>>, %arg16: memref<1x4x4x144xf32, #tpu.memory_space<vmem>>, %arg17: memref<1x256xf32, #tpu.memory_space<vmem>>) attributes {dimension_semantics = [#tpu.dimension_semantics<parallel>], iteration_bounds = array<i64: 2>, scalar_prefetch = 0 : i64, scratch_operands = 7 : i64, tpu.core_type = #tpu.core_type<tc>, window_params = [{transform_indices = @transform_0, window_bounds = array<i64: 1, 12, 12, 3>}, {pipeline_mode = #tpu.pipeline_mode<synchronous>, transform_indices = @transform_1, window_bounds = array<i64: 27, 8>}, {pipeline_mode = #tpu.pipeline_mode<synchronous>, transform_indices = @transform_2, window_bounds = array<i64: 1, 8>}, {pipeline_mode = #tpu.pipeline_mode<synchronous>, transform_indices = @transform_3, window_bounds = array<i64: 72, 16>}, {pipeline_mode = #tpu.pipeline_mode<synchronous>, transform_indices = @transform_4, window_bounds = array<i64: 1, 16>}, {pipeline_mode = #tpu.pipeline_mode<synchronous>, transform_indices = @transform_5, window_bounds = array<i64: 144, 16>}, {pipeline_mode = #tpu.pipeline_mode<synchronous>, transform_indices = @transform_6, window_bounds = array<i64: 1, 16>}, {pipeline_mode = #tpu.pipeline_mode<synchronous>, transform_indices = @transform_7, window_bounds = array<i64: 256, 10>}, {pipeline_mode = #tpu.pipeline_mode<synchronous>, transform_indices = @transform_8, window_bounds = array<i64: 1, 10>}, {transform_indices = @transform_9, window_bounds = array<i64: 1, 1, 10>}]} {
    %c0 = arith.constant 0 : index
    %c0_0 = arith.constant 0 : index
    %c0_1 = arith.constant 0 : index
    %c0_2 = arith.constant 0 : index
    %0 = vector.load %arg1[%c0, %c0_0, %c0_1, %c0_2] : memref<1x12x12x3xf32, #tpu.memory_space<vmem>>, vector<1x12x12x3xf32>
    %cst = arith.constant 0.000000e+00 : f32
    %1 = vector.broadcast %cst : f32 to vector<1x1x14x3xf32>
    %c0_3 = arith.constant 0 : index
    %c0_4 = arith.constant 0 : index
    %c0_5 = arith.constant 0 : index
    %c0_6 = arith.constant 0 : index
    %2 = vector.load %arg11[%c0_3, %c0_4, %c0_5, %c0_6] : memref<1x14x14x3xf32, #tpu.memory_space<vmem>>, vector<1x1x14x3xf32>
    tpu.vector_store %arg11[%c0_3, %c0_4, %c0_5, %c0_6], %1 {strides = array<i32>} : memref<1x14x14x3xf32, #tpu.memory_space<vmem>>, vector<1x1x14x3xf32>,
    %cst_7 = arith.constant 0.000000e+00 : f32
    %3 = vector.broadcast %cst_7 : f32 to vector<1x1x14x3xf32>
    %c0_8 = arith.constant 0 : index
    %c13 = arith.constant 13 : index
    %c0_9 = arith.constant 0 : index
    %c0_10 = arith.constant 0 : index
    %4 = vector.load %arg11[%c0_8, %c13, %c0_9, %c0_10] : memref<1x14x14x3xf32, #tpu.memory_space<vmem>>, vector<1x1x14x3xf32>
    tpu.vector_store %arg11[%c0_8, %c13, %c0_9, %c0_10], %3 {strides = array<i32>} : memref<1x14x14x3xf32, #tpu.memory_space<vmem>>, vector<1x1x14x3xf32>,
    %cst_11 = arith.constant 0.000000e+00 : f32
    %5 = vector.broadcast %cst_11 : f32 to vector<1x14x1x3xf32>
    %c0_12 = arith.constant 0 : index
    %c0_13 = arith.constant 0 : index
    %c0_14 = arith.constant 0 : index
    %c0_15 = arith.constant 0 : index
    %6 = vector.load %arg11[%c0_12, %c0_13, %c0_14, %c0_15] : memref<1x14x14x3xf32, #tpu.memory_space<vmem>>, vector<1x14x1x3xf32>
    tpu.vector_store %arg11[%c0_12, %c0_13, %c0_14, %c0_15], %5 {strides = array<i32>} : memref<1x14x14x3xf32, #tpu.memory_space<vmem>>, vector<1x14x1x3xf32>,
    %cst_16 = arith.constant 0.000000e+00 : f32
    %7 = vector.broadcast %cst_16 : f32 to vector<1x14x1x3xf32>
    %c0_17 = arith.constant 0 : index
    %c0_18 = arith.constant 0 : index
    %c13_19 = arith.constant 13 : index
    %c0_20 = arith.constant 0 : index
    %8 = vector.load %arg11[%c0_17, %c0_18, %c13_19, %c0_20] : memref<1x14x14x3xf32, #tpu.memory_space<vmem>>, vector<1x14x1x3xf32>
    tpu.vector_store %arg11[%c0_17, %c0_18, %c13_19, %c0_20], %7 {strides = array<i32>} : memref<1x14x14x3xf32, #tpu.memory_space<vmem>>, vector<1x14x1x3xf32>,
    %c0_21 = arith.constant 0 : index
    %c1 = arith.constant 1 : index
    %c1_22 = arith.constant 1 : index
    %c0_23 = arith.constant 0 : index
    %9 = vector.load %arg11[%c0_21, %c1, %c1_22, %c0_23] : memref<1x14x14x3xf32, #tpu.memory_space<vmem>>, vector<1x12x12x3xf32>
    tpu.vector_store %arg11[%c0_21, %c1, %c1_22, %c0_23], %0 {strides = array<i32>} : memref<1x14x14x3xf32, #tpu.memory_space<vmem>>, vector<1x12x12x3xf32>,
    %c0_24 = arith.constant 0 : index
    %c0_25 = arith.constant 0 : index
    %c0_26 = arith.constant 0 : index
    %c0_27 = arith.constant 0 : index
    %10 = vector.load %arg11[%c0_24, %c0_25, %c0_26, %c0_27] : memref<1x14x14x3xf32, #tpu.memory_space<vmem>>, vector<1x12x12x3xf32>
    %c0_28 = arith.constant 0 : index
    %c0_29 = arith.constant 0 : index
    %c0_30 = arith.constant 0 : index
    %c0_31 = arith.constant 0 : index
    %11 = vector.load %arg14[%c0_28, %c0_29, %c0_30, %c0_31] : memref<1x12x12x27xf32, #tpu.memory_space<vmem>>, vector<1x12x12x3xf32>
    tpu.vector_store %arg14[%c0_28, %c0_29, %c0_30, %c0_31], %10 {strides = array<i32>} : memref<1x12x12x27xf32, #tpu.memory_space<vmem>>, vector<1x12x12x3xf32>,
    %c0_32 = arith.constant 0 : index
    %c0_33 = arith.constant 0 : index
    %c1_34 = arith.constant 1 : index
    %c0_35 = arith.constant 0 : index
    %12 = vector.load %arg11[%c0_32, %c0_33, %c1_34, %c0_35] : memref<1x14x14x3xf32, #tpu.memory_space<vmem>>, vector<1x12x12x3xf32>
    %c0_36 = arith.constant 0 : index
    %c0_37 = arith.constant 0 : index
    %c0_38 = arith.constant 0 : index
    %c3 = arith.constant 3 : index
    %13 = vector.load %arg14[%c0_36, %c0_37, %c0_38, %c3] : memref<1x12x12x27xf32, #tpu.memory_space<vmem>>, vector<1x12x12x3xf32>
    tpu.vector_store %arg14[%c0_36, %c0_37, %c0_38, %c3], %12 {strides = array<i32>} : memref<1x12x12x27xf32, #tpu.memory_space<vmem>>, vector<1x12x12x3xf32>,
    %c0_39 = arith.constant 0 : index
    %c0_40 = arith.constant 0 : index
    %c2 = arith.constant 2 : index
    %c0_41 = arith.constant 0 : index
    %14 = vector.load %arg11[%c0_39, %c0_40, %c2, %c0_41] : memref<1x14x14x3xf32, #tpu.memory_space<vmem>>, vector<1x12x12x3xf32>
    %c0_42 = arith.constant 0 : index
    %c0_43 = arith.constant 0 : index
    %c0_44 = arith.constant 0 : index
    %c6 = arith.constant 6 : index
    %15 = vector.load %arg14[%c0_42, %c0_43, %c0_44, %c6] : memref<1x12x12x27xf32, #tpu.memory_space<vmem>>, vector<1x12x12x3xf32>
    tpu.vector_store %arg14[%c0_42, %c0_43, %c0_44, %c6], %14 {strides = array<i32>} : memref<1x12x12x27xf32, #tpu.memory_space<vmem>>, vector<1x12x12x3xf32>,
    %c0_45 = arith.constant 0 : index
    %c1_46 = arith.constant 1 : index
    %c0_47 = arith.constant 0 : index
    %c0_48 = arith.constant 0 : index
    %16 = vector.load %arg11[%c0_45, %c1_46, %c0_47, %c0_48] : memref<1x14x14x3xf32, #tpu.memory_space<vmem>>, vector<1x12x12x3xf32>
    %c0_49 = arith.constant 0 : index
    %c0_50 = arith.constant 0 : index
    %c0_51 = arith.constant 0 : index
    %c9 = arith.constant 9 : index
    %17 = vector.load %arg14[%c0_49, %c0_50, %c0_51, %c9] : memref<1x12x12x27xf32, #tpu.memory_space<vmem>>, vector<1x12x12x3xf32>
    tpu.vector_store %arg14[%c0_49, %c0_50, %c0_51, %c9], %16 {strides = array<i32>} : memref<1x12x12x27xf32, #tpu.memory_space<vmem>>, vector<1x12x12x3xf32>,
    %c0_52 = arith.constant 0 : index
    %c1_53 = arith.constant 1 : index
    %c1_54 = arith.constant 1 : index
    %c0_55 = arith.constant 0 : index
    %18 = vector.load %arg11[%c0_52, %c1_53, %c1_54, %c0_55] : memref<1x14x14x3xf32, #tpu.memory_space<vmem>>, vector<1x12x12x3xf32>
    %c0_56 = arith.constant 0 : index
    %c0_57 = arith.constant 0 : index
    %c0_58 = arith.constant 0 : index
    %c12 = arith.constant 12 : index
    %19 = vector.load %arg14[%c0_56, %c0_57, %c0_58, %c12] : memref<1x12x12x27xf32, #tpu.memory_space<vmem>>, vector<1x12x12x3xf32>
    tpu.vector_store %arg14[%c0_56, %c0_57, %c0_58, %c12], %18 {strides = array<i32>} : memref<1x12x12x27xf32, #tpu.memory_space<vmem>>, vector<1x12x12x3xf32>,
    %c0_59 = arith.constant 0 : index
    %c1_60 = arith.constant 1 : index
    %c2_61 = arith.constant 2 : index
    %c0_62 = arith.constant 0 : index
    %20 = vector.load %arg11[%c0_59, %c1_60, %c2_61, %c0_62] : memref<1x14x14x3xf32, #tpu.memory_space<vmem>>, vector<1x12x12x3xf32>
    %c0_63 = arith.constant 0 : index
    %c0_64 = arith.constant 0 : index
    %c0_65 = arith.constant 0 : index
    %c15 = arith.constant 15 : index
    %21 = vector.load %arg14[%c0_63, %c0_64, %c0_65, %c15] : memref<1x12x12x27xf32, #tpu.memory_space<vmem>>, vector<1x12x12x3xf32>
    tpu.vector_store %arg14[%c0_63, %c0_64, %c0_65, %c15], %20 {strides = array<i32>} : memref<1x12x12x27xf32, #tpu.memory_space<vmem>>, vector<1x12x12x3xf32>,
    %c0_66 = arith.constant 0 : index
    %c2_67 = arith.constant 2 : index
    %c0_68 = arith.constant 0 : index
    %c0_69 = arith.constant 0 : index
    %22 = vector.load %arg11[%c0_66, %c2_67, %c0_68, %c0_69] : memref<1x14x14x3xf32, #tpu.memory_space<vmem>>, vector<1x12x12x3xf32>
    %c0_70 = arith.constant 0 : index
    %c0_71 = arith.constant 0 : index
    %c0_72 = arith.constant 0 : index
    %c18 = arith.constant 18 : index
    %23 = vector.load %arg14[%c0_70, %c0_71, %c0_72, %c18] : memref<1x12x12x27xf32, #tpu.memory_space<vmem>>, vector<1x12x12x3xf32>
    tpu.vector_store %arg14[%c0_70, %c0_71, %c0_72, %c18], %22 {strides = array<i32>} : memref<1x12x12x27xf32, #tpu.memory_space<vmem>>, vector<1x12x12x3xf32>,
    %c0_73 = arith.constant 0 : index
    %c2_74 = arith.constant 2 : index
    %c1_75 = arith.constant 1 : index
    %c0_76 = arith.constant 0 : index
    %24 = vector.load %arg11[%c0_73, %c2_74, %c1_75, %c0_76] : memref<1x14x14x3xf32, #tpu.memory_space<vmem>>, vector<1x12x12x3xf32>
    %c0_77 = arith.constant 0 : index
    %c0_78 = arith.constant 0 : index
    %c0_79 = arith.constant 0 : index
    %c21 = arith.constant 21 : index
    %25 = vector.load %arg14[%c0_77, %c0_78, %c0_79, %c21] : memref<1x12x12x27xf32, #tpu.memory_space<vmem>>, vector<1x12x12x3xf32>
    tpu.vector_store %arg14[%c0_77, %c0_78, %c0_79, %c21], %24 {strides = array<i32>} : memref<1x12x12x27xf32, #tpu.memory_space<vmem>>, vector<1x12x12x3xf32>,
    %c0_80 = arith.constant 0 : index
    %c2_81 = arith.constant 2 : index
    %c2_82 = arith.constant 2 : index
    %c0_83 = arith.constant 0 : index
    %26 = vector.load %arg11[%c0_80, %c2_81, %c2_82, %c0_83] : memref<1x14x14x3xf32, #tpu.memory_space<vmem>>, vector<1x12x12x3xf32>
    %c0_84 = arith.constant 0 : index
    %c0_85 = arith.constant 0 : index
    %c0_86 = arith.constant 0 : index
    %c24 = arith.constant 24 : index
    %27 = vector.load %arg14[%c0_84, %c0_85, %c0_86, %c24] : memref<1x12x12x27xf32, #tpu.memory_space<vmem>>, vector<1x12x12x3xf32>
    tpu.vector_store %arg14[%c0_84, %c0_85, %c0_86, %c24], %26 {strides = array<i32>} : memref<1x12x12x27xf32, #tpu.memory_space<vmem>>, vector<1x12x12x3xf32>,
    %c0_87 = arith.constant 0 : index
    %c0_88 = arith.constant 0 : index
    %c0_89 = arith.constant 0 : index
    %c0_90 = arith.constant 0 : index
    %28 = vector.load %arg14[%c0_87, %c0_88, %c0_89, %c0_90] : memref<1x12x12x27xf32, #tpu.memory_space<vmem>>, vector<1x12x12x27xf32>
    %29 = vector.shape_cast %28 : vector<1x12x12x27xf32> to vector<144x27xf32>
    %c0_91 = arith.constant 0 : index
    %c0_92 = arith.constant 0 : index
    %30 = vector.load %arg2[%c0_91, %c0_92] : memref<27x8xf32, #tpu.memory_space<vmem>>, vector<27x8xf32>
    %cst_93 = arith.constant dense<0.000000e+00> : vector<144x8xf32>
    %31 = tpu.matmul %29, %30, %cst_93 {dimension_numbers = #tpu.dot_dimension_numbers<[1], [0], [0], [1], [0, 0, 1, 1], [], []>} : vector<144x27xf32>, vector<27x8xf32>, vector<144x8xf32> -> vector<144x8xf32>
    %c0_94 = arith.constant 0 : index
    %c0_95 = arith.constant 0 : index
    %32 = vector.load %arg3[%c0_94, %c0_95] : memref<1x8xf32, #tpu.memory_space<vmem>>, vector<1x8xf32>
    %33 = vector.broadcast %32 : vector<1x8xf32> to vector<144x8xf32>
    %34 = arith.addf %31, %33 : vector<144x8xf32>
    %35 = vector.shape_cast %34 : vector<144x8xf32> to vector<1x12x12x8xf32>
    %cst_96 = arith.constant 0.000000e+00 : f32
    %36 = vector.broadcast %cst_96 : f32 to vector<1x1x14x8xf32>
    %c0_97 = arith.constant 0 : index
    %c0_98 = arith.constant 0 : index
    %c0_99 = arith.constant 0 : index
    %c0_100 = arith.constant 0 : index
    %37 = vector.load %arg12[%c0_97, %c0_98, %c0_99, %c0_100] : memref<1x14x14x8xf32, #tpu.memory_space<vmem>>, vector<1x1x14x8xf32>
    tpu.vector_store %arg12[%c0_97, %c0_98, %c0_99, %c0_100], %36 {strides = array<i32>} : memref<1x14x14x8xf32, #tpu.memory_space<vmem>>, vector<1x1x14x8xf32>,
    %cst_101 = arith.constant 0.000000e+00 : f32
    %38 = vector.broadcast %cst_101 : f32 to vector<1x1x14x8xf32>
    %c0_102 = arith.constant 0 : index
    %c13_103 = arith.constant 13 : index
    %c0_104 = arith.constant 0 : index
    %c0_105 = arith.constant 0 : index
    %39 = vector.load %arg12[%c0_102, %c13_103, %c0_104, %c0_105] : memref<1x14x14x8xf32, #tpu.memory_space<vmem>>, vector<1x1x14x8xf32>
    tpu.vector_store %arg12[%c0_102, %c13_103, %c0_104, %c0_105], %38 {strides = array<i32>} : memref<1x14x14x8xf32, #tpu.memory_space<vmem>>, vector<1x1x14x8xf32>,
    %cst_106 = arith.constant 0.000000e+00 : f32
    %40 = vector.broadcast %cst_106 : f32 to vector<1x14x1x8xf32>
    %c0_107 = arith.constant 0 : index
    %c0_108 = arith.constant 0 : index
    %c0_109 = arith.constant 0 : index
    %c0_110 = arith.constant 0 : index
    %41 = vector.load %arg12[%c0_107, %c0_108, %c0_109, %c0_110] : memref<1x14x14x8xf32, #tpu.memory_space<vmem>>, vector<1x14x1x8xf32>
    tpu.vector_store %arg12[%c0_107, %c0_108, %c0_109, %c0_110], %40 {strides = array<i32>} : memref<1x14x14x8xf32, #tpu.memory_space<vmem>>, vector<1x14x1x8xf32>,
    %cst_111 = arith.constant 0.000000e+00 : f32
    %42 = vector.broadcast %cst_111 : f32 to vector<1x14x1x8xf32>
    %c0_112 = arith.constant 0 : index
    %c0_113 = arith.constant 0 : index
    %c13_114 = arith.constant 13 : index
    %c0_115 = arith.constant 0 : index
    %43 = vector.load %arg12[%c0_112, %c0_113, %c13_114, %c0_115] : memref<1x14x14x8xf32, #tpu.memory_space<vmem>>, vector<1x14x1x8xf32>
    tpu.vector_store %arg12[%c0_112, %c0_113, %c13_114, %c0_115], %42 {strides = array<i32>} : memref<1x14x14x8xf32, #tpu.memory_space<vmem>>, vector<1x14x1x8xf32>,
    %c0_116 = arith.constant 0 : index
    %c1_117 = arith.constant 1 : index
    %c1_118 = arith.constant 1 : index
    %c0_119 = arith.constant 0 : index
    %44 = vector.load %arg12[%c0_116, %c1_117, %c1_118, %c0_119] : memref<1x14x14x8xf32, #tpu.memory_space<vmem>>, vector<1x12x12x8xf32>
    tpu.vector_store %arg12[%c0_116, %c1_117, %c1_118, %c0_119], %35 {strides = array<i32>} : memref<1x14x14x8xf32, #tpu.memory_space<vmem>>, vector<1x12x12x8xf32>,
    %c0_120 = arith.constant 0 : index
    %c0_121 = arith.constant 0 : index
    %c0_122 = arith.constant 0 : index
    %c0_123 = arith.constant 0 : index
    %45 = vector.load %arg12[%c0_120, %c0_121, %c0_122, %c0_123] : memref<1x14x14x8xf32, #tpu.memory_space<vmem>>, vector<1x12x12x8xf32>
    %c0_124 = arith.constant 0 : index
    %c0_125 = arith.constant 0 : index
    %c0_126 = arith.constant 0 : index
    %c0_127 = arith.constant 0 : index
    %46 = vector.load %arg15[%c0_124, %c0_125, %c0_126, %c0_127] : memref<1x12x12x72xf32, #tpu.memory_space<vmem>>, vector<1x12x12x8xf32>
    tpu.vector_store %arg15[%c0_124, %c0_125, %c0_126, %c0_127], %45 {strides = array<i32>} : memref<1x12x12x72xf32, #tpu.memory_space<vmem>>, vector<1x12x12x8xf32>,
    %c0_128 = arith.constant 0 : index
    %c0_129 = arith.constant 0 : index
    %c1_130 = arith.constant 1 : index
    %c0_131 = arith.constant 0 : index
    %47 = vector.load %arg12[%c0_128, %c0_129, %c1_130, %c0_131] : memref<1x14x14x8xf32, #tpu.memory_space<vmem>>, vector<1x12x12x8xf32>
    %c0_132 = arith.constant 0 : index
    %c0_133 = arith.constant 0 : index
    %c0_134 = arith.constant 0 : index
    %c8 = arith.constant 8 : index
    %48 = vector.load %arg15[%c0_132, %c0_133, %c0_134, %c8] : memref<1x12x12x72xf32, #tpu.memory_space<vmem>>, vector<1x12x12x8xf32>
    tpu.vector_store %arg15[%c0_132, %c0_133, %c0_134, %c8], %47 {strides = array<i32>} : memref<1x12x12x72xf32, #tpu.memory_space<vmem>>, vector<1x12x12x8xf32>,
    %c0_135 = arith.constant 0 : index
    %c0_136 = arith.constant 0 : index
    %c2_137 = arith.constant 2 : index
    %c0_138 = arith.constant 0 : index
    %49 = vector.load %arg12[%c0_135, %c0_136, %c2_137, %c0_138] : memref<1x14x14x8xf32, #tpu.memory_space<vmem>>, vector<1x12x12x8xf32>
    %c0_139 = arith.constant 0 : index
    %c0_140 = arith.constant 0 : index
    %c0_141 = arith.constant 0 : index
    %c16 = arith.constant 16 : index
    %50 = vector.load %arg15[%c0_139, %c0_140, %c0_141, %c16] : memref<1x12x12x72xf32, #tpu.memory_space<vmem>>, vector<1x12x12x8xf32>
    tpu.vector_store %arg15[%c0_139, %c0_140, %c0_141, %c16], %49 {strides = array<i32>} : memref<1x12x12x72xf32, #tpu.memory_space<vmem>>, vector<1x12x12x8xf32>,
    %c0_142 = arith.constant 0 : index
    %c1_143 = arith.constant 1 : index
    %c0_144 = arith.constant 0 : index
    %c0_145 = arith.constant 0 : index
    %51 = vector.load %arg12[%c0_142, %c1_143, %c0_144, %c0_145] : memref<1x14x14x8xf32, #tpu.memory_space<vmem>>, vector<1x12x12x8xf32>
    %c0_146 = arith.constant 0 : index
    %c0_147 = arith.constant 0 : index
    %c0_148 = arith.constant 0 : index
    %c24_149 = arith.constant 24 : index
    %52 = vector.load %arg15[%c0_146, %c0_147, %c0_148, %c24_149] : memref<1x12x12x72xf32, #tpu.memory_space<vmem>>, vector<1x12x12x8xf32>
    tpu.vector_store %arg15[%c0_146, %c0_147, %c0_148, %c24_149], %51 {strides = array<i32>} : memref<1x12x12x72xf32, #tpu.memory_space<vmem>>, vector<1x12x12x8xf32>,
    %c0_150 = arith.constant 0 : index
    %c1_151 = arith.constant 1 : index
    %c1_152 = arith.constant 1 : index
    %c0_153 = arith.constant 0 : index
    %53 = vector.load %arg12[%c0_150, %c1_151, %c1_152, %c0_153] : memref<1x14x14x8xf32, #tpu.memory_space<vmem>>, vector<1x12x12x8xf32>
    %c0_154 = arith.constant 0 : index
    %c0_155 = arith.constant 0 : index
    %c0_156 = arith.constant 0 : index
    %c32 = arith.constant 32 : index
    %54 = vector.load %arg15[%c0_154, %c0_155, %c0_156, %c32] : memref<1x12x12x72xf32, #tpu.memory_space<vmem>>, vector<1x12x12x8xf32>
    tpu.vector_store %arg15[%c0_154, %c0_155, %c0_156, %c32], %53 {strides = array<i32>} : memref<1x12x12x72xf32, #tpu.memory_space<vmem>>, vector<1x12x12x8xf32>,
    %c0_157 = arith.constant 0 : index
    %c1_158 = arith.constant 1 : index
    %c2_159 = arith.constant 2 : index
    %c0_160 = arith.constant 0 : index
    %55 = vector.load %arg12[%c0_157, %c1_158, %c2_159, %c0_160] : memref<1x14x14x8xf32, #tpu.memory_space<vmem>>, vector<1x12x12x8xf32>
    %c0_161 = arith.constant 0 : index
    %c0_162 = arith.constant 0 : index
    %c0_163 = arith.constant 0 : index
    %c40 = arith.constant 40 : index
    %56 = vector.load %arg15[%c0_161, %c0_162, %c0_163, %c40] : memref<1x12x12x72xf32, #tpu.memory_space<vmem>>, vector<1x12x12x8xf32>
    tpu.vector_store %arg15[%c0_161, %c0_162, %c0_163, %c40], %55 {strides = array<i32>} : memref<1x12x12x72xf32, #tpu.memory_space<vmem>>, vector<1x12x12x8xf32>,
    %c0_164 = arith.constant 0 : index
    %c2_165 = arith.constant 2 : index
    %c0_166 = arith.constant 0 : index
    %c0_167 = arith.constant 0 : index
    %57 = vector.load %arg12[%c0_164, %c2_165, %c0_166, %c0_167] : memref<1x14x14x8xf32, #tpu.memory_space<vmem>>, vector<1x12x12x8xf32>
    %c0_168 = arith.constant 0 : index
    %c0_169 = arith.constant 0 : index
    %c0_170 = arith.constant 0 : index
    %c48 = arith.constant 48 : index
    %58 = vector.load %arg15[%c0_168, %c0_169, %c0_170, %c48] : memref<1x12x12x72xf32, #tpu.memory_space<vmem>>, vector<1x12x12x8xf32>
    tpu.vector_store %arg15[%c0_168, %c0_169, %c0_170, %c48], %57 {strides = array<i32>} : memref<1x12x12x72xf32, #tpu.memory_space<vmem>>, vector<1x12x12x8xf32>,
    %c0_171 = arith.constant 0 : index
    %c2_172 = arith.constant 2 : index
    %c1_173 = arith.constant 1 : index
    %c0_174 = arith.constant 0 : index
    %59 = vector.load %arg12[%c0_171, %c2_172, %c1_173, %c0_174] : memref<1x14x14x8xf32, #tpu.memory_space<vmem>>, vector<1x12x12x8xf32>
    %c0_175 = arith.constant 0 : index
    %c0_176 = arith.constant 0 : index
    %c0_177 = arith.constant 0 : index
    %c56 = arith.constant 56 : index
    %60 = vector.load %arg15[%c0_175, %c0_176, %c0_177, %c56] : memref<1x12x12x72xf32, #tpu.memory_space<vmem>>, vector<1x12x12x8xf32>
    tpu.vector_store %arg15[%c0_175, %c0_176, %c0_177, %c56], %59 {strides = array<i32>} : memref<1x12x12x72xf32, #tpu.memory_space<vmem>>, vector<1x12x12x8xf32>,
    %c0_178 = arith.constant 0 : index
    %c2_179 = arith.constant 2 : index
    %c2_180 = arith.constant 2 : index
    %c0_181 = arith.constant 0 : index
    %61 = vector.load %arg12[%c0_178, %c2_179, %c2_180, %c0_181] : memref<1x14x14x8xf32, #tpu.memory_space<vmem>>, vector<1x12x12x8xf32>
    %c0_182 = arith.constant 0 : index
    %c0_183 = arith.constant 0 : index
    %c0_184 = arith.constant 0 : index
    %c64 = arith.constant 64 : index
    %62 = vector.load %arg15[%c0_182, %c0_183, %c0_184, %c64] : memref<1x12x12x72xf32, #tpu.memory_space<vmem>>, vector<1x12x12x8xf32>
    tpu.vector_store %arg15[%c0_182, %c0_183, %c0_184, %c64], %61 {strides = array<i32>} : memref<1x12x12x72xf32, #tpu.memory_space<vmem>>, vector<1x12x12x8xf32>,
    %c0_185 = arith.constant 0 : index
    %c0_186 = arith.constant 0 : index
    %c0_187 = arith.constant 0 : index
    %c0_188 = arith.constant 0 : index
    %63 = vector.load %arg15[%c0_185, %c0_186, %c0_187, %c0_188] : memref<1x12x12x72xf32, #tpu.memory_space<vmem>>, vector<1x12x12x72xf32>
    %64 = vector.shape_cast %63 : vector<1x12x12x72xf32> to vector<144x72xf32>
    %c0_189 = arith.constant 0 : index
    %c0_190 = arith.constant 0 : index
    %65 = vector.load %arg4[%c0_189, %c0_190] : memref<72x16xf32, #tpu.memory_space<vmem>>, vector<72x16xf32>
    %cst_191 = arith.constant dense<0.000000e+00> : vector<144x16xf32>
    %66 = tpu.matmul %64, %65, %cst_191 {dimension_numbers = #tpu.dot_dimension_numbers<[1], [0], [0], [1], [0, 0, 1, 1], [], []>} : vector<144x72xf32>, vector<72x16xf32>, vector<144x16xf32> -> vector<144x16xf32>
    %c0_192 = arith.constant 0 : index
    %c0_193 = arith.constant 0 : index
    %67 = vector.load %arg5[%c0_192, %c0_193] : memref<1x16xf32, #tpu.memory_space<vmem>>, vector<1x16xf32>
    %68 = vector.broadcast %67 : vector<1x16xf32> to vector<144x16xf32>
    %69 = arith.addf %66, %68 : vector<144x16xf32>
    %70 = vector.shape_cast %69 : vector<144x16xf32> to vector<1x12x12x16xf32>
    %71 = vector.shape_cast %70 : vector<1x12x12x16xf32> to vector<12x12x16xf32>
    %72 = vector.shape_cast %71 : vector<12x12x16xf32> to vector<12x4x3x16xf32>
    %cst_194 = arith.constant dense<0xFF800000> : vector<12x4x16xf32>
    %73 = vector.multi_reduction <maximumf>, %72, %cst_194 [2] : vector<12x4x3x16xf32> to vector<12x4x16xf32>
    %74 = vector.shape_cast %73 : vector<12x4x16xf32> to vector<4x3x4x16xf32>
    %75 = vector.extract_strided_slice %74 {offsets = [0, 0, 0, 0], sizes = [4, 1, 4, 16], strides = [1, 1, 1, 1]} : vector<4x3x4x16xf32> to vector<4x1x4x16xf32>
    %76 = vector.shape_cast %75 : vector<4x1x4x16xf32> to vector<4x4x16xf32>
    %77 = vector.extract_strided_slice %74 {offsets = [0, 1, 0, 0], sizes = [4, 1, 4, 16], strides = [1, 1, 1, 1]} : vector<4x3x4x16xf32> to vector<4x1x4x16xf32>
    %78 = vector.shape_cast %77 : vector<4x1x4x16xf32> to vector<4x4x16xf32>
    %79 = arith.maximumf %76, %78 : vector<4x4x16xf32>
    %80 = vector.extract_strided_slice %74 {offsets = [0, 2, 0, 0], sizes = [4, 1, 4, 16], strides = [1, 1, 1, 1]} : vector<4x3x4x16xf32> to vector<4x1x4x16xf32>
    %81 = vector.shape_cast %80 : vector<4x1x4x16xf32> to vector<4x4x16xf32>
    %82 = arith.maximumf %79, %81 : vector<4x4x16xf32>
    %83 = vector.shape_cast %82 : vector<4x4x16xf32> to vector<1x4x4x16xf32>
    %cst_195 = arith.constant 0.000000e+00 : f32
    %84 = vector.broadcast %cst_195 : f32 to vector<1x1x6x16xf32>
    %c0_196 = arith.constant 0 : index
    %c0_197 = arith.constant 0 : index
    %c0_198 = arith.constant 0 : index
    %c0_199 = arith.constant 0 : index
    %85 = vector.load %arg13[%c0_196, %c0_197, %c0_198, %c0_199] : memref<1x6x6x16xf32, #tpu.memory_space<vmem>>, vector<1x1x6x16xf32>
    tpu.vector_store %arg13[%c0_196, %c0_197, %c0_198, %c0_199], %84 {strides = array<i32>} : memref<1x6x6x16xf32, #tpu.memory_space<vmem>>, vector<1x1x6x16xf32>,
    %cst_200 = arith.constant 0.000000e+00 : f32
    %86 = vector.broadcast %cst_200 : f32 to vector<1x1x6x16xf32>
    %c0_201 = arith.constant 0 : index
    %c5 = arith.constant 5 : index
    %c0_202 = arith.constant 0 : index
    %c0_203 = arith.constant 0 : index
    %87 = vector.load %arg13[%c0_201, %c5, %c0_202, %c0_203] : memref<1x6x6x16xf32, #tpu.memory_space<vmem>>, vector<1x1x6x16xf32>
    tpu.vector_store %arg13[%c0_201, %c5, %c0_202, %c0_203], %86 {strides = array<i32>} : memref<1x6x6x16xf32, #tpu.memory_space<vmem>>, vector<1x1x6x16xf32>,
    %cst_204 = arith.constant 0.000000e+00 : f32
    %88 = vector.broadcast %cst_204 : f32 to vector<1x6x1x16xf32>
    %c0_205 = arith.constant 0 : index
    %c0_206 = arith.constant 0 : index
    %c0_207 = arith.constant 0 : index
    %c0_208 = arith.constant 0 : index
    %89 = vector.load %arg13[%c0_205, %c0_206, %c0_207, %c0_208] : memref<1x6x6x16xf32, #tpu.memory_space<vmem>>, vector<1x6x1x16xf32>
    tpu.vector_store %arg13[%c0_205, %c0_206, %c0_207, %c0_208], %88 {strides = array<i32>} : memref<1x6x6x16xf32, #tpu.memory_space<vmem>>, vector<1x6x1x16xf32>,
    %cst_209 = arith.constant 0.000000e+00 : f32
    %90 = vector.broadcast %cst_209 : f32 to vector<1x6x1x16xf32>
    %c0_210 = arith.constant 0 : index
    %c0_211 = arith.constant 0 : index
    %c5_212 = arith.constant 5 : index
    %c0_213 = arith.constant 0 : index
    %91 = vector.load %arg13[%c0_210, %c0_211, %c5_212, %c0_213] : memref<1x6x6x16xf32, #tpu.memory_space<vmem>>, vector<1x6x1x16xf32>
    tpu.vector_store %arg13[%c0_210, %c0_211, %c5_212, %c0_213], %90 {strides = array<i32>} : memref<1x6x6x16xf32, #tpu.memory_space<vmem>>, vector<1x6x1x16xf32>,
    %c0_214 = arith.constant 0 : index
    %c1_215 = arith.constant 1 : index
    %c1_216 = arith.constant 1 : index
    %c0_217 = arith.constant 0 : index
    %92 = vector.load %arg13[%c0_214, %c1_215, %c1_216, %c0_217] : memref<1x6x6x16xf32, #tpu.memory_space<vmem>>, vector<1x4x4x16xf32>
    tpu.vector_store %arg13[%c0_214, %c1_215, %c1_216, %c0_217], %83 {strides = array<i32>} : memref<1x6x6x16xf32, #tpu.memory_space<vmem>>, vector<1x4x4x16xf32>,
    %c0_218 = arith.constant 0 : index
    %c0_219 = arith.constant 0 : index
    %c0_220 = arith.constant 0 : index
    %c0_221 = arith.constant 0 : index
    %93 = vector.load %arg13[%c0_218, %c0_219, %c0_220, %c0_221] : memref<1x6x6x16xf32, #tpu.memory_space<vmem>>, vector<1x4x4x16xf32>
    %c0_222 = arith.constant 0 : index
    %c0_223 = arith.constant 0 : index
    %c0_224 = arith.constant 0 : index
    %c0_225 = arith.constant 0 : index
    %94 = vector.load %arg16[%c0_222, %c0_223, %c0_224, %c0_225] : memref<1x4x4x144xf32, #tpu.memory_space<vmem>>, vector<1x4x4x16xf32>
    tpu.vector_store %arg16[%c0_222, %c0_223, %c0_224, %c0_225], %93 {strides = array<i32>} : memref<1x4x4x144xf32, #tpu.memory_space<vmem>>, vector<1x4x4x16xf32>,
    %c0_226 = arith.constant 0 : index
    %c0_227 = arith.constant 0 : index
    %c1_228 = arith.constant 1 : index
    %c0_229 = arith.constant 0 : index
    %95 = vector.load %arg13[%c0_226, %c0_227, %c1_228, %c0_229] : memref<1x6x6x16xf32, #tpu.memory_space<vmem>>, vector<1x4x4x16xf32>
    %c0_230 = arith.constant 0 : index
    %c0_231 = arith.constant 0 : index
    %c0_232 = arith.constant 0 : index
    %c16_233 = arith.constant 16 : index
    %96 = vector.load %arg16[%c0_230, %c0_231, %c0_232, %c16_233] : memref<1x4x4x144xf32, #tpu.memory_space<vmem>>, vector<1x4x4x16xf32>
    tpu.vector_store %arg16[%c0_230, %c0_231, %c0_232, %c16_233], %95 {strides = array<i32>} : memref<1x4x4x144xf32, #tpu.memory_space<vmem>>, vector<1x4x4x16xf32>,
    %c0_234 = arith.constant 0 : index
    %c0_235 = arith.constant 0 : index
    %c2_236 = arith.constant 2 : index
    %c0_237 = arith.constant 0 : index
    %97 = vector.load %arg13[%c0_234, %c0_235, %c2_236, %c0_237] : memref<1x6x6x16xf32, #tpu.memory_space<vmem>>, vector<1x4x4x16xf32>
    %c0_238 = arith.constant 0 : index
    %c0_239 = arith.constant 0 : index
    %c0_240 = arith.constant 0 : index
    %c32_241 = arith.constant 32 : index
    %98 = vector.load %arg16[%c0_238, %c0_239, %c0_240, %c32_241] : memref<1x4x4x144xf32, #tpu.memory_space<vmem>>, vector<1x4x4x16xf32>
    tpu.vector_store %arg16[%c0_238, %c0_239, %c0_240, %c32_241], %97 {strides = array<i32>} : memref<1x4x4x144xf32, #tpu.memory_space<vmem>>, vector<1x4x4x16xf32>,
    %c0_242 = arith.constant 0 : index
    %c1_243 = arith.constant 1 : index
    %c0_244 = arith.constant 0 : index
    %c0_245 = arith.constant 0 : index
    %99 = vector.load %arg13[%c0_242, %c1_243, %c0_244, %c0_245] : memref<1x6x6x16xf32, #tpu.memory_space<vmem>>, vector<1x4x4x16xf32>
    %c0_246 = arith.constant 0 : index
    %c0_247 = arith.constant 0 : index
    %c0_248 = arith.constant 0 : index
    %c48_249 = arith.constant 48 : index
    %100 = vector.load %arg16[%c0_246, %c0_247, %c0_248, %c48_249] : memref<1x4x4x144xf32, #tpu.memory_space<vmem>>, vector<1x4x4x16xf32>
    tpu.vector_store %arg16[%c0_246, %c0_247, %c0_248, %c48_249], %99 {strides = array<i32>} : memref<1x4x4x144xf32, #tpu.memory_space<vmem>>, vector<1x4x4x16xf32>,
    %c0_250 = arith.constant 0 : index
    %c1_251 = arith.constant 1 : index
    %c1_252 = arith.constant 1 : index
    %c0_253 = arith.constant 0 : index
    %101 = vector.load %arg13[%c0_250, %c1_251, %c1_252, %c0_253] : memref<1x6x6x16xf32, #tpu.memory_space<vmem>>, vector<1x4x4x16xf32>
    %c0_254 = arith.constant 0 : index
    %c0_255 = arith.constant 0 : index
    %c0_256 = arith.constant 0 : index
    %c64_257 = arith.constant 64 : index
    %102 = vector.load %arg16[%c0_254, %c0_255, %c0_256, %c64_257] : memref<1x4x4x144xf32, #tpu.memory_space<vmem>>, vector<1x4x4x16xf32>
    tpu.vector_store %arg16[%c0_254, %c0_255, %c0_256, %c64_257], %101 {strides = array<i32>} : memref<1x4x4x144xf32, #tpu.memory_space<vmem>>, vector<1x4x4x16xf32>,
    %c0_258 = arith.constant 0 : index
    %c1_259 = arith.constant 1 : index
    %c2_260 = arith.constant 2 : index
    %c0_261 = arith.constant 0 : index
    %103 = vector.load %arg13[%c0_258, %c1_259, %c2_260, %c0_261] : memref<1x6x6x16xf32, #tpu.memory_space<vmem>>, vector<1x4x4x16xf32>
    %c0_262 = arith.constant 0 : index
    %c0_263 = arith.constant 0 : index
    %c0_264 = arith.constant 0 : index
    %c80 = arith.constant 80 : index
    %104 = vector.load %arg16[%c0_262, %c0_263, %c0_264, %c80] : memref<1x4x4x144xf32, #tpu.memory_space<vmem>>, vector<1x4x4x16xf32>
    tpu.vector_store %arg16[%c0_262, %c0_263, %c0_264, %c80], %103 {strides = array<i32>} : memref<1x4x4x144xf32, #tpu.memory_space<vmem>>, vector<1x4x4x16xf32>,
    %c0_265 = arith.constant 0 : index
    %c2_266 = arith.constant 2 : index
    %c0_267 = arith.constant 0 : index
    %c0_268 = arith.constant 0 : index
    %105 = vector.load %arg13[%c0_265, %c2_266, %c0_267, %c0_268] : memref<1x6x6x16xf32, #tpu.memory_space<vmem>>, vector<1x4x4x16xf32>
    %c0_269 = arith.constant 0 : index
    %c0_270 = arith.constant 0 : index
    %c0_271 = arith.constant 0 : index
    %c96 = arith.constant 96 : index
    %106 = vector.load %arg16[%c0_269, %c0_270, %c0_271, %c96] : memref<1x4x4x144xf32, #tpu.memory_space<vmem>>, vector<1x4x4x16xf32>
    tpu.vector_store %arg16[%c0_269, %c0_270, %c0_271, %c96], %105 {strides = array<i32>} : memref<1x4x4x144xf32, #tpu.memory_space<vmem>>, vector<1x4x4x16xf32>,
    %c0_272 = arith.constant 0 : index
    %c2_273 = arith.constant 2 : index
    %c1_274 = arith.constant 1 : index
    %c0_275 = arith.constant 0 : index
    %107 = vector.load %arg13[%c0_272, %c2_273, %c1_274, %c0_275] : memref<1x6x6x16xf32, #tpu.memory_space<vmem>>, vector<1x4x4x16xf32>
    %c0_276 = arith.constant 0 : index
    %c0_277 = arith.constant 0 : index
    %c0_278 = arith.constant 0 : index
    %c112 = arith.constant 112 : index
    %108 = vector.load %arg16[%c0_276, %c0_277, %c0_278, %c112] : memref<1x4x4x144xf32, #tpu.memory_space<vmem>>, vector<1x4x4x16xf32>
    tpu.vector_store %arg16[%c0_276, %c0_277, %c0_278, %c112], %107 {strides = array<i32>} : memref<1x4x4x144xf32, #tpu.memory_space<vmem>>, vector<1x4x4x16xf32>,
    %c0_279 = arith.constant 0 : index
    %c2_280 = arith.constant 2 : index
    %c2_281 = arith.constant 2 : index
    %c0_282 = arith.constant 0 : index
    %109 = vector.load %arg13[%c0_279, %c2_280, %c2_281, %c0_282] : memref<1x6x6x16xf32, #tpu.memory_space<vmem>>, vector<1x4x4x16xf32>
    %c0_283 = arith.constant 0 : index
    %c0_284 = arith.constant 0 : index
    %c0_285 = arith.constant 0 : index
    %c128 = arith.constant 128 : index
    %110 = vector.load %arg16[%c0_283, %c0_284, %c0_285, %c128] : memref<1x4x4x144xf32, #tpu.memory_space<vmem>>, vector<1x4x4x16xf32>
    tpu.vector_store %arg16[%c0_283, %c0_284, %c0_285, %c128], %109 {strides = array<i32>} : memref<1x4x4x144xf32, #tpu.memory_space<vmem>>, vector<1x4x4x16xf32>,
    %c0_286 = arith.constant 0 : index
    %c0_287 = arith.constant 0 : index
    %c0_288 = arith.constant 0 : index
    %c0_289 = arith.constant 0 : index
    %111 = vector.load %arg16[%c0_286, %c0_287, %c0_288, %c0_289] : memref<1x4x4x144xf32, #tpu.memory_space<vmem>>, vector<1x4x4x144xf32>
    %112 = vector.shape_cast %111 : vector<1x4x4x144xf32> to vector<16x144xf32>
    %c0_290 = arith.constant 0 : index
    %c0_291 = arith.constant 0 : index
    %113 = vector.load %arg6[%c0_290, %c0_291] : memref<144x16xf32, #tpu.memory_space<vmem>>, vector<144x16xf32>
    %cst_292 = arith.constant dense<0.000000e+00> : vector<16x16xf32>
    %114 = tpu.matmul %112, %113, %cst_292 {dimension_numbers = #tpu.dot_dimension_numbers<[1], [0], [0], [1], [0, 0, 1, 1], [], []>} : vector<16x144xf32>, vector<144x16xf32>, vector<16x16xf32> -> vector<16x16xf32>
    %c0_293 = arith.constant 0 : index
    %c0_294 = arith.constant 0 : index
    %115 = vector.load %arg7[%c0_293, %c0_294] : memref<1x16xf32, #tpu.memory_space<vmem>>, vector<1x16xf32>
    %116 = vector.broadcast %115 : vector<1x16xf32> to vector<16x16xf32>
    %117 = arith.addf %114, %116 : vector<16x16xf32>
    %118 = vector.shape_cast %117 : vector<16x16xf32> to vector<1x4x4x16xf32>
    %119 = vector.shape_cast %118 : vector<1x4x4x16xf32> to vector<1x16x16xf32>
    %120 = vector.extract_strided_slice %119 {offsets = [0, 0, 0], sizes = [1, 1, 16], strides = [1, 1, 1]} : vector<1x16x16xf32> to vector<1x1x16xf32>
    %121 = vector.shape_cast %120 : vector<1x1x16xf32> to vector<1x16xf32>
    %c0_295 = arith.constant 0 : index
    %c0_296 = arith.constant 0 : index
    %122 = vector.load %arg17[%c0_295, %c0_296] : memref<1x256xf32, #tpu.memory_space<vmem>>, vector<1x16xf32>
    tpu.vector_store %arg17[%c0_295, %c0_296], %121 {strides = array<i32>} : memref<1x256xf32, #tpu.memory_space<vmem>>, vector<1x16xf32>,
    %123 = vector.extract_strided_slice %119 {offsets = [0, 1, 0], sizes = [1, 1, 16], strides = [1, 1, 1]} : vector<1x16x16xf32> to vector<1x1x16xf32>
    %124 = vector.shape_cast %123 : vector<1x1x16xf32> to vector<1x16xf32>
    %c0_297 = arith.constant 0 : index
    %c16_298 = arith.constant 16 : index
    %125 = vector.load %arg17[%c0_297, %c16_298] : memref<1x256xf32, #tpu.memory_space<vmem>>, vector<1x16xf32>
    tpu.vector_store %arg17[%c0_297, %c16_298], %124 {strides = array<i32>} : memref<1x256xf32, #tpu.memory_space<vmem>>, vector<1x16xf32>,
    %126 = vector.extract_strided_slice %119 {offsets = [0, 2, 0], sizes = [1, 1, 16], strides = [1, 1, 1]} : vector<1x16x16xf32> to vector<1x1x16xf32>
    %127 = vector.shape_cast %126 : vector<1x1x16xf32> to vector<1x16xf32>
    %c0_299 = arith.constant 0 : index
    %c32_300 = arith.constant 32 : index
    %128 = vector.load %arg17[%c0_299, %c32_300] : memref<1x256xf32, #tpu.memory_space<vmem>>, vector<1x16xf32>
    tpu.vector_store %arg17[%c0_299, %c32_300], %127 {strides = array<i32>} : memref<1x256xf32, #tpu.memory_space<vmem>>, vector<1x16xf32>,
    %129 = vector.extract_strided_slice %119 {offsets = [0, 3, 0], sizes = [1, 1, 16], strides = [1, 1, 1]} : vector<1x16x16xf32> to vector<1x1x16xf32>
    %130 = vector.shape_cast %129 : vector<1x1x16xf32> to vector<1x16xf32>
    %c0_301 = arith.constant 0 : index
    %c48_302 = arith.constant 48 : index
    %131 = vector.load %arg17[%c0_301, %c48_302] : memref<1x256xf32, #tpu.memory_space<vmem>>, vector<1x16xf32>
    tpu.vector_store %arg17[%c0_301, %c48_302], %130 {strides = array<i32>} : memref<1x256xf32, #tpu.memory_space<vmem>>, vector<1x16xf32>,
    %132 = vector.extract_strided_slice %119 {offsets = [0, 4, 0], sizes = [1, 1, 16], strides = [1, 1, 1]} : vector<1x16x16xf32> to vector<1x1x16xf32>
    %133 = vector.shape_cast %132 : vector<1x1x16xf32> to vector<1x16xf32>
    %c0_303 = arith.constant 0 : index
    %c64_304 = arith.constant 64 : index
    %134 = vector.load %arg17[%c0_303, %c64_304] : memref<1x256xf32, #tpu.memory_space<vmem>>, vector<1x16xf32>
    tpu.vector_store %arg17[%c0_303, %c64_304], %133 {strides = array<i32>} : memref<1x256xf32, #tpu.memory_space<vmem>>, vector<1x16xf32>,
    %135 = vector.extract_strided_slice %119 {offsets = [0, 5, 0], sizes = [1, 1, 16], strides = [1, 1, 1]} : vector<1x16x16xf32> to vector<1x1x16xf32>
    %136 = vector.shape_cast %135 : vector<1x1x16xf32> to vector<1x16xf32>
    %c0_305 = arith.constant 0 : index
    %c80_306 = arith.constant 80 : index
    %137 = vector.load %arg17[%c0_305, %c80_306] : memref<1x256xf32, #tpu.memory_space<vmem>>, vector<1x16xf32>
    tpu.vector_store %arg17[%c0_305, %c80_306], %136 {strides = array<i32>} : memref<1x256xf32, #tpu.memory_space<vmem>>, vector<1x16xf32>,
    %138 = vector.extract_strided_slice %119 {offsets = [0, 6, 0], sizes = [1, 1, 16], strides = [1, 1, 1]} : vector<1x16x16xf32> to vector<1x1x16xf32>
    %139 = vector.shape_cast %138 : vector<1x1x16xf32> to vector<1x16xf32>
    %c0_307 = arith.constant 0 : index
    %c96_308 = arith.constant 96 : index
    %140 = vector.load %arg17[%c0_307, %c96_308] : memref<1x256xf32, #tpu.memory_space<vmem>>, vector<1x16xf32>
    tpu.vector_store %arg17[%c0_307, %c96_308], %139 {strides = array<i32>} : memref<1x256xf32, #tpu.memory_space<vmem>>, vector<1x16xf32>,
    %141 = vector.extract_strided_slice %119 {offsets = [0, 7, 0], sizes = [1, 1, 16], strides = [1, 1, 1]} : vector<1x16x16xf32> to vector<1x1x16xf32>
    %142 = vector.shape_cast %141 : vector<1x1x16xf32> to vector<1x16xf32>
    %c0_309 = arith.constant 0 : index
    %c112_310 = arith.constant 112 : index
    %143 = vector.load %arg17[%c0_309, %c112_310] : memref<1x256xf32, #tpu.memory_space<vmem>>, vector<1x16xf32>
    tpu.vector_store %arg17[%c0_309, %c112_310], %142 {strides = array<i32>} : memref<1x256xf32, #tpu.memory_space<vmem>>, vector<1x16xf32>,
    %144 = vector.extract_strided_slice %119 {offsets = [0, 8, 0], sizes = [1, 1, 16], strides = [1, 1, 1]} : vector<1x16x16xf32> to vector<1x1x16xf32>
    %145 = vector.shape_cast %144 : vector<1x1x16xf32> to vector<1x16xf32>
    %c0_311 = arith.constant 0 : index
    %c128_312 = arith.constant 128 : index
    %146 = vector.load %arg17[%c0_311, %c128_312] : memref<1x256xf32, #tpu.memory_space<vmem>>, vector<1x16xf32>
    tpu.vector_store %arg17[%c0_311, %c128_312], %145 {strides = array<i32>} : memref<1x256xf32, #tpu.memory_space<vmem>>, vector<1x16xf32>,
    %147 = vector.extract_strided_slice %119 {offsets = [0, 9, 0], sizes = [1, 1, 16], strides = [1, 1, 1]} : vector<1x16x16xf32> to vector<1x1x16xf32>
    %148 = vector.shape_cast %147 : vector<1x1x16xf32> to vector<1x16xf32>
    %c0_313 = arith.constant 0 : index
    %c144 = arith.constant 144 : index
    %149 = vector.load %arg17[%c0_313, %c144] : memref<1x256xf32, #tpu.memory_space<vmem>>, vector<1x16xf32>
    tpu.vector_store %arg17[%c0_313, %c144], %148 {strides = array<i32>} : memref<1x256xf32, #tpu.memory_space<vmem>>, vector<1x16xf32>,
    %150 = vector.extract_strided_slice %119 {offsets = [0, 10, 0], sizes = [1, 1, 16], strides = [1, 1, 1]} : vector<1x16x16xf32> to vector<1x1x16xf32>
    %151 = vector.shape_cast %150 : vector<1x1x16xf32> to vector<1x16xf32>
    %c0_314 = arith.constant 0 : index
    %c160 = arith.constant 160 : index
    %152 = vector.load %arg17[%c0_314, %c160] : memref<1x256xf32, #tpu.memory_space<vmem>>, vector<1x16xf32>
    tpu.vector_store %arg17[%c0_314, %c160], %151 {strides = array<i32>} : memref<1x256xf32, #tpu.memory_space<vmem>>, vector<1x16xf32>,
    %153 = vector.extract_strided_slice %119 {offsets = [0, 11, 0], sizes = [1, 1, 16], strides = [1, 1, 1]} : vector<1x16x16xf32> to vector<1x1x16xf32>
    %154 = vector.shape_cast %153 : vector<1x1x16xf32> to vector<1x16xf32>
    %c0_315 = arith.constant 0 : index
    %c176 = arith.constant 176 : index
    %155 = vector.load %arg17[%c0_315, %c176] : memref<1x256xf32, #tpu.memory_space<vmem>>, vector<1x16xf32>
    tpu.vector_store %arg17[%c0_315, %c176], %154 {strides = array<i32>} : memref<1x256xf32, #tpu.memory_space<vmem>>, vector<1x16xf32>,
    %156 = vector.extract_strided_slice %119 {offsets = [0, 12, 0], sizes = [1, 1, 16], strides = [1, 1, 1]} : vector<1x16x16xf32> to vector<1x1x16xf32>
    %157 = vector.shape_cast %156 : vector<1x1x16xf32> to vector<1x16xf32>
    %c0_316 = arith.constant 0 : index
    %c192 = arith.constant 192 : index
    %158 = vector.load %arg17[%c0_316, %c192] : memref<1x256xf32, #tpu.memory_space<vmem>>, vector<1x16xf32>
    tpu.vector_store %arg17[%c0_316, %c192], %157 {strides = array<i32>} : memref<1x256xf32, #tpu.memory_space<vmem>>, vector<1x16xf32>,
    %159 = vector.extract_strided_slice %119 {offsets = [0, 13, 0], sizes = [1, 1, 16], strides = [1, 1, 1]} : vector<1x16x16xf32> to vector<1x1x16xf32>
    %160 = vector.shape_cast %159 : vector<1x1x16xf32> to vector<1x16xf32>
    %c0_317 = arith.constant 0 : index
    %c208 = arith.constant 208 : index
    %161 = vector.load %arg17[%c0_317, %c208] : memref<1x256xf32, #tpu.memory_space<vmem>>, vector<1x16xf32>
    tpu.vector_store %arg17[%c0_317, %c208], %160 {strides = array<i32>} : memref<1x256xf32, #tpu.memory_space<vmem>>, vector<1x16xf32>,
    %162 = vector.extract_strided_slice %119 {offsets = [0, 14, 0], sizes = [1, 1, 16], strides = [1, 1, 1]} : vector<1x16x16xf32> to vector<1x1x16xf32>
    %163 = vector.shape_cast %162 : vector<1x1x16xf32> to vector<1x16xf32>
    %c0_318 = arith.constant 0 : index
    %c224 = arith.constant 224 : index
    %164 = vector.load %arg17[%c0_318, %c224] : memref<1x256xf32, #tpu.memory_space<vmem>>, vector<1x16xf32>
    tpu.vector_store %arg17[%c0_318, %c224], %163 {strides = array<i32>} : memref<1x256xf32, #tpu.memory_space<vmem>>, vector<1x16xf32>,
    %165 = vector.extract_strided_slice %119 {offsets = [0, 15, 0], sizes = [1, 1, 16], strides = [1, 1, 1]} : vector<1x16x16xf32> to vector<1x1x16xf32>
    %166 = vector.shape_cast %165 : vector<1x1x16xf32> to vector<1x16xf32>
    %c0_319 = arith.constant 0 : index
    %c240 = arith.constant 240 : index
    %167 = vector.load %arg17[%c0_319, %c240] : memref<1x256xf32, #tpu.memory_space<vmem>>, vector<1x16xf32>
    tpu.vector_store %arg17[%c0_319, %c240], %166 {strides = array<i32>} : memref<1x256xf32, #tpu.memory_space<vmem>>, vector<1x16xf32>,
    %c0_320 = arith.constant 0 : index
    %c0_321 = arith.constant 0 : index
    %168 = vector.load %arg9[%c0_320, %c0_321] : memref<1x10xf32, #tpu.memory_space<vmem>>, vector<1x10xf32>
    %c0_322 = arith.constant 0 : index
    %c0_323 = arith.constant 0 : index
    %169 = vector.load %arg17[%c0_322, %c0_323] : memref<1x256xf32, #tpu.memory_space<vmem>>, vector<1x256xf32>
    %c0_324 = arith.constant 0 : index
    %c0_325 = arith.constant 0 : index
    %170 = vector.load %arg8[%c0_324, %c0_325] : memref<256x10xf32, #tpu.memory_space<vmem>>, vector<256x10xf32>
    %cst_326 = arith.constant dense<0.000000e+00> : vector<1x10xf32>
    %171 = tpu.matmul %169, %170, %cst_326 {dimension_numbers = #tpu.dot_dimension_numbers<[1], [0], [0], [1], [0, 0, 1, 1], [], []>} : vector<1x256xf32>, vector<256x10xf32>, vector<1x10xf32> -> vector<1x10xf32>
    %172 = arith.addf %168, %171 : vector<1x10xf32>
    %173 = vector.shape_cast %172 : vector<1x10xf32> to vector<1x1x10xf32>
    %c0_327 = arith.constant 0 : index
    %c0_328 = arith.constant 0 : index
    %c0_329 = arith.constant 0 : index
    %174 = vector.load %arg10[%c0_327, %c0_328, %c0_329] : memref<1x1x10xf32, #tpu.memory_space<vmem>>, vector<1x1x10xf32>
    tpu.vector_store %arg10[%c0_327, %c0_328, %c0_329], %173 {strides = array<i32>} : memref<1x1x10xf32, #tpu.memory_space<vmem>>, vector<1x1x10xf32>,
    return
  }
  func.func @transform_0(%arg0: i32) -> (i32, i32, i32, i32) {
    %c0_i32 = arith.constant 0 : i32
    %c0_i32_0 = arith.constant 0 : i32
    %c0_i32_1 = arith.constant 0 : i32
    %c0_i32_2 = arith.constant 0 : i32
    return %arg0, %c0_i32, %c0_i32_0, %c0_i32_1 : i32, i32, i32, i32
  }
  func.func @transform_1(%arg0: i32) -> (i32, i32) {
    %c0_i32 = arith.constant 0 : i32
    %c0_i32_0 = arith.constant 0 : i32
    %c0_i32_1 = arith.constant 0 : i32
    return %c0_i32, %c0_i32_0 : i32, i32
  }
  func.func @transform_2(%arg0: i32) -> (i32, i32) {
    %c0_i32 = arith.constant 0 : i32
    %c0_i32_0 = arith.constant 0 : i32
    %c0_i32_1 = arith.constant 0 : i32
    return %c0_i32, %c0_i32_0 : i32, i32
  }
  func.func @transform_3(%arg0: i32) -> (i32, i32) {
    %c0_i32 = arith.constant 0 : i32
    %c0_i32_0 = arith.constant 0 : i32
    %c0_i32_1 = arith.constant 0 : i32
    return %c0_i32, %c0_i32_0 : i32, i32
  }
  func.func @transform_4(%arg0: i32) -> (i32, i32) {
    %c0_i32 = arith.constant 0 : i32
    %c0_i32_0 = arith.constant 0 : i32
    %c0_i32_1 = arith.constant 0 : i32
    return %c0_i32, %c0_i32_0 : i32, i32
  }
  func.func @transform_5(%arg0: i32) -> (i32, i32) {
    %c0_i32 = arith.constant 0 : i32
    %c0_i32_0 = arith.constant 0 : i32
    %c0_i32_1 = arith.constant 0 : i32
    return %c0_i32, %c0_i32_0 : i32, i32
  }
  func.func @transform_6(%arg0: i32) -> (i32, i32) {
    %c0_i32 = arith.constant 0 : i32
    %c0_i32_0 = arith.constant 0 : i32
    %c0_i32_1 = arith.constant 0 : i32
    return %c0_i32, %c0_i32_0 : i32, i32
  }
  func.func @transform_7(%arg0: i32) -> (i32, i32) {
    %c0_i32 = arith.constant 0 : i32
    %c0_i32_0 = arith.constant 0 : i32
    %c0_i32_1 = arith.constant 0 : i32
    return %c0_i32, %c0_i32_0 : i32, i32
  }
  func.func @transform_8(%arg0: i32) -> (i32, i32) {
    %c0_i32 = arith.constant 0 : i32
    %c0_i32_0 = arith.constant 0 : i32
    %c0_i32_1 = arith.constant 0 : i32
    return %c0_i32, %c0_i32_0 : i32, i32
  }
  func.func @transform_9(%arg0: i32) -> (i32, i32, i32) {
    %c0_i32 = arith.constant 0 : i32
    %c0_i32_0 = arith.constant 0 : i32
    %c0_i32_1 = arith.constant 0 : i32
    return %arg0, %c0_i32, %c0_i32_0 : i32, i32, i32
  }
}

</mosaic_0001>

<llo_original>
// kernel: tpu_custom_call.1
$region0: #{tpu_custom_call.1}
  #allocation0 [shape = 'u32[]', space=smem, size = 0x4, offset = 0x4, fixed_abs, tag = 'smem constant byte address 0x4 - core index']
  #allocation1 [shape = 'u32[144,128]{1,0:T(1,128)}', space=vmem, size = 0x12000, scoped, tag = 'internal scratch']
  #allocation2 [shape = 'f32[1,14,14,3]{3,2,1,0:T(8,128)}', space=vmem, size = 0x1c000, scoped, tag = 'scratch operand']
  #allocation3 [shape = 'f32[1,14,14,8]{3,2,1,0:T(8,128)}', space=vmem, size = 0x1c000, scoped, tag = 'scratch operand']
  #allocation4 [shape = 'f32[1,6,6,16]{3,2,1,0:T(8,128)}', space=vmem, size = 0x6000, scoped, tag = 'scratch operand']
  #allocation5 [shape = 'f32[1,12,12,27]{3,2,1,0:T(8,128)}', space=vmem, size = 0x18000, scoped, tag = 'scratch operand']
  #allocation6 [shape = 'f32[1,12,12,72]{3,2,1,0:T(8,128)}', space=vmem, size = 0x18000, scoped, tag = 'scratch operand']
  #allocation7 [shape = 'f32[1,4,4,144]{3,2,1,0:T(4,128)}', space=vmem, size = 0x4000, scoped, tag = 'scratch operand']
  #allocation8 [shape = 'f32[1,256]{1,0:T(1,128)}', space=vmem, size = 0x400, scoped, tag = 'scratch operand']
  %s0 = inlined_call_operand.hbm [shape: f32[2,12,12,3], index: 0, kind: input, shape index: {}]
  %s1 = inlined_call_operand.hbm [shape: f32[27,8], index: 1, kind: input, shape index: {}]
  %s2 = inlined_call_operand.hbm [shape: f32[1,8], index: 2, kind: input, shape index: {}]
  %s3 = inlined_call_operand.hbm [shape: f32[72,16], index: 3, kind: input, shape index: {}]
  %s4 = inlined_call_operand.hbm [shape: f32[1,16], index: 4, kind: input, shape index: {}]
  %s5 = inlined_call_operand.hbm [shape: f32[144,16], index: 5, kind: input, shape index: {}]
  %s6 = inlined_call_operand.hbm [shape: f32[1,16], index: 6, kind: input, shape index: {}]
  %s7 = inlined_call_operand.hbm [shape: f32[256,10], index: 7, kind: input, shape index: {}]
  %s8 = inlined_call_operand.hbm [shape: f32[1,10], index: 8, kind: input, shape index: {}]
  %s9 = inlined_call_operand.hbm [shape: f32[2,1,10], index: 9, kind: output, shape index: {}]
  %s10 = sld [smem:[#allocation0]]
  $region105: #{tpu_custom_call.1} parent=0
    _
  %s12 = ssub.s32 1, %s10
  %s13 = scalar_select 0, %s12, %s10
  $region1: #{tpu_custom_call.1} parent=0
    #allocation9 [shape = 'u8[196608]{0}', space=vmem, size = 0x30000, scoped, tag = 'input window, operand 0']
    #allocation10 [shape = 's32[2]{0}', space=sflag, size = 0x8, scoped, tag = 'scoped memory for tpu_custom_call.1']
    #allocation11 [shape = 's32[2]{0}', space=sflag, size = 0x8, scoped, tag = 'scoped memory for tpu_custom_call.1']
    #allocation12 [shape = 'u8[16384]{0}', space=vmem, size = 0x4000, scoped, tag = 'input window, operand 1, single buffered']
    #allocation13 [shape = 's32[1]{0}', space=sflag, size = 0x4, scoped, tag = 'scoped memory for tpu_custom_call.1']
    #allocation14 [shape = 'u8[512]{0}', space=vmem, size = 0x400, scoped, tag = 'input window, operand 2, single buffered']
    #allocation15 [shape = 'u8[36864]{0}', space=vmem, size = 0x9000, scoped, tag = 'input window, operand 3, single buffered']
    #allocation16 [shape = 's32[1]{0}', space=sflag, size = 0x4, scoped, tag = 'scoped memory for tpu_custom_call.1']
    #allocation17 [shape = 'u8[512]{0}', space=vmem, size = 0x400, scoped, tag = 'input window, operand 4, single buffered']
    #allocation18 [shape = 'u8[73728]{0}', space=vmem, size = 0x12000, scoped, tag = 'input window, operand 5, single buffered']
    #allocation19 [shape = 's32[1]{0}', space=sflag, size = 0x4, scoped, tag = 'scoped memory for tpu_custom_call.1']
    #allocation20 [shape = 'u8[512]{0}', space=vmem, size = 0x400, scoped, tag = 'input window, operand 6, single buffered']
    #allocation21 [shape = 'u8[131072]{0}', space=vmem, size = 0x20000, scoped, tag = 'input window, operand 7, single buffered']
    #allocation22 [shape = 's32[1]{0}', space=sflag, size = 0x4, scoped, tag = 'scoped memory for tpu_custom_call.1']
    #allocation23 [shape = 'u8[512]{0}', space=vmem, size = 0x400, scoped, tag = 'input window, operand 8, single buffered']
    #allocation24 [shape = 'u8[1024]{0}', space=vmem, size = 0x400, scoped, tag = 'output window, operand 0']
    %14 = vsyncpa [#allocation10], 0
    %s15 = scalar_lea.sflag [#allocation10], 1
    %16 = vsyncpa %s15, 0
    %17 = vsyncpa [#allocation13], 0
    %18 = vsyncpa [#allocation16], 0
    %19 = vsyncpa [#allocation19], 0
    %20 = vsyncpa [#allocation22], 0
    %21 = vsyncpa [#allocation11], 0
    %s22 = scalar_lea.sflag [#allocation11], 1
    %23 = vsyncpa %s22, 0
    loop: start=0, step=1, limit=4
    $region2: #{tpu_custom_call.1} parent=1 // loop_pre_header
      _
    $region3: #{tpu_custom_call.1} parent=1 // loop_header
      %s25 = sphi 0, %s29
      %p26 = scmp.ge.s32.totalorder %s25, 4
      %s35 = sphi 0, %s37
      %s38 = sphi 0, %s35
      %s39 = sphi 0, %s38
      %s55 = sphi 0, %s39
      %s59 = sphi 0, %s59
      %s61 = sphi 0, %s59
      %s62 = sphi 0, %s61
      %s76 = sphi 0, %s62
      %s80 = sphi 0, %s80
      %s82 = sphi 0, %s80
      %s83 = sphi 0, %s82
      %s97 = sphi 0, %s83
      %s101 = sphi 0, %s101
      %s103 = sphi 0, %s101
      %s104 = sphi 0, %s103
      %s118 = sphi 0, %s104
      %s122 = sphi 0, %s122
      %s124 = sphi 0, %s122
      %s125 = sphi 0, %s124
      %s139 = sphi 0, %s125
      %s143 = sphi 0, %s143
      %s145 = sphi 0, %s143
      %s146 = sphi 0, %s145
      %s160 = sphi 0, %s146
      %s164 = sphi 0, %s164
      %s166 = sphi 0, %s164
      %s167 = sphi 0, %s166
      %s181 = sphi 0, %s167
      %s185 = sphi 0, %s185
      %s187 = sphi 0, %s185
      %s188 = sphi 0, %s187
      %s202 = sphi 0, %s188
      %s206 = sphi 0, %s206
      %s208 = sphi 0, %s206
      %s209 = sphi 0, %s208
      %s223 = sphi 0, %s209
      %s229 = sphi 0, %s231
      %s232 = sphi 0, %s229
      %s233 = sphi 0, %s232
      %s249 = sphi 0, %s233
    $region4: #{tpu_custom_call.1} parent=1 // loop_header_branch
      %28 = sbr.rel (%p26) target = $region8
    $region5: #{tpu_custom_call.1} parent=1 // loop_body
      %s30 = ssub.s32 %s25, 1
      %s31 = ssub.s32 %s25, 2
      %s32 = sadd.s32 %s25, 1
      %s33 = ssub.s32 %s25, %s32
      %p34 = scmp.eq.s32.totalorder %s33, 0
      %s36 = sadd.s32 %s35, 1
      %s37 = scalar_select %p34, %s35, %s36
      %p40 = pneg %p34
      %p41 = scmp.eq.s32.totalorder %s25, 1
      %p42 = por %p40, %p41
      %p43 = scmp.ne.s32.totalorder %s35, %s38
      %p44 = scmp.eq.s32.totalorder %s25, 0
      %p45 = por %p43, %p44
      %p46 = scmp.ne.s32.totalorder %s35, %s38
      %p47 = scmp.eq.s32.totalorder %s30, 1
      %p48 = por %p46, %p47
      %p49 = scmp.ne.s32.totalorder %s38, %s39
      %p50 = scmp.eq.s32.totalorder %s30, 0
      %p51 = por %p49, %p50
      %p52 = scmp.ne.s32.totalorder %s38, %s39
      %p53 = scmp.eq.s32.totalorder %s31, 1
      %p54 = por %p52, %p53
      %p56 = scmp.ne.s32.totalorder %s39, %s55
      %p57 = scmp.eq.s32.totalorder %s31, 0
      %p58 = por %p56, %p57
      %s60 = sadd.s32 %s59, 1
      %p63 = scmp.eq.s32.totalorder %s25, 1
      %p64 = scmp.ne.s32.totalorder %s59, %s61
      %p65 = scmp.eq.s32.totalorder %s25, 0
      %p66 = por %p64, %p65
      %p67 = scmp.ne.s32.totalorder %s59, %s61
      %p68 = scmp.eq.s32.totalorder %s30, 1
      %p69 = por %p67, %p68
      %p70 = scmp.ne.s32.totalorder %s61, %s62
      %p71 = scmp.eq.s32.totalorder %s30, 0
      %p72 = por %p70, %p71
      %p73 = scmp.ne.s32.totalorder %s61, %s62
      %p74 = scmp.eq.s32.totalorder %s31, 1
      %p75 = por %p73, %p74
      %p77 = scmp.ne.s32.totalorder %s62, %s76
      %p78 = scmp.eq.s32.totalorder %s31, 0
      %p79 = por %p77, %p78
      %s81 = sadd.s32 %s80, 1
      %p84 = scmp.eq.s32.totalorder %s25, 1
      %p85 = scmp.ne.s32.totalorder %s80, %s82
      %p86 = scmp.eq.s32.totalorder %s25, 0
      %p87 = por %p85, %p86
      %p88 = scmp.ne.s32.totalorder %s80, %s82
      %p89 = scmp.eq.s32.totalorder %s30, 1
      %p90 = por %p88, %p89
      %p91 = scmp.ne.s32.totalorder %s82, %s83
      %p92 = scmp.eq.s32.totalorder %s30, 0
      %p93 = por %p91, %p92
      %p94 = scmp.ne.s32.totalorder %s82, %s83
      %p95 = scmp.eq.s32.totalorder %s31, 1
      %p96 = por %p94, %p95
      %p98 = scmp.ne.s32.totalorder %s83, %s97
      %p99 = scmp.eq.s32.totalorder %s31, 0
      %p100 = por %p98, %p99
      %s102 = sadd.s32 %s101, 1
      %p105 = scmp.eq.s32.totalorder %s25, 1
      %p106 = scmp.ne.s32.totalorder %s101, %s103
      %p107 = scmp.eq.s32.totalorder %s25, 0
      %p108 = por %p106, %p107
      %p109 = scmp.ne.s32.totalorder %s101, %s103
      %p110 = scmp.eq.s32.totalorder %s30, 1
      %p111 = por %p109, %p110
      %p112 = scmp.ne.s32.totalorder %s103, %s104
      %p113 = scmp.eq.s32.totalorder %s30, 0
      %p114 = por %p112, %p113
      %p115 = scmp.ne.s32.totalorder %s103, %s104
      %p116 = scmp.eq.s32.totalorder %s31, 1
      %p117 = por %p115, %p116
      %p119 = scmp.ne.s32.totalorder %s104, %s118
      %p120 = scmp.eq.s32.totalorder %s31, 0
      %p121 = por %p119, %p120
      %s123 = sadd.s32 %s122, 1
      %p126 = scmp.eq.s32.totalorder %s25, 1
      %p127 = scmp.ne.s32.totalorder %s122, %s124
      %p128 = scmp.eq.s32.totalorder %s25, 0
      %p129 = por %p127, %p128
      %p130 = scmp.ne.s32.totalorder %s122, %s124
      %p131 = scmp.eq.s32.totalorder %s30, 1
      %p132 = por %p130, %p131
      %p133 = scmp.ne.s32.totalorder %s124, %s125
      %p134 = scmp.eq.s32.totalorder %s30, 0
      %p135 = por %p133, %p134
      %p136 = scmp.ne.s32.totalorder %s124, %s125
      %p137 = scmp.eq.s32.totalorder %s31, 1
      %p138 = por %p136, %p137
      %p140 = scmp.ne.s32.totalorder %s125, %s139
      %p141 = scmp.eq.s32.totalorder %s31, 0
      %p142 = por %p140, %p141
      %s144 = sadd.s32 %s143, 1
      %p147 = scmp.eq.s32.totalorder %s25, 1
      %p148 = scmp.ne.s32.totalorder %s143, %s145
      %p149 = scmp.eq.s32.totalorder %s25, 0
      %p150 = por %p148, %p149
      %p151 = scmp.ne.s32.totalorder %s143, %s145
      %p152 = scmp.eq.s32.totalorder %s30, 1
      %p153 = por %p151, %p152
      %p154 = scmp.ne.s32.totalorder %s145, %s146
      %p155 = scmp.eq.s32.totalorder %s30, 0
      %p156 = por %p154, %p155
      %p157 = scmp.ne.s32.totalorder %s145, %s146
      %p158 = scmp.eq.s32.totalorder %s31, 1
      %p159 = por %p157, %p158
      %p161 = scmp.ne.s32.totalorder %s146, %s160
      %p162 = scmp.eq.s32.totalorder %s31, 0
      %p163 = por %p161, %p162
      %s165 = sadd.s32 %s164, 1
      %p168 = scmp.eq.s32.totalorder %s25, 1
      %p169 = scmp.ne.s32.totalorder %s164, %s166
      %p170 = scmp.eq.s32.totalorder %s25, 0
      %p171 = por %p169, %p170
      %p172 = scmp.ne.s32.totalorder %s164, %s166
      %p173 = scmp.eq.s32.totalorder %s30, 1
      %p174 = por %p172, %p173
      %p175 = scmp.ne.s32.totalorder %s166, %s167
      %p176 = scmp.eq.s32.totalorder %s30, 0
      %p177 = por %p175, %p176
      %p178 = scmp.ne.s32.totalorder %s166, %s167
      %p179 = scmp.eq.s32.totalorder %s31, 1
      %p180 = por %p178, %p179
      %p182 = scmp.ne.s32.totalorder %s167, %s181
      %p183 = scmp.eq.s32.totalorder %s31, 0
      %p184 = por %p182, %p183
      %s186 = sadd.s32 %s185, 1
      %p189 = scmp.eq.s32.totalorder %s25, 1
      %p190 = scmp.ne.s32.totalorder %s185, %s187
      %p191 = scmp.eq.s32.totalorder %s25, 0
      %p192 = por %p190, %p191
      %p193 = scmp.ne.s32.totalorder %s185, %s187
      %p194 = scmp.eq.s32.totalorder %s30, 1
      %p195 = por %p193, %p194
      %p196 = scmp.ne.s32.totalorder %s187, %s188
      %p197 = scmp.eq.s32.totalorder %s30, 0
      %p198 = por %p196, %p197
      %p199 = scmp.ne.s32.totalorder %s187, %s188
      %p200 = scmp.eq.s32.totalorder %s31, 1
      %p201 = por %p199, %p200
      %p203 = scmp.ne.s32.totalorder %s188, %s202
      %p204 = scmp.eq.s32.totalorder %s31, 0
      %p205 = por %p203, %p204
      %s207 = sadd.s32 %s206, 1
      %p210 = scmp.eq.s32.totalorder %s25, 1
      %p211 = scmp.ne.s32.totalorder %s206, %s208
      %p212 = scmp.eq.s32.totalorder %s25, 0
      %p213 = por %p211, %p212
      %p214 = scmp.ne.s32.totalorder %s206, %s208
      %p215 = scmp.eq.s32.totalorder %s30, 1
      %p216 = por %p214, %p215
      %p217 = scmp.ne.s32.totalorder %s208, %s209
      %p218 = scmp.eq.s32.totalorder %s30, 0
      %p219 = por %p217, %p218
      %p220 = scmp.ne.s32.totalorder %s208, %s209
      %p221 = scmp.eq.s32.totalorder %s31, 1
      %p222 = por %p220, %p221
      %p224 = scmp.ne.s32.totalorder %s209, %s223
      %p225 = scmp.eq.s32.totalorder %s31, 0
      %p226 = por %p224, %p225
      %s227 = ssub.s32 %s25, %s32
      %p228 = scmp.eq.s32.totalorder %s227, 0
      %s230 = sadd.s32 %s229, 1
      %s231 = scalar_select %p228, %s229, %s230
      %p234 = pneg %p228
      %p235 = scmp.eq.s32.totalorder %s25, 1
      %p236 = por %p234, %p235
      %p237 = scmp.ne.s32.totalorder %s229, %s232
      %p238 = scmp.eq.s32.totalorder %s25, 0
      %p239 = por %p237, %p238
      %p240 = scmp.ne.s32.totalorder %s229, %s232
      %p241 = scmp.eq.s32.totalorder %s30, 1
      %p242 = por %p240, %p241
      %p243 = scmp.ne.s32.totalorder %s232, %s233
      %p244 = scmp.eq.s32.totalorder %s30, 0
      %p245 = por %p243, %p244
      %p246 = scmp.ne.s32.totalorder %s232, %s233
      %p247 = scmp.eq.s32.totalorder %s31, 1
      %p248 = por %p246, %p247
      %p250 = scmp.ne.s32.totalorder %s233, %s249
      %p251 = scmp.eq.s32.totalorder %s31, 0
      %p252 = por %p250, %p251
      %p253 = scmp.le.s32.totalorder 1, %s25
      %p254 = scmp.lt.s32.totalorder %s25, 3
      %p255 = pnand %p253, %p254
      %p256 = pneg %p255
      // Predicated region
      $region9: #{tpu_custom_call.1} parent=5 // pred_check
        _
      $region10: #{tpu_custom_call.1} parent=5 // pred_check_branch
        %258 = sbr.rel (%p255) target = $region12
      $region11: #{tpu_custom_call.1} parent=5 // pred_region
        %s259 = ssub.s32 %s25, 1
        // Predicated region
        $region13: #{tpu_custom_call.1} parent=11 // pred_check
          %p260 = pneg %p72
        $region14: #{tpu_custom_call.1} parent=11 // pred_check_branch
          %262 = sbr.rel (%p260) target = $region16
        $region15: #{tpu_custom_call.1} parent=11 // pred_region
          %s264 = ssub.s32 512, 512
          %265 = vsyncadd [#allocation13], %s264
          %s266 = sshll.u32 [#allocation12], 4
          %s267 = int_to_ptr.vmem [resolvable:$true] %s266
          %272 = dma.hbm_to_vmem [thread:$0]  %s1, 512, %s267, [#allocation13], 128, 128, 8
        $region16: #{tpu_custom_call.1} parent=11 // pred_fallthru
          _
        // Predicated region
        $region17: #{tpu_custom_call.1} parent=11 // pred_check
          %p273 = pneg %p93
        $region18: #{tpu_custom_call.1} parent=11 // pred_check_branch
          %275 = sbr.rel (%p273) target = $region20
        $region19: #{tpu_custom_call.1} parent=11 // pred_region
          %s277 = ssub.s32 16, 16
          %278 = vsyncadd [#allocation13], %s277
          %s280 = sshll.u32 [#allocation14], 4
          %s281 = int_to_ptr.vmem [resolvable:$true] %s280
          %283 = dma.hbm_to_vmem [thread:$0]  %s2, 16, %s281, [#allocation13]
        $region20: #{tpu_custom_call.1} parent=11 // pred_fallthru
          _
        // Predicated region
        $region21: #{tpu_custom_call.1} parent=11 // pred_check
          %p284 = pneg %p114
        $region22: #{tpu_custom_call.1} parent=11 // pred_check_branch
          %286 = sbr.rel (%p284) target = $region24
        $region23: #{tpu_custom_call.1} parent=11 // pred_region
          %s288 = ssub.s32 1152, 1152
          %289 = vsyncadd [#allocation16], %s288
          %s290 = sshll.u32 [#allocation15], 4
          %s291 = int_to_ptr.vmem [resolvable:$true] %s290
          %296 = dma.hbm_to_vmem [thread:$0]  %s3, 1152, %s291, [#allocation16], 128, 128, 8
        $region24: #{tpu_custom_call.1} parent=11 // pred_fallthru
          _
        // Predicated region
        $region25: #{tpu_custom_call.1} parent=11 // pred_check
          %p297 = pneg %p135
        $region26: #{tpu_custom_call.1} parent=11 // pred_check_branch
          %299 = sbr.rel (%p297) target = $region28
        $region27: #{tpu_custom_call.1} parent=11 // pred_region
          %s301 = ssub.s32 16, 16
          %302 = vsyncadd [#allocation16], %s301
          %s304 = sshll.u32 [#allocation17], 4
          %s305 = int_to_ptr.vmem [resolvable:$true] %s304
          %307 = dma.hbm_to_vmem [thread:$0]  %s4, 16, %s305, [#allocation16]
        $region28: #{tpu_custom_call.1} parent=11 // pred_fallthru
          _
        // Predicated region
        $region29: #{tpu_custom_call.1} parent=11 // pred_check
          %p308 = pneg %p156
        $region30: #{tpu_custom_call.1} parent=11 // pred_check_branch
          %310 = sbr.rel (%p308) target = $region32
        $region31: #{tpu_custom_call.1} parent=11 // pred_region
          %s312 = ssub.s32 2304, 2304
          %313 = vsyncadd [#allocation19], %s312
          %s314 = sshll.u32 [#allocation18], 4
          %s315 = int_to_ptr.vmem [resolvable:$true] %s314
          %320 = dma.hbm_to_vmem [thread:$0]  %s5, 2304, %s315, [#allocation19], 128, 128, 8
        $region32: #{tpu_custom_call.1} parent=11 // pred_fallthru
          _
        // Predicated region
        $region33: #{tpu_custom_call.1} parent=11 // pred_check
          %p321 = pneg %p177
        $region34: #{tpu_custom_call.1} parent=11 // pred_check_branch
          %323 = sbr.rel (%p321) target = $region36
        $region35: #{tpu_custom_call.1} parent=11 // pred_region
          %s325 = ssub.s32 16, 16
          %326 = vsyncadd [#allocation19], %s325
          %s328 = sshll.u32 [#allocation20], 4
          %s329 = int_to_ptr.vmem [resolvable:$true] %s328
          %331 = dma.hbm_to_vmem [thread:$0]  %s6, 16, %s329, [#allocation19]
        $region36: #{tpu_custom_call.1} parent=11 // pred_fallthru
          _
        // Predicated region
        $region37: #{tpu_custom_call.1} parent=11 // pred_check
          %p332 = pneg %p198
        $region38: #{tpu_custom_call.1} parent=11 // pred_check_branch
          %334 = sbr.rel (%p332) target = $region40
        $region39: #{tpu_custom_call.1} parent=11 // pred_region
          %s336 = ssub.s32 4096, 4096
          %337 = vsyncadd [#allocation22], %s336
          %s338 = sshll.u32 [#allocation21], 4
          %s339 = int_to_ptr.vmem [resolvable:$true] %s338
          %344 = dma.hbm_to_vmem [thread:$0]  %s7, 4096, %s339, [#allocation22], 128, 128, 8
        $region40: #{tpu_custom_call.1} parent=11 // pred_fallthru
          _
        // Predicated region
        $region41: #{tpu_custom_call.1} parent=11 // pred_check
          %p345 = pneg %p219
        $region42: #{tpu_custom_call.1} parent=11 // pred_check_branch
          %347 = sbr.rel (%p345) target = $region44
        $region43: #{tpu_custom_call.1} parent=11 // pred_region
          %s349 = ssub.s32 16, 16
          %350 = vsyncadd [#allocation22], %s349
          %s352 = sshll.u32 [#allocation23], 4
          %s353 = int_to_ptr.vmem [resolvable:$true] %s352
          %355 = dma.hbm_to_vmem [thread:$0]  %s8, 16, %s353, [#allocation22]
        $region44: #{tpu_custom_call.1} parent=11 // pred_fallthru
          _
      $region12: #{tpu_custom_call.1} parent=5 // pred_fallthru
        _
      %p356 = scmp.lt.s32.totalorder %s25, 2
      // Predicated region
      $region45: #{tpu_custom_call.1} parent=5 // pred_check
        %p357 = pneg %p356
      $region46: #{tpu_custom_call.1} parent=5 // pred_check_branch
        %359 = sbr.rel (%p357) target = $region48
      $region47: #{tpu_custom_call.1} parent=5 // pred_region
        // Predicated region
        $region49: #{tpu_custom_call.1} parent=47 // pred_check
          %p360 = pneg %p45
        $region50: #{tpu_custom_call.1} parent=47 // pred_check_branch
          %362 = sbr.rel (%p360) target = $region52
        $region51: #{tpu_custom_call.1} parent=47 // pred_region
          %s363 = sand.u32 %s35, 1
          %s364 = scalar_lea.sflag [#allocation10], %s363
          %s365 = sand.u32 %s35, 1
          %s366 = smul.addr %s365, 192
          %s367 = scalar_lea.vmem [#allocation9], %s366
          %s369 = ssub.s32 3072, 3072
          %370 = vsyncadd %s364, %s369
          %s371 = smul.addr %s25, 24
          %s372 = smul.addr %s371, 128
          %s373 = scalar_lea.hbm %s0, %s372
          %s374 = sshll.u32 %s367, 4
          %s375 = int_to_ptr.vmem [resolvable:$true] %s374
          %380 = dma.hbm_to_vmem [thread:$0]  %s373, 3072, %s375, %s364, 128, 128, 8
        $region52: #{tpu_custom_call.1} parent=47 // pred_fallthru
          _
      $region48: #{tpu_custom_call.1} parent=5 // pred_fallthru
        _
      %p381 = scmp.le.s32.totalorder 1, %s25
      %p382 = scmp.lt.s32.totalorder %s25, 3
      %p383 = pnand %p381, %p382
      %p384 = pneg %p383
      // Predicated region
      $region53: #{tpu_custom_call.1} parent=5 // pred_check
        _
      $region54: #{tpu_custom_call.1} parent=5 // pred_check_branch
        %386 = sbr.rel (%p383) target = $region56
      $region55: #{tpu_custom_call.1} parent=5 // pred_region
        %s387 = ssub.s32 %s25, 1
        %s388 = sand.u32 %s38, 1
        %s389 = scalar_lea.sflag [#allocation10], %s388
        %s390 = sand.u32 %s38, 1
        %s391 = smul.addr %s390, 192
        %s392 = scalar_lea.vmem [#allocation9], %s391
        // Predicated region
        $region57: #{tpu_custom_call.1} parent=55 // pred_check
          %p393 = pneg %p51
        $region58: #{tpu_custom_call.1} parent=55 // pred_check_branch
          %395 = sbr.rel (%p393) target = $region60
        $region59: #{tpu_custom_call.1} parent=55 // pred_region
          %396 = dma.done %s389, 3072
        $region60: #{tpu_custom_call.1} parent=55 // pred_fallthru
          _
        // Predicated region
        $region61: #{tpu_custom_call.1} parent=55 // pred_check
          %p397 = pneg %p72
        $region62: #{tpu_custom_call.1} parent=55 // pred_check_branch
          %399 = sbr.rel (%p397) target = $region64
        $region63: #{tpu_custom_call.1} parent=55 // pred_region
          %400 = dma.done [#allocation13], 512
        $region64: #{tpu_custom_call.1} parent=55 // pred_fallthru
          _
        // Predicated region
        $region65: #{tpu_custom_call.1} parent=55 // pred_check
          %p401 = pneg %p93
        $region66: #{tpu_custom_call.1} parent=55 // pred_check_branch
          %403 = sbr.rel (%p401) target = $region68
        $region67: #{tpu_custom_call.1} parent=55 // pred_region
          %404 = dma.done [#allocation13], 16
        $region68: #{tpu_custom_call.1} parent=55 // pred_fallthru
          _
        // Predicated region
        $region69: #{tpu_custom_call.1} parent=55 // pred_check
          %p405 = pneg %p114
        $region70: #{tpu_custom_call.1} parent=55 // pred_check_branch
          %407 = sbr.rel (%p405) target = $region72
        $region71: #{tpu_custom_call.1} parent=55 // pred_region
          %408 = dma.done [#allocation16], 1152
        $region72: #{tpu_custom_call.1} parent=55 // pred_fallthru
          _
        // Predicated region
        $region73: #{tpu_custom_call.1} parent=55 // pred_check
          %p409 = pneg %p135
        $region74: #{tpu_custom_call.1} parent=55 // pred_check_branch
          %411 = sbr.rel (%p409) target = $region76
        $region75: #{tpu_custom_call.1} parent=55 // pred_region
          %412 = dma.done [#allocation16], 16
        $region76: #{tpu_custom_call.1} parent=55 // pred_fallthru
          _
        // Predicated region
        $region77: #{tpu_custom_call.1} parent=55 // pred_check
          %p413 = pneg %p156
        $region78: #{tpu_custom_call.1} parent=55 // pred_check_branch
          %415 = sbr.rel (%p413) target = $region80
        $region79: #{tpu_custom_call.1} parent=55 // pred_region
          %416 = dma.done [#allocation19], 2304
        $region80: #{tpu_custom_call.1} parent=55 // pred_fallthru
          _
        // Predicated region
        $region81: #{tpu_custom_call.1} parent=55 // pred_check
          %p417 = pneg %p177
        $region82: #{tpu_custom_call.1} parent=55 // pred_check_branch
          %419 = sbr.rel (%p417) target = $region84
        $region83: #{tpu_custom_call.1} parent=55 // pred_region
          %420 = dma.done [#allocation19], 16
        $region84: #{tpu_custom_call.1} parent=55 // pred_fallthru
          _
        // Predicated region
        $region85: #{tpu_custom_call.1} parent=55 // pred_check
          %p421 = pneg %p198
        $region86: #{tpu_custom_call.1} parent=55 // pred_check_branch
          %423 = sbr.rel (%p421) target = $region88
        $region87: #{tpu_custom_call.1} parent=55 // pred_region
          %424 = dma.done [#allocation22], 4096
        $region88: #{tpu_custom_call.1} parent=55 // pred_fallthru
          _
        // Predicated region
        $region89: #{tpu_custom_call.1} parent=55 // pred_check
          %p425 = pneg %p219
        $region90: #{tpu_custom_call.1} parent=55 // pred_check_branch
          %427 = sbr.rel (%p425) target = $region92
        $region91: #{tpu_custom_call.1} parent=55 // pred_region
          %428 = dma.done [#allocation22], 16
        $region92: #{tpu_custom_call.1} parent=55 // pred_fallthru
          _
        %s429 = sand.u32 %s38, 1
        %s430 = scalar_lea.sflag [#allocation10], %s429
        %s431 = sand.u32 %s38, 1
        %s432 = smul.addr %s431, 192
        %s433 = scalar_lea.vmem [#allocation9], %s432
        %p434 = pneg %p51
        %p435 = pneg %p48
        %p436 = pneg %p72
        %p437 = pneg %p69
        %p438 = pneg %p93
        %p439 = pneg %p90
        %p440 = pneg %p114
        %p441 = pneg %p111
        %p442 = pneg %p135
        %p443 = pneg %p132
        %p444 = pneg %p156
        %p445 = pneg %p153
        %p446 = pneg %p177
        %p447 = pneg %p174
        %p448 = pneg %p198
        %p449 = pneg %p195
        %p450 = pneg %p219
        %p451 = pneg %p216
        %p452 = pneg %p245
        %p453 = pneg %p242
        %s454 = sand.u32 %s232, 1
        %s455 = scalar_lea.sflag [#allocation11], %s454
        %s456 = sand.u32 %s232, 1
        %s457 = scalar_lea.vmem [#allocation24], %s456
        %v458 = vld [vmem:[%s392] sm:$0xff]
        %v459 = vld [vmem:[%s392 + $0x8] sm:$0xf]
        %v460 = vld [vmem:[%s392 + $0x10] sm:$0xff]
        %v461 = vld [vmem:[%s392 + $0x18] sm:$0xf]
        %v462 = vld [vmem:[%s392 + $0x20] sm:$0xff]
        %v463 = vld [vmem:[%s392 + $0x28] sm:$0xf]
        %v464 = vld [vmem:[%s392 + $0x30] sm:$0xff]
        %v465 = vld [vmem:[%s392 + $0x38] sm:$0xf]
        %v466 = vld [vmem:[%s392 + $0x40] sm:$0xff]
        %v467 = vld [vmem:[%s392 + $0x48] sm:$0xf]
        %v468 = vld [vmem:[%s392 + $0x50] sm:$0xff]
        %v469 = vld [vmem:[%s392 + $0x58] sm:$0xf]
        %v470 = vld [vmem:[%s392 + $0x60] sm:$0xff]
        %v471 = vld [vmem:[%s392 + $0x68] sm:$0xf]
        %v472 = vld [vmem:[%s392 + $0x70] sm:$0xff]
        %v473 = vld [vmem:[%s392 + $0x78] sm:$0xf]
        %v474 = vld [vmem:[%s392 + $0x80] sm:$0xff]
        %v475 = vld [vmem:[%s392 + $0x88] sm:$0xf]
        %v476 = vld [vmem:[%s392 + $0x90] sm:$0xff]
        %v477 = vld [vmem:[%s392 + $0x98] sm:$0xf]
        %v478 = vld [vmem:[%s392 + $0xa0] sm:$0xff]
        %v479 = vld [vmem:[%s392 + $0xa8] sm:$0xf]
        %v480 = vld [vmem:[%s392 + $0xb0] sm:$0xff]
        %v481 = vld [vmem:[%s392 + $0xb8] sm:$0xf]
        %vm482 = vcmask 23552
        %483 = vst.msk [vmem:[#allocation2] sm:$0xff] %vm482, 0.0
        %vm484 = vcmask 21504
        %485 = vst.msk [vmem:[#allocation2 + $0x8] sm:$0x3f] %vm484, 0.0
        %s486 = scalar_lea.vmem [#allocation2], 208
        %487 = vst.msk [vmem:[%s486] sm:$0xff] %vm482, 0.0
        %488 = vst.msk [vmem:[%s486 + $0x8] sm:$0x3f] %vm484, 0.0
        %vm489 = vcmask 16384
        %490 = vst.msk [vmem:[#allocation2] sm:$0x1] %vm489, 0.0
        %491 = vst.msk [vmem:[#allocation2 + $0x10] sm:$0x1] %vm489, 0.0
        %492 = vst.msk [vmem:[#allocation2 + $0x20] sm:$0x1] %vm489, 0.0
        %493 = vst.msk [vmem:[#allocation2 + $0x30] sm:$0x1] %vm489, 0.0
        %494 = vst.msk [vmem:[#allocation2 + $0x40] sm:$0x1] %vm489, 0.0
        %495 = vst.msk [vmem:[#allocation2 + $0x50] sm:$0x1] %vm489, 0.0
        %496 = vst.msk [vmem:[#allocation2 + $0x60] sm:$0x1] %vm489, 0.0
        %497 = vst.msk [vmem:[#allocation2 + $0x70] sm:$0x1] %vm489, 0.0
        %498 = vst.msk [vmem:[#allocation2 + $0x80] sm:$0x1] %vm489, 0.0
        %499 = vst.msk [vmem:[#allocation2 + $0x90] sm:$0x1] %vm489, 0.0
        %500 = vst.msk [vmem:[#allocation2 + $0xa0] sm:$0x1] %vm489, 0.0
        %501 = vst.msk [vmem:[#allocation2 + $0xb0] sm:$0x1] %vm489, 0.0
        %502 = vst.msk [vmem:[#allocation2 + $0xc0] sm:$0x1] %vm489, 0.0
        %503 = vst.msk [vmem:[#allocation2 + $0xd0] sm:$0x1] %vm489, 0.0
        %504 = vst.msk [vmem:[#allocation2 + $0xd] sm:$0x1] %vm489, 0.0
        %505 = vst.msk [vmem:[#allocation2 + $0x1d] sm:$0x1] %vm489, 0.0
        %506 = vst.msk [vmem:[#allocation2 + $0x2d] sm:$0x1] %vm489, 0.0
        %507 = vst.msk [vmem:[#allocation2 + $0x3d] sm:$0x1] %vm489, 0.0
        %508 = vst.msk [vmem:[#allocation2 + $0x4d] sm:$0x1] %vm489, 0.0
        %509 = vst.msk [vmem:[#allocation2 + $0x5d] sm:$0x1] %vm489, 0.0
        %510 = vst.msk [vmem:[#allocation2 + $0x6d] sm:$0x1] %vm489, 0.0
        %511 = vst.msk [vmem:[#allocation2 + $0x7d] sm:$0x1] %vm489, 0.0
        %512 = vst.msk [vmem:[#allocation2 + $0x8d] sm:$0x1] %vm489, 0.0
        %513 = vst.msk [vmem:[#allocation2 + $0x9d] sm:$0x1] %vm489, 0.0
        %514 = vst.msk [vmem:[#allocation2 + $0xad] sm:$0x1] %vm489, 0.0
        %515 = vst.msk [vmem:[#allocation2 + $0xbd] sm:$0x1] %vm489, 0.0
        %516 = vst.msk [vmem:[#allocation2 + $0xcd] sm:$0x1] %vm489, 0.0
        %517 = vst.msk [vmem:[#allocation2 + $0xdd] sm:$0x1] %vm489, 0.0
        %s518 = scalar_lea.vmem [#allocation2], 16
        %519 = vst.msk [vmem:[%s518 + $0x1] sm:$0xff] %vm482, %v458
        %vm520 = vcmask 19456
        %521 = vst.msk [vmem:[%s518 + $0x9] sm:$0xf] %vm520, %v459
        %522 = vst.msk [vmem:[%s518 + $0x11] sm:$0xff] %vm482, %v460
        %523 = vst.msk [vmem:[%s518 + $0x19] sm:$0xf] %vm520, %v461
        %524 = vst.msk [vmem:[%s518 + $0x21] sm:$0xff] %vm482, %v462
        %525 = vst.msk [vmem:[%s518 + $0x29] sm:$0xf] %vm520, %v463
        %526 = vst.msk [vmem:[%s518 + $0x31] sm:$0xff] %vm482, %v464
        %527 = vst.msk [vmem:[%s518 + $0x39] sm:$0xf] %vm520, %v465
        %528 = vst.msk [vmem:[%s518 + $0x41] sm:$0xff] %vm482, %v466
        %529 = vst.msk [vmem:[%s518 + $0x49] sm:$0xf] %vm520, %v467
        %530 = vst.msk [vmem:[%s518 + $0x51] sm:$0xff] %vm482, %v468
        %531 = vst.msk [vmem:[%s518 + $0x59] sm:$0xf] %vm520, %v469
        %532 = vst.msk [vmem:[%s518 + $0x61] sm:$0xff] %vm482, %v470
        %533 = vst.msk [vmem:[%s518 + $0x69] sm:$0xf] %vm520, %v471
        %534 = vst.msk [vmem:[%s518 + $0x71] sm:$0xff] %vm482, %v472
        %535 = vst.msk [vmem:[%s518 + $0x79] sm:$0xf] %vm520, %v473
        %536 = vst.msk [vmem:[%s518 + $0x81] sm:$0xff] %vm482, %v474
        %537 = vst.msk [vmem:[%s518 + $0x89] sm:$0xf] %vm520, %v475
        %538 = vst.msk [vmem:[%s518 + $0x91] sm:$0xff] %vm482, %v476
        %539 = vst.msk [vmem:[%s518 + $0x99] sm:$0xf] %vm520, %v477
        %540 = vst.msk [vmem:[%s518 + $0xa1] sm:$0xff] %vm482, %v478
        %541 = vst.msk [vmem:[%s518 + $0xa9] sm:$0xf] %vm520, %v479
        %542 = vst.msk [vmem:[%s518 + $0xb1] sm:$0xff] %vm482, %v480
        %543 = vst.msk [vmem:[%s518 + $0xb9] sm:$0xf] %vm520, %v481
        %v544 = vld [vmem:[#allocation2] sm:$0xff]
        %v545 = vld [vmem:[#allocation2 + $0x8] sm:$0xf]
        %v546 = vld [vmem:[#allocation2 + $0x10] sm:$0xff]
        %v547 = vld [vmem:[#allocation2 + $0x18] sm:$0xf]
        %v548 = vld [vmem:[#allocation2 + $0x20] sm:$0xff]
        %v549 = vld [vmem:[#allocation2 + $0x28] sm:$0xf]
        %v550 = vld [vmem:[#allocation2 + $0x30] sm:$0xff]
        %v551 = vld [vmem:[#allocation2 + $0x38] sm:$0xf]
        %v552 = vld [vmem:[#allocation2 + $0x40] sm:$0xff]
        %v553 = vld [vmem:[#allocation2 + $0x48] sm:$0xf]
        %v554 = vld [vmem:[#allocation2 + $0x50] sm:$0xff]
        %v555 = vld [vmem:[#allocation2 + $0x58] sm:$0xf]
        %v556 = vld [vmem:[#allocation2 + $0x60] sm:$0xff]
        %v557 = vld [vmem:[#allocation2 + $0x68] sm:$0xf]
        %v558 = vld [vmem:[#allocation2 + $0x70] sm:$0xff]
        %v559 = vld [vmem:[#allocation2 + $0x78] sm:$0xf]
        %v560 = vld [vmem:[#allocation2 + $0x80] sm:$0xff]
        %v561 = vld [vmem:[#allocation2 + $0x88] sm:$0xf]
        %v562 = vld [vmem:[#allocation2 + $0x90] sm:$0xff]
        %v563 = vld [vmem:[#allocation2 + $0x98] sm:$0xf]
        %v564 = vld [vmem:[#allocation2 + $0xa0] sm:$0xff]
        %v565 = vld [vmem:[#allocation2 + $0xa8] sm:$0xf]
        %v566 = vld [vmem:[#allocation2 + $0xb0] sm:$0xff]
        %v567 = vld [vmem:[#allocation2 + $0xb8] sm:$0xf]
        %568 = vst.msk [vmem:[#allocation5] sm:$0xff] %vm482, %v544
        %569 = vst.msk [vmem:[#allocation5 + $0x8] sm:$0xf] %vm520, %v545
        %570 = vst.msk [vmem:[#allocation5 + $0x10] sm:$0xff] %vm482, %v546
        %571 = vst.msk [vmem:[#allocation5 + $0x18] sm:$0xf] %vm520, %v547
        %572 = vst.msk [vmem:[#allocation5 + $0x20] sm:$0xff] %vm482, %v548
        %573 = vst.msk [vmem:[#allocation5 + $0x28] sm:$0xf] %vm520, %v549
        %574 = vst.msk [vmem:[#allocation5 + $0x30] sm:$0xff] %vm482, %v550
        %575 = vst.msk [vmem:[#allocation5 + $0x38] sm:$0xf] %vm520, %v551
        %576 = vst.msk [vmem:[#allocation5 + $0x40] sm:$0xff] %vm482, %v552
        %577 = vst.msk [vmem:[#allocation5 + $0x48] sm:$0xf] %vm520, %v553
        %578 = vst.msk [vmem:[#allocation5 + $0x50] sm:$0xff] %vm482, %v554
        %579 = vst.msk [vmem:[#allocation5 + $0x58] sm:$0xf] %vm520, %v555
        %580 = vst.msk [vmem:[#allocation5 + $0x60] sm:$0xff] %vm482, %v556
        %581 = vst.msk [vmem:[#allocation5 + $0x68] sm:$0xf] %vm520, %v557
        %582 = vst.msk [vmem:[#allocation5 + $0x70] sm:$0xff] %vm482, %v558
        %583 = vst.msk [vmem:[#allocation5 + $0x78] sm:$0xf] %vm520, %v559
        %584 = vst.msk [vmem:[#allocation5 + $0x80] sm:$0xff] %vm482, %v560
        %585 = vst.msk [vmem:[#allocation5 + $0x88] sm:$0xf] %vm520, %v561
        %586 = vst.msk [vmem:[#allocation5 + $0x90] sm:$0xff] %vm482, %v562
        %587 = vst.msk [vmem:[#allocation5 + $0x98] sm:$0xf] %vm520, %v563
        %588 = vst.msk [vmem:[#allocation5 + $0xa0] sm:$0xff] %vm482, %v564
        %589 = vst.msk [vmem:[#allocation5 + $0xa8] sm:$0xf] %vm520, %v565
        %590 = vst.msk [vmem:[#allocation5 + $0xb0] sm:$0xff] %vm482, %v566
        %591 = vst.msk [vmem:[#allocation5 + $0xb8] sm:$0xf] %vm520, %v567
        %v592 = vld [vmem:[#allocation2 + $0x1] sm:$0xff]
        %v593 = vld [vmem:[#allocation2 + $0x9] sm:$0xf]
        %v594 = vld [vmem:[#allocation2 + $0x11] sm:$0xff]
        %v595 = vld [vmem:[#allocation2 + $0x19] sm:$0xf]
        %v596 = vld [vmem:[#allocation2 + $0x21] sm:$0xff]
        %v597 = vld [vmem:[#allocation2 + $0x29] sm:$0xf]
        %v598 = vld [vmem:[#allocation2 + $0x31] sm:$0xff]
        %v599 = vld [vmem:[#allocation2 + $0x39] sm:$0xf]
        %v600 = vld [vmem:[#allocation2 + $0x41] sm:$0xff]
        %v601 = vld [vmem:[#allocation2 + $0x49] sm:$0xf]
        %v602 = vld [vmem:[#allocation2 + $0x51] sm:$0xff]
        %v603 = vld [vmem:[#allocation2 + $0x59] sm:$0xf]
        %v604 = vld [vmem:[#allocation2 + $0x61] sm:$0xff]
        %v605 = vld [vmem:[#allocation2 + $0x69] sm:$0xf]
        %v606 = vld [vmem:[#allocation2 + $0x71] sm:$0xff]
        %v607 = vld [vmem:[#allocation2 + $0x79] sm:$0xf]
        %v608 = vld [vmem:[#allocation2 + $0x81] sm:$0xff]
        %v609 = vld [vmem:[#allocation2 + $0x89] sm:$0xf]
        %v610 = vld [vmem:[#allocation2 + $0x91] sm:$0xff]
        %v611 = vld [vmem:[#allocation2 + $0x99] sm:$0xf]
        %v612 = vld [vmem:[#allocation2 + $0xa1] sm:$0xff]
        %v613 = vld [vmem:[#allocation2 + $0xa9] sm:$0xf]
        %v614 = vld [vmem:[#allocation2 + $0xb1] sm:$0xff]
        %v615 = vld [vmem:[#allocation2 + $0xb9] sm:$0xf]
        %640 = vrot.lane.b32.xlu0 %v592, 3
        %v641 = vpop.permute.xlu0 %640
        %642 = vrot.lane.b32.xlu0 %v593, 3
        %v643 = vpop.permute.xlu0 %642
        %644 = vrot.lane.b32.xlu0 %v594, 3
        %v645 = vpop.permute.xlu0 %644
        %646 = vrot.lane.b32.xlu0 %v595, 3
        %v647 = vpop.permute.xlu0 %646
        %648 = vrot.lane.b32.xlu0 %v596, 3
        %v649 = vpop.permute.xlu0 %648
        %650 = vrot.lane.b32.xlu0 %v597, 3
        %v651 = vpop.permute.xlu0 %650
        %652 = vrot.lane.b32.xlu0 %v598, 3
        %v653 = vpop.permute.xlu0 %652
        %654 = vrot.lane.b32.xlu0 %v599, 3
        %v655 = vpop.permute.xlu0 %654
        %656 = vrot.lane.b32.xlu0 %v600, 3
        %v657 = vpop.permute.xlu0 %656
        %658 = vrot.lane.b32.xlu0 %v601, 3
        %v659 = vpop.permute.xlu0 %658
        %660 = vrot.lane.b32.xlu0 %v602, 3
        %v661 = vpop.permute.xlu0 %660
        %662 = vrot.lane.b32.xlu0 %v603, 3
        %v663 = vpop.permute.xlu0 %662
        %664 = vrot.lane.b32.xlu0 %v604, 3
        %v665 = vpop.permute.xlu0 %664
        %666 = vrot.lane.b32.xlu0 %v605, 3
        %v667 = vpop.permute.xlu0 %666
        %668 = vrot.lane.b32.xlu0 %v606, 3
        %v669 = vpop.permute.xlu0 %668
        %670 = vrot.lane.b32.xlu0 %v607, 3
        %v671 = vpop.permute.xlu0 %670
        %672 = vrot.lane.b32.xlu0 %v608, 3
        %v673 = vpop.permute.xlu0 %672
        %674 = vrot.lane.b32.xlu0 %v609, 3
        %v675 = vpop.permute.xlu0 %674
        %676 = vrot.lane.b32.xlu0 %v610, 3
        %v677 = vpop.permute.xlu0 %676
        %678 = vrot.lane.b32.xlu0 %v611, 3
        %v679 = vpop.permute.xlu0 %678
        %680 = vrot.lane.b32.xlu0 %v612, 3
        %v681 = vpop.permute.xlu0 %680
        %682 = vrot.lane.b32.xlu0 %v613, 3
        %v683 = vpop.permute.xlu0 %682
        %684 = vrot.lane.b32.xlu0 %v614, 3
        %v685 = vpop.permute.xlu0 %684
        %686 = vrot.lane.b32.xlu0 %v615, 3
        %v687 = vpop.permute.xlu0 %686
        %vm712 = vcmask 48152
        %713 = vst.msk [vmem:[#allocation5] sm:$0xff] %vm712, %v641
        %vm714 = vcmask 44056
        %715 = vst.msk [vmem:[#allocation5 + $0x8] sm:$0xf] %vm714, %v643
        %716 = vst.msk [vmem:[#allocation5 + $0x10] sm:$0xff] %vm712, %v645
        %717 = vst.msk [vmem:[#allocation5 + $0x18] sm:$0xf] %vm714, %v647
        %718 = vst.msk [vmem:[#allocation5 + $0x20] sm:$0xff] %vm712, %v649
        %719 = vst.msk [vmem:[#allocation5 + $0x28] sm:$0xf] %vm714, %v651
        %720 = vst.msk [vmem:[#allocation5 + $0x30] sm:$0xff] %vm712, %v653
        %721 = vst.msk [vmem:[#allocation5 + $0x38] sm:$0xf] %vm714, %v655
        %722 = vst.msk [vmem:[#allocation5 + $0x40] sm:$0xff] %vm712, %v657
        %723 = vst.msk [vmem:[#allocation5 + $0x48] sm:$0xf] %vm714, %v659
        %724 = vst.msk [vmem:[#allocation5 + $0x50] sm:$0xff] %vm712, %v661
        %725 = vst.msk [vmem:[#allocation5 + $0x58] sm:$0xf] %vm714, %v663
        %726 = vst.msk [vmem:[#allocation5 + $0x60] sm:$0xff] %vm712, %v665
        %727 = vst.msk [vmem:[#allocation5 + $0x68] sm:$0xf] %vm714, %v667
        %728 = vst.msk [vmem:[#allocation5 + $0x70] sm:$0xff] %vm712, %v669
        %729 = vst.msk [vmem:[#allocation5 + $0x78] sm:$0xf] %vm714, %v671
        %730 = vst.msk [vmem:[#allocation5 + $0x80] sm:$0xff] %vm712, %v673
        %731 = vst.msk [vmem:[#allocation5 + $0x88] sm:$0xf] %vm714, %v675
        %732 = vst.msk [vmem:[#allocation5 + $0x90] sm:$0xff] %vm712, %v677
        %733 = vst.msk [vmem:[#allocation5 + $0x98] sm:$0xf] %vm714, %v679
        %734 = vst.msk [vmem:[#allocation5 + $0xa0] sm:$0xff] %vm712, %v681
        %735 = vst.msk [vmem:[#allocation5 + $0xa8] sm:$0xf] %vm714, %v683
        %736 = vst.msk [vmem:[#allocation5 + $0xb0] sm:$0xff] %vm712, %v685
        %737 = vst.msk [vmem:[#allocation5 + $0xb8] sm:$0xf] %vm714, %v687
        %v738 = vld [vmem:[#allocation2 + $0x2] sm:$0xff]
        %v739 = vld [vmem:[#allocation2 + $0xa] sm:$0xf]
        %v740 = vld [vmem:[#allocation2 + $0x12] sm:$0xff]
        %v741 = vld [vmem:[#allocation2 + $0x1a] sm:$0xf]
        %v742 = vld [vmem:[#allocation2 + $0x22] sm:$0xff]
        %v743 = vld [vmem:[#allocation2 + $0x2a] sm:$0xf]
        %v744 = vld [vmem:[#allocation2 + $0x32] sm:$0xff]
        %v745 = vld [vmem:[#allocation2 + $0x3a] sm:$0xf]
        %v746 = vld [vmem:[#allocation2 + $0x42] sm:$0xff]
        %v747 = vld [vmem:[#allocation2 + $0x4a] sm:$0xf]
        %v748 = vld [vmem:[#allocation2 + $0x52] sm:$0xff]
        %v749 = vld [vmem:[#allocation2 + $0x5a] sm:$0xf]
        %v750 = vld [vmem:[#allocation2 + $0x62] sm:$0xff]
        %v751 = vld [vmem:[#allocation2 + $0x6a] sm:$0xf]
        %v752 = vld [vmem:[#allocation2 + $0x72] sm:$0xff]
        %v753 = vld [vmem:[#allocation2 + $0x7a] sm:$0xf]
        %v754 = vld [vmem:[#allocation2 + $0x82] sm:$0xff]
        %v755 = vld [vmem:[#allocation2 + $0x8a] sm:$0xf]
        %v756 = vld [vmem:[#allocation2 + $0x92] sm:$0xff]
        %v757 = vld [vmem:[#allocation2 + $0x9a] sm:$0xf]
        %v758 = vld [vmem:[#allocation2 + $0xa2] sm:$0xff]
        %v759 = vld [vmem:[#allocation2 + $0xaa] sm:$0xf]
        %v760 = vld [vmem:[#allocation2 + $0xb2] sm:$0xff]
        %v761 = vld [vmem:[#allocation2 + $0xba] sm:$0xf]
        %786 = vrot.lane.b32.xlu0 %v738, 6
        %v787 = vpop.permute.xlu0 %786
        %788 = vrot.lane.b32.xlu0 %v739, 6
        %v789 = vpop.permute.xlu0 %788
        %790 = vrot.lane.b32.xlu0 %v740, 6
        %v791 = vpop.permute.xlu0 %790
        %792 = vrot.lane.b32.xlu0 %v741, 6
        %v793 = vpop.permute.xlu0 %792
        %794 = vrot.lane.b32.xlu0 %v742, 6
        %v795 = vpop.permute.xlu0 %794
        %796 = vrot.lane.b32.xlu0 %v743, 6
        %v797 = vpop.permute.xlu0 %796
        %798 = vrot.lane.b32.xlu0 %v744, 6
        %v799 = vpop.permute.xlu0 %798
        %800 = vrot.lane.b32.xlu0 %v745, 6
        %v801 = vpop.permute.xlu0 %800
        %802 = vrot.lane.b32.xlu0 %v746, 6
        %v803 = vpop.permute.xlu0 %802
        %804 = vrot.lane.b32.xlu0 %v747, 6
        %v805 = vpop.permute.xlu0 %804
        %806 = vrot.lane.b32.xlu0 %v748, 6
        %v807 = vpop.permute.xlu0 %806
        %808 = vrot.lane.b32.xlu0 %v749, 6
        %v809 = vpop.permute.xlu0 %808
        %810 = vrot.lane.b32.xlu0 %v750, 6
        %v811 = vpop.permute.xlu0 %810
        %812 = vrot.lane.b32.xlu0 %v751, 6
        %v813 = vpop.permute.xlu0 %812
        %814 = vrot.lane.b32.xlu0 %v752, 6
        %v815 = vpop.permute.xlu0 %814
        %816 = vrot.lane.b32.xlu0 %v753, 6
        %v817 = vpop.permute.xlu0 %816
        %818 = vrot.lane.b32.xlu0 %v754, 6
        %v819 = vpop.permute.xlu0 %818
        %820 = vrot.lane.b32.xlu0 %v755, 6
        %v821 = vpop.permute.xlu0 %820
        %822 = vrot.lane.b32.xlu0 %v756, 6
        %v823 = vpop.permute.xlu0 %822
        %824 = vrot.lane.b32.xlu0 %v757, 6
        %v825 = vpop.permute.xlu0 %824
        %826 = vrot.lane.b32.xlu0 %v758, 6
        %v827 = vpop.permute.xlu0 %826
        %828 = vrot.lane.b32.xlu0 %v759, 6
        %v829 = vpop.permute.xlu0 %828
        %830 = vrot.lane.b32.xlu0 %v760, 6
        %v831 = vpop.permute.xlu0 %830
        %832 = vrot.lane.b32.xlu0 %v761, 6
        %v833 = vpop.permute.xlu0 %832
        %vm858 = vcmask 72752
        %859 = vst.msk [vmem:[#allocation5] sm:$0xff] %vm858, %v787
        %vm860 = vcmask 68656
        %861 = vst.msk [vmem:[#allocation5 + $0x8] sm:$0xf] %vm860, %v789
        %862 = vst.msk [vmem:[#allocation5 + $0x10] sm:$0xff] %vm858, %v791
        %863 = vst.msk [vmem:[#allocation5 + $0x18] sm:$0xf] %vm860, %v793
        %864 = vst.msk [vmem:[#allocation5 + $0x20] sm:$0xff] %vm858, %v795
        %865 = vst.msk [vmem:[#allocation5 + $0x28] sm:$0xf] %vm860, %v797
        %866 = vst.msk [vmem:[#allocation5 + $0x30] sm:$0xff] %vm858, %v799
        %867 = vst.msk [vmem:[#allocation5 + $0x38] sm:$0xf] %vm860, %v801
        %868 = vst.msk [vmem:[#allocation5 + $0x40] sm:$0xff] %vm858, %v803
        %869 = vst.msk [vmem:[#allocation5 + $0x48] sm:$0xf] %vm860, %v805
        %870 = vst.msk [vmem:[#allocation5 + $0x50] sm:$0xff] %vm858, %v807
        %871 = vst.msk [vmem:[#allocation5 + $0x58] sm:$0xf] %vm860, %v809
        %872 = vst.msk [vmem:[#allocation5 + $0x60] sm:$0xff] %vm858, %v811
        %873 = vst.msk [vmem:[#allocation5 + $0x68] sm:$0xf] %vm860, %v813
        %874 = vst.msk [vmem:[#allocation5 + $0x70] sm:$0xff] %vm858, %v815
        %875 = vst.msk [vmem:[#allocation5 + $0x78] sm:$0xf] %vm860, %v817
        %876 = vst.msk [vmem:[#allocation5 + $0x80] sm:$0xff] %vm858, %v819
        %877 = vst.msk [vmem:[#allocation5 + $0x88] sm:$0xf] %vm860, %v821
        %878 = vst.msk [vmem:[#allocation5 + $0x90] sm:$0xff] %vm858, %v823
        %879 = vst.msk [vmem:[#allocation5 + $0x98] sm:$0xf] %vm860, %v825
        %880 = vst.msk [vmem:[#allocation5 + $0xa0] sm:$0xff] %vm858, %v827
        %881 = vst.msk [vmem:[#allocation5 + $0xa8] sm:$0xf] %vm860, %v829
        %882 = vst.msk [vmem:[#allocation5 + $0xb0] sm:$0xff] %vm858, %v831
        %883 = vst.msk [vmem:[#allocation5 + $0xb8] sm:$0xf] %vm860, %v833
        %v884 = vld [vmem:[%s518] sm:$0xff]
        %v885 = vld [vmem:[%s518 + $0x8] sm:$0xf]
        %v886 = vld [vmem:[%s518 + $0x10] sm:$0xff]
        %v887 = vld [vmem:[%s518 + $0x18] sm:$0xf]
        %v888 = vld [vmem:[%s518 + $0x20] sm:$0xff]
        %v889 = vld [vmem:[%s518 + $0x28] sm:$0xf]
        %v890 = vld [vmem:[%s518 + $0x30] sm:$0xff]
        %v891 = vld [vmem:[%s518 + $0x38] sm:$0xf]
        %v892 = vld [vmem:[%s518 + $0x40] sm:$0xff]
        %v893 = vld [vmem:[%s518 + $0x48] sm:$0xf]
        %v894 = vld [vmem:[%s518 + $0x50] sm:$0xff]
        %v895 = vld [vmem:[%s518 + $0x58] sm:$0xf]
        %v896 = vld [vmem:[%s518 + $0x60] sm:$0xff]
        %v897 = vld [vmem:[%s518 + $0x68] sm:$0xf]
        %v898 = vld [vmem:[%s518 + $0x70] sm:$0xff]
        %v899 = vld [vmem:[%s518 + $0x78] sm:$0xf]
        %v900 = vld [vmem:[%s518 + $0x80] sm:$0xff]
        %v901 = vld [vmem:[%s518 + $0x88] sm:$0xf]
        %v902 = vld [vmem:[%s518 + $0x90] sm:$0xff]
        %v903 = vld [vmem:[%s518 + $0x98] sm:$0xf]
        %v904 = vld [vmem:[%s518 + $0xa0] sm:$0xff]
        %v905 = vld [vmem:[%s518 + $0xa8] sm:$0xf]
        %v906 = vld [vmem:[%s518 + $0xb0] sm:$0xff]
        %v907 = vld [vmem:[%s518 + $0xb8] sm:$0xf]
        %932 = vrot.lane.b32.xlu0 %v884, 9
        %v933 = vpop.permute.xlu0 %932
        %934 = vrot.lane.b32.xlu0 %v885, 9
        %v935 = vpop.permute.xlu0 %934
        %936 = vrot.lane.b32.xlu0 %v886, 9
        %v937 = vpop.permute.xlu0 %936
        %938 = vrot.lane.b32.xlu0 %v887, 9
        %v939 = vpop.permute.xlu0 %938
        %940 = vrot.lane.b32.xlu0 %v888, 9
        %v941 = vpop.permute.xlu0 %940
        %942 = vrot.lane.b32.xlu0 %v889, 9
        %v943 = vpop.permute.xlu0 %942
        %944 = vrot.lane.b32.xlu0 %v890, 9
        %v945 = vpop.permute.xlu0 %944
        %946 = vrot.lane.b32.xlu0 %v891, 9
        %v947 = vpop.permute.xlu0 %946
        %948 = vrot.lane.b32.xlu0 %v892, 9
        %v949 = vpop.permute.xlu0 %948
        %950 = vrot.lane.b32.xlu0 %v893, 9
        %v951 = vpop.permute.xlu0 %950
        %952 = vrot.lane.b32.xlu0 %v894, 9
        %v953 = vpop.permute.xlu0 %952
        %954 = vrot.lane.b32.xlu0 %v895, 9
        %v955 = vpop.permute.xlu0 %954
        %956 = vrot.lane.b32.xlu0 %v896, 9
        %v957 = vpop.permute.xlu0 %956
        %958 = vrot.lane.b32.xlu0 %v897, 9
        %v959 = vpop.permute.xlu0 %958
        %960 = vrot.lane.b32.xlu0 %v898, 9
        %v961 = vpop.permute.xlu0 %960
        %962 = vrot.lane.b32.xlu0 %v899, 9
        %v963 = vpop.permute.xlu0 %962
        %964 = vrot.lane.b32.xlu0 %v900, 9
        %v965 = vpop.permute.xlu0 %964
        %966 = vrot.lane.b32.xlu0 %v901, 9
        %v967 = vpop.permute.xlu0 %966
        %968 = vrot.lane.b32.xlu0 %v902, 9
        %v969 = vpop.permute.xlu0 %968
        %970 = vrot.lane.b32.xlu0 %v903, 9
        %v971 = vpop.permute.xlu0 %970
        %972 = vrot.lane.b32.xlu0 %v904, 9
        %v973 = vpop.permute.xlu0 %972
        %974 = vrot.lane.b32.xlu0 %v905, 9
        %v975 = vpop.permute.xlu0 %974
        %976 = vrot.lane.b32.xlu0 %v906, 9
        %v977 = vpop.permute.xlu0 %976
        %978 = vrot.lane.b32.xlu0 %v907, 9
        %v979 = vpop.permute.xlu0 %978
        %vm1004 = vcmask 97352
        %1005 = vst.msk [vmem:[#allocation5] sm:$0xff] %vm1004, %v933
        %vm1006 = vcmask 93256
        %1007 = vst.msk [vmem:[#allocation5 + $0x8] sm:$0xf] %vm1006, %v935
        %1008 = vst.msk [vmem:[#allocation5 + $0x10] sm:$0xff] %vm1004, %v937
        %1009 = vst.msk [vmem:[#allocation5 + $0x18] sm:$0xf] %vm1006, %v939
        %1010 = vst.msk [vmem:[#allocation5 + $0x20] sm:$0xff] %vm1004, %v941
        %1011 = vst.msk [vmem:[#allocation5 + $0x28] sm:$0xf] %vm1006, %v943
        %1012 = vst.msk [vmem:[#allocation5 + $0x30] sm:$0xff] %vm1004, %v945
        %1013 = vst.msk [vmem:[#allocation5 + $0x38] sm:$0xf] %vm1006, %v947
        %1014 = vst.msk [vmem:[#allocation5 + $0x40] sm:$0xff] %vm1004, %v949
        %1015 = vst.msk [vmem:[#allocation5 + $0x48] sm:$0xf] %vm1006, %v951
        %1016 = vst.msk [vmem:[#allocation5 + $0x50] sm:$0xff] %vm1004, %v953
        %1017 = vst.msk [vmem:[#allocation5 + $0x58] sm:$0xf] %vm1006, %v955
        %1018 = vst.msk [vmem:[#allocation5 + $0x60] sm:$0xff] %vm1004, %v957
        %1019 = vst.msk [vmem:[#allocation5 + $0x68] sm:$0xf] %vm1006, %v959
        %1020 = vst.msk [vmem:[#allocation5 + $0x70] sm:$0xff] %vm1004, %v961
        %1021 = vst.msk [vmem:[#allocation5 + $0x78] sm:$0xf] %vm1006, %v963
        %1022 = vst.msk [vmem:[#allocation5 + $0x80] sm:$0xff] %vm1004, %v965
        %1023 = vst.msk [vmem:[#allocation5 + $0x88] sm:$0xf] %vm1006, %v967
        %1024 = vst.msk [vmem:[#allocation5 + $0x90] sm:$0xff] %vm1004, %v969
        %1025 = vst.msk [vmem:[#allocation5 + $0x98] sm:$0xf] %vm1006, %v971
        %1026 = vst.msk [vmem:[#allocation5 + $0xa0] sm:$0xff] %vm1004, %v973
        %1027 = vst.msk [vmem:[#allocation5 + $0xa8] sm:$0xf] %vm1006, %v975
        %1028 = vst.msk [vmem:[#allocation5 + $0xb0] sm:$0xff] %vm1004, %v977
        %1029 = vst.msk [vmem:[#allocation5 + $0xb8] sm:$0xf] %vm1006, %v979
        %v1030 = vld [vmem:[%s518 + $0x1] sm:$0xff]
        %v1031 = vld [vmem:[%s518 + $0x9] sm:$0xf]
        %v1032 = vld [vmem:[%s518 + $0x11] sm:$0xff]
        %v1033 = vld [vmem:[%s518 + $0x19] sm:$0xf]
        %v1034 = vld [vmem:[%s518 + $0x21] sm:$0xff]
        %v1035 = vld [vmem:[%s518 + $0x29] sm:$0xf]
        %v1036 = vld [vmem:[%s518 + $0x31] sm:$0xff]
        %v1037 = vld [vmem:[%s518 + $0x39] sm:$0xf]
        %v1038 = vld [vmem:[%s518 + $0x41] sm:$0xff]
        %v1039 = vld [vmem:[%s518 + $0x49] sm:$0xf]
        %v1040 = vld [vmem:[%s518 + $0x51] sm:$0xff]
        %v1041 = vld [vmem:[%s518 + $0x59] sm:$0xf]
        %v1042 = vld [vmem:[%s518 + $0x61] sm:$0xff]
        %v1043 = vld [vmem:[%s518 + $0x69] sm:$0xf]
        %v1044 = vld [vmem:[%s518 + $0x71] sm:$0xff]
        %v1045 = vld [vmem:[%s518 + $0x79] sm:$0xf]
        %v1046 = vld [vmem:[%s518 + $0x81] sm:$0xff]
        %v1047 = vld [vmem:[%s518 + $0x89] sm:$0xf]
        %v1048 = vld [vmem:[%s518 + $0x91] sm:$0xff]
        %v1049 = vld [vmem:[%s518 + $0x99] sm:$0xf]
        %v1050 = vld [vmem:[%s518 + $0xa1] sm:$0xff]
        %v1051 = vld [vmem:[%s518 + $0xa9] sm:$0xf]
        %v1052 = vld [vmem:[%s518 + $0xb1] sm:$0xff]
        %v1053 = vld [vmem:[%s518 + $0xb9] sm:$0xf]
        %1078 = vrot.lane.b32.xlu0 %v1030, 12
        %v1079 = vpop.permute.xlu0 %1078
        %1080 = vrot.lane.b32.xlu0 %v1031, 12
        %v1081 = vpop.permute.xlu0 %1080
        %1082 = vrot.lane.b32.xlu0 %v1032, 12
        %v1083 = vpop.permute.xlu0 %1082
        %1084 = vrot.lane.b32.xlu0 %v1033, 12
        %v1085 = vpop.permute.xlu0 %1084
        %1086 = vrot.lane.b32.xlu0 %v1034, 12
        %v1087 = vpop.permute.xlu0 %1086
        %1088 = vrot.lane.b32.xlu0 %v1035, 12
        %v1089 = vpop.permute.xlu0 %1088
        %1090 = vrot.lane.b32.xlu0 %v1036, 12
        %v1091 = vpop.permute.xlu0 %1090
        %1092 = vrot.lane.b32.xlu0 %v1037, 12
        %v1093 = vpop.permute.xlu0 %1092
        %1094 = vrot.lane.b32.xlu0 %v1038, 12
        %v1095 = vpop.permute.xlu0 %1094
        %1096 = vrot.lane.b32.xlu0 %v1039, 12
        %v1097 = vpop.permute.xlu0 %1096
        %1098 = vrot.lane.b32.xlu0 %v1040, 12
        %v1099 = vpop.permute.xlu0 %1098
        %1100 = vrot.lane.b32.xlu0 %v1041, 12
        %v1101 = vpop.permute.xlu0 %1100
        %1102 = vrot.lane.b32.xlu0 %v1042, 12
        %v1103 = vpop.permute.xlu0 %1102
        %1104 = vrot.lane.b32.xlu0 %v1043, 12
        %v1105 = vpop.permute.xlu0 %1104
        %1106 = vrot.lane.b32.xlu0 %v1044, 12
        %v1107 = vpop.permute.xlu0 %1106
        %1108 = vrot.lane.b32.xlu0 %v1045, 12
        %v1109 = vpop.permute.xlu0 %1108
        %1110 = vrot.lane.b32.xlu0 %v1046, 12
        %v1111 = vpop.permute.xlu0 %1110
        %1112 = vrot.lane.b32.xlu0 %v1047, 12
        %v1113 = vpop.permute.xlu0 %1112
        %1114 = vrot.lane.b32.xlu0 %v1048, 12
        %v1115 = vpop.permute.xlu0 %1114
        %1116 = vrot.lane.b32.xlu0 %v1049, 12
        %v1117 = vpop.permute.xlu0 %1116
        %1118 = vrot.lane.b32.xlu0 %v1050, 12
        %v1119 = vpop.permute.xlu0 %1118
        %1120 = vrot.lane.b32.xlu0 %v1051, 12
        %v1121 = vpop.permute.xlu0 %1120
        %1122 = vrot.lane.b32.xlu0 %v1052, 12
        %v1123 = vpop.permute.xlu0 %1122
        %1124 = vrot.lane.b32.xlu0 %v1053, 12
        %v1125 = vpop.permute.xlu0 %1124
        %vm1150 = vcmask 121952
        %1151 = vst.msk [vmem:[#allocation5] sm:$0xff] %vm1150, %v1079
        %vm1152 = vcmask 117856
        %1153 = vst.msk [vmem:[#allocation5 + $0x8] sm:$0xf] %vm1152, %v1081
        %1154 = vst.msk [vmem:[#allocation5 + $0x10] sm:$0xff] %vm1150, %v1083
        %1155 = vst.msk [vmem:[#allocation5 + $0x18] sm:$0xf] %vm1152, %v1085
        %1156 = vst.msk [vmem:[#allocation5 + $0x20] sm:$0xff] %vm1150, %v1087
        %1157 = vst.msk [vmem:[#allocation5 + $0x28] sm:$0xf] %vm1152, %v1089
        %1158 = vst.msk [vmem:[#allocation5 + $0x30] sm:$0xff] %vm1150, %v1091
        %1159 = vst.msk [vmem:[#allocation5 + $0x38] sm:$0xf] %vm1152, %v1093
        %1160 = vst.msk [vmem:[#allocation5 + $0x40] sm:$0xff] %vm1150, %v1095
        %1161 = vst.msk [vmem:[#allocation5 + $0x48] sm:$0xf] %vm1152, %v1097
        %1162 = vst.msk [vmem:[#allocation5 + $0x50] sm:$0xff] %vm1150, %v1099
        %1163 = vst.msk [vmem:[#allocation5 + $0x58] sm:$0xf] %vm1152, %v1101
        %1164 = vst.msk [vmem:[#allocation5 + $0x60] sm:$0xff] %vm1150, %v1103
        %1165 = vst.msk [vmem:[#allocation5 + $0x68] sm:$0xf] %vm1152, %v1105
        %1166 = vst.msk [vmem:[#allocation5 + $0x70] sm:$0xff] %vm1150, %v1107
        %1167 = vst.msk [vmem:[#allocation5 + $0x78] sm:$0xf] %vm1152, %v1109
        %1168 = vst.msk [vmem:[#allocation5 + $0x80] sm:$0xff] %vm1150, %v1111
        %1169 = vst.msk [vmem:[#allocation5 + $0x88] sm:$0xf] %vm1152, %v1113
        %1170 = vst.msk [vmem:[#allocation5 + $0x90] sm:$0xff] %vm1150, %v1115
        %1171 = vst.msk [vmem:[#allocation5 + $0x98] sm:$0xf] %vm1152, %v1117
        %1172 = vst.msk [vmem:[#allocation5 + $0xa0] sm:$0xff] %vm1150, %v1119
        %1173 = vst.msk [vmem:[#allocation5 + $0xa8] sm:$0xf] %vm1152, %v1121
        %1174 = vst.msk [vmem:[#allocation5 + $0xb0] sm:$0xff] %vm1150, %v1123
        %1175 = vst.msk [vmem:[#allocation5 + $0xb8] sm:$0xf] %vm1152, %v1125
        %v1176 = vld [vmem:[%s518 + $0x2] sm:$0xff]
        %v1177 = vld [vmem:[%s518 + $0xa] sm:$0xf]
        %v1178 = vld [vmem:[%s518 + $0x12] sm:$0xff]
        %v1179 = vld [vmem:[%s518 + $0x1a] sm:$0xf]
        %v1180 = vld [vmem:[%s518 + $0x22] sm:$0xff]
        %v1181 = vld [vmem:[%s518 + $0x2a] sm:$0xf]
        %v1182 = vld [vmem:[%s518 + $0x32] sm:$0xff]
        %v1183 = vld [vmem:[%s518 + $0x3a] sm:$0xf]
        %v1184 = vld [vmem:[%s518 + $0x42] sm:$0xff]
        %v1185 = vld [vmem:[%s518 + $0x4a] sm:$0xf]
        %v1186 = vld [vmem:[%s518 + $0x52] sm:$0xff]
        %v1187 = vld [vmem:[%s518 + $0x5a] sm:$0xf]
        %v1188 = vld [vmem:[%s518 + $0x62] sm:$0xff]
        %v1189 = vld [vmem:[%s518 + $0x6a] sm:$0xf]
        %v1190 = vld [vmem:[%s518 + $0x72] sm:$0xff]
        %v1191 = vld [vmem:[%s518 + $0x7a] sm:$0xf]
        %v1192 = vld [vmem:[%s518 + $0x82] sm:$0xff]
        %v1193 = vld [vmem:[%s518 + $0x8a] sm:$0xf]
        %v1194 = vld [vmem:[%s518 + $0x92] sm:$0xff]
        %v1195 = vld [vmem:[%s518 + $0x9a] sm:$0xf]
        %v1196 = vld [vmem:[%s518 + $0xa2] sm:$0xff]
        %v1197 = vld [vmem:[%s518 + $0xaa] sm:$0xf]
        %v1198 = vld [vmem:[%s518 + $0xb2] sm:$0xff]
        %v1199 = vld [vmem:[%s518 + $0xba] sm:$0xf]
        %1224 = vrot.lane.b32.xlu0 %v1176, 15
        %v1225 = vpop.permute.xlu0 %1224
        %1226 = vrot.lane.b32.xlu0 %v1177, 15
        %v1227 = vpop.permute.xlu0 %1226
        %1228 = vrot.lane.b32.xlu0 %v1178, 15
        %v1229 = vpop.permute.xlu0 %1228
        %1230 = vrot.lane.b32.xlu0 %v1179, 15
        %v1231 = vpop.permute.xlu0 %1230
        %1232 = vrot.lane.b32.xlu0 %v1180, 15
        %v1233 = vpop.permute.xlu0 %1232
        %1234 = vrot.lane.b32.xlu0 %v1181, 15
        %v1235 = vpop.permute.xlu0 %1234
        %1236 = vrot.lane.b32.xlu0 %v1182, 15
        %v1237 = vpop.permute.xlu0 %1236
        %1238 = vrot.lane.b32.xlu0 %v1183, 15
        %v1239 = vpop.permute.xlu0 %1238
        %1240 = vrot.lane.b32.xlu0 %v1184, 15
        %v1241 = vpop.permute.xlu0 %1240
        %1242 = vrot.lane.b32.xlu0 %v1185, 15
        %v1243 = vpop.permute.xlu0 %1242
        %1244 = vrot.lane.b32.xlu0 %v1186, 15
        %v1245 = vpop.permute.xlu0 %1244
        %1246 = vrot.lane.b32.xlu0 %v1187, 15
        %v1247 = vpop.permute.xlu0 %1246
        %1248 = vrot.lane.b32.xlu0 %v1188, 15
        %v1249 = vpop.permute.xlu0 %1248
        %1250 = vrot.lane.b32.xlu0 %v1189, 15
        %v1251 = vpop.permute.xlu0 %1250
        %1252 = vrot.lane.b32.xlu0 %v1190, 15
        %v1253 = vpop.permute.xlu0 %1252
        %1254 = vrot.lane.b32.xlu0 %v1191, 15
        %v1255 = vpop.permute.xlu0 %1254
        %1256 = vrot.lane.b32.xlu0 %v1192, 15
        %v1257 = vpop.permute.xlu0 %1256
        %1258 = vrot.lane.b32.xlu0 %v1193, 15
        %v1259 = vpop.permute.xlu0 %1258
        %1260 = vrot.lane.b32.xlu0 %v1194, 15
        %v1261 = vpop.permute.xlu0 %1260
        %1262 = vrot.lane.b32.xlu0 %v1195, 15
        %v1263 = vpop.permute.xlu0 %1262
        %1264 = vrot.lane.b32.xlu0 %v1196, 15
        %v1265 = vpop.permute.xlu0 %1264
        %1266 = vrot.lane.b32.xlu0 %v1197, 15
        %v1267 = vpop.permute.xlu0 %1266
        %1268 = vrot.lane.b32.xlu0 %v1198, 15
        %v1269 = vpop.permute.xlu0 %1268
        %1270 = vrot.lane.b32.xlu0 %v1199, 15
        %v1271 = vpop.permute.xlu0 %1270
        %vm1296 = vcmask 146552
        %1297 = vst.msk [vmem:[#allocation5] sm:$0xff] %vm1296, %v1225
        %vm1298 = vcmask 142456
        %1299 = vst.msk [vmem:[#allocation5 + $0x8] sm:$0xf] %vm1298, %v1227
        %1300 = vst.msk [vmem:[#allocation5 + $0x10] sm:$0xff] %vm1296, %v1229
        %1301 = vst.msk [vmem:[#allocation5 + $0x18] sm:$0xf] %vm1298, %v1231
        %1302 = vst.msk [vmem:[#allocation5 + $0x20] sm:$0xff] %vm1296, %v1233
        %1303 = vst.msk [vmem:[#allocation5 + $0x28] sm:$0xf] %vm1298, %v1235
        %1304 = vst.msk [vmem:[#allocation5 + $0x30] sm:$0xff] %vm1296, %v1237
        %1305 = vst.msk [vmem:[#allocation5 + $0x38] sm:$0xf] %vm1298, %v1239
        %1306 = vst.msk [vmem:[#allocation5 + $0x40] sm:$0xff] %vm1296, %v1241
        %1307 = vst.msk [vmem:[#allocation5 + $0x48] sm:$0xf] %vm1298, %v1243
        %1308 = vst.msk [vmem:[#allocation5 + $0x50] sm:$0xff] %vm1296, %v1245
        %1309 = vst.msk [vmem:[#allocation5 + $0x58] sm:$0xf] %vm1298, %v1247
        %1310 = vst.msk [vmem:[#allocation5 + $0x60] sm:$0xff] %vm1296, %v1249
        %1311 = vst.msk [vmem:[#allocation5 + $0x68] sm:$0xf] %vm1298, %v1251
        %1312 = vst.msk [vmem:[#allocation5 + $0x70] sm:$0xff] %vm1296, %v1253
        %1313 = vst.msk [vmem:[#allocation5 + $0x78] sm:$0xf] %vm1298, %v1255
        %1314 = vst.msk [vmem:[#allocation5 + $0x80] sm:$0xff] %vm1296, %v1257
        %1315 = vst.msk [vmem:[#allocation5 + $0x88] sm:$0xf] %vm1298, %v1259
        %1316 = vst.msk [vmem:[#allocation5 + $0x90] sm:$0xff] %vm1296, %v1261
        %1317 = vst.msk [vmem:[#allocation5 + $0x98] sm:$0xf] %vm1298, %v1263
        %1318 = vst.msk [vmem:[#allocation5 + $0xa0] sm:$0xff] %vm1296, %v1265
        %1319 = vst.msk [vmem:[#allocation5 + $0xa8] sm:$0xf] %vm1298, %v1267
        %1320 = vst.msk [vmem:[#allocation5 + $0xb0] sm:$0xff] %vm1296, %v1269
        %1321 = vst.msk [vmem:[#allocation5 + $0xb8] sm:$0xf] %vm1298, %v1271
        %s1322 = scalar_lea.vmem [#allocation2], 32
        %v1323 = vld [vmem:[%s1322] sm:$0xff]
        %v1324 = vld [vmem:[%s1322 + $0x8] sm:$0xf]
        %v1325 = vld [vmem:[%s1322 + $0x10] sm:$0xff]
        %v1326 = vld [vmem:[%s1322 + $0x18] sm:$0xf]
        %v1327 = vld [vmem:[%s1322 + $0x20] sm:$0xff]
        %v1328 = vld [vmem:[%s1322 + $0x28] sm:$0xf]
        %v1329 = vld [vmem:[%s1322 + $0x30] sm:$0xff]
        %v1330 = vld [vmem:[%s1322 + $0x38] sm:$0xf]
        %v1331 = vld [vmem:[%s1322 + $0x40] sm:$0xff]
        %v1332 = vld [vmem:[%s1322 + $0x48] sm:$0xf]
        %v1333 = vld [vmem:[%s1322 + $0x50] sm:$0xff]
        %v1334 = vld [vmem:[%s1322 + $0x58] sm:$0xf]
        %v1335 = vld [vmem:[%s1322 + $0x60] sm:$0xff]
        %v1336 = vld [vmem:[%s1322 + $0x68] sm:$0xf]
        %v1337 = vld [vmem:[%s1322 + $0x70] sm:$0xff]
        %v1338 = vld [vmem:[%s1322 + $0x78] sm:$0xf]
        %v1339 = vld [vmem:[%s1322 + $0x80] sm:$0xff]
        %v1340 = vld [vmem:[%s1322 + $0x88] sm:$0xf]
        %v1341 = vld [vmem:[%s1322 + $0x90] sm:$0xff]
        %v1342 = vld [vmem:[%s1322 + $0x98] sm:$0xf]
        %v1343 = vld [vmem:[%s1322 + $0xa0] sm:$0xff]
        %v1344 = vld [vmem:[%s1322 + $0xa8] sm:$0xf]
        %v1345 = vld [vmem:[%s1322 + $0xb0] sm:$0xff]
        %v1346 = vld [vmem:[%s1322 + $0xb8] sm:$0xf]
        %1371 = vrot.lane.b32.xlu0 %v1323, 18
        %v1372 = vpop.permute.xlu0 %1371
        %1373 = vrot.lane.b32.xlu0 %v1324, 18
        %v1374 = vpop.permute.xlu0 %1373
        %1375 = vrot.lane.b32.xlu0 %v1325, 18
        %v1376 = vpop.permute.xlu0 %1375
        %1377 = vrot.lane.b32.xlu0 %v1326, 18
        %v1378 = vpop.permute.xlu0 %1377
        %1379 = vrot.lane.b32.xlu0 %v1327, 18
        %v1380 = vpop.permute.xlu0 %1379
        %1381 = vrot.lane.b32.xlu0 %v1328, 18
        %v1382 = vpop.permute.xlu0 %1381
        %1383 = vrot.lane.b32.xlu0 %v1329, 18
        %v1384 = vpop.permute.xlu0 %1383
        %1385 = vrot.lane.b32.xlu0 %v1330, 18
        %v1386 = vpop.permute.xlu0 %1385
        %1387 = vrot.lane.b32.xlu0 %v1331, 18
        %v1388 = vpop.permute.xlu0 %1387
        %1389 = vrot.lane.b32.xlu0 %v1332, 18
        %v1390 = vpop.permute.xlu0 %1389
        %1391 = vrot.lane.b32.xlu0 %v1333, 18
        %v1392 = vpop.permute.xlu0 %1391
        %1393 = vrot.lane.b32.xlu0 %v1334, 18
        %v1394 = vpop.permute.xlu0 %1393
        %1395 = vrot.lane.b32.xlu0 %v1335, 18
        %v1396 = vpop.permute.xlu0 %1395
        %1397 = vrot.lane.b32.xlu0 %v1336, 18
        %v1398 = vpop.permute.xlu0 %1397
        %1399 = vrot.lane.b32.xlu0 %v1337, 18
        %v1400 = vpop.permute.xlu0 %1399
        %1401 = vrot.lane.b32.xlu0 %v1338, 18
        %v1402 = vpop.permute.xlu0 %1401
        %1403 = vrot.lane.b32.xlu0 %v1339, 18
        %v1404 = vpop.permute.xlu0 %1403
        %1405 = vrot.lane.b32.xlu0 %v1340, 18
        %v1406 = vpop.permute.xlu0 %1405
        %1407 = vrot.lane.b32.xlu0 %v1341, 18
        %v1408 = vpop.permute.xlu0 %1407
        %1409 = vrot.lane.b32.xlu0 %v1342, 18
        %v1410 = vpop.permute.xlu0 %1409
        %1411 = vrot.lane.b32.xlu0 %v1343, 18
        %v1412 = vpop.permute.xlu0 %1411
        %1413 = vrot.lane.b32.xlu0 %v1344, 18
        %v1414 = vpop.permute.xlu0 %1413
        %1415 = vrot.lane.b32.xlu0 %v1345, 18
        %v1416 = vpop.permute.xlu0 %1415
        %1417 = vrot.lane.b32.xlu0 %v1346, 18
        %v1418 = vpop.permute.xlu0 %1417
        %vm1443 = vcmask 171152
        %1444 = vst.msk [vmem:[#allocation5] sm:$0xff] %vm1443, %v1372
        %vm1445 = vcmask 167056
        %1446 = vst.msk [vmem:[#allocation5 + $0x8] sm:$0xf] %vm1445, %v1374
        %1447 = vst.msk [vmem:[#allocation5 + $0x10] sm:$0xff] %vm1443, %v1376
        %1448 = vst.msk [vmem:[#allocation5 + $0x18] sm:$0xf] %vm1445, %v1378
        %1449 = vst.msk [vmem:[#allocation5 + $0x20] sm:$0xff] %vm1443, %v1380
        %1450 = vst.msk [vmem:[#allocation5 + $0x28] sm:$0xf] %vm1445, %v1382
        %1451 = vst.msk [vmem:[#allocation5 + $0x30] sm:$0xff] %vm1443, %v1384
        %1452 = vst.msk [vmem:[#allocation5 + $0x38] sm:$0xf] %vm1445, %v1386
        %1453 = vst.msk [vmem:[#allocation5 + $0x40] sm:$0xff] %vm1443, %v1388
        %1454 = vst.msk [vmem:[#allocation5 + $0x48] sm:$0xf] %vm1445, %v1390
        %1455 = vst.msk [vmem:[#allocation5 + $0x50] sm:$0xff] %vm1443, %v1392
        %1456 = vst.msk [vmem:[#allocation5 + $0x58] sm:$0xf] %vm1445, %v1394
        %1457 = vst.msk [vmem:[#allocation5 + $0x60] sm:$0xff] %vm1443, %v1396
        %1458 = vst.msk [vmem:[#allocation5 + $0x68] sm:$0xf] %vm1445, %v1398
        %1459 = vst.msk [vmem:[#allocation5 + $0x70] sm:$0xff] %vm1443, %v1400
        %1460 = vst.msk [vmem:[#allocation5 + $0x78] sm:$0xf] %vm1445, %v1402
        %1461 = vst.msk [vmem:[#allocation5 + $0x80] sm:$0xff] %vm1443, %v1404
        %1462 = vst.msk [vmem:[#allocation5 + $0x88] sm:$0xf] %vm1445, %v1406
        %1463 = vst.msk [vmem:[#allocation5 + $0x90] sm:$0xff] %vm1443, %v1408
        %1464 = vst.msk [vmem:[#allocation5 + $0x98] sm:$0xf] %vm1445, %v1410
        %1465 = vst.msk [vmem:[#allocation5 + $0xa0] sm:$0xff] %vm1443, %v1412
        %1466 = vst.msk [vmem:[#allocation5 + $0xa8] sm:$0xf] %vm1445, %v1414
        %1467 = vst.msk [vmem:[#allocation5 + $0xb0] sm:$0xff] %vm1443, %v1416
        %1468 = vst.msk [vmem:[#allocation5 + $0xb8] sm:$0xf] %vm1445, %v1418
        %v1469 = vld [vmem:[%s1322 + $0x1] sm:$0xff]
        %v1470 = vld [vmem:[%s1322 + $0x9] sm:$0xf]
        %v1471 = vld [vmem:[%s1322 + $0x11] sm:$0xff]
        %v1472 = vld [vmem:[%s1322 + $0x19] sm:$0xf]
        %v1473 = vld [vmem:[%s1322 + $0x21] sm:$0xff]
        %v1474 = vld [vmem:[%s1322 + $0x29] sm:$0xf]
        %v1475 = vld [vmem:[%s1322 + $0x31] sm:$0xff]
        %v1476 = vld [vmem:[%s1322 + $0x39] sm:$0xf]
        %v1477 = vld [vmem:[%s1322 + $0x41] sm:$0xff]
        %v1478 = vld [vmem:[%s1322 + $0x49] sm:$0xf]
        %v1479 = vld [vmem:[%s1322 + $0x51] sm:$0xff]
        %v1480 = vld [vmem:[%s1322 + $0x59] sm:$0xf]
        %v1481 = vld [vmem:[%s1322 + $0x61] sm:$0xff]
        %v1482 = vld [vmem:[%s1322 + $0x69] sm:$0xf]
        %v1483 = vld [vmem:[%s1322 + $0x71] sm:$0xff]
        %v1484 = vld [vmem:[%s1322 + $0x79] sm:$0xf]
        %v1485 = vld [vmem:[%s1322 + $0x81] sm:$0xff]
        %v1486 = vld [vmem:[%s1322 + $0x89] sm:$0xf]
        %v1487 = vld [vmem:[%s1322 + $0x91] sm:$0xff]
        %v1488 = vld [vmem:[%s1322 + $0x99] sm:$0xf]
        %v1489 = vld [vmem:[%s1322 + $0xa1] sm:$0xff]
        %v1490 = vld [vmem:[%s1322 + $0xa9] sm:$0xf]
        %v1491 = vld [vmem:[%s1322 + $0xb1] sm:$0xff]
        %v1492 = vld [vmem:[%s1322 + $0xb9] sm:$0xf]
        %1517 = vrot.lane.b32.xlu0 %v1469, 21
        %v1518 = vpop.permute.xlu0 %1517
        %1519 = vrot.lane.b32.xlu0 %v1470, 21
        %v1520 = vpop.permute.xlu0 %1519
        %1521 = vrot.lane.b32.xlu0 %v1471, 21
        %v1522 = vpop.permute.xlu0 %1521
        %1523 = vrot.lane.b32.xlu0 %v1472, 21
        %v1524 = vpop.permute.xlu0 %1523
        %1525 = vrot.lane.b32.xlu0 %v1473, 21
        %v1526 = vpop.permute.xlu0 %1525
        %1527 = vrot.lane.b32.xlu0 %v1474, 21
        %v1528 = vpop.permute.xlu0 %1527
        %1529 = vrot.lane.b32.xlu0 %v1475, 21
        %v1530 = vpop.permute.xlu0 %1529
        %1531 = vrot.lane.b32.xlu0 %v1476, 21
        %v1532 = vpop.permute.xlu0 %1531
        %1533 = vrot.lane.b32.xlu0 %v1477, 21
        %v1534 = vpop.permute.xlu0 %1533
        %1535 = vrot.lane.b32.xlu0 %v1478, 21
        %v1536 = vpop.permute.xlu0 %1535
        %1537 = vrot.lane.b32.xlu0 %v1479, 21
        %v1538 = vpop.permute.xlu0 %1537
        %1539 = vrot.lane.b32.xlu0 %v1480, 21
        %v1540 = vpop.permute.xlu0 %1539
        %1541 = vrot.lane.b32.xlu0 %v1481, 21
        %v1542 = vpop.permute.xlu0 %1541
        %1543 = vrot.lane.b32.xlu0 %v1482, 21
        %v1544 = vpop.permute.xlu0 %1543
        %1545 = vrot.lane.b32.xlu0 %v1483, 21
        %v1546 = vpop.permute.xlu0 %1545
        %1547 = vrot.lane.b32.xlu0 %v1484, 21
        %v1548 = vpop.permute.xlu0 %1547
        %1549 = vrot.lane.b32.xlu0 %v1485, 21
        %v1550 = vpop.permute.xlu0 %1549
        %1551 = vrot.lane.b32.xlu0 %v1486, 21
        %v1552 = vpop.permute.xlu0 %1551
        %1553 = vrot.lane.b32.xlu0 %v1487, 21
        %v1554 = vpop.permute.xlu0 %1553
        %1555 = vrot.lane.b32.xlu0 %v1488, 21
        %v1556 = vpop.permute.xlu0 %1555
        %1557 = vrot.lane.b32.xlu0 %v1489, 21
        %v1558 = vpop.permute.xlu0 %1557
        %1559 = vrot.lane.b32.xlu0 %v1490, 21
        %v1560 = vpop.permute.xlu0 %1559
        %1561 = vrot.lane.b32.xlu0 %v1491, 21
        %v1562 = vpop.permute.xlu0 %1561
        %1563 = vrot.lane.b32.xlu0 %v1492, 21
        %v1564 = vpop.permute.xlu0 %1563
        %vm1589 = vcmask 195752
        %1590 = vst.msk [vmem:[#allocation5] sm:$0xff] %vm1589, %v1518
        %vm1591 = vcmask 191656
        %1592 = vst.msk [vmem:[#allocation5 + $0x8] sm:$0xf] %vm1591, %v1520
        %1593 = vst.msk [vmem:[#allocation5 + $0x10] sm:$0xff] %vm1589, %v1522
        %1594 = vst.msk [vmem:[#allocation5 + $0x18] sm:$0xf] %vm1591, %v1524
        %1595 = vst.msk [vmem:[#allocation5 + $0x20] sm:$0xff] %vm1589, %v1526
        %1596 = vst.msk [vmem:[#allocation5 + $0x28] sm:$0xf] %vm1591, %v1528
        %1597 = vst.msk [vmem:[#allocation5 + $0x30] sm:$0xff] %vm1589, %v1530
        %1598 = vst.msk [vmem:[#allocation5 + $0x38] sm:$0xf] %vm1591, %v1532
        %1599 = vst.msk [vmem:[#allocation5 + $0x40] sm:$0xff] %vm1589, %v1534
        %1600 = vst.msk [vmem:[#allocation5 + $0x48] sm:$0xf] %vm1591, %v1536
        %1601 = vst.msk [vmem:[#allocation5 + $0x50] sm:$0xff] %vm1589, %v1538
        %1602 = vst.msk [vmem:[#allocation5 + $0x58] sm:$0xf] %vm1591, %v1540
        %1603 = vst.msk [vmem:[#allocation5 + $0x60] sm:$0xff] %vm1589, %v1542
        %1604 = vst.msk [vmem:[#allocation5 + $0x68] sm:$0xf] %vm1591, %v1544
        %1605 = vst.msk [vmem:[#allocation5 + $0x70] sm:$0xff] %vm1589, %v1546
        %1606 = vst.msk [vmem:[#allocation5 + $0x78] sm:$0xf] %vm1591, %v1548
        %1607 = vst.msk [vmem:[#allocation5 + $0x80] sm:$0xff] %vm1589, %v1550
        %1608 = vst.msk [vmem:[#allocation5 + $0x88] sm:$0xf] %vm1591, %v1552
        %1609 = vst.msk [vmem:[#allocation5 + $0x90] sm:$0xff] %vm1589, %v1554
        %1610 = vst.msk [vmem:[#allocation5 + $0x98] sm:$0xf] %vm1591, %v1556
        %1611 = vst.msk [vmem:[#allocation5 + $0xa0] sm:$0xff] %vm1589, %v1558
        %1612 = vst.msk [vmem:[#allocation5 + $0xa8] sm:$0xf] %vm1591, %v1560
        %1613 = vst.msk [vmem:[#allocation5 + $0xb0] sm:$0xff] %vm1589, %v1562
        %1614 = vst.msk [vmem:[#allocation5 + $0xb8] sm:$0xf] %vm1591, %v1564
        %v1615 = vld [vmem:[%s1322 + $0x2] sm:$0xff]
        %v1616 = vld [vmem:[%s1322 + $0xa] sm:$0xf]
        %v1617 = vld [vmem:[%s1322 + $0x12] sm:$0xff]
        %v1618 = vld [vmem:[%s1322 + $0x1a] sm:$0xf]
        %v1619 = vld [vmem:[%s1322 + $0x22] sm:$0xff]
        %v1620 = vld [vmem:[%s1322 + $0x2a] sm:$0xf]
        %v1621 = vld [vmem:[%s1322 + $0x32] sm:$0xff]
        %v1622 = vld [vmem:[%s1322 + $0x3a] sm:$0xf]
        %v1623 = vld [vmem:[%s1322 + $0x42] sm:$0xff]
        %v1624 = vld [vmem:[%s1322 + $0x4a] sm:$0xf]
        %v1625 = vld [vmem:[%s1322 + $0x52] sm:$0xff]
        %v1626 = vld [vmem:[%s1322 + $0x5a] sm:$0xf]
        %v1627 = vld [vmem:[%s1322 + $0x62] sm:$0xff]
        %v1628 = vld [vmem:[%s1322 + $0x6a] sm:$0xf]
        %v1629 = vld [vmem:[%s1322 + $0x72] sm:$0xff]
        %v1630 = vld [vmem:[%s1322 + $0x7a] sm:$0xf]
        %v1631 = vld [vmem:[%s1322 + $0x82] sm:$0xff]
        %v1632 = vld [vmem:[%s1322 + $0x8a] sm:$0xf]
        %v1633 = vld [vmem:[%s1322 + $0x92] sm:$0xff]
        %v1634 = vld [vmem:[%s1322 + $0x9a] sm:$0xf]
        %v1635 = vld [vmem:[%s1322 + $0xa2] sm:$0xff]
        %v1636 = vld [vmem:[%s1322 + $0xaa] sm:$0xf]
        %v1637 = vld [vmem:[%s1322 + $0xb2] sm:$0xff]
        %v1638 = vld [vmem:[%s1322 + $0xba] sm:$0xf]
        %1663 = vrot.lane.b32.xlu0 %v1615, 24
        %v1664 = vpop.permute.xlu0 %1663
        %1665 = vrot.lane.b32.xlu0 %v1616, 24
        %v1666 = vpop.permute.xlu0 %1665
        %1667 = vrot.lane.b32.xlu0 %v1617, 24
        %v1668 = vpop.permute.xlu0 %1667
        %1669 = vrot.lane.b32.xlu0 %v1618, 24
        %v1670 = vpop.permute.xlu0 %1669
        %1671 = vrot.lane.b32.xlu0 %v1619, 24
        %v1672 = vpop.permute.xlu0 %1671
        %1673 = vrot.lane.b32.xlu0 %v1620, 24
        %v1674 = vpop.permute.xlu0 %1673
        %1675 = vrot.lane.b32.xlu0 %v1621, 24
        %v1676 = vpop.permute.xlu0 %1675
        %1677 = vrot.lane.b32.xlu0 %v1622, 24
        %v1678 = vpop.permute.xlu0 %1677
        %1679 = vrot.lane.b32.xlu0 %v1623, 24
        %v1680 = vpop.permute.xlu0 %1679
        %1681 = vrot.lane.b32.xlu0 %v1624, 24
        %v1682 = vpop.permute.xlu0 %1681
        %1683 = vrot.lane.b32.xlu0 %v1625, 24
        %v1684 = vpop.permute.xlu0 %1683
        %1685 = vrot.lane.b32.xlu0 %v1626, 24
        %v1686 = vpop.permute.xlu0 %1685
        %1687 = vrot.lane.b32.xlu0 %v1627, 24
        %v1688 = vpop.permute.xlu0 %1687
        %1689 = vrot.lane.b32.xlu0 %v1628, 24
        %v1690 = vpop.permute.xlu0 %1689
        %1691 = vrot.lane.b32.xlu0 %v1629, 24
        %v1692 = vpop.permute.xlu0 %1691
        %1693 = vrot.lane.b32.xlu0 %v1630, 24
        %v1694 = vpop.permute.xlu0 %1693
        %1695 = vrot.lane.b32.xlu0 %v1631, 24
        %v1696 = vpop.permute.xlu0 %1695
        %1697 = vrot.lane.b32.xlu0 %v1632, 24
        %v1698 = vpop.permute.xlu0 %1697
        %1699 = vrot.lane.b32.xlu0 %v1633, 24
        %v1700 = vpop.permute.xlu0 %1699
        %1701 = vrot.lane.b32.xlu0 %v1634, 24
        %v1702 = vpop.permute.xlu0 %1701
        %1703 = vrot.lane.b32.xlu0 %v1635, 24
        %v1704 = vpop.permute.xlu0 %1703
        %1705 = vrot.lane.b32.xlu0 %v1636, 24
        %v1706 = vpop.permute.xlu0 %1705
        %1707 = vrot.lane.b32.xlu0 %v1637, 24
        %v1708 = vpop.permute.xlu0 %1707
        %1709 = vrot.lane.b32.xlu0 %v1638, 24
        %v1710 = vpop.permute.xlu0 %1709
        %vm1735 = vcmask 220352
        %1736 = vst.msk [vmem:[#allocation5] sm:$0xff] %vm1735, %v1664
        %vm1737 = vcmask 216256
        %1738 = vst.msk [vmem:[#allocation5 + $0x8] sm:$0xf] %vm1737, %v1666
        %1739 = vst.msk [vmem:[#allocation5 + $0x10] sm:$0xff] %vm1735, %v1668
        %1740 = vst.msk [vmem:[#allocation5 + $0x18] sm:$0xf] %vm1737, %v1670
        %1741 = vst.msk [vmem:[#allocation5 + $0x20] sm:$0xff] %vm1735, %v1672
        %1742 = vst.msk [vmem:[#allocation5 + $0x28] sm:$0xf] %vm1737, %v1674
        %1743 = vst.msk [vmem:[#allocation5 + $0x30] sm:$0xff] %vm1735, %v1676
        %1744 = vst.msk [vmem:[#allocation5 + $0x38] sm:$0xf] %vm1737, %v1678
        %1745 = vst.msk [vmem:[#allocation5 + $0x40] sm:$0xff] %vm1735, %v1680
        %1746 = vst.msk [vmem:[#allocation5 + $0x48] sm:$0xf] %vm1737, %v1682
        %1747 = vst.msk [vmem:[#allocation5 + $0x50] sm:$0xff] %vm1735, %v1684
        %1748 = vst.msk [vmem:[#allocation5 + $0x58] sm:$0xf] %vm1737, %v1686
        %1749 = vst.msk [vmem:[#allocation5 + $0x60] sm:$0xff] %vm1735, %v1688
        %1750 = vst.msk [vmem:[#allocation5 + $0x68] sm:$0xf] %vm1737, %v1690
        %1751 = vst.msk [vmem:[#allocation5 + $0x70] sm:$0xff] %vm1735, %v1692
        %1752 = vst.msk [vmem:[#allocation5 + $0x78] sm:$0xf] %vm1737, %v1694
        %1753 = vst.msk [vmem:[#allocation5 + $0x80] sm:$0xff] %vm1735, %v1696
        %1754 = vst.msk [vmem:[#allocation5 + $0x88] sm:$0xf] %vm1737, %v1698
        %1755 = vst.msk [vmem:[#allocation5 + $0x90] sm:$0xff] %vm1735, %v1700
        %1756 = vst.msk [vmem:[#allocation5 + $0x98] sm:$0xf] %vm1737, %v1702
        %1757 = vst.msk [vmem:[#allocation5 + $0xa0] sm:$0xff] %vm1735, %v1704
        %1758 = vst.msk [vmem:[#allocation5 + $0xa8] sm:$0xf] %vm1737, %v1706
        %1759 = vst.msk [vmem:[#allocation5 + $0xb0] sm:$0xff] %vm1735, %v1708
        %1760 = vst.msk [vmem:[#allocation5 + $0xb8] sm:$0xf] %vm1737, %v1710
        %v1761 = vld [vmem:[#allocation5] sm:$0xff]
        %v1762 = vld [vmem:[#allocation5 + $0x8] sm:$0xf]
        %v1763 = vld [vmem:[#allocation5 + $0x10] sm:$0xff]
        %v1764 = vld [vmem:[#allocation5 + $0x18] sm:$0xf]
        %v1765 = vld [vmem:[#allocation5 + $0x20] sm:$0xff]
        %v1766 = vld [vmem:[#allocation5 + $0x28] sm:$0xf]
        %v1767 = vld [vmem:[#allocation5 + $0x30] sm:$0xff]
        %v1768 = vld [vmem:[#allocation5 + $0x38] sm:$0xf]
        %v1769 = vld [vmem:[#allocation5 + $0x40] sm:$0xff]
        %v1770 = vld [vmem:[#allocation5 + $0x48] sm:$0xf]
        %v1771 = vld [vmem:[#allocation5 + $0x50] sm:$0xff]
        %v1772 = vld [vmem:[#allocation5 + $0x58] sm:$0xf]
        %v1773 = vld [vmem:[#allocation5 + $0x60] sm:$0xff]
        %v1774 = vld [vmem:[#allocation5 + $0x68] sm:$0xf]
        %v1775 = vld [vmem:[#allocation5 + $0x70] sm:$0xff]
        %v1776 = vld [vmem:[#allocation5 + $0x78] sm:$0xf]
        %v1777 = vld [vmem:[#allocation5 + $0x80] sm:$0xff]
        %v1778 = vld [vmem:[#allocation5 + $0x88] sm:$0xf]
        %v1779 = vld [vmem:[#allocation5 + $0x90] sm:$0xff]
        %v1780 = vld [vmem:[#allocation5 + $0x98] sm:$0xf]
        %v1781 = vld [vmem:[#allocation5 + $0xa0] sm:$0xff]
        %v1782 = vld [vmem:[#allocation5 + $0xa8] sm:$0xf]
        %v1783 = vld [vmem:[#allocation5 + $0xb0] sm:$0xff]
        %v1784 = vld [vmem:[#allocation5 + $0xb8] sm:$0xf]
        %v1809 = vcombine.high %v1761, %v1761
        %v1810 = vcombine.high %v1763, %v1763
        %v1811 = vcombine.high %v1765, %v1765
        %v1812 = vcombine.high %v1767, %v1767
        %v1813 = vcombine.high %v1769, %v1769
        %v1814 = vcombine.high %v1771, %v1771
        %v1815 = vcombine.high %v1773, %v1773
        %v1816 = vcombine.high %v1775, %v1775
        %v1817 = vcombine.high %v1777, %v1777
        %v1818 = vcombine.high %v1779, %v1779
        %v1819 = vcombine.high %v1781, %v1781
        %v1820 = vcombine.high %v1783, %v1783
        %v1821 = vld [vmem:[#allocation12] sm:$0xff]
        %v1822 = vld [vmem:[#allocation12 + $0x8] sm:$0xff]
        %v1823 = vld [vmem:[#allocation12 + $0x10] sm:$0xff]
        %v1824 = vld [vmem:[#allocation12 + $0x18] sm:$0x7]
        %v1825 = vld [vmem:[#allocation14] sm:$0x1]
        %v1827 = vlaneseq
        %v1828 = vshrl.u32 %v1827, 7
        %v1829 = vsub.s32 0, %v1828
        %v1830 = vrot.slane %v1825, %v1829
        %v1832 = vcombine.low %v1761, %v1809
        %v1833 = vcombine.low %v1762, %v1763
        %v1834 = vcombine.low %v1810, %v1764
        %v1835 = vcombine.low %v1765, %v1811
        %v1836 = vcombine.low %v1766, %v1767
        %v1837 = vcombine.low %v1812, %v1768
        %v1838 = vcombine.low %v1769, %v1813
        %v1839 = vcombine.low %v1770, %v1771
        %v1840 = vcombine.low %v1814, %v1772
        %v1841 = vcombine.low %v1773, %v1815
        %v1842 = vcombine.low %v1774, %v1775
        %v1843 = vcombine.low %v1816, %v1776
        %v1844 = vcombine.low %v1777, %v1817
        %v1845 = vcombine.low %v1778, %v1779
        %v1846 = vcombine.low %v1818, %v1780
        %v1847 = vcombine.low %v1781, %v1819
        %v1848 = vcombine.low %v1782, %v1783
        %v1849 = vcombine.low %v1820, %v1784
        %vm1850 = vcmask 220160
        %v1851 = vsel %vm1850, %v1832, 0
        %v1853 = vsel %vm1850, %v1833, 0
        %v1855 = vsel %vm1850, %v1834, 0
        %v1857 = vsel %vm1850, %v1835, 0
        %v1859 = vsel %vm1850, %v1836, 0
        %v1861 = vsel %vm1850, %v1837, 0
        %v1863 = vsel %vm1850, %v1838, 0
        %v1865 = vsel %vm1850, %v1839, 0
        %v1867 = vsel %vm1850, %v1840, 0
        %v1869 = vsel %vm1850, %v1841, 0
        %v1871 = vsel %vm1850, %v1842, 0
        %v1873 = vsel %vm1850, %v1843, 0
        %v1875 = vsel %vm1850, %v1844, 0
        %v1877 = vsel %vm1850, %v1845, 0
        %v1879 = vsel %vm1850, %v1846, 0
        %v1881 = vsel %vm1850, %v1847, 0
        %v1883 = vsel %vm1850, %v1848, 0
        %v1885 = vsel %vm1850, %v1849, 0
        %vm1887 = vcmask 1042432
        %v1889 = vsel %vm1887, %v1824, 0
        %1891 = vmatprep.subr.mxu0 0.0
        %1892 = vmatpush1.msra.mxu0 %v1821
        %1893 = vmatprep.subr.mxu0 0.0
        %1894 = vmatpush1.msra.mxu0 %v1822
        %1895 = vmatprep.subr.mxu0 0.0
        %1896 = vmatpush1.msra.mxu0 %v1823
        %1897 = vmatprep.subr.mxu0 0.0
        %1898 = vmatpush1.msra.mxu0 %v1889
        %1899 = vmatprep.subr.mxu0 0.0
        %1900 = vmatpush1.msra.mxu0 0.0
        %1901 = vmatprep.subr.mxu0 0.0
        %1902 = vmatpush1.msra.mxu0 0.0
        %1903 = vmatprep.subr.mxu0 0.0
        %1904 = vmatpush1.msra.mxu0 0.0
        %1905 = vmatprep.subr.mxu0 0.0
        %1906 = vmatpush1.msra.mxu0 0.0
        %1907 = vmatprep.subr.mxu0 0.0
        %1908 = vmatpush1.msra.mxu0 0.0
        %1909 = vmatprep.subr.mxu0 0.0
        %1910 = vmatpush1.msra.mxu0 0.0
        %1911 = vmatprep.subr.mxu0 0.0
        %1912 = vmatpush1.msra.mxu0 0.0
        %1913 = vmatprep.subr.mxu0 0.0
        %1914 = vmatpush1.msra.mxu0 0.0
        %1915 = vmatprep.subr.mxu0 0.0
        %1916 = vmatpush1.msra.mxu0 0.0
        %1917 = vmatprep.subr.mxu0 0.0
        %1918 = vmatpush1.msra.mxu0 0.0
        %1919 = vmatprep.subr.mxu0 0.0
        %1920 = vmatpush1.msra.mxu0 0.0
        %1921 = vmatprep.subr.mxu0 0.0
        %1922 = vmatpush1.msra.mxu0 0.0
        %1923 = vmatprep.subr.mxu0 0.0
        %1924 = vmatpush1.msra.mxu0 0.0
        %1925 = vmatprep.subr.mxu0 0.0
        %1926 = vmatpush1.msra.mxu0 0.0
        %1927 = vmatprep.subr.mxu0 0.0
        %1928 = vmatpush1.msra.mxu0 0.0
        %1929 = vmatprep.subr.mxu0 0.0
        %1930 = vmatpush1.msra.mxu0 0.0
        %1931 = vmatprep.subr.mxu0 0.0
        %1932 = vmatpush1.msra.mxu0 0.0
        %1933 = vmatprep.subr.mxu0 0.0
        %1934 = vmatpush1.msra.mxu0 0.0
        %1935 = vmatprep.subr.mxu0 0.0
        %1936 = vmatpush1.msra.mxu0 0.0
        %1937 = vmatprep.subr.mxu0 0.0
        %1938 = vmatpush1.msra.mxu0 0.0
        %1939 = vmatprep.subr.mxu0 0.0
        %1940 = vmatpush1.msra.mxu0 0.0
        %1941 = vmatprep.subr.mxu0 0.0
        %1942 = vmatpush1.msra.mxu0 0.0
        %1943 = vmatprep.subr.mxu0 0.0
        %1944 = vmatpush1.msra.mxu0 0.0
        %1945 = vmatprep.subr.mxu0 0.0
        %1946 = vmatpush1.msra.mxu0 0.0
        %1947 = vmatprep.subr.mxu0 0.0
        %1948 = vmatpush1.msra.mxu0 0.0
        %1949 = vmatprep.subr.mxu0 0.0
        %1950 = vmatpush1.msra.mxu0 0.0
        %1951 = vmatprep.subr.mxu0 0.0
        %1952 = vmatpush1.msra.mxu0 0.0
        %1953 = vmatprep.subr.mxu0 0.0
        %1954 = vmatpush1.msra.mxu0 0.0
        %1955 = vmatprep.mubr.f32.mxu0 0.0
        %1956 = vmatmul.mubr.f32.gmra.mrb[0].mxu0 %v1851
        %v1957 = vpop.f32.mrb[0].mxu0
        %v1958 = vadd.f32 %v1830, %v1957
        %v1959 = vpop.f32.mrb[0].mxu0
        %1960 = vmatprep.mubr.f32.mxu0 0.0
        %1961 = vmatmul.mubr.f32.gmra.mrb[0].mxu0 %v1853
        %v1962 = vpop.f32.mrb[0].mxu0
        %v1963 = vadd.f32 %v1830, %v1962
        %v1964 = vpop.f32.mrb[0].mxu0
        %1965 = vmatprep.mubr.f32.mxu0 0.0
        %1966 = vmatmul.mubr.f32.gmra.mrb[0].mxu0 %v1855
        %v1967 = vpop.f32.mrb[0].mxu0
        %v1968 = vadd.f32 %v1830, %v1967
        %v1969 = vpop.f32.mrb[0].mxu0
        %1970 = vmatprep.mubr.f32.mxu0 0.0
        %1971 = vmatmul.mubr.f32.gmra.mrb[0].mxu0 %v1857
        %v1972 = vpop.f32.mrb[0].mxu0
        %v1973 = vadd.f32 %v1830, %v1972
        %v1974 = vpop.f32.mrb[0].mxu0
        %1975 = vmatprep.mubr.f32.mxu0 0.0
        %1976 = vmatmul.mubr.f32.gmra.mrb[0].mxu0 %v1859
        %v1977 = vpop.f32.mrb[0].mxu0
        %v1978 = vadd.f32 %v1830, %v1977
        %v1979 = vpop.f32.mrb[0].mxu0
        %1980 = vmatprep.mubr.f32.mxu0 0.0
        %1981 = vmatmul.mubr.f32.gmra.mrb[0].mxu0 %v1861
        %v1982 = vpop.f32.mrb[0].mxu0
        %v1983 = vadd.f32 %v1830, %v1982
        %v1984 = vpop.f32.mrb[0].mxu0
        %1985 = vmatprep.mubr.f32.mxu0 0.0
        %1986 = vmatmul.mubr.f32.gmra.mrb[0].mxu0 %v1863
        %v1987 = vpop.f32.mrb[0].mxu0
        %v1988 = vadd.f32 %v1830, %v1987
        %v1989 = vpop.f32.mrb[0].mxu0
        %1990 = vmatprep.mubr.f32.mxu0 0.0
        %1991 = vmatmul.mubr.f32.gmra.mrb[0].mxu0 %v1865
        %v1992 = vpop.f32.mrb[0].mxu0
        %v1993 = vadd.f32 %v1830, %v1992
        %v1994 = vpop.f32.mrb[0].mxu0
        %1995 = vmatprep.mubr.f32.mxu0 0.0
        %1996 = vmatmul.mubr.f32.gmra.mrb[0].mxu0 %v1867
        %v1997 = vpop.f32.mrb[0].mxu0
        %v1998 = vadd.f32 %v1830, %v1997
        %v1999 = vpop.f32.mrb[0].mxu0
        %2000 = vmatprep.mubr.f32.mxu0 0.0
        %2001 = vmatmul.mubr.f32.gmra.mrb[0].mxu0 %v1869
        %v2002 = vpop.f32.mrb[0].mxu0
        %v2003 = vadd.f32 %v1830, %v2002
        %v2004 = vpop.f32.mrb[0].mxu0
        %2005 = vmatprep.mubr.f32.mxu0 0.0
        %2006 = vmatmul.mubr.f32.gmra.mrb[0].mxu0 %v1871
        %v2007 = vpop.f32.mrb[0].mxu0
        %v2008 = vadd.f32 %v1830, %v2007
        %v2009 = vpop.f32.mrb[0].mxu0
        %2010 = vmatprep.mubr.f32.mxu0 0.0
        %2011 = vmatmul.mubr.f32.gmra.mrb[0].mxu0 %v1873
        %v2012 = vpop.f32.mrb[0].mxu0
        %v2013 = vadd.f32 %v1830, %v2012
        %v2014 = vpop.f32.mrb[0].mxu0
        %2015 = vmatprep.mubr.f32.mxu0 0.0
        %2016 = vmatmul.mubr.f32.gmra.mrb[0].mxu0 %v1875
        %v2017 = vpop.f32.mrb[0].mxu0
        %v2018 = vadd.f32 %v1830, %v2017
        %v2019 = vpop.f32.mrb[0].mxu0
        %2020 = vmatprep.mubr.f32.mxu0 0.0
        %2021 = vmatmul.mubr.f32.gmra.mrb[0].mxu0 %v1877
        %v2022 = vpop.f32.mrb[0].mxu0
        %v2023 = vadd.f32 %v1830, %v2022
        %v2024 = vpop.f32.mrb[0].mxu0
        %2025 = vmatprep.mubr.f32.mxu0 0.0
        %2026 = vmatmul.mubr.f32.gmra.mrb[0].mxu0 %v1879
        %v2027 = vpop.f32.mrb[0].mxu0
        %v2028 = vadd.f32 %v1830, %v2027
        %v2029 = vpop.f32.mrb[0].mxu0
        %2030 = vmatprep.mubr.f32.mxu0 0.0
        %2031 = vmatmul.mubr.f32.gmra.mrb[0].mxu0 %v1881
        %v2032 = vpop.f32.mrb[0].mxu0
        %v2033 = vadd.f32 %v1830, %v2032
        %v2034 = vpop.f32.mrb[0].mxu0
        %2035 = vmatprep.mubr.f32.mxu0 0.0
        %2036 = vmatmul.mubr.f32.gmra.mrb[0].mxu0 %v1883
        %v2037 = vpop.f32.mrb[0].mxu0
        %v2038 = vadd.f32 %v1830, %v2037
        %v2039 = vpop.f32.mrb[0].mxu0
        %2040 = vmatprep.mubr.f32.mxu0 0.0
        %2041 = vmatmul.mubr.f32.gmra.mrb[0].mxu0 %v1885
        %v2042 = vpop.f32.mrb[0].mxu0
        %v2043 = vadd.f32 %v1830, %v2042
        %v2044 = vpop.f32.mrb[0].mxu0
        %2045 = vdwg.mxu0
        %v2064 = vcombine.high %v1958, %v1958
        %v2065 = vcombine.high %v1963, %v1963
        %v2066 = vcombine.high %v1968, %v1968
        %v2067 = vcombine.high %v1973, %v1973
        %v2068 = vcombine.high %v1978, %v1978
        %v2069 = vcombine.high %v1983, %v1983
        %v2070 = vcombine.high %v1988, %v1988
        %v2071 = vcombine.high %v1993, %v1993
        %v2072 = vcombine.high %v1998, %v1998
        %v2073 = vcombine.high %v2003, %v2003
        %v2074 = vcombine.high %v2008, %v2008
        %v2075 = vcombine.high %v2013, %v2013
        %v2076 = vcombine.high %v2018, %v2018
        %v2077 = vcombine.high %v2023, %v2023
        %v2078 = vcombine.high %v2028, %v2028
        %v2079 = vcombine.high %v2033, %v2033
        %v2080 = vcombine.high %v2038, %v2038
        %v2081 = vcombine.high %v2043, %v2043
        %vm2088 = vcmask 64512
        %2089 = vst.msk [vmem:[#allocation3] sm:$0xff] %vm2088, 0.0
        %vm2090 = vcmask 62464
        %2091 = vst.msk [vmem:[#allocation3 + $0x8] sm:$0x3f] %vm2090, 0.0
        %s2092 = scalar_lea.vmem [#allocation3], 208
        %2093 = vst.msk [vmem:[%s2092] sm:$0xff] %vm2088, 0.0
        %2094 = vst.msk [vmem:[%s2092 + $0x8] sm:$0x3f] %vm2090, 0.0
        %vm2095 = vcmask 57344
        %2096 = vst.msk [vmem:[#allocation3] sm:$0x1] %vm2095, 0.0
        %2097 = vst.msk [vmem:[#allocation3 + $0x10] sm:$0x1] %vm2095, 0.0
        %2098 = vst.msk [vmem:[#allocation3 + $0x20] sm:$0x1] %vm2095, 0.0
        %2099 = vst.msk [vmem:[#allocation3 + $0x30] sm:$0x1] %vm2095, 0.0
        %2100 = vst.msk [vmem:[#allocation3 + $0x40] sm:$0x1] %vm2095, 0.0
        %2101 = vst.msk [vmem:[#allocation3 + $0x50] sm:$0x1] %vm2095, 0.0
        %2102 = vst.msk [vmem:[#allocation3 + $0x60] sm:$0x1] %vm2095, 0.0
        %2103 = vst.msk [vmem:[#allocation3 + $0x70] sm:$0x1] %vm2095, 0.0
        %2104 = vst.msk [vmem:[#allocation3 + $0x80] sm:$0x1] %vm2095, 0.0
        %2105 = vst.msk [vmem:[#allocation3 + $0x90] sm:$0x1] %vm2095, 0.0
        %2106 = vst.msk [vmem:[#allocation3 + $0xa0] sm:$0x1] %vm2095, 0.0
        %2107 = vst.msk [vmem:[#allocation3 + $0xb0] sm:$0x1] %vm2095, 0.0
        %2108 = vst.msk [vmem:[#allocation3 + $0xc0] sm:$0x1] %vm2095, 0.0
        %2109 = vst.msk [vmem:[#allocation3 + $0xd0] sm:$0x1] %vm2095, 0.0
        %2110 = vst.msk [vmem:[#allocation3 + $0xd] sm:$0x1] %vm2095, 0.0
        %2111 = vst.msk [vmem:[#allocation3 + $0x1d] sm:$0x1] %vm2095, 0.0
        %2112 = vst.msk [vmem:[#allocation3 + $0x2d] sm:$0x1] %vm2095, 0.0
        %2113 = vst.msk [vmem:[#allocation3 + $0x3d] sm:$0x1] %vm2095, 0.0
        %2114 = vst.msk [vmem:[#allocation3 + $0x4d] sm:$0x1] %vm2095, 0.0
        %2115 = vst.msk [vmem:[#allocation3 + $0x5d] sm:$0x1] %vm2095, 0.0
        %2116 = vst.msk [vmem:[#allocation3 + $0x6d] sm:$0x1] %vm2095, 0.0
        %2117 = vst.msk [vmem:[#allocation3 + $0x7d] sm:$0x1] %vm2095, 0.0
        %2118 = vst.msk [vmem:[#allocation3 + $0x8d] sm:$0x1] %vm2095, 0.0
        %2119 = vst.msk [vmem:[#allocation3 + $0x9d] sm:$0x1] %vm2095, 0.0
        %2120 = vst.msk [vmem:[#allocation3 + $0xad] sm:$0x1] %vm2095, 0.0
        %2121 = vst.msk [vmem:[#allocation3 + $0xbd] sm:$0x1] %vm2095, 0.0
        %2122 = vst.msk [vmem:[#allocation3 + $0xcd] sm:$0x1] %vm2095, 0.0
        %2123 = vst.msk [vmem:[#allocation3 + $0xdd] sm:$0x1] %vm2095, 0.0
        %v2124 = vcombine.low %v1958, %v2064
        %v2125 = vcombine.low %v2065, %v1968
        %v2126 = vcombine.low %v1973, %v2067
        %v2127 = vcombine.low %v2068, %v1983
        %v2128 = vcombine.low %v1988, %v2070
        %v2129 = vcombine.low %v2071, %v1998
        %v2130 = vcombine.low %v2003, %v2073
        %v2131 = vcombine.low %v2074, %v2013
        %v2132 = vcombine.low %v2018, %v2076
        %v2133 = vcombine.low %v2077, %v2028
        %v2134 = vcombine.low %v2033, %v2079
        %v2135 = vcombine.low %v2080, %v2043
        %s2148 = scalar_lea.vmem [#allocation3], 16
        %2149 = vst.msk [vmem:[%s2148 + $0x1] sm:$0xff] %vm2088, %v2124
        %vm2150 = vcmask 60416
        %2151 = vst.msk [vmem:[%s2148 + $0x9] sm:$0xf] %vm2150, %v1963
        %2152 = vst.msk [vmem:[%s2148 + $0x11] sm:$0xff] %vm2088, %v2125
        %2153 = vst.msk [vmem:[%s2148 + $0x19] sm:$0xf] %vm2150, %v2066
        %2154 = vst.msk [vmem:[%s2148 + $0x21] sm:$0xff] %vm2088, %v2126
        %2155 = vst.msk [vmem:[%s2148 + $0x29] sm:$0xf] %vm2150, %v1978
        %2156 = vst.msk [vmem:[%s2148 + $0x31] sm:$0xff] %vm2088, %v2127
        %2157 = vst.msk [vmem:[%s2148 + $0x39] sm:$0xf] %vm2150, %v2069
        %2158 = vst.msk [vmem:[%s2148 + $0x41] sm:$0xff] %vm2088, %v2128
        %2159 = vst.msk [vmem:[%s2148 + $0x49] sm:$0xf] %vm2150, %v1993
        %2160 = vst.msk [vmem:[%s2148 + $0x51] sm:$0xff] %vm2088, %v2129
        %2161 = vst.msk [vmem:[%s2148 + $0x59] sm:$0xf] %vm2150, %v2072
        %2162 = vst.msk [vmem:[%s2148 + $0x61] sm:$0xff] %vm2088, %v2130
        %2163 = vst.msk [vmem:[%s2148 + $0x69] sm:$0xf] %vm2150, %v2008
        %2164 = vst.msk [vmem:[%s2148 + $0x71] sm:$0xff] %vm2088, %v2131
        %2165 = vst.msk [vmem:[%s2148 + $0x79] sm:$0xf] %vm2150, %v2075
        %2166 = vst.msk [vmem:[%s2148 + $0x81] sm:$0xff] %vm2088, %v2132
        %2167 = vst.msk [vmem:[%s2148 + $0x89] sm:$0xf] %vm2150, %v2023
        %2168 = vst.msk [vmem:[%s2148 + $0x91] sm:$0xff] %vm2088, %v2133
        %2169 = vst.msk [vmem:[%s2148 + $0x99] sm:$0xf] %vm2150, %v2078
        %2170 = vst.msk [vmem:[%s2148 + $0xa1] sm:$0xff] %vm2088, %v2134
        %2171 = vst.msk [vmem:[%s2148 + $0xa9] sm:$0xf] %vm2150, %v2038
        %2172 = vst.msk [vmem:[%s2148 + $0xb1] sm:$0xff] %vm2088, %v2135
        %2173 = vst.msk [vmem:[%s2148 + $0xb9] sm:$0xf] %vm2150, %v2081
        %v2174 = vld [vmem:[#allocation3] sm:$0xff]
        %v2175 = vld [vmem:[#allocation3 + $0x8] sm:$0xf]
        %v2176 = vld [vmem:[#allocation3 + $0x10] sm:$0xff]
        %v2177 = vld [vmem:[#allocation3 + $0x18] sm:$0xf]
        %v2178 = vld [vmem:[#allocation3 + $0x20] sm:$0xff]
        %v2179 = vld [vmem:[#allocation3 + $0x28] sm:$0xf]
        %v2180 = vld [vmem:[#allocation3 + $0x30] sm:$0xff]
        %v2181 = vld [vmem:[#allocation3 + $0x38] sm:$0xf]
        %v2182 = vld [vmem:[#allocation3 + $0x40] sm:$0xff]
        %v2183 = vld [vmem:[#allocation3 + $0x48] sm:$0xf]
        %v2184 = vld [vmem:[#allocation3 + $0x50] sm:$0xff]
        %v2185 = vld [vmem:[#allocation3 + $0x58] sm:$0xf]
        %v2186 = vld [vmem:[#allocation3 + $0x60] sm:$0xff]
        %v2187 = vld [vmem:[#allocation3 + $0x68] sm:$0xf]
        %v2188 = vld [vmem:[#allocation3 + $0x70] sm:$0xff]
        %v2189 = vld [vmem:[#allocation3 + $0x78] sm:$0xf]
        %v2190 = vld [vmem:[#allocation3 + $0x80] sm:$0xff]
        %v2191 = vld [vmem:[#allocation3 + $0x88] sm:$0xf]
        %v2192 = vld [vmem:[#allocation3 + $0x90] sm:$0xff]
        %v2193 = vld [vmem:[#allocation3 + $0x98] sm:$0xf]
        %v2194 = vld [vmem:[#allocation3 + $0xa0] sm:$0xff]
        %v2195 = vld [vmem:[#allocation3 + $0xa8] sm:$0xf]
        %v2196 = vld [vmem:[#allocation3 + $0xb0] sm:$0xff]
        %v2197 = vld [vmem:[#allocation3 + $0xb8] sm:$0xf]
        %2198 = vst.msk [vmem:[#allocation6] sm:$0xff] %vm2088, %v2174
        %2199 = vst.msk [vmem:[#allocation6 + $0x8] sm:$0xf] %vm2150, %v2175
        %2200 = vst.msk [vmem:[#allocation6 + $0x10] sm:$0xff] %vm2088, %v2176
        %2201 = vst.msk [vmem:[#allocation6 + $0x18] sm:$0xf] %vm2150, %v2177
        %2202 = vst.msk [vmem:[#allocation6 + $0x20] sm:$0xff] %vm2088, %v2178
        %2203 = vst.msk [vmem:[#allocation6 + $0x28] sm:$0xf] %vm2150, %v2179
        %2204 = vst.msk [vmem:[#allocation6 + $0x30] sm:$0xff] %vm2088, %v2180
        %2205 = vst.msk [vmem:[#allocation6 + $0x38] sm:$0xf] %vm2150, %v2181
        %2206 = vst.msk [vmem:[#allocation6 + $0x40] sm:$0xff] %vm2088, %v2182
        %2207 = vst.msk [vmem:[#allocation6 + $0x48] sm:$0xf] %vm2150, %v2183
        %2208 = vst.msk [vmem:[#allocation6 + $0x50] sm:$0xff] %vm2088, %v2184
        %2209 = vst.msk [vmem:[#allocation6 + $0x58] sm:$0xf] %vm2150, %v2185
        %2210 = vst.msk [vmem:[#allocation6 + $0x60] sm:$0xff] %vm2088, %v2186
        %2211 = vst.msk [vmem:[#allocation6 + $0x68] sm:$0xf] %vm2150, %v2187
        %2212 = vst.msk [vmem:[#allocation6 + $0x70] sm:$0xff] %vm2088, %v2188
        %2213 = vst.msk [vmem:[#allocation6 + $0x78] sm:$0xf] %vm2150, %v2189
        %2214 = vst.msk [vmem:[#allocation6 + $0x80] sm:$0xff] %vm2088, %v2190
        %2215 = vst.msk [vmem:[#allocation6 + $0x88] sm:$0xf] %vm2150, %v2191
        %2216 = vst.msk [vmem:[#allocation6 + $0x90] sm:$0xff] %vm2088, %v2192
        %2217 = vst.msk [vmem:[#allocation6 + $0x98] sm:$0xf] %vm2150, %v2193
        %2218 = vst.msk [vmem:[#allocation6 + $0xa0] sm:$0xff] %vm2088, %v2194
        %2219 = vst.msk [vmem:[#allocation6 + $0xa8] sm:$0xf] %vm2150, %v2195
        %2220 = vst.msk [vmem:[#allocation6 + $0xb0] sm:$0xff] %vm2088, %v2196
        %2221 = vst.msk [vmem:[#allocation6 + $0xb8] sm:$0xf] %vm2150, %v2197
        %v2222 = vld [vmem:[#allocation3 + $0x1] sm:$0xff]
        %v2223 = vld [vmem:[#allocation3 + $0x9] sm:$0xf]
        %v2224 = vld [vmem:[#allocation3 + $0x11] sm:$0xff]
        %v2225 = vld [vmem:[#allocation3 + $0x19] sm:$0xf]
        %v2226 = vld [vmem:[#allocation3 + $0x21] sm:$0xff]
        %v2227 = vld [vmem:[#allocation3 + $0x29] sm:$0xf]
        %v2228 = vld [vmem:[#allocation3 + $0x31] sm:$0xff]
        %v2229 = vld [vmem:[#allocation3 + $0x39] sm:$0xf]
        %v2230 = vld [vmem:[#allocation3 + $0x41] sm:$0xff]
        %v2231 = vld [vmem:[#allocation3 + $0x49] sm:$0xf]
        %v2232 = vld [vmem:[#allocation3 + $0x51] sm:$0xff]
        %v2233 = vld [vmem:[#allocation3 + $0x59] sm:$0xf]
        %v2234 = vld [vmem:[#allocation3 + $0x61] sm:$0xff]
        %v2235 = vld [vmem:[#allocation3 + $0x69] sm:$0xf]
        %v2236 = vld [vmem:[#allocation3 + $0x71] sm:$0xff]
        %v2237 = vld [vmem:[#allocation3 + $0x79] sm:$0xf]
        %v2238 = vld [vmem:[#allocation3 + $0x81] sm:$0xff]
        %v2239 = vld [vmem:[#allocation3 + $0x89] sm:$0xf]
        %v2240 = vld [vmem:[#allocation3 + $0x91] sm:$0xff]
        %v2241 = vld [vmem:[#allocation3 + $0x99] sm:$0xf]
        %v2242 = vld [vmem:[#allocation3 + $0xa1] sm:$0xff]
        %v2243 = vld [vmem:[#allocation3 + $0xa9] sm:$0xf]
        %v2244 = vld [vmem:[#allocation3 + $0xb1] sm:$0xff]
        %v2245 = vld [vmem:[#allocation3 + $0xb9] sm:$0xf]
        %2270 = vrot.lane.b32.xlu0 %v2222, 8
        %v2271 = vpop.permute.xlu0 %2270
        %2272 = vrot.lane.b32.xlu0 %v2223, 8
        %v2273 = vpop.permute.xlu0 %2272
        %2274 = vrot.lane.b32.xlu0 %v2224, 8
        %v2275 = vpop.permute.xlu0 %2274
        %2276 = vrot.lane.b32.xlu0 %v2225, 8
        %v2277 = vpop.permute.xlu0 %2276
        %2278 = vrot.lane.b32.xlu0 %v2226, 8
        %v2279 = vpop.permute.xlu0 %2278
        %2280 = vrot.lane.b32.xlu0 %v2227, 8
        %v2281 = vpop.permute.xlu0 %2280
        %2282 = vrot.lane.b32.xlu0 %v2228, 8
        %v2283 = vpop.permute.xlu0 %2282
        %2284 = vrot.lane.b32.xlu0 %v2229, 8
        %v2285 = vpop.permute.xlu0 %2284
        %2286 = vrot.lane.b32.xlu0 %v2230, 8
        %v2287 = vpop.permute.xlu0 %2286
        %2288 = vrot.lane.b32.xlu0 %v2231, 8
        %v2289 = vpop.permute.xlu0 %2288
        %2290 = vrot.lane.b32.xlu0 %v2232, 8
        %v2291 = vpop.permute.xlu0 %2290
        %2292 = vrot.lane.b32.xlu0 %v2233, 8
        %v2293 = vpop.permute.xlu0 %2292
        %2294 = vrot.lane.b32.xlu0 %v2234, 8
        %v2295 = vpop.permute.xlu0 %2294
        %2296 = vrot.lane.b32.xlu0 %v2235, 8
        %v2297 = vpop.permute.xlu0 %2296
        %2298 = vrot.lane.b32.xlu0 %v2236, 8
        %v2299 = vpop.permute.xlu0 %2298
        %2300 = vrot.lane.b32.xlu0 %v2237, 8
        %v2301 = vpop.permute.xlu0 %2300
        %2302 = vrot.lane.b32.xlu0 %v2238, 8
        %v2303 = vpop.permute.xlu0 %2302
        %2304 = vrot.lane.b32.xlu0 %v2239, 8
        %v2305 = vpop.permute.xlu0 %2304
        %2306 = vrot.lane.b32.xlu0 %v2240, 8
        %v2307 = vpop.permute.xlu0 %2306
        %2308 = vrot.lane.b32.xlu0 %v2241, 8
        %v2309 = vpop.permute.xlu0 %2308
        %2310 = vrot.lane.b32.xlu0 %v2242, 8
        %v2311 = vpop.permute.xlu0 %2310
        %2312 = vrot.lane.b32.xlu0 %v2243, 8
        %v2313 = vpop.permute.xlu0 %2312
        %2314 = vrot.lane.b32.xlu0 %v2244, 8
        %v2315 = vpop.permute.xlu0 %2314
        %2316 = vrot.lane.b32.xlu0 %v2245, 8
        %v2317 = vpop.permute.xlu0 %2316
        %vm2342 = vcmask 130112
        %2343 = vst.msk [vmem:[#allocation6] sm:$0xff] %vm2342, %v2271
        %vm2344 = vcmask 126016
        %2345 = vst.msk [vmem:[#allocation6 + $0x8] sm:$0xf] %vm2344, %v2273
        %2346 = vst.msk [vmem:[#allocation6 + $0x10] sm:$0xff] %vm2342, %v2275
        %2347 = vst.msk [vmem:[#allocation6 + $0x18] sm:$0xf] %vm2344, %v2277
        %2348 = vst.msk [vmem:[#allocation6 + $0x20] sm:$0xff] %vm2342, %v2279
        %2349 = vst.msk [vmem:[#allocation6 + $0x28] sm:$0xf] %vm2344, %v2281
        %2350 = vst.msk [vmem:[#allocation6 + $0x30] sm:$0xff] %vm2342, %v2283
        %2351 = vst.msk [vmem:[#allocation6 + $0x38] sm:$0xf] %vm2344, %v2285
        %2352 = vst.msk [vmem:[#allocation6 + $0x40] sm:$0xff] %vm2342, %v2287
        %2353 = vst.msk [vmem:[#allocation6 + $0x48] sm:$0xf] %vm2344, %v2289
        %2354 = vst.msk [vmem:[#allocation6 + $0x50] sm:$0xff] %vm2342, %v2291
        %2355 = vst.msk [vmem:[#allocation6 + $0x58] sm:$0xf] %vm2344, %v2293
        %2356 = vst.msk [vmem:[#allocation6 + $0x60] sm:$0xff] %vm2342, %v2295
        %2357 = vst.msk [vmem:[#allocation6 + $0x68] sm:$0xf] %vm2344, %v2297
        %2358 = vst.msk [vmem:[#allocation6 + $0x70] sm:$0xff] %vm2342, %v2299
        %2359 = vst.msk [vmem:[#allocation6 + $0x78] sm:$0xf] %vm2344, %v2301
        %2360 = vst.msk [vmem:[#allocation6 + $0x80] sm:$0xff] %vm2342, %v2303
        %2361 = vst.msk [vmem:[#allocation6 + $0x88] sm:$0xf] %vm2344, %v2305
        %2362 = vst.msk [vmem:[#allocation6 + $0x90] sm:$0xff] %vm2342, %v2307
        %2363 = vst.msk [vmem:[#allocation6 + $0x98] sm:$0xf] %vm2344, %v2309
        %2364 = vst.msk [vmem:[#allocation6 + $0xa0] sm:$0xff] %vm2342, %v2311
        %2365 = vst.msk [vmem:[#allocation6 + $0xa8] sm:$0xf] %vm2344, %v2313
        %2366 = vst.msk [vmem:[#allocation6 + $0xb0] sm:$0xff] %vm2342, %v2315
        %2367 = vst.msk [vmem:[#allocation6 + $0xb8] sm:$0xf] %vm2344, %v2317
        %v2368 = vld [vmem:[#allocation3 + $0x2] sm:$0xff]
        %v2369 = vld [vmem:[#allocation3 + $0xa] sm:$0xf]
        %v2370 = vld [vmem:[#allocation3 + $0x12] sm:$0xff]
        %v2371 = vld [vmem:[#allocation3 + $0x1a] sm:$0xf]
        %v2372 = vld [vmem:[#allocation3 + $0x22] sm:$0xff]
        %v2373 = vld [vmem:[#allocation3 + $0x2a] sm:$0xf]
        %v2374 = vld [vmem:[#allocation3 + $0x32] sm:$0xff]
        %v2375 = vld [vmem:[#allocation3 + $0x3a] sm:$0xf]
        %v2376 = vld [vmem:[#allocation3 + $0x42] sm:$0xff]
        %v2377 = vld [vmem:[#allocation3 + $0x4a] sm:$0xf]
        %v2378 = vld [vmem:[#allocation3 + $0x52] sm:$0xff]
        %v2379 = vld [vmem:[#allocation3 + $0x5a] sm:$0xf]
        %v2380 = vld [vmem:[#allocation3 + $0x62] sm:$0xff]
        %v2381 = vld [vmem:[#allocation3 + $0x6a] sm:$0xf]
        %v2382 = vld [vmem:[#allocation3 + $0x72] sm:$0xff]
        %v2383 = vld [vmem:[#allocation3 + $0x7a] sm:$0xf]
        %v2384 = vld [vmem:[#allocation3 + $0x82] sm:$0xff]
        %v2385 = vld [vmem:[#allocation3 + $0x8a] sm:$0xf]
        %v2386 = vld [vmem:[#allocation3 + $0x92] sm:$0xff]
        %v2387 = vld [vmem:[#allocation3 + $0x9a] sm:$0xf]
        %v2388 = vld [vmem:[#allocation3 + $0xa2] sm:$0xff]
        %v2389 = vld [vmem:[#allocation3 + $0xaa] sm:$0xf]
        %v2390 = vld [vmem:[#allocation3 + $0xb2] sm:$0xff]
        %v2391 = vld [vmem:[#allocation3 + $0xba] sm:$0xf]
        %2416 = vrot.lane.b32.xlu0 %v2368, 16
        %v2417 = vpop.permute.xlu0 %2416
        %2418 = vrot.lane.b32.xlu0 %v2369, 16
        %v2419 = vpop.permute.xlu0 %2418
        %2420 = vrot.lane.b32.xlu0 %v2370, 16
        %v2421 = vpop.permute.xlu0 %2420
        %2422 = vrot.lane.b32.xlu0 %v2371, 16
        %v2423 = vpop.permute.xlu0 %2422
        %2424 = vrot.lane.b32.xlu0 %v2372, 16
        %v2425 = vpop.permute.xlu0 %2424
        %2426 = vrot.lane.b32.xlu0 %v2373, 16
        %v2427 = vpop.permute.xlu0 %2426
        %2428 = vrot.lane.b32.xlu0 %v2374, 16
        %v2429 = vpop.permute.xlu0 %2428
        %2430 = vrot.lane.b32.xlu0 %v2375, 16
        %v2431 = vpop.permute.xlu0 %2430
        %2432 = vrot.lane.b32.xlu0 %v2376, 16
        %v2433 = vpop.permute.xlu0 %2432
        %2434 = vrot.lane.b32.xlu0 %v2377, 16
        %v2435 = vpop.permute.xlu0 %2434
        %2436 = vrot.lane.b32.xlu0 %v2378, 16
        %v2437 = vpop.permute.xlu0 %2436
        %2438 = vrot.lane.b32.xlu0 %v2379, 16
        %v2439 = vpop.permute.xlu0 %2438
        %2440 = vrot.lane.b32.xlu0 %v2380, 16
        %v2441 = vpop.permute.xlu0 %2440
        %2442 = vrot.lane.b32.xlu0 %v2381, 16
        %v2443 = vpop.permute.xlu0 %2442
        %2444 = vrot.lane.b32.xlu0 %v2382, 16
        %v2445 = vpop.permute.xlu0 %2444
        %2446 = vrot.lane.b32.xlu0 %v2383, 16
        %v2447 = vpop.permute.xlu0 %2446
        %2448 = vrot.lane.b32.xlu0 %v2384, 16
        %v2449 = vpop.permute.xlu0 %2448
        %2450 = vrot.lane.b32.xlu0 %v2385, 16
        %v2451 = vpop.permute.xlu0 %2450
        %2452 = vrot.lane.b32.xlu0 %v2386, 16
        %v2453 = vpop.permute.xlu0 %2452
        %2454 = vrot.lane.b32.xlu0 %v2387, 16
        %v2455 = vpop.permute.xlu0 %2454
        %2456 = vrot.lane.b32.xlu0 %v2388, 16
        %v2457 = vpop.permute.xlu0 %2456
        %2458 = vrot.lane.b32.xlu0 %v2389, 16
        %v2459 = vpop.permute.xlu0 %2458
        %2460 = vrot.lane.b32.xlu0 %v2390, 16
        %v2461 = vpop.permute.xlu0 %2460
        %2462 = vrot.lane.b32.xlu0 %v2391, 16
        %v2463 = vpop.permute.xlu0 %2462
        %vm2488 = vcmask 195712
        %2489 = vst.msk [vmem:[#allocation6] sm:$0xff] %vm2488, %v2417
        %vm2490 = vcmask 191616
        %2491 = vst.msk [vmem:[#allocation6 + $0x8] sm:$0xf] %vm2490, %v2419
        %2492 = vst.msk [vmem:[#allocation6 + $0x10] sm:$0xff] %vm2488, %v2421
        %2493 = vst.msk [vmem:[#allocation6 + $0x18] sm:$0xf] %vm2490, %v2423
        %2494 = vst.msk [vmem:[#allocation6 + $0x20] sm:$0xff] %vm2488, %v2425
        %2495 = vst.msk [vmem:[#allocation6 + $0x28] sm:$0xf] %vm2490, %v2427
        %2496 = vst.msk [vmem:[#allocation6 + $0x30] sm:$0xff] %vm2488, %v2429
        %2497 = vst.msk [vmem:[#allocation6 + $0x38] sm:$0xf] %vm2490, %v2431
        %2498 = vst.msk [vmem:[#allocation6 + $0x40] sm:$0xff] %vm2488, %v2433
        %2499 = vst.msk [vmem:[#allocation6 + $0x48] sm:$0xf] %vm2490, %v2435
        %2500 = vst.msk [vmem:[#allocation6 + $0x50] sm:$0xff] %vm2488, %v2437
        %2501 = vst.msk [vmem:[#allocation6 + $0x58] sm:$0xf] %vm2490, %v2439
        %2502 = vst.msk [vmem:[#allocation6 + $0x60] sm:$0xff] %vm2488, %v2441
        %2503 = vst.msk [vmem:[#allocation6 + $0x68] sm:$0xf] %vm2490, %v2443
        %2504 = vst.msk [vmem:[#allocation6 + $0x70] sm:$0xff] %vm2488, %v2445
        %2505 = vst.msk [vmem:[#allocation6 + $0x78] sm:$0xf] %vm2490, %v2447
        %2506 = vst.msk [vmem:[#allocation6 + $0x80] sm:$0xff] %vm2488, %v2449
        %2507 = vst.msk [vmem:[#allocation6 + $0x88] sm:$0xf] %vm2490, %v2451
        %2508 = vst.msk [vmem:[#allocation6 + $0x90] sm:$0xff] %vm2488, %v2453
        %2509 = vst.msk [vmem:[#allocation6 + $0x98] sm:$0xf] %vm2490, %v2455
        %2510 = vst.msk [vmem:[#allocation6 + $0xa0] sm:$0xff] %vm2488, %v2457
        %2511 = vst.msk [vmem:[#allocation6 + $0xa8] sm:$0xf] %vm2490, %v2459
        %2512 = vst.msk [vmem:[#allocation6 + $0xb0] sm:$0xff] %vm2488, %v2461
        %2513 = vst.msk [vmem:[#allocation6 + $0xb8] sm:$0xf] %vm2490, %v2463
        %v2514 = vld [vmem:[%s2148] sm:$0xff]
        %v2515 = vld [vmem:[%s2148 + $0x8] sm:$0xf]
        %v2516 = vld [vmem:[%s2148 + $0x10] sm:$0xff]
        %v2517 = vld [vmem:[%s2148 + $0x18] sm:$0xf]
        %v2518 = vld [vmem:[%s2148 + $0x20] sm:$0xff]
        %v2519 = vld [vmem:[%s2148 + $0x28] sm:$0xf]
        %v2520 = vld [vmem:[%s2148 + $0x30] sm:$0xff]
        %v2521 = vld [vmem:[%s2148 + $0x38] sm:$0xf]
        %v2522 = vld [vmem:[%s2148 + $0x40] sm:$0xff]
        %v2523 = vld [vmem:[%s2148 + $0x48] sm:$0xf]
        %v2524 = vld [vmem:[%s2148 + $0x50] sm:$0xff]
        %v2525 = vld [vmem:[%s2148 + $0x58] sm:$0xf]
        %v2526 = vld [vmem:[%s2148 + $0x60] sm:$0xff]
        %v2527 = vld [vmem:[%s2148 + $0x68] sm:$0xf]
        %v2528 = vld [vmem:[%s2148 + $0x70] sm:$0xff]
        %v2529 = vld [vmem:[%s2148 + $0x78] sm:$0xf]
        %v2530 = vld [vmem:[%s2148 + $0x80] sm:$0xff]
        %v2531 = vld [vmem:[%s2148 + $0x88] sm:$0xf]
        %v2532 = vld [vmem:[%s2148 + $0x90] sm:$0xff]
        %v2533 = vld [vmem:[%s2148 + $0x98] sm:$0xf]
        %v2534 = vld [vmem:[%s2148 + $0xa0] sm:$0xff]
        %v2535 = vld [vmem:[%s2148 + $0xa8] sm:$0xf]
        %v2536 = vld [vmem:[%s2148 + $0xb0] sm:$0xff]
        %v2537 = vld [vmem:[%s2148 + $0xb8] sm:$0xf]
        %2562 = vrot.lane.b32.xlu0 %v2514, 24
        %v2563 = vpop.permute.xlu0 %2562
        %2564 = vrot.lane.b32.xlu0 %v2515, 24
        %v2565 = vpop.permute.xlu0 %2564
        %2566 = vrot.lane.b32.xlu0 %v2516, 24
        %v2567 = vpop.permute.xlu0 %2566
        %2568 = vrot.lane.b32.xlu0 %v2517, 24
        %v2569 = vpop.permute.xlu0 %2568
        %2570 = vrot.lane.b32.xlu0 %v2518, 24
        %v2571 = vpop.permute.xlu0 %2570
        %2572 = vrot.lane.b32.xlu0 %v2519, 24
        %v2573 = vpop.permute.xlu0 %2572
        %2574 = vrot.lane.b32.xlu0 %v2520, 24
        %v2575 = vpop.permute.xlu0 %2574
        %2576 = vrot.lane.b32.xlu0 %v2521, 24
        %v2577 = vpop.permute.xlu0 %2576
        %2578 = vrot.lane.b32.xlu0 %v2522, 24
        %v2579 = vpop.permute.xlu0 %2578
        %2580 = vrot.lane.b32.xlu0 %v2523, 24
        %v2581 = vpop.permute.xlu0 %2580
        %2582 = vrot.lane.b32.xlu0 %v2524, 24
        %v2583 = vpop.permute.xlu0 %2582
        %2584 = vrot.lane.b32.xlu0 %v2525, 24
        %v2585 = vpop.permute.xlu0 %2584
        %2586 = vrot.lane.b32.xlu0 %v2526, 24
        %v2587 = vpop.permute.xlu0 %2586
        %2588 = vrot.lane.b32.xlu0 %v2527, 24
        %v2589 = vpop.permute.xlu0 %2588
        %2590 = vrot.lane.b32.xlu0 %v2528, 24
        %v2591 = vpop.permute.xlu0 %2590
        %2592 = vrot.lane.b32.xlu0 %v2529, 24
        %v2593 = vpop.permute.xlu0 %2592
        %2594 = vrot.lane.b32.xlu0 %v2530, 24
        %v2595 = vpop.permute.xlu0 %2594
        %2596 = vrot.lane.b32.xlu0 %v2531, 24
        %v2597 = vpop.permute.xlu0 %2596
        %2598 = vrot.lane.b32.xlu0 %v2532, 24
        %v2599 = vpop.permute.xlu0 %2598
        %2600 = vrot.lane.b32.xlu0 %v2533, 24
        %v2601 = vpop.permute.xlu0 %2600
        %2602 = vrot.lane.b32.xlu0 %v2534, 24
        %v2603 = vpop.permute.xlu0 %2602
        %2604 = vrot.lane.b32.xlu0 %v2535, 24
        %v2605 = vpop.permute.xlu0 %2604
        %2606 = vrot.lane.b32.xlu0 %v2536, 24
        %v2607 = vpop.permute.xlu0 %2606
        %2608 = vrot.lane.b32.xlu0 %v2537, 24
        %v2609 = vpop.permute.xlu0 %2608
        %vm2634 = vcmask 261312
        %2635 = vst.msk [vmem:[#allocation6] sm:$0xff] %vm2634, %v2563
        %vm2636 = vcmask 257216
        %2637 = vst.msk [vmem:[#allocation6 + $0x8] sm:$0xf] %vm2636, %v2565
        %2638 = vst.msk [vmem:[#allocation6 + $0x10] sm:$0xff] %vm2634, %v2567
        %2639 = vst.msk [vmem:[#allocation6 + $0x18] sm:$0xf] %vm2636, %v2569
        %2640 = vst.msk [vmem:[#allocation6 + $0x20] sm:$0xff] %vm2634, %v2571
        %2641 = vst.msk [vmem:[#allocation6 + $0x28] sm:$0xf] %vm2636, %v2573
        %2642 = vst.msk [vmem:[#allocation6 + $0x30] sm:$0xff] %vm2634, %v2575
        %2643 = vst.msk [vmem:[#allocation6 + $0x38] sm:$0xf] %vm2636, %v2577
        %2644 = vst.msk [vmem:[#allocation6 + $0x40] sm:$0xff] %vm2634, %v2579
        %2645 = vst.msk [vmem:[#allocation6 + $0x48] sm:$0xf] %vm2636, %v2581
        %2646 = vst.msk [vmem:[#allocation6 + $0x50] sm:$0xff] %vm2634, %v2583
        %2647 = vst.msk [vmem:[#allocation6 + $0x58] sm:$0xf] %vm2636, %v2585
        %2648 = vst.msk [vmem:[#allocation6 + $0x60] sm:$0xff] %vm2634, %v2587
        %2649 = vst.msk [vmem:[#allocation6 + $0x68] sm:$0xf] %vm2636, %v2589
        %2650 = vst.msk [vmem:[#allocation6 + $0x70] sm:$0xff] %vm2634, %v2591
        %2651 = vst.msk [vmem:[#allocation6 + $0x78] sm:$0xf] %vm2636, %v2593
        %2652 = vst.msk [vmem:[#allocation6 + $0x80] sm:$0xff] %vm2634, %v2595
        %2653 = vst.msk [vmem:[#allocation6 + $0x88] sm:$0xf] %vm2636, %v2597
        %2654 = vst.msk [vmem:[#allocation6 + $0x90] sm:$0xff] %vm2634, %v2599
        %2655 = vst.msk [vmem:[#allocation6 + $0x98] sm:$0xf] %vm2636, %v2601
        %2656 = vst.msk [vmem:[#allocation6 + $0xa0] sm:$0xff] %vm2634, %v2603
        %2657 = vst.msk [vmem:[#allocation6 + $0xa8] sm:$0xf] %vm2636, %v2605
        %2658 = vst.msk [vmem:[#allocation6 + $0xb0] sm:$0xff] %vm2634, %v2607
        %2659 = vst.msk [vmem:[#allocation6 + $0xb8] sm:$0xf] %vm2636, %v2609
        %v2660 = vld [vmem:[%s2148 + $0x1] sm:$0xff]
        %v2661 = vld [vmem:[%s2148 + $0x9] sm:$0xf]
        %v2662 = vld [vmem:[%s2148 + $0x11] sm:$0xff]
        %v2663 = vld [vmem:[%s2148 + $0x19] sm:$0xf]
        %v2664 = vld [vmem:[%s2148 + $0x21] sm:$0xff]
        %v2665 = vld [vmem:[%s2148 + $0x29] sm:$0xf]
        %v2666 = vld [vmem:[%s2148 + $0x31] sm:$0xff]
        %v2667 = vld [vmem:[%s2148 + $0x39] sm:$0xf]
        %v2668 = vld [vmem:[%s2148 + $0x41] sm:$0xff]
        %v2669 = vld [vmem:[%s2148 + $0x49] sm:$0xf]
        %v2670 = vld [vmem:[%s2148 + $0x51] sm:$0xff]
        %v2671 = vld [vmem:[%s2148 + $0x59] sm:$0xf]
        %v2672 = vld [vmem:[%s2148 + $0x61] sm:$0xff]
        %v2673 = vld [vmem:[%s2148 + $0x69] sm:$0xf]
        %v2674 = vld [vmem:[%s2148 + $0x71] sm:$0xff]
        %v2675 = vld [vmem:[%s2148 + $0x79] sm:$0xf]
        %v2676 = vld [vmem:[%s2148 + $0x81] sm:$0xff]
        %v2677 = vld [vmem:[%s2148 + $0x89] sm:$0xf]
        %v2678 = vld [vmem:[%s2148 + $0x91] sm:$0xff]
        %v2679 = vld [vmem:[%s2148 + $0x99] sm:$0xf]
        %v2680 = vld [vmem:[%s2148 + $0xa1] sm:$0xff]
        %v2681 = vld [vmem:[%s2148 + $0xa9] sm:$0xf]
        %v2682 = vld [vmem:[%s2148 + $0xb1] sm:$0xff]
        %v2683 = vld [vmem:[%s2148 + $0xb9] sm:$0xf]
        %2708 = vrot.lane.b32.xlu0 %v2660, 32
        %v2709 = vpop.permute.xlu0 %2708
        %2710 = vrot.lane.b32.xlu0 %v2661, 32
        %v2711 = vpop.permute.xlu0 %2710
        %2712 = vrot.lane.b32.xlu0 %v2662, 32
        %v2713 = vpop.permute.xlu0 %2712
        %2714 = vrot.lane.b32.xlu0 %v2663, 32
        %v2715 = vpop.permute.xlu0 %2714
        %2716 = vrot.lane.b32.xlu0 %v2664, 32
        %v2717 = vpop.permute.xlu0 %2716
        %2718 = vrot.lane.b32.xlu0 %v2665, 32
        %v2719 = vpop.permute.xlu0 %2718
        %2720 = vrot.lane.b32.xlu0 %v2666, 32
        %v2721 = vpop.permute.xlu0 %2720
        %2722 = vrot.lane.b32.xlu0 %v2667, 32
        %v2723 = vpop.permute.xlu0 %2722
        %2724 = vrot.lane.b32.xlu0 %v2668, 32
        %v2725 = vpop.permute.xlu0 %2724
        %2726 = vrot.lane.b32.xlu0 %v2669, 32
        %v2727 = vpop.permute.xlu0 %2726
        %2728 = vrot.lane.b32.xlu0 %v2670, 32
        %v2729 = vpop.permute.xlu0 %2728
        %2730 = vrot.lane.b32.xlu0 %v2671, 32
        %v2731 = vpop.permute.xlu0 %2730
        %2732 = vrot.lane.b32.xlu0 %v2672, 32
        %v2733 = vpop.permute.xlu0 %2732
        %2734 = vrot.lane.b32.xlu0 %v2673, 32
        %v2735 = vpop.permute.xlu0 %2734
        %2736 = vrot.lane.b32.xlu0 %v2674, 32
        %v2737 = vpop.permute.xlu0 %2736
        %2738 = vrot.lane.b32.xlu0 %v2675, 32
        %v2739 = vpop.permute.xlu0 %2738
        %2740 = vrot.lane.b32.xlu0 %v2676, 32
        %v2741 = vpop.permute.xlu0 %2740
        %2742 = vrot.lane.b32.xlu0 %v2677, 32
        %v2743 = vpop.permute.xlu0 %2742
        %2744 = vrot.lane.b32.xlu0 %v2678, 32
        %v2745 = vpop.permute.xlu0 %2744
        %2746 = vrot.lane.b32.xlu0 %v2679, 32
        %v2747 = vpop.permute.xlu0 %2746
        %2748 = vrot.lane.b32.xlu0 %v2680, 32
        %v2749 = vpop.permute.xlu0 %2748
        %2750 = vrot.lane.b32.xlu0 %v2681, 32
        %v2751 = vpop.permute.xlu0 %2750
        %2752 = vrot.lane.b32.xlu0 %v2682, 32
        %v2753 = vpop.permute.xlu0 %2752
        %2754 = vrot.lane.b32.xlu0 %v2683, 32
        %v2755 = vpop.permute.xlu0 %2754
        %vm2780 = vcmask 326912
        %2781 = vst.msk [vmem:[#allocation6] sm:$0xff] %vm2780, %v2709
        %vm2782 = vcmask 322816
        %2783 = vst.msk [vmem:[#allocation6 + $0x8] sm:$0xf] %vm2782, %v2711
        %2784 = vst.msk [vmem:[#allocation6 + $0x10] sm:$0xff] %vm2780, %v2713
        %2785 = vst.msk [vmem:[#allocation6 + $0x18] sm:$0xf] %vm2782, %v2715
        %2786 = vst.msk [vmem:[#allocation6 + $0x20] sm:$0xff] %vm2780, %v2717
        %2787 = vst.msk [vmem:[#allocation6 + $0x28] sm:$0xf] %vm2782, %v2719
        %2788 = vst.msk [vmem:[#allocation6 + $0x30] sm:$0xff] %vm2780, %v2721
        %2789 = vst.msk [vmem:[#allocation6 + $0x38] sm:$0xf] %vm2782, %v2723
        %2790 = vst.msk [vmem:[#allocation6 + $0x40] sm:$0xff] %vm2780, %v2725
        %2791 = vst.msk [vmem:[#allocation6 + $0x48] sm:$0xf] %vm2782, %v2727
        %2792 = vst.msk [vmem:[#allocation6 + $0x50] sm:$0xff] %vm2780, %v2729
        %2793 = vst.msk [vmem:[#allocation6 + $0x58] sm:$0xf] %vm2782, %v2731
        %2794 = vst.msk [vmem:[#allocation6 + $0x60] sm:$0xff] %vm2780, %v2733
        %2795 = vst.msk [vmem:[#allocation6 + $0x68] sm:$0xf] %vm2782, %v2735
        %2796 = vst.msk [vmem:[#allocation6 + $0x70] sm:$0xff] %vm2780, %v2737
        %2797 = vst.msk [vmem:[#allocation6 + $0x78] sm:$0xf] %vm2782, %v2739
        %2798 = vst.msk [vmem:[#allocation6 + $0x80] sm:$0xff] %vm2780, %v2741
        %2799 = vst.msk [vmem:[#allocation6 + $0x88] sm:$0xf] %vm2782, %v2743
        %2800 = vst.msk [vmem:[#allocation6 + $0x90] sm:$0xff] %vm2780, %v2745
        %2801 = vst.msk [vmem:[#allocation6 + $0x98] sm:$0xf] %vm2782, %v2747
        %2802 = vst.msk [vmem:[#allocation6 + $0xa0] sm:$0xff] %vm2780, %v2749
        %2803 = vst.msk [vmem:[#allocation6 + $0xa8] sm:$0xf] %vm2782, %v2751
        %2804 = vst.msk [vmem:[#allocation6 + $0xb0] sm:$0xff] %vm2780, %v2753
        %2805 = vst.msk [vmem:[#allocation6 + $0xb8] sm:$0xf] %vm2782, %v2755
        %v2806 = vld [vmem:[%s2148 + $0x2] sm:$0xff]
        %v2807 = vld [vmem:[%s2148 + $0xa] sm:$0xf]
        %v2808 = vld [vmem:[%s2148 + $0x12] sm:$0xff]
        %v2809 = vld [vmem:[%s2148 + $0x1a] sm:$0xf]
        %v2810 = vld [vmem:[%s2148 + $0x22] sm:$0xff]
        %v2811 = vld [vmem:[%s2148 + $0x2a] sm:$0xf]
        %v2812 = vld [vmem:[%s2148 + $0x32] sm:$0xff]
        %v2813 = vld [vmem:[%s2148 + $0x3a] sm:$0xf]
        %v2814 = vld [vmem:[%s2148 + $0x42] sm:$0xff]
        %v2815 = vld [vmem:[%s2148 + $0x4a] sm:$0xf]
        %v2816 = vld [vmem:[%s2148 + $0x52] sm:$0xff]
        %v2817 = vld [vmem:[%s2148 + $0x5a] sm:$0xf]
        %v2818 = vld [vmem:[%s2148 + $0x62] sm:$0xff]
        %v2819 = vld [vmem:[%s2148 + $0x6a] sm:$0xf]
        %v2820 = vld [vmem:[%s2148 + $0x72] sm:$0xff]
        %v2821 = vld [vmem:[%s2148 + $0x7a] sm:$0xf]
        %v2822 = vld [vmem:[%s2148 + $0x82] sm:$0xff]
        %v2823 = vld [vmem:[%s2148 + $0x8a] sm:$0xf]
        %v2824 = vld [vmem:[%s2148 + $0x92] sm:$0xff]
        %v2825 = vld [vmem:[%s2148 + $0x9a] sm:$0xf]
        %v2826 = vld [vmem:[%s2148 + $0xa2] sm:$0xff]
        %v2827 = vld [vmem:[%s2148 + $0xaa] sm:$0xf]
        %v2828 = vld [vmem:[%s2148 + $0xb2] sm:$0xff]
        %v2829 = vld [vmem:[%s2148 + $0xba] sm:$0xf]
        %2854 = vrot.lane.b32.xlu0 %v2806, 40
        %v2855 = vpop.permute.xlu0 %2854
        %2856 = vrot.lane.b32.xlu0 %v2807, 40
        %v2857 = vpop.permute.xlu0 %2856
        %2858 = vrot.lane.b32.xlu0 %v2808, 40
        %v2859 = vpop.permute.xlu0 %2858
        %2860 = vrot.lane.b32.xlu0 %v2809, 40
        %v2861 = vpop.permute.xlu0 %2860
        %2862 = vrot.lane.b32.xlu0 %v2810, 40
        %v2863 = vpop.permute.xlu0 %2862
        %2864 = vrot.lane.b32.xlu0 %v2811, 40
        %v2865 = vpop.permute.xlu0 %2864
        %2866 = vrot.lane.b32.xlu0 %v2812, 40
        %v2867 = vpop.permute.xlu0 %2866
        %2868 = vrot.lane.b32.xlu0 %v2813, 40
        %v2869 = vpop.permute.xlu0 %2868
        %2870 = vrot.lane.b32.xlu0 %v2814, 40
        %v2871 = vpop.permute.xlu0 %2870
        %2872 = vrot.lane.b32.xlu0 %v2815, 40
        %v2873 = vpop.permute.xlu0 %2872
        %2874 = vrot.lane.b32.xlu0 %v2816, 40
        %v2875 = vpop.permute.xlu0 %2874
        %2876 = vrot.lane.b32.xlu0 %v2817, 40
        %v2877 = vpop.permute.xlu0 %2876
        %2878 = vrot.lane.b32.xlu0 %v2818, 40
        %v2879 = vpop.permute.xlu0 %2878
        %2880 = vrot.lane.b32.xlu0 %v2819, 40
        %v2881 = vpop.permute.xlu0 %2880
        %2882 = vrot.lane.b32.xlu0 %v2820, 40
        %v2883 = vpop.permute.xlu0 %2882
        %2884 = vrot.lane.b32.xlu0 %v2821, 40
        %v2885 = vpop.permute.xlu0 %2884
        %2886 = vrot.lane.b32.xlu0 %v2822, 40
        %v2887 = vpop.permute.xlu0 %2886
        %2888 = vrot.lane.b32.xlu0 %v2823, 40
        %v2889 = vpop.permute.xlu0 %2888
        %2890 = vrot.lane.b32.xlu0 %v2824, 40
        %v2891 = vpop.permute.xlu0 %2890
        %2892 = vrot.lane.b32.xlu0 %v2825, 40
        %v2893 = vpop.permute.xlu0 %2892
        %2894 = vrot.lane.b32.xlu0 %v2826, 40
        %v2895 = vpop.permute.xlu0 %2894
        %2896 = vrot.lane.b32.xlu0 %v2827, 40
        %v2897 = vpop.permute.xlu0 %2896
        %2898 = vrot.lane.b32.xlu0 %v2828, 40
        %v2899 = vpop.permute.xlu0 %2898
        %2900 = vrot.lane.b32.xlu0 %v2829, 40
        %v2901 = vpop.permute.xlu0 %2900
        %vm2926 = vcmask 392512
        %2927 = vst.msk [vmem:[#allocation6] sm:$0xff] %vm2926, %v2855
        %vm2928 = vcmask 388416
        %2929 = vst.msk [vmem:[#allocation6 + $0x8] sm:$0xf] %vm2928, %v2857
        %2930 = vst.msk [vmem:[#allocation6 + $0x10] sm:$0xff] %vm2926, %v2859
        %2931 = vst.msk [vmem:[#allocation6 + $0x18] sm:$0xf] %vm2928, %v2861
        %2932 = vst.msk [vmem:[#allocation6 + $0x20] sm:$0xff] %vm2926, %v2863
        %2933 = vst.msk [vmem:[#allocation6 + $0x28] sm:$0xf] %vm2928, %v2865
        %2934 = vst.msk [vmem:[#allocation6 + $0x30] sm:$0xff] %vm2926, %v2867
        %2935 = vst.msk [vmem:[#allocation6 + $0x38] sm:$0xf] %vm2928, %v2869
        %2936 = vst.msk [vmem:[#allocation6 + $0x40] sm:$0xff] %vm2926, %v2871
        %2937 = vst.msk [vmem:[#allocation6 + $0x48] sm:$0xf] %vm2928, %v2873
        %2938 = vst.msk [vmem:[#allocation6 + $0x50] sm:$0xff] %vm2926, %v2875
        %2939 = vst.msk [vmem:[#allocation6 + $0x58] sm:$0xf] %vm2928, %v2877
        %2940 = vst.msk [vmem:[#allocation6 + $0x60] sm:$0xff] %vm2926, %v2879
        %2941 = vst.msk [vmem:[#allocation6 + $0x68] sm:$0xf] %vm2928, %v2881
        %2942 = vst.msk [vmem:[#allocation6 + $0x70] sm:$0xff] %vm2926, %v2883
        %2943 = vst.msk [vmem:[#allocation6 + $0x78] sm:$0xf] %vm2928, %v2885
        %2944 = vst.msk [vmem:[#allocation6 + $0x80] sm:$0xff] %vm2926, %v2887
        %2945 = vst.msk [vmem:[#allocation6 + $0x88] sm:$0xf] %vm2928, %v2889
        %2946 = vst.msk [vmem:[#allocation6 + $0x90] sm:$0xff] %vm2926, %v2891
        %2947 = vst.msk [vmem:[#allocation6 + $0x98] sm:$0xf] %vm2928, %v2893
        %2948 = vst.msk [vmem:[#allocation6 + $0xa0] sm:$0xff] %vm2926, %v2895
        %2949 = vst.msk [vmem:[#allocation6 + $0xa8] sm:$0xf] %vm2928, %v2897
        %2950 = vst.msk [vmem:[#allocation6 + $0xb0] sm:$0xff] %vm2926, %v2899
        %2951 = vst.msk [vmem:[#allocation6 + $0xb8] sm:$0xf] %vm2928, %v2901
        %s2952 = scalar_lea.vmem [#allocation3], 32
        %v2953 = vld [vmem:[%s2952] sm:$0xff]
        %v2954 = vld [vmem:[%s2952 + $0x8] sm:$0xf]
        %v2955 = vld [vmem:[%s2952 + $0x10] sm:$0xff]
        %v2956 = vld [vmem:[%s2952 + $0x18] sm:$0xf]
        %v2957 = vld [vmem:[%s2952 + $0x20] sm:$0xff]
        %v2958 = vld [vmem:[%s2952 + $0x28] sm:$0xf]
        %v2959 = vld [vmem:[%s2952 + $0x30] sm:$0xff]
        %v2960 = vld [vmem:[%s2952 + $0x38] sm:$0xf]
        %v2961 = vld [vmem:[%s2952 + $0x40] sm:$0xff]
        %v2962 = vld [vmem:[%s2952 + $0x48] sm:$0xf]
        %v2963 = vld [vmem:[%s2952 + $0x50] sm:$0xff]
        %v2964 = vld [vmem:[%s2952 + $0x58] sm:$0xf]
        %v2965 = vld [vmem:[%s2952 + $0x60] sm:$0xff]
        %v2966 = vld [vmem:[%s2952 + $0x68] sm:$0xf]
        %v2967 = vld [vmem:[%s2952 + $0x70] sm:$0xff]
        %v2968 = vld [vmem:[%s2952 + $0x78] sm:$0xf]
        %v2969 = vld [vmem:[%s2952 + $0x80] sm:$0xff]
        %v2970 = vld [vmem:[%s2952 + $0x88] sm:$0xf]
        %v2971 = vld [vmem:[%s2952 + $0x90] sm:$0xff]
        %v2972 = vld [vmem:[%s2952 + $0x98] sm:$0xf]
        %v2973 = vld [vmem:[%s2952 + $0xa0] sm:$0xff]
        %v2974 = vld [vmem:[%s2952 + $0xa8] sm:$0xf]
        %v2975 = vld [vmem:[%s2952 + $0xb0] sm:$0xff]
        %v2976 = vld [vmem:[%s2952 + $0xb8] sm:$0xf]
        %3001 = vrot.lane.b32.xlu0 %v2953, 48
        %v3002 = vpop.permute.xlu0 %3001
        %3003 = vrot.lane.b32.xlu0 %v2954, 48
        %v3004 = vpop.permute.xlu0 %3003
        %3005 = vrot.lane.b32.xlu0 %v2955, 48
        %v3006 = vpop.permute.xlu0 %3005
        %3007 = vrot.lane.b32.xlu0 %v2956, 48
        %v3008 = vpop.permute.xlu0 %3007
        %3009 = vrot.lane.b32.xlu0 %v2957, 48
        %v3010 = vpop.permute.xlu0 %3009
        %3011 = vrot.lane.b32.xlu0 %v2958, 48
        %v3012 = vpop.permute.xlu0 %3011
        %3013 = vrot.lane.b32.xlu0 %v2959, 48
        %v3014 = vpop.permute.xlu0 %3013
        %3015 = vrot.lane.b32.xlu0 %v2960, 48
        %v3016 = vpop.permute.xlu0 %3015
        %3017 = vrot.lane.b32.xlu0 %v2961, 48
        %v3018 = vpop.permute.xlu0 %3017
        %3019 = vrot.lane.b32.xlu0 %v2962, 48
        %v3020 = vpop.permute.xlu0 %3019
        %3021 = vrot.lane.b32.xlu0 %v2963, 48
        %v3022 = vpop.permute.xlu0 %3021
        %3023 = vrot.lane.b32.xlu0 %v2964, 48
        %v3024 = vpop.permute.xlu0 %3023
        %3025 = vrot.lane.b32.xlu0 %v2965, 48
        %v3026 = vpop.permute.xlu0 %3025
        %3027 = vrot.lane.b32.xlu0 %v2966, 48
        %v3028 = vpop.permute.xlu0 %3027
        %3029 = vrot.lane.b32.xlu0 %v2967, 48
        %v3030 = vpop.permute.xlu0 %3029
        %3031 = vrot.lane.b32.xlu0 %v2968, 48
        %v3032 = vpop.permute.xlu0 %3031
        %3033 = vrot.lane.b32.xlu0 %v2969, 48
        %v3034 = vpop.permute.xlu0 %3033
        %3035 = vrot.lane.b32.xlu0 %v2970, 48
        %v3036 = vpop.permute.xlu0 %3035
        %3037 = vrot.lane.b32.xlu0 %v2971, 48
        %v3038 = vpop.permute.xlu0 %3037
        %3039 = vrot.lane.b32.xlu0 %v2972, 48
        %v3040 = vpop.permute.xlu0 %3039
        %3041 = vrot.lane.b32.xlu0 %v2973, 48
        %v3042 = vpop.permute.xlu0 %3041
        %3043 = vrot.lane.b32.xlu0 %v2974, 48
        %v3044 = vpop.permute.xlu0 %3043
        %3045 = vrot.lane.b32.xlu0 %v2975, 48
        %v3046 = vpop.permute.xlu0 %3045
        %3047 = vrot.lane.b32.xlu0 %v2976, 48
        %v3048 = vpop.permute.xlu0 %3047
        %vm3073 = vcmask 458112
        %3074 = vst.msk [vmem:[#allocation6] sm:$0xff] %vm3073, %v3002
        %vm3075 = vcmask 454016
        %3076 = vst.msk [vmem:[#allocation6 + $0x8] sm:$0xf] %vm3075, %v3004
        %3077 = vst.msk [vmem:[#allocation6 + $0x10] sm:$0xff] %vm3073, %v3006
        %3078 = vst.msk [vmem:[#allocation6 + $0x18] sm:$0xf] %vm3075, %v3008
        %3079 = vst.msk [vmem:[#allocation6 + $0x20] sm:$0xff] %vm3073, %v3010
        %3080 = vst.msk [vmem:[#allocation6 + $0x28] sm:$0xf] %vm3075, %v3012
        %3081 = vst.msk [vmem:[#allocation6 + $0x30] sm:$0xff] %vm3073, %v3014
        %3082 = vst.msk [vmem:[#allocation6 + $0x38] sm:$0xf] %vm3075, %v3016
        %3083 = vst.msk [vmem:[#allocation6 + $0x40] sm:$0xff] %vm3073, %v3018
        %3084 = vst.msk [vmem:[#allocation6 + $0x48] sm:$0xf] %vm3075, %v3020
        %3085 = vst.msk [vmem:[#allocation6 + $0x50] sm:$0xff] %vm3073, %v3022
        %3086 = vst.msk [vmem:[#allocation6 + $0x58] sm:$0xf] %vm3075, %v3024
        %3087 = vst.msk [vmem:[#allocation6 + $0x60] sm:$0xff] %vm3073, %v3026
        %3088 = vst.msk [vmem:[#allocation6 + $0x68] sm:$0xf] %vm3075, %v3028
        %3089 = vst.msk [vmem:[#allocation6 + $0x70] sm:$0xff] %vm3073, %v3030
        %3090 = vst.msk [vmem:[#allocation6 + $0x78] sm:$0xf] %vm3075, %v3032
        %3091 = vst.msk [vmem:[#allocation6 + $0x80] sm:$0xff] %vm3073, %v3034
        %3092 = vst.msk [vmem:[#allocation6 + $0x88] sm:$0xf] %vm3075, %v3036
        %3093 = vst.msk [vmem:[#allocation6 + $0x90] sm:$0xff] %vm3073, %v3038
        %3094 = vst.msk [vmem:[#allocation6 + $0x98] sm:$0xf] %vm3075, %v3040
        %3095 = vst.msk [vmem:[#allocation6 + $0xa0] sm:$0xff] %vm3073, %v3042
        %3096 = vst.msk [vmem:[#allocation6 + $0xa8] sm:$0xf] %vm3075, %v3044
        %3097 = vst.msk [vmem:[#allocation6 + $0xb0] sm:$0xff] %vm3073, %v3046
        %3098 = vst.msk [vmem:[#allocation6 + $0xb8] sm:$0xf] %vm3075, %v3048
        %v3099 = vld [vmem:[%s2952 + $0x1] sm:$0xff]
        %v3100 = vld [vmem:[%s2952 + $0x9] sm:$0xf]
        %v3101 = vld [vmem:[%s2952 + $0x11] sm:$0xff]
        %v3102 = vld [vmem:[%s2952 + $0x19] sm:$0xf]
        %v3103 = vld [vmem:[%s2952 + $0x21] sm:$0xff]
        %v3104 = vld [vmem:[%s2952 + $0x29] sm:$0xf]
        %v3105 = vld [vmem:[%s2952 + $0x31] sm:$0xff]
        %v3106 = vld [vmem:[%s2952 + $0x39] sm:$0xf]
        %v3107 = vld [vmem:[%s2952 + $0x41] sm:$0xff]
        %v3108 = vld [vmem:[%s2952 + $0x49] sm:$0xf]
        %v3109 = vld [vmem:[%s2952 + $0x51] sm:$0xff]
        %v3110 = vld [vmem:[%s2952 + $0x59] sm:$0xf]
        %v3111 = vld [vmem:[%s2952 + $0x61] sm:$0xff]
        %v3112 = vld [vmem:[%s2952 + $0x69] sm:$0xf]
        %v3113 = vld [vmem:[%s2952 + $0x71] sm:$0xff]
        %v3114 = vld [vmem:[%s2952 + $0x79] sm:$0xf]
        %v3115 = vld [vmem:[%s2952 + $0x81] sm:$0xff]
        %v3116 = vld [vmem:[%s2952 + $0x89] sm:$0xf]
        %v3117 = vld [vmem:[%s2952 + $0x91] sm:$0xff]
        %v3118 = vld [vmem:[%s2952 + $0x99] sm:$0xf]
        %v3119 = vld [vmem:[%s2952 + $0xa1] sm:$0xff]
        %v3120 = vld [vmem:[%s2952 + $0xa9] sm:$0xf]
        %v3121 = vld [vmem:[%s2952 + $0xb1] sm:$0xff]
        %v3122 = vld [vmem:[%s2952 + $0xb9] sm:$0xf]
        %3147 = vrot.lane.b32.xlu0 %v3099, 56
        %v3148 = vpop.permute.xlu0 %3147
        %3149 = vrot.lane.b32.xlu0 %v3100, 56
        %v3150 = vpop.permute.xlu0 %3149
        %3151 = vrot.lane.b32.xlu0 %v3101, 56
        %v3152 = vpop.permute.xlu0 %3151
        %3153 = vrot.lane.b32.xlu0 %v3102, 56
        %v3154 = vpop.permute.xlu0 %3153
        %3155 = vrot.lane.b32.xlu0 %v3103, 56
        %v3156 = vpop.permute.xlu0 %3155
        %3157 = vrot.lane.b32.xlu0 %v3104, 56
        %v3158 = vpop.permute.xlu0 %3157
        %3159 = vrot.lane.b32.xlu0 %v3105, 56
        %v3160 = vpop.permute.xlu0 %3159
        %3161 = vrot.lane.b32.xlu0 %v3106, 56
        %v3162 = vpop.permute.xlu0 %3161
        %3163 = vrot.lane.b32.xlu0 %v3107, 56
        %v3164 = vpop.permute.xlu0 %3163
        %3165 = vrot.lane.b32.xlu0 %v3108, 56
        %v3166 = vpop.permute.xlu0 %3165
        %3167 = vrot.lane.b32.xlu0 %v3109, 56
        %v3168 = vpop.permute.xlu0 %3167
        %3169 = vrot.lane.b32.xlu0 %v3110, 56
        %v3170 = vpop.permute.xlu0 %3169
        %3171 = vrot.lane.b32.xlu0 %v3111, 56
        %v3172 = vpop.permute.xlu0 %3171
        %3173 = vrot.lane.b32.xlu0 %v3112, 56
        %v3174 = vpop.permute.xlu0 %3173
        %3175 = vrot.lane.b32.xlu0 %v3113, 56
        %v3176 = vpop.permute.xlu0 %3175
        %3177 = vrot.lane.b32.xlu0 %v3114, 56
        %v3178 = vpop.permute.xlu0 %3177
        %3179 = vrot.lane.b32.xlu0 %v3115, 56
        %v3180 = vpop.permute.xlu0 %3179
        %3181 = vrot.lane.b32.xlu0 %v3116, 56
        %v3182 = vpop.permute.xlu0 %3181
        %3183 = vrot.lane.b32.xlu0 %v3117, 56
        %v3184 = vpop.permute.xlu0 %3183
        %3185 = vrot.lane.b32.xlu0 %v3118, 56
        %v3186 = vpop.permute.xlu0 %3185
        %3187 = vrot.lane.b32.xlu0 %v3119, 56
        %v3188 = vpop.permute.xlu0 %3187
        %3189 = vrot.lane.b32.xlu0 %v3120, 56
        %v3190 = vpop.permute.xlu0 %3189
        %3191 = vrot.lane.b32.xlu0 %v3121, 56
        %v3192 = vpop.permute.xlu0 %3191
        %3193 = vrot.lane.b32.xlu0 %v3122, 56
        %v3194 = vpop.permute.xlu0 %3193
        %vm3219 = vcmask 523712
        %3220 = vst.msk [vmem:[#allocation6] sm:$0xff] %vm3219, %v3148
        %vm3221 = vcmask 519616
        %3222 = vst.msk [vmem:[#allocation6 + $0x8] sm:$0xf] %vm3221, %v3150
        %3223 = vst.msk [vmem:[#allocation6 + $0x10] sm:$0xff] %vm3219, %v3152
        %3224 = vst.msk [vmem:[#allocation6 + $0x18] sm:$0xf] %vm3221, %v3154
        %3225 = vst.msk [vmem:[#allocation6 + $0x20] sm:$0xff] %vm3219, %v3156
        %3226 = vst.msk [vmem:[#allocation6 + $0x28] sm:$0xf] %vm3221, %v3158
        %3227 = vst.msk [vmem:[#allocation6 + $0x30] sm:$0xff] %vm3219, %v3160
        %3228 = vst.msk [vmem:[#allocation6 + $0x38] sm:$0xf] %vm3221, %v3162
        %3229 = vst.msk [vmem:[#allocation6 + $0x40] sm:$0xff] %vm3219, %v3164
        %3230 = vst.msk [vmem:[#allocation6 + $0x48] sm:$0xf] %vm3221, %v3166
        %3231 = vst.msk [vmem:[#allocation6 + $0x50] sm:$0xff] %vm3219, %v3168
        %3232 = vst.msk [vmem:[#allocation6 + $0x58] sm:$0xf] %vm3221, %v3170
        %3233 = vst.msk [vmem:[#allocation6 + $0x60] sm:$0xff] %vm3219, %v3172
        %3234 = vst.msk [vmem:[#allocation6 + $0x68] sm:$0xf] %vm3221, %v3174
        %3235 = vst.msk [vmem:[#allocation6 + $0x70] sm:$0xff] %vm3219, %v3176
        %3236 = vst.msk [vmem:[#allocation6 + $0x78] sm:$0xf] %vm3221, %v3178
        %3237 = vst.msk [vmem:[#allocation6 + $0x80] sm:$0xff] %vm3219, %v3180
        %3238 = vst.msk [vmem:[#allocation6 + $0x88] sm:$0xf] %vm3221, %v3182
        %3239 = vst.msk [vmem:[#allocation6 + $0x90] sm:$0xff] %vm3219, %v3184
        %3240 = vst.msk [vmem:[#allocation6 + $0x98] sm:$0xf] %vm3221, %v3186
        %3241 = vst.msk [vmem:[#allocation6 + $0xa0] sm:$0xff] %vm3219, %v3188
        %3242 = vst.msk [vmem:[#allocation6 + $0xa8] sm:$0xf] %vm3221, %v3190
        %3243 = vst.msk [vmem:[#allocation6 + $0xb0] sm:$0xff] %vm3219, %v3192
        %3244 = vst.msk [vmem:[#allocation6 + $0xb8] sm:$0xf] %vm3221, %v3194
        %v3245 = vld [vmem:[%s2952 + $0x2] sm:$0xff]
        %v3246 = vld [vmem:[%s2952 + $0xa] sm:$0xf]
        %v3247 = vld [vmem:[%s2952 + $0x12] sm:$0xff]
        %v3248 = vld [vmem:[%s2952 + $0x1a] sm:$0xf]
        %v3249 = vld [vmem:[%s2952 + $0x22] sm:$0xff]
        %v3250 = vld [vmem:[%s2952 + $0x2a] sm:$0xf]
        %v3251 = vld [vmem:[%s2952 + $0x32] sm:$0xff]
        %v3252 = vld [vmem:[%s2952 + $0x3a] sm:$0xf]
        %v3253 = vld [vmem:[%s2952 + $0x42] sm:$0xff]
        %v3254 = vld [vmem:[%s2952 + $0x4a] sm:$0xf]
        %v3255 = vld [vmem:[%s2952 + $0x52] sm:$0xff]
        %v3256 = vld [vmem:[%s2952 + $0x5a] sm:$0xf]
        %v3257 = vld [vmem:[%s2952 + $0x62] sm:$0xff]
        %v3258 = vld [vmem:[%s2952 + $0x6a] sm:$0xf]
        %v3259 = vld [vmem:[%s2952 + $0x72] sm:$0xff]
        %v3260 = vld [vmem:[%s2952 + $0x7a] sm:$0xf]
        %v3261 = vld [vmem:[%s2952 + $0x82] sm:$0xff]
        %v3262 = vld [vmem:[%s2952 + $0x8a] sm:$0xf]
        %v3263 = vld [vmem:[%s2952 + $0x92] sm:$0xff]
        %v3264 = vld [vmem:[%s2952 + $0x9a] sm:$0xf]
        %v3265 = vld [vmem:[%s2952 + $0xa2] sm:$0xff]
        %v3266 = vld [vmem:[%s2952 + $0xaa] sm:$0xf]
        %v3267 = vld [vmem:[%s2952 + $0xb2] sm:$0xff]
        %v3268 = vld [vmem:[%s2952 + $0xba] sm:$0xf]
        %3293 = vrot.lane.b32.xlu0 %v3245, 64
        %v3294 = vpop.permute.xlu0 %3293
        %3295 = vrot.lane.b32.xlu0 %v3246, 64
        %v3296 = vpop.permute.xlu0 %3295
        %3297 = vrot.lane.b32.xlu0 %v3247, 64
        %v3298 = vpop.permute.xlu0 %3297
        %3299 = vrot.lane.b32.xlu0 %v3248, 64
        %v3300 = vpop.permute.xlu0 %3299
        %3301 = vrot.lane.b32.xlu0 %v3249, 64
        %v3302 = vpop.permute.xlu0 %3301
        %3303 = vrot.lane.b32.xlu0 %v3250, 64
        %v3304 = vpop.permute.xlu0 %3303
        %3305 = vrot.lane.b32.xlu0 %v3251, 64
        %v3306 = vpop.permute.xlu0 %3305
        %3307 = vrot.lane.b32.xlu0 %v3252, 64
        %v3308 = vpop.permute.xlu0 %3307
        %3309 = vrot.lane.b32.xlu0 %v3253, 64
        %v3310 = vpop.permute.xlu0 %3309
        %3311 = vrot.lane.b32.xlu0 %v3254, 64
        %v3312 = vpop.permute.xlu0 %3311
        %3313 = vrot.lane.b32.xlu0 %v3255, 64
        %v3314 = vpop.permute.xlu0 %3313
        %3315 = vrot.lane.b32.xlu0 %v3256, 64
        %v3316 = vpop.permute.xlu0 %3315
        %3317 = vrot.lane.b32.xlu0 %v3257, 64
        %v3318 = vpop.permute.xlu0 %3317
        %3319 = vrot.lane.b32.xlu0 %v3258, 64
        %v3320 = vpop.permute.xlu0 %3319
        %3321 = vrot.lane.b32.xlu0 %v3259, 64
        %v3322 = vpop.permute.xlu0 %3321
        %3323 = vrot.lane.b32.xlu0 %v3260, 64
        %v3324 = vpop.permute.xlu0 %3323
        %3325 = vrot.lane.b32.xlu0 %v3261, 64
        %v3326 = vpop.permute.xlu0 %3325
        %3327 = vrot.lane.b32.xlu0 %v3262, 64
        %v3328 = vpop.permute.xlu0 %3327
        %3329 = vrot.lane.b32.xlu0 %v3263, 64
        %v3330 = vpop.permute.xlu0 %3329
        %3331 = vrot.lane.b32.xlu0 %v3264, 64
        %v3332 = vpop.permute.xlu0 %3331
        %3333 = vrot.lane.b32.xlu0 %v3265, 64
        %v3334 = vpop.permute.xlu0 %3333
        %3335 = vrot.lane.b32.xlu0 %v3266, 64
        %v3336 = vpop.permute.xlu0 %3335
        %3337 = vrot.lane.b32.xlu0 %v3267, 64
        %v3338 = vpop.permute.xlu0 %3337
        %3339 = vrot.lane.b32.xlu0 %v3268, 64
        %v3340 = vpop.permute.xlu0 %3339
        %vm3365 = vcmask 589312
        %3366 = vst.msk [vmem:[#allocation6] sm:$0xff] %vm3365, %v3294
        %vm3367 = vcmask 585216
        %3368 = vst.msk [vmem:[#allocation6 + $0x8] sm:$0xf] %vm3367, %v3296
        %3369 = vst.msk [vmem:[#allocation6 + $0x10] sm:$0xff] %vm3365, %v3298
        %3370 = vst.msk [vmem:[#allocation6 + $0x18] sm:$0xf] %vm3367, %v3300
        %3371 = vst.msk [vmem:[#allocation6 + $0x20] sm:$0xff] %vm3365, %v3302
        %3372 = vst.msk [vmem:[#allocation6 + $0x28] sm:$0xf] %vm3367, %v3304
        %3373 = vst.msk [vmem:[#allocation6 + $0x30] sm:$0xff] %vm3365, %v3306
        %3374 = vst.msk [vmem:[#allocation6 + $0x38] sm:$0xf] %vm3367, %v3308
        %3375 = vst.msk [vmem:[#allocation6 + $0x40] sm:$0xff] %vm3365, %v3310
        %3376 = vst.msk [vmem:[#allocation6 + $0x48] sm:$0xf] %vm3367, %v3312
        %3377 = vst.msk [vmem:[#allocation6 + $0x50] sm:$0xff] %vm3365, %v3314
        %3378 = vst.msk [vmem:[#allocation6 + $0x58] sm:$0xf] %vm3367, %v3316
        %3379 = vst.msk [vmem:[#allocation6 + $0x60] sm:$0xff] %vm3365, %v3318
        %3380 = vst.msk [vmem:[#allocation6 + $0x68] sm:$0xf] %vm3367, %v3320
        %3381 = vst.msk [vmem:[#allocation6 + $0x70] sm:$0xff] %vm3365, %v3322
        %3382 = vst.msk [vmem:[#allocation6 + $0x78] sm:$0xf] %vm3367, %v3324
        %3383 = vst.msk [vmem:[#allocation6 + $0x80] sm:$0xff] %vm3365, %v3326
        %3384 = vst.msk [vmem:[#allocation6 + $0x88] sm:$0xf] %vm3367, %v3328
        %3385 = vst.msk [vmem:[#allocation6 + $0x90] sm:$0xff] %vm3365, %v3330
        %3386 = vst.msk [vmem:[#allocation6 + $0x98] sm:$0xf] %vm3367, %v3332
        %3387 = vst.msk [vmem:[#allocation6 + $0xa0] sm:$0xff] %vm3365, %v3334
        %3388 = vst.msk [vmem:[#allocation6 + $0xa8] sm:$0xf] %vm3367, %v3336
        %3389 = vst.msk [vmem:[#allocation6 + $0xb0] sm:$0xff] %vm3365, %v3338
        %3390 = vst.msk [vmem:[#allocation6 + $0xb8] sm:$0xf] %vm3367, %v3340
        %v3391 = vld [vmem:[#allocation6] sm:$0xff]
        %v3392 = vld [vmem:[#allocation6 + $0x8] sm:$0xf]
        %v3393 = vld [vmem:[#allocation6 + $0x10] sm:$0xff]
        %v3394 = vld [vmem:[#allocation6 + $0x18] sm:$0xf]
        %v3395 = vld [vmem:[#allocation6 + $0x20] sm:$0xff]
        %v3396 = vld [vmem:[#allocation6 + $0x28] sm:$0xf]
        %v3397 = vld [vmem:[#allocation6 + $0x30] sm:$0xff]
        %v3398 = vld [vmem:[#allocation6 + $0x38] sm:$0xf]
        %v3399 = vld [vmem:[#allocation6 + $0x40] sm:$0xff]
        %v3400 = vld [vmem:[#allocation6 + $0x48] sm:$0xf]
        %v3401 = vld [vmem:[#allocation6 + $0x50] sm:$0xff]
        %v3402 = vld [vmem:[#allocation6 + $0x58] sm:$0xf]
        %v3403 = vld [vmem:[#allocation6 + $0x60] sm:$0xff]
        %v3404 = vld [vmem:[#allocation6 + $0x68] sm:$0xf]
        %v3405 = vld [vmem:[#allocation6 + $0x70] sm:$0xff]
        %v3406 = vld [vmem:[#allocation6 + $0x78] sm:$0xf]
        %v3407 = vld [vmem:[#allocation6 + $0x80] sm:$0xff]
        %v3408 = vld [vmem:[#allocation6 + $0x88] sm:$0xf]
        %v3409 = vld [vmem:[#allocation6 + $0x90] sm:$0xff]
        %v3410 = vld [vmem:[#allocation6 + $0x98] sm:$0xf]
        %v3411 = vld [vmem:[#allocation6 + $0xa0] sm:$0xff]
        %v3412 = vld [vmem:[#allocation6 + $0xa8] sm:$0xf]
        %v3413 = vld [vmem:[#allocation6 + $0xb0] sm:$0xff]
        %v3414 = vld [vmem:[#allocation6 + $0xb8] sm:$0xf]
        %v3439 = vcombine.high %v3391, %v3391
        %v3440 = vcombine.high %v3393, %v3393
        %v3441 = vcombine.high %v3395, %v3395
        %v3442 = vcombine.high %v3397, %v3397
        %v3443 = vcombine.high %v3399, %v3399
        %v3444 = vcombine.high %v3401, %v3401
        %v3445 = vcombine.high %v3403, %v3403
        %v3446 = vcombine.high %v3405, %v3405
        %v3447 = vcombine.high %v3407, %v3407
        %v3448 = vcombine.high %v3409, %v3409
        %v3449 = vcombine.high %v3411, %v3411
        %v3450 = vcombine.high %v3413, %v3413
        %v3451 = vld [vmem:[#allocation15] sm:$0xff]
        %v3452 = vld [vmem:[#allocation15 + $0x8] sm:$0xff]
        %v3453 = vld [vmem:[#allocation15 + $0x10] sm:$0xff]
        %v3454 = vld [vmem:[#allocation15 + $0x18] sm:$0xff]
        %v3455 = vld [vmem:[#allocation15 + $0x20] sm:$0xff]
        %v3456 = vld [vmem:[#allocation15 + $0x28] sm:$0xff]
        %v3457 = vld [vmem:[#allocation15 + $0x30] sm:$0xff]
        %v3458 = vld [vmem:[#allocation15 + $0x38] sm:$0xff]
        %v3459 = vld [vmem:[#allocation15 + $0x40] sm:$0xff]
        %v3460 = vld [vmem:[#allocation17] sm:$0x1]
        %v3462 = vlaneseq
        %v3463 = vshrl.u32 %v3462, 7
        %v3464 = vsub.s32 0, %v3463
        %v3465 = vrot.slane %v3460, %v3464
        %v3467 = vcombine.low %v3391, %v3439
        %v3468 = vcombine.low %v3392, %v3393
        %v3469 = vcombine.low %v3440, %v3394
        %v3470 = vcombine.low %v3395, %v3441
        %v3471 = vcombine.low %v3396, %v3397
        %v3472 = vcombine.low %v3442, %v3398
        %v3473 = vcombine.low %v3399, %v3443
        %v3474 = vcombine.low %v3400, %v3401
        %v3475 = vcombine.low %v3444, %v3402
        %v3476 = vcombine.low %v3403, %v3445
        %v3477 = vcombine.low %v3404, %v3405
        %v3478 = vcombine.low %v3446, %v3406
        %v3479 = vcombine.low %v3407, %v3447
        %v3480 = vcombine.low %v3408, %v3409
        %v3481 = vcombine.low %v3448, %v3410
        %v3482 = vcombine.low %v3411, %v3449
        %v3483 = vcombine.low %v3412, %v3413
        %v3484 = vcombine.low %v3450, %v3414
        %vm3485 = vcmask 588800
        %v3486 = vsel %vm3485, %v3467, 0
        %v3488 = vsel %vm3485, %v3468, 0
        %v3490 = vsel %vm3485, %v3469, 0
        %v3492 = vsel %vm3485, %v3470, 0
        %v3494 = vsel %vm3485, %v3471, 0
        %v3496 = vsel %vm3485, %v3472, 0
        %v3498 = vsel %vm3485, %v3473, 0
        %v3500 = vsel %vm3485, %v3474, 0
        %v3502 = vsel %vm3485, %v3475, 0
        %v3504 = vsel %vm3485, %v3476, 0
        %v3506 = vsel %vm3485, %v3477, 0
        %v3508 = vsel %vm3485, %v3478, 0
        %v3510 = vsel %vm3485, %v3479, 0
        %v3512 = vsel %vm3485, %v3480, 0
        %v3514 = vsel %vm3485, %v3481, 0
        %v3516 = vsel %vm3485, %v3482, 0
        %v3518 = vsel %vm3485, %v3483, 0
        %v3520 = vsel %vm3485, %v3484, 0
        %3522 = vmatprep.subr.mxu0 0.0
        %3523 = vmatpush1.msra.mxu0 %v3451
        %3524 = vmatprep.subr.mxu0 0.0
        %3525 = vmatpush1.msra.mxu0 %v3452
        %3526 = vmatprep.subr.mxu0 0.0
        %3527 = vmatpush1.msra.mxu0 %v3453
        %3528 = vmatprep.subr.mxu0 0.0
        %3529 = vmatpush1.msra.mxu0 %v3454
        %3530 = vmatprep.subr.mxu0 0.0
        %3531 = vmatpush1.msra.mxu0 %v3455
        %3532 = vmatprep.subr.mxu0 0.0
        %3533 = vmatpush1.msra.mxu0 %v3456
        %3534 = vmatprep.subr.mxu0 0.0
        %3535 = vmatpush1.msra.mxu0 %v3457
        %3536 = vmatprep.subr.mxu0 0.0
        %3537 = vmatpush1.msra.mxu0 %v3458
        %3538 = vmatprep.subr.mxu0 0.0
        %3539 = vmatpush1.msra.mxu0 %v3459
        %3540 = vmatprep.subr.mxu0 0.0
        %3541 = vmatpush1.msra.mxu0 0.0
        %3542 = vmatprep.subr.mxu0 0.0
        %3543 = vmatpush1.msra.mxu0 0.0
        %3544 = vmatprep.subr.mxu0 0.0
        %3545 = vmatpush1.msra.mxu0 0.0
        %3546 = vmatprep.subr.mxu0 0.0
        %3547 = vmatpush1.msra.mxu0 0.0
        %3548 = vmatprep.subr.mxu0 0.0
        %3549 = vmatpush1.msra.mxu0 0.0
        %3550 = vmatprep.subr.mxu0 0.0
        %3551 = vmatpush1.msra.mxu0 0.0
        %3552 = vmatprep.subr.mxu0 0.0
        %3553 = vmatpush1.msra.mxu0 0.0
        %3554 = vmatprep.subr.mxu0 0.0
        %3555 = vmatpush1.msra.mxu0 0.0
        %3556 = vmatprep.subr.mxu0 0.0
        %3557 = vmatpush1.msra.mxu0 0.0
        %3558 = vmatprep.subr.mxu0 0.0
        %3559 = vmatpush1.msra.mxu0 0.0
        %3560 = vmatprep.subr.mxu0 0.0
        %3561 = vmatpush1.msra.mxu0 0.0
        %3562 = vmatprep.subr.mxu0 0.0
        %3563 = vmatpush1.msra.mxu0 0.0
        %3564 = vmatprep.subr.mxu0 0.0
        %3565 = vmatpush1.msra.mxu0 0.0
        %3566 = vmatprep.subr.mxu0 0.0
        %3567 = vmatpush1.msra.mxu0 0.0
        %3568 = vmatprep.subr.mxu0 0.0
        %3569 = vmatpush1.msra.mxu0 0.0
        %3570 = vmatprep.subr.mxu0 0.0
        %3571 = vmatpush1.msra.mxu0 0.0
        %3572 = vmatprep.subr.mxu0 0.0
        %3573 = vmatpush1.msra.mxu0 0.0
        %3574 = vmatprep.subr.mxu0 0.0
        %3575 = vmatpush1.msra.mxu0 0.0
        %3576 = vmatprep.subr.mxu0 0.0
        %3577 = vmatpush1.msra.mxu0 0.0
        %3578 = vmatprep.subr.mxu0 0.0
        %3579 = vmatpush1.msra.mxu0 0.0
        %3580 = vmatprep.subr.mxu0 0.0
        %3581 = vmatpush1.msra.mxu0 0.0
        %3582 = vmatprep.subr.mxu0 0.0
        %3583 = vmatpush1.msra.mxu0 0.0
        %3584 = vmatprep.subr.mxu0 0.0
        %3585 = vmatpush1.msra.mxu0 0.0
        %3586 = vmatprep.mubr.f32.mxu0 0.0
        %3587 = vmatmul.mubr.f32.gmra.mrb[0].mxu0 %v3486
        %v3588 = vpop.f32.mrb[0].mxu0
        %v3589 = vadd.f32 %v3465, %v3588
        %v3590 = vpop.f32.mrb[0].mxu0
        %3591 = vmatprep.mubr.f32.mxu0 0.0
        %3592 = vmatmul.mubr.f32.gmra.mrb[0].mxu0 %v3488
        %v3593 = vpop.f32.mrb[0].mxu0
        %v3594 = vadd.f32 %v3465, %v3593
        %v3595 = vpop.f32.mrb[0].mxu0
        %3596 = vmatprep.mubr.f32.mxu0 0.0
        %3597 = vmatmul.mubr.f32.gmra.mrb[0].mxu0 %v3490
        %v3598 = vpop.f32.mrb[0].mxu0
        %v3599 = vadd.f32 %v3465, %v3598
        %v3600 = vpop.f32.mrb[0].mxu0
        %3601 = vmatprep.mubr.f32.mxu0 0.0
        %3602 = vmatmul.mubr.f32.gmra.mrb[0].mxu0 %v3492
        %v3603 = vpop.f32.mrb[0].mxu0
        %v3604 = vadd.f32 %v3465, %v3603
        %v3605 = vpop.f32.mrb[0].mxu0
        %3606 = vmatprep.mubr.f32.mxu0 0.0
        %3607 = vmatmul.mubr.f32.gmra.mrb[0].mxu0 %v3494
        %v3608 = vpop.f32.mrb[0].mxu0
        %v3609 = vadd.f32 %v3465, %v3608
        %v3610 = vpop.f32.mrb[0].mxu0
        %3611 = vmatprep.mubr.f32.mxu0 0.0
        %3612 = vmatmul.mubr.f32.gmra.mrb[0].mxu0 %v3496
        %v3613 = vpop.f32.mrb[0].mxu0
        %v3614 = vadd.f32 %v3465, %v3613
        %v3615 = vpop.f32.mrb[0].mxu0
        %3616 = vmatprep.mubr.f32.mxu0 0.0
        %3617 = vmatmul.mubr.f32.gmra.mrb[0].mxu0 %v3498
        %v3618 = vpop.f32.mrb[0].mxu0
        %v3619 = vadd.f32 %v3465, %v3618
        %v3620 = vpop.f32.mrb[0].mxu0
        %3621 = vmatprep.mubr.f32.mxu0 0.0
        %3622 = vmatmul.mubr.f32.gmra.mrb[0].mxu0 %v3500
        %v3623 = vpop.f32.mrb[0].mxu0
        %v3624 = vadd.f32 %v3465, %v3623
        %v3625 = vpop.f32.mrb[0].mxu0
        %3626 = vmatprep.mubr.f32.mxu0 0.0
        %3627 = vmatmul.mubr.f32.gmra.mrb[0].mxu0 %v3502
        %v3628 = vpop.f32.mrb[0].mxu0
        %v3629 = vadd.f32 %v3465, %v3628
        %v3630 = vpop.f32.mrb[0].mxu0
        %3631 = vmatprep.mubr.f32.mxu0 0.0
        %3632 = vmatmul.mubr.f32.gmra.mrb[0].mxu0 %v3504
        %v3633 = vpop.f32.mrb[0].mxu0
        %v3634 = vadd.f32 %v3465, %v3633
        %v3635 = vpop.f32.mrb[0].mxu0
        %3636 = vmatprep.mubr.f32.mxu0 0.0
        %3637 = vmatmul.mubr.f32.gmra.mrb[0].mxu0 %v3506
        %v3638 = vpop.f32.mrb[0].mxu0
        %v3639 = vadd.f32 %v3465, %v3638
        %v3640 = vpop.f32.mrb[0].mxu0
        %3641 = vmatprep.mubr.f32.mxu0 0.0
        %3642 = vmatmul.mubr.f32.gmra.mrb[0].mxu0 %v3508
        %v3643 = vpop.f32.mrb[0].mxu0
        %v3644 = vadd.f32 %v3465, %v3643
        %v3645 = vpop.f32.mrb[0].mxu0
        %3646 = vmatprep.mubr.f32.mxu0 0.0
        %3647 = vmatmul.mubr.f32.gmra.mrb[0].mxu0 %v3510
        %v3648 = vpop.f32.mrb[0].mxu0
        %v3649 = vadd.f32 %v3465, %v3648
        %v3650 = vpop.f32.mrb[0].mxu0
        %3651 = vmatprep.mubr.f32.mxu0 0.0
        %3652 = vmatmul.mubr.f32.gmra.mrb[0].mxu0 %v3512
        %v3653 = vpop.f32.mrb[0].mxu0
        %v3654 = vadd.f32 %v3465, %v3653
        %v3655 = vpop.f32.mrb[0].mxu0
        %3656 = vmatprep.mubr.f32.mxu0 0.0
        %3657 = vmatmul.mubr.f32.gmra.mrb[0].mxu0 %v3514
        %v3658 = vpop.f32.mrb[0].mxu0
        %v3659 = vadd.f32 %v3465, %v3658
        %v3660 = vpop.f32.mrb[0].mxu0
        %3661 = vmatprep.mubr.f32.mxu0 0.0
        %3662 = vmatmul.mubr.f32.gmra.mrb[0].mxu0 %v3516
        %v3663 = vpop.f32.mrb[0].mxu0
        %v3664 = vadd.f32 %v3465, %v3663
        %v3665 = vpop.f32.mrb[0].mxu0
        %3666 = vmatprep.mubr.f32.mxu0 0.0
        %3667 = vmatmul.mubr.f32.gmra.mrb[0].mxu0 %v3518
        %v3668 = vpop.f32.mrb[0].mxu0
        %v3669 = vadd.f32 %v3465, %v3668
        %v3670 = vpop.f32.mrb[0].mxu0
        %3671 = vmatprep.mubr.f32.mxu0 0.0
        %3672 = vmatmul.mubr.f32.gmra.mrb[0].mxu0 %v3520
        %v3673 = vpop.f32.mrb[0].mxu0
        %v3674 = vadd.f32 %v3465, %v3673
        %v3675 = vpop.f32.mrb[0].mxu0
        %3676 = vdwg.mxu0
        %v3695 = vcombine.high %v3589, %v3589
        %v3697 = vunpack.c.l.s4 1966171168
        %v3698 = vunpack.c.0.s8 %v3697
        %v3699 = vlaneseq
        %v3700 = vshrl.u32 %v3699, 7
        %v3701 = vsub.s32 %v3698, %v3700
        %v3702 = vrot.slane %v3589, %v3701
        %v3704 = vunpack.c.l.s4 1966171168
        %v3705 = vunpack.c.0.s8 %v3704
        %v3706 = vlaneseq
        %v3707 = vshrl.u32 %v3706, 7
        %v3708 = vsub.s32 %v3705, %v3707
        %v3709 = vrot.slane %v3695, %v3708
        %v3710 = vcombine.high %v3702, %v3702
        %v3711 = vcombine.high %v3709, %v3709
        %v3713 = vunpack.c.l.s4 1966171168
        %v3714 = vunpack.c.0.s8 %v3713
        %v3715 = vlaneseq
        %v3716 = vshrl.u32 %v3715, 7
        %v3717 = vsub.s32 %v3714, %v3716
        %v3718 = vrot.slane %v3702, %v3717
        %v3720 = vunpack.c.l.s4 1966171168
        %v3721 = vunpack.c.0.s8 %v3720
        %v3722 = vlaneseq
        %v3723 = vshrl.u32 %v3722, 7
        %v3724 = vsub.s32 %v3721, %v3723
        %v3725 = vrot.slane %v3709, %v3724
        %v3727 = vunpack.c.l.s4 1966171168
        %v3728 = vunpack.c.0.s8 %v3727
        %v3729 = vlaneseq
        %v3730 = vshrl.u32 %v3729, 7
        %v3731 = vsub.s32 %v3728, %v3730
        %v3732 = vrot.slane %v3710, %v3731
        %v3734 = vunpack.c.l.s4 1966171168
        %v3735 = vunpack.c.0.s8 %v3734
        %v3736 = vlaneseq
        %v3737 = vshrl.u32 %v3736, 7
        %v3738 = vsub.s32 %v3735, %v3737
        %v3739 = vrot.slane %v3711, %v3738
        %v3740 = vcombine.high %v3718, %v3718
        %v3741 = vcombine.high %v3725, %v3725
        %v3742 = vcombine.high %v3732, %v3732
        %v3743 = vcombine.high %v3739, %v3739
        %v3744 = vcombine.high %v3594, %v3594
        %v3746 = vunpack.c.l.s4 1966171168
        %v3747 = vunpack.c.0.s8 %v3746
        %v3748 = vlaneseq
        %v3749 = vshrl.u32 %v3748, 7
        %v3750 = vsub.s32 %v3747, %v3749
        %v3751 = vrot.slane %v3594, %v3750
        %v3753 = vunpack.c.l.s4 1966171168
        %v3754 = vunpack.c.0.s8 %v3753
        %v3755 = vlaneseq
        %v3756 = vshrl.u32 %v3755, 7
        %v3757 = vsub.s32 %v3754, %v3756
        %v3758 = vrot.slane %v3744, %v3757
        %v3759 = vcombine.high %v3751, %v3751
        %v3760 = vcombine.high %v3758, %v3758
        %v3762 = vunpack.c.l.s4 1966171168
        %v3763 = vunpack.c.0.s8 %v3762
        %v3764 = vlaneseq
        %v3765 = vshrl.u32 %v3764, 7
        %v3766 = vsub.s32 %v3763, %v3765
        %v3767 = vrot.slane %v3751, %v3766
        %v3769 = vunpack.c.l.s4 1966171168
        %v3770 = vunpack.c.0.s8 %v3769
        %v3771 = vlaneseq
        %v3772 = vshrl.u32 %v3771, 7
        %v3773 = vsub.s32 %v3770, %v3772
        %v3774 = vrot.slane %v3758, %v3773
        %v3776 = vunpack.c.l.s4 1966171168
        %v3777 = vunpack.c.0.s8 %v3776
        %v3778 = vlaneseq
        %v3779 = vshrl.u32 %v3778, 7
        %v3780 = vsub.s32 %v3777, %v3779
        %v3781 = vrot.slane %v3759, %v3780
        %v3783 = vunpack.c.l.s4 1966171168
        %v3784 = vunpack.c.0.s8 %v3783
        %v3785 = vlaneseq
        %v3786 = vshrl.u32 %v3785, 7
        %v3787 = vsub.s32 %v3784, %v3786
        %v3788 = vrot.slane %v3760, %v3787
        %v3789 = vcombine.high %v3767, %v3767
        %v3790 = vcombine.high %v3774, %v3774
        %v3791 = vcombine.high %v3781, %v3781
        %v3792 = vcombine.high %v3788, %v3788
        %v3793 = vcombine.high %v3599, %v3599
        %v3795 = vunpack.c.l.s4 1966171168
        %v3796 = vunpack.c.0.s8 %v3795
        %v3797 = vlaneseq
        %v3798 = vshrl.u32 %v3797, 7
        %v3799 = vsub.s32 %v3796, %v3798
        %v3800 = vrot.slane %v3599, %v3799
        %v3802 = vunpack.c.l.s4 1966171168
        %v3803 = vunpack.c.0.s8 %v3802
        %v3804 = vlaneseq
        %v3805 = vshrl.u32 %v3804, 7
        %v3806 = vsub.s32 %v3803, %v3805
        %v3807 = vrot.slane %v3793, %v3806
        %v3808 = vcombine.high %v3800, %v3800
        %v3809 = vcombine.high %v3807, %v3807
        %v3811 = vunpack.c.l.s4 1966171168
        %v3812 = vunpack.c.0.s8 %v3811
        %v3813 = vlaneseq
        %v3814 = vshrl.u32 %v3813, 7
        %v3815 = vsub.s32 %v3812, %v3814
        %v3816 = vrot.slane %v3800, %v3815
        %v3818 = vunpack.c.l.s4 1966171168
        %v3819 = vunpack.c.0.s8 %v3818
        %v3820 = vlaneseq
        %v3821 = vshrl.u32 %v3820, 7
        %v3822 = vsub.s32 %v3819, %v3821
        %v3823 = vrot.slane %v3807, %v3822
        %v3825 = vunpack.c.l.s4 1966171168
        %v3826 = vunpack.c.0.s8 %v3825
        %v3827 = vlaneseq
        %v3828 = vshrl.u32 %v3827, 7
        %v3829 = vsub.s32 %v3826, %v3828
        %v3830 = vrot.slane %v3808, %v3829
        %v3832 = vunpack.c.l.s4 1966171168
        %v3833 = vunpack.c.0.s8 %v3832
        %v3834 = vlaneseq
        %v3835 = vshrl.u32 %v3834, 7
        %v3836 = vsub.s32 %v3833, %v3835
        %v3837 = vrot.slane %v3809, %v3836
        %v3838 = vcombine.high %v3816, %v3816
        %v3839 = vcombine.high %v3823, %v3823
        %v3840 = vcombine.high %v3830, %v3830
        %v3841 = vcombine.high %v3837, %v3837
        %v3842 = vcombine.high %v3604, %v3604
        %v3844 = vunpack.c.l.s4 1966171168
        %v3845 = vunpack.c.0.s8 %v3844
        %v3846 = vlaneseq
        %v3847 = vshrl.u32 %v3846, 7
        %v3848 = vsub.s32 %v3845, %v3847
        %v3849 = vrot.slane %v3604, %v3848
        %v3851 = vunpack.c.l.s4 1966171168
        %v3852 = vunpack.c.0.s8 %v3851
        %v3853 = vlaneseq
        %v3854 = vshrl.u32 %v3853, 7
        %v3855 = vsub.s32 %v3852, %v3854
        %v3856 = vrot.slane %v3842, %v3855
        %v3857 = vcombine.high %v3849, %v3849
        %v3858 = vcombine.high %v3856, %v3856
        %v3860 = vunpack.c.l.s4 1966171168
        %v3861 = vunpack.c.0.s8 %v3860
        %v3862 = vlaneseq
        %v3863 = vshrl.u32 %v3862, 7
        %v3864 = vsub.s32 %v3861, %v3863
        %v3865 = vrot.slane %v3849, %v3864
        %v3867 = vunpack.c.l.s4 1966171168
        %v3868 = vunpack.c.0.s8 %v3867
        %v3869 = vlaneseq
        %v3870 = vshrl.u32 %v3869, 7
        %v3871 = vsub.s32 %v3868, %v3870
        %v3872 = vrot.slane %v3856, %v3871
        %v3874 = vunpack.c.l.s4 1966171168
        %v3875 = vunpack.c.0.s8 %v3874
        %v3876 = vlaneseq
        %v3877 = vshrl.u32 %v3876, 7
        %v3878 = vsub.s32 %v3875, %v3877
        %v3879 = vrot.slane %v3857, %v3878
        %v3881 = vunpack.c.l.s4 1966171168
        %v3882 = vunpack.c.0.s8 %v3881
        %v3883 = vlaneseq
        %v3884 = vshrl.u32 %v3883, 7
        %v3885 = vsub.s32 %v3882, %v3884
        %v3886 = vrot.slane %v3858, %v3885
        %v3887 = vcombine.high %v3865, %v3865
        %v3888 = vcombine.high %v3872, %v3872
        %v3889 = vcombine.high %v3879, %v3879
        %v3890 = vcombine.high %v3886, %v3886
        %v3891 = vcombine.high %v3609, %v3609
        %v3893 = vunpack.c.l.s4 1966171168
        %v3894 = vunpack.c.0.s8 %v3893
        %v3895 = vlaneseq
        %v3896 = vshrl.u32 %v3895, 7
        %v3897 = vsub.s32 %v3894, %v3896
        %v3898 = vrot.slane %v3609, %v3897
        %v3900 = vunpack.c.l.s4 1966171168
        %v3901 = vunpack.c.0.s8 %v3900
        %v3902 = vlaneseq
        %v3903 = vshrl.u32 %v3902, 7
        %v3904 = vsub.s32 %v3901, %v3903
        %v3905 = vrot.slane %v3891, %v3904
        %v3906 = vcombine.high %v3898, %v3898
        %v3907 = vcombine.high %v3905, %v3905
        %v3909 = vunpack.c.l.s4 1966171168
        %v3910 = vunpack.c.0.s8 %v3909
        %v3911 = vlaneseq
        %v3912 = vshrl.u32 %v3911, 7
        %v3913 = vsub.s32 %v3910, %v3912
        %v3914 = vrot.slane %v3898, %v3913
        %v3916 = vunpack.c.l.s4 1966171168
        %v3917 = vunpack.c.0.s8 %v3916
        %v3918 = vlaneseq
        %v3919 = vshrl.u32 %v3918, 7
        %v3920 = vsub.s32 %v3917, %v3919
        %v3921 = vrot.slane %v3905, %v3920
        %v3923 = vunpack.c.l.s4 1966171168
        %v3924 = vunpack.c.0.s8 %v3923
        %v3925 = vlaneseq
        %v3926 = vshrl.u32 %v3925, 7
        %v3927 = vsub.s32 %v3924, %v3926
        %v3928 = vrot.slane %v3906, %v3927
        %v3930 = vunpack.c.l.s4 1966171168
        %v3931 = vunpack.c.0.s8 %v3930
        %v3932 = vlaneseq
        %v3933 = vshrl.u32 %v3932, 7
        %v3934 = vsub.s32 %v3931, %v3933
        %v3935 = vrot.slane %v3907, %v3934
        %v3936 = vcombine.high %v3914, %v3914
        %v3937 = vcombine.high %v3921, %v3921
        %v3938 = vcombine.high %v3928, %v3928
        %v3939 = vcombine.high %v3935, %v3935
        %v3940 = vcombine.high %v3614, %v3614
        %v3942 = vunpack.c.l.s4 1966171168
        %v3943 = vunpack.c.0.s8 %v3942
        %v3944 = vlaneseq
        %v3945 = vshrl.u32 %v3944, 7
        %v3946 = vsub.s32 %v3943, %v3945
        %v3947 = vrot.slane %v3614, %v3946
        %v3949 = vunpack.c.l.s4 1966171168
        %v3950 = vunpack.c.0.s8 %v3949
        %v3951 = vlaneseq
        %v3952 = vshrl.u32 %v3951, 7
        %v3953 = vsub.s32 %v3950, %v3952
        %v3954 = vrot.slane %v3940, %v3953
        %v3955 = vcombine.high %v3947, %v3947
        %v3956 = vcombine.high %v3954, %v3954
        %v3958 = vunpack.c.l.s4 1966171168
        %v3959 = vunpack.c.0.s8 %v3958
        %v3960 = vlaneseq
        %v3961 = vshrl.u32 %v3960, 7
        %v3962 = vsub.s32 %v3959, %v3961
        %v3963 = vrot.slane %v3947, %v3962
        %v3965 = vunpack.c.l.s4 1966171168
        %v3966 = vunpack.c.0.s8 %v3965
        %v3967 = vlaneseq
        %v3968 = vshrl.u32 %v3967, 7
        %v3969 = vsub.s32 %v3966, %v3968
        %v3970 = vrot.slane %v3954, %v3969
        %v3972 = vunpack.c.l.s4 1966171168
        %v3973 = vunpack.c.0.s8 %v3972
        %v3974 = vlaneseq
        %v3975 = vshrl.u32 %v3974, 7
        %v3976 = vsub.s32 %v3973, %v3975
        %v3977 = vrot.slane %v3955, %v3976
        %v3979 = vunpack.c.l.s4 1966171168
        %v3980 = vunpack.c.0.s8 %v3979
        %v3981 = vlaneseq
        %v3982 = vshrl.u32 %v3981, 7
        %v3983 = vsub.s32 %v3980, %v3982
        %v3984 = vrot.slane %v3956, %v3983
        %v3985 = vcombine.high %v3963, %v3963
        %v3986 = vcombine.high %v3970, %v3970
        %v3987 = vcombine.high %v3977, %v3977
        %v3988 = vcombine.high %v3984, %v3984
        %v3989 = vcombine.high %v3619, %v3619
        %v3991 = vunpack.c.l.s4 1966171168
        %v3992 = vunpack.c.0.s8 %v3991
        %v3993 = vlaneseq
        %v3994 = vshrl.u32 %v3993, 7
        %v3995 = vsub.s32 %v3992, %v3994
        %v3996 = vrot.slane %v3619, %v3995
        %v3998 = vunpack.c.l.s4 1966171168
        %v3999 = vunpack.c.0.s8 %v3998
        %v4000 = vlaneseq
        %v4001 = vshrl.u32 %v4000, 7
        %v4002 = vsub.s32 %v3999, %v4001
        %v4003 = vrot.slane %v3989, %v4002
        %v4004 = vcombine.high %v3996, %v3996
        %v4005 = vcombine.high %v4003, %v4003
        %v4007 = vunpack.c.l.s4 1966171168
        %v4008 = vunpack.c.0.s8 %v4007
        %v4009 = vlaneseq
        %v4010 = vshrl.u32 %v4009, 7
        %v4011 = vsub.s32 %v4008, %v4010
        %v4012 = vrot.slane %v3996, %v4011
        %v4014 = vunpack.c.l.s4 1966171168
        %v4015 = vunpack.c.0.s8 %v4014
        %v4016 = vlaneseq
        %v4017 = vshrl.u32 %v4016, 7
        %v4018 = vsub.s32 %v4015, %v4017
        %v4019 = vrot.slane %v4003, %v4018
        %v4021 = vunpack.c.l.s4 1966171168
        %v4022 = vunpack.c.0.s8 %v4021
        %v4023 = vlaneseq
        %v4024 = vshrl.u32 %v4023, 7
        %v4025 = vsub.s32 %v4022, %v4024
        %v4026 = vrot.slane %v4004, %v4025
        %v4028 = vunpack.c.l.s4 1966171168
        %v4029 = vunpack.c.0.s8 %v4028
        %v4030 = vlaneseq
        %v4031 = vshrl.u32 %v4030, 7
        %v4032 = vsub.s32 %v4029, %v4031
        %v4033 = vrot.slane %v4005, %v4032
        %v4034 = vcombine.high %v4012, %v4012
        %v4035 = vcombine.high %v4019, %v4019
        %v4036 = vcombine.high %v4026, %v4026
        %v4037 = vcombine.high %v4033, %v4033
        %v4038 = vcombine.high %v3624, %v3624
        %v4040 = vunpack.c.l.s4 1966171168
        %v4041 = vunpack.c.0.s8 %v4040
        %v4042 = vlaneseq
        %v4043 = vshrl.u32 %v4042, 7
        %v4044 = vsub.s32 %v4041, %v4043
        %v4045 = vrot.slane %v3624, %v4044
        %v4047 = vunpack.c.l.s4 1966171168
        %v4048 = vunpack.c.0.s8 %v4047
        %v4049 = vlaneseq
        %v4050 = vshrl.u32 %v4049, 7
        %v4051 = vsub.s32 %v4048, %v4050
        %v4052 = vrot.slane %v4038, %v4051
        %v4053 = vcombine.high %v4045, %v4045
        %v4054 = vcombine.high %v4052, %v4052
        %v4056 = vunpack.c.l.s4 1966171168
        %v4057 = vunpack.c.0.s8 %v4056
        %v4058 = vlaneseq
        %v4059 = vshrl.u32 %v4058, 7
        %v4060 = vsub.s32 %v4057, %v4059
        %v4061 = vrot.slane %v4045, %v4060
        %v4063 = vunpack.c.l.s4 1966171168
        %v4064 = vunpack.c.0.s8 %v4063
        %v4065 = vlaneseq
        %v4066 = vshrl.u32 %v4065, 7
        %v4067 = vsub.s32 %v4064, %v4066
        %v4068 = vrot.slane %v4052, %v4067
        %v4070 = vunpack.c.l.s4 1966171168
        %v4071 = vunpack.c.0.s8 %v4070
        %v4072 = vlaneseq
        %v4073 = vshrl.u32 %v4072, 7
        %v4074 = vsub.s32 %v4071, %v4073
        %v4075 = vrot.slane %v4053, %v4074
        %v4077 = vunpack.c.l.s4 1966171168
        %v4078 = vunpack.c.0.s8 %v4077
        %v4079 = vlaneseq
        %v4080 = vshrl.u32 %v4079, 7
        %v4081 = vsub.s32 %v4078, %v4080
        %v4082 = vrot.slane %v4054, %v4081
        %v4083 = vcombine.high %v4061, %v4061
        %v4084 = vcombine.high %v4068, %v4068
        %v4085 = vcombine.high %v4075, %v4075
        %v4086 = vcombine.high %v4082, %v4082
        %v4087 = vcombine.high %v3629, %v3629
        %v4089 = vunpack.c.l.s4 1966171168
        %v4090 = vunpack.c.0.s8 %v4089
        %v4091 = vlaneseq
        %v4092 = vshrl.u32 %v4091, 7
        %v4093 = vsub.s32 %v4090, %v4092
        %v4094 = vrot.slane %v3629, %v4093
        %v4096 = vunpack.c.l.s4 1966171168
        %v4097 = vunpack.c.0.s8 %v4096
        %v4098 = vlaneseq
        %v4099 = vshrl.u32 %v4098, 7
        %v4100 = vsub.s32 %v4097, %v4099
        %v4101 = vrot.slane %v4087, %v4100
        %v4102 = vcombine.high %v4094, %v4094
        %v4103 = vcombine.high %v4101, %v4101
        %v4105 = vunpack.c.l.s4 1966171168
        %v4106 = vunpack.c.0.s8 %v4105
        %v4107 = vlaneseq
        %v4108 = vshrl.u32 %v4107, 7
        %v4109 = vsub.s32 %v4106, %v4108
        %v4110 = vrot.slane %v4094, %v4109
        %v4112 = vunpack.c.l.s4 1966171168
        %v4113 = vunpack.c.0.s8 %v4112
        %v4114 = vlaneseq
        %v4115 = vshrl.u32 %v4114, 7
        %v4116 = vsub.s32 %v4113, %v4115
        %v4117 = vrot.slane %v4101, %v4116
        %v4119 = vunpack.c.l.s4 1966171168
        %v4120 = vunpack.c.0.s8 %v4119
        %v4121 = vlaneseq
        %v4122 = vshrl.u32 %v4121, 7
        %v4123 = vsub.s32 %v4120, %v4122
        %v4124 = vrot.slane %v4102, %v4123
        %v4126 = vunpack.c.l.s4 1966171168
        %v4127 = vunpack.c.0.s8 %v4126
        %v4128 = vlaneseq
        %v4129 = vshrl.u32 %v4128, 7
        %v4130 = vsub.s32 %v4127, %v4129
        %v4131 = vrot.slane %v4103, %v4130
        %v4132 = vcombine.high %v4110, %v4110
        %v4133 = vcombine.high %v4117, %v4117
        %v4134 = vcombine.high %v4124, %v4124
        %v4135 = vcombine.high %v4131, %v4131
        %v4136 = vcombine.high %v3634, %v3634
        %v4138 = vunpack.c.l.s4 1966171168
        %v4139 = vunpack.c.0.s8 %v4138
        %v4140 = vlaneseq
        %v4141 = vshrl.u32 %v4140, 7
        %v4142 = vsub.s32 %v4139, %v4141
        %v4143 = vrot.slane %v3634, %v4142
        %v4145 = vunpack.c.l.s4 1966171168
        %v4146 = vunpack.c.0.s8 %v4145
        %v4147 = vlaneseq
        %v4148 = vshrl.u32 %v4147, 7
        %v4149 = vsub.s32 %v4146, %v4148
        %v4150 = vrot.slane %v4136, %v4149
        %v4151 = vcombine.high %v4143, %v4143
        %v4152 = vcombine.high %v4150, %v4150
        %v4154 = vunpack.c.l.s4 1966171168
        %v4155 = vunpack.c.0.s8 %v4154
        %v4156 = vlaneseq
        %v4157 = vshrl.u32 %v4156, 7
        %v4158 = vsub.s32 %v4155, %v4157
        %v4159 = vrot.slane %v4143, %v4158
        %v4161 = vunpack.c.l.s4 1966171168
        %v4162 = vunpack.c.0.s8 %v4161
        %v4163 = vlaneseq
        %v4164 = vshrl.u32 %v4163, 7
        %v4165 = vsub.s32 %v4162, %v4164
        %v4166 = vrot.slane %v4150, %v4165
        %v4168 = vunpack.c.l.s4 1966171168
        %v4169 = vunpack.c.0.s8 %v4168
        %v4170 = vlaneseq
        %v4171 = vshrl.u32 %v4170, 7
        %v4172 = vsub.s32 %v4169, %v4171
        %v4173 = vrot.slane %v4151, %v4172
        %v4175 = vunpack.c.l.s4 1966171168
        %v4176 = vunpack.c.0.s8 %v4175
        %v4177 = vlaneseq
        %v4178 = vshrl.u32 %v4177, 7
        %v4179 = vsub.s32 %v4176, %v4178
        %v4180 = vrot.slane %v4152, %v4179
        %v4181 = vcombine.high %v4159, %v4159
        %v4182 = vcombine.high %v4166, %v4166
        %v4183 = vcombine.high %v4173, %v4173
        %v4184 = vcombine.high %v4180, %v4180
        %v4185 = vcombine.high %v3639, %v3639
        %v4187 = vunpack.c.l.s4 1966171168
        %v4188 = vunpack.c.0.s8 %v4187
        %v4189 = vlaneseq
        %v4190 = vshrl.u32 %v4189, 7
        %v4191 = vsub.s32 %v4188, %v4190
        %v4192 = vrot.slane %v3639, %v4191
        %v4194 = vunpack.c.l.s4 1966171168
        %v4195 = vunpack.c.0.s8 %v4194
        %v4196 = vlaneseq
        %v4197 = vshrl.u32 %v4196, 7
        %v4198 = vsub.s32 %v4195, %v4197
        %v4199 = vrot.slane %v4185, %v4198
        %v4200 = vcombine.high %v4192, %v4192
        %v4201 = vcombine.high %v4199, %v4199
        %v4203 = vunpack.c.l.s4 1966171168
        %v4204 = vunpack.c.0.s8 %v4203
        %v4205 = vlaneseq
        %v4206 = vshrl.u32 %v4205, 7
        %v4207 = vsub.s32 %v4204, %v4206
        %v4208 = vrot.slane %v4192, %v4207
        %v4210 = vunpack.c.l.s4 1966171168
        %v4211 = vunpack.c.0.s8 %v4210
        %v4212 = vlaneseq
        %v4213 = vshrl.u32 %v4212, 7
        %v4214 = vsub.s32 %v4211, %v4213
        %v4215 = vrot.slane %v4199, %v4214
        %v4217 = vunpack.c.l.s4 1966171168
        %v4218 = vunpack.c.0.s8 %v4217
        %v4219 = vlaneseq
        %v4220 = vshrl.u32 %v4219, 7
        %v4221 = vsub.s32 %v4218, %v4220
        %v4222 = vrot.slane %v4200, %v4221
        %v4224 = vunpack.c.l.s4 1966171168
        %v4225 = vunpack.c.0.s8 %v4224
        %v4226 = vlaneseq
        %v4227 = vshrl.u32 %v4226, 7
        %v4228 = vsub.s32 %v4225, %v4227
        %v4229 = vrot.slane %v4201, %v4228
        %v4230 = vcombine.high %v4208, %v4208
        %v4231 = vcombine.high %v4215, %v4215
        %v4232 = vcombine.high %v4222, %v4222
        %v4233 = vcombine.high %v4229, %v4229
        %v4234 = vcombine.high %v3644, %v3644
        %v4236 = vunpack.c.l.s4 1966171168
        %v4237 = vunpack.c.0.s8 %v4236
        %v4238 = vlaneseq
        %v4239 = vshrl.u32 %v4238, 7
        %v4240 = vsub.s32 %v4237, %v4239
        %v4241 = vrot.slane %v3644, %v4240
        %v4243 = vunpack.c.l.s4 1966171168
        %v4244 = vunpack.c.0.s8 %v4243
        %v4245 = vlaneseq
        %v4246 = vshrl.u32 %v4245, 7
        %v4247 = vsub.s32 %v4244, %v4246
        %v4248 = vrot.slane %v4234, %v4247
        %v4249 = vcombine.high %v4241, %v4241
        %v4250 = vcombine.high %v4248, %v4248
        %v4252 = vunpack.c.l.s4 1966171168
        %v4253 = vunpack.c.0.s8 %v4252
        %v4254 = vlaneseq
        %v4255 = vshrl.u32 %v4254, 7
        %v4256 = vsub.s32 %v4253, %v4255
        %v4257 = vrot.slane %v4241, %v4256
        %v4259 = vunpack.c.l.s4 1966171168
        %v4260 = vunpack.c.0.s8 %v4259
        %v4261 = vlaneseq
        %v4262 = vshrl.u32 %v4261, 7
        %v4263 = vsub.s32 %v4260, %v4262
        %v4264 = vrot.slane %v4248, %v4263
        %v4266 = vunpack.c.l.s4 1966171168
        %v4267 = vunpack.c.0.s8 %v4266
        %v4268 = vlaneseq
        %v4269 = vshrl.u32 %v4268, 7
        %v4270 = vsub.s32 %v4267, %v4269
        %v4271 = vrot.slane %v4249, %v4270
        %v4273 = vunpack.c.l.s4 1966171168
        %v4274 = vunpack.c.0.s8 %v4273
        %v4275 = vlaneseq
        %v4276 = vshrl.u32 %v4275, 7
        %v4277 = vsub.s32 %v4274, %v4276
        %v4278 = vrot.slane %v4250, %v4277
        %v4279 = vcombine.high %v4257, %v4257
        %v4280 = vcombine.high %v4264, %v4264
        %v4281 = vcombine.high %v4271, %v4271
        %v4282 = vcombine.high %v4278, %v4278
        %v4283 = vcombine.high %v3649, %v3649
        %v4285 = vunpack.c.l.s4 1966171168
        %v4286 = vunpack.c.0.s8 %v4285
        %v4287 = vlaneseq
        %v4288 = vshrl.u32 %v4287, 7
        %v4289 = vsub.s32 %v4286, %v4288
        %v4290 = vrot.slane %v3649, %v4289
        %v4292 = vunpack.c.l.s4 1966171168
        %v4293 = vunpack.c.0.s8 %v4292
        %v4294 = vlaneseq
        %v4295 = vshrl.u32 %v4294, 7
        %v4296 = vsub.s32 %v4293, %v4295
        %v4297 = vrot.slane %v4283, %v4296
        %v4298 = vcombine.high %v4290, %v4290
        %v4299 = vcombine.high %v4297, %v4297
        %v4301 = vunpack.c.l.s4 1966171168
        %v4302 = vunpack.c.0.s8 %v4301
        %v4303 = vlaneseq
        %v4304 = vshrl.u32 %v4303, 7
        %v4305 = vsub.s32 %v4302, %v4304
        %v4306 = vrot.slane %v4290, %v4305
        %v4308 = vunpack.c.l.s4 1966171168
        %v4309 = vunpack.c.0.s8 %v4308
        %v4310 = vlaneseq
        %v4311 = vshrl.u32 %v4310, 7
        %v4312 = vsub.s32 %v4309, %v4311
        %v4313 = vrot.slane %v4297, %v4312
        %v4315 = vunpack.c.l.s4 1966171168
        %v4316 = vunpack.c.0.s8 %v4315
        %v4317 = vlaneseq
        %v4318 = vshrl.u32 %v4317, 7
        %v4319 = vsub.s32 %v4316, %v4318
        %v4320 = vrot.slane %v4298, %v4319
        %v4322 = vunpack.c.l.s4 1966171168
        %v4323 = vunpack.c.0.s8 %v4322
        %v4324 = vlaneseq
        %v4325 = vshrl.u32 %v4324, 7
        %v4326 = vsub.s32 %v4323, %v4325
        %v4327 = vrot.slane %v4299, %v4326
        %v4328 = vcombine.high %v4306, %v4306
        %v4329 = vcombine.high %v4313, %v4313
        %v4330 = vcombine.high %v4320, %v4320
        %v4331 = vcombine.high %v4327, %v4327
        %v4332 = vcombine.high %v3654, %v3654
        %v4334 = vunpack.c.l.s4 1966171168
        %v4335 = vunpack.c.0.s8 %v4334
        %v4336 = vlaneseq
        %v4337 = vshrl.u32 %v4336, 7
        %v4338 = vsub.s32 %v4335, %v4337
        %v4339 = vrot.slane %v3654, %v4338
        %v4341 = vunpack.c.l.s4 1966171168
        %v4342 = vunpack.c.0.s8 %v4341
        %v4343 = vlaneseq
        %v4344 = vshrl.u32 %v4343, 7
        %v4345 = vsub.s32 %v4342, %v4344
        %v4346 = vrot.slane %v4332, %v4345
        %v4347 = vcombine.high %v4339, %v4339
        %v4348 = vcombine.high %v4346, %v4346
        %v4350 = vunpack.c.l.s4 1966171168
        %v4351 = vunpack.c.0.s8 %v4350
        %v4352 = vlaneseq
        %v4353 = vshrl.u32 %v4352, 7
        %v4354 = vsub.s32 %v4351, %v4353
        %v4355 = vrot.slane %v4339, %v4354
        %v4357 = vunpack.c.l.s4 1966171168
        %v4358 = vunpack.c.0.s8 %v4357
        %v4359 = vlaneseq
        %v4360 = vshrl.u32 %v4359, 7
        %v4361 = vsub.s32 %v4358, %v4360
        %v4362 = vrot.slane %v4346, %v4361
        %v4364 = vunpack.c.l.s4 1966171168
        %v4365 = vunpack.c.0.s8 %v4364
        %v4366 = vlaneseq
        %v4367 = vshrl.u32 %v4366, 7
        %v4368 = vsub.s32 %v4365, %v4367
        %v4369 = vrot.slane %v4347, %v4368
        %v4371 = vunpack.c.l.s4 1966171168
        %v4372 = vunpack.c.0.s8 %v4371
        %v4373 = vlaneseq
        %v4374 = vshrl.u32 %v4373, 7
        %v4375 = vsub.s32 %v4372, %v4374
        %v4376 = vrot.slane %v4348, %v4375
        %v4377 = vcombine.high %v4355, %v4355
        %v4378 = vcombine.high %v4362, %v4362
        %v4379 = vcombine.high %v4369, %v4369
        %v4380 = vcombine.high %v4376, %v4376
        %v4381 = vcombine.high %v3659, %v3659
        %v4383 = vunpack.c.l.s4 1966171168
        %v4384 = vunpack.c.0.s8 %v4383
        %v4385 = vlaneseq
        %v4386 = vshrl.u32 %v4385, 7
        %v4387 = vsub.s32 %v4384, %v4386
        %v4388 = vrot.slane %v3659, %v4387
        %v4390 = vunpack.c.l.s4 1966171168
        %v4391 = vunpack.c.0.s8 %v4390
        %v4392 = vlaneseq
        %v4393 = vshrl.u32 %v4392, 7
        %v4394 = vsub.s32 %v4391, %v4393
        %v4395 = vrot.slane %v4381, %v4394
        %v4396 = vcombine.high %v4388, %v4388
        %v4397 = vcombine.high %v4395, %v4395
        %v4399 = vunpack.c.l.s4 1966171168
        %v4400 = vunpack.c.0.s8 %v4399
        %v4401 = vlaneseq
        %v4402 = vshrl.u32 %v4401, 7
        %v4403 = vsub.s32 %v4400, %v4402
        %v4404 = vrot.slane %v4388, %v4403
        %v4406 = vunpack.c.l.s4 1966171168
        %v4407 = vunpack.c.0.s8 %v4406
        %v4408 = vlaneseq
        %v4409 = vshrl.u32 %v4408, 7
        %v4410 = vsub.s32 %v4407, %v4409
        %v4411 = vrot.slane %v4395, %v4410
        %v4413 = vunpack.c.l.s4 1966171168
        %v4414 = vunpack.c.0.s8 %v4413
        %v4415 = vlaneseq
        %v4416 = vshrl.u32 %v4415, 7
        %v4417 = vsub.s32 %v4414, %v4416
        %v4418 = vrot.slane %v4396, %v4417
        %v4420 = vunpack.c.l.s4 1966171168
        %v4421 = vunpack.c.0.s8 %v4420
        %v4422 = vlaneseq
        %v4423 = vshrl.u32 %v4422, 7
        %v4424 = vsub.s32 %v4421, %v4423
        %v4425 = vrot.slane %v4397, %v4424
        %v4426 = vcombine.high %v4404, %v4404
        %v4427 = vcombine.high %v4411, %v4411
        %v4428 = vcombine.high %v4418, %v4418
        %v4429 = vcombine.high %v4425, %v4425
        %v4430 = vcombine.high %v3664, %v3664
        %v4432 = vunpack.c.l.s4 1966171168
        %v4433 = vunpack.c.0.s8 %v4432
        %v4434 = vlaneseq
        %v4435 = vshrl.u32 %v4434, 7
        %v4436 = vsub.s32 %v4433, %v4435
        %v4437 = vrot.slane %v3664, %v4436
        %v4439 = vunpack.c.l.s4 1966171168
        %v4440 = vunpack.c.0.s8 %v4439
        %v4441 = vlaneseq
        %v4442 = vshrl.u32 %v4441, 7
        %v4443 = vsub.s32 %v4440, %v4442
        %v4444 = vrot.slane %v4430, %v4443
        %v4445 = vcombine.high %v4437, %v4437
        %v4446 = vcombine.high %v4444, %v4444
        %v4448 = vunpack.c.l.s4 1966171168
        %v4449 = vunpack.c.0.s8 %v4448
        %v4450 = vlaneseq
        %v4451 = vshrl.u32 %v4450, 7
        %v4452 = vsub.s32 %v4449, %v4451
        %v4453 = vrot.slane %v4437, %v4452
        %v4455 = vunpack.c.l.s4 1966171168
        %v4456 = vunpack.c.0.s8 %v4455
        %v4457 = vlaneseq
        %v4458 = vshrl.u32 %v4457, 7
        %v4459 = vsub.s32 %v4456, %v4458
        %v4460 = vrot.slane %v4444, %v4459
        %v4462 = vunpack.c.l.s4 1966171168
        %v4463 = vunpack.c.0.s8 %v4462
        %v4464 = vlaneseq
        %v4465 = vshrl.u32 %v4464, 7
        %v4466 = vsub.s32 %v4463, %v4465
        %v4467 = vrot.slane %v4445, %v4466
        %v4469 = vunpack.c.l.s4 1966171168
        %v4470 = vunpack.c.0.s8 %v4469
        %v4471 = vlaneseq
        %v4472 = vshrl.u32 %v4471, 7
        %v4473 = vsub.s32 %v4470, %v4472
        %v4474 = vrot.slane %v4446, %v4473
        %v4475 = vcombine.high %v4453, %v4453
        %v4476 = vcombine.high %v4460, %v4460
        %v4477 = vcombine.high %v4467, %v4467
        %v4478 = vcombine.high %v4474, %v4474
        %v4479 = vcombine.high %v3669, %v3669
        %v4481 = vunpack.c.l.s4 1966171168
        %v4482 = vunpack.c.0.s8 %v4481
        %v4483 = vlaneseq
        %v4484 = vshrl.u32 %v4483, 7
        %v4485 = vsub.s32 %v4482, %v4484
        %v4486 = vrot.slane %v3669, %v4485
        %v4488 = vunpack.c.l.s4 1966171168
        %v4489 = vunpack.c.0.s8 %v4488
        %v4490 = vlaneseq
        %v4491 = vshrl.u32 %v4490, 7
        %v4492 = vsub.s32 %v4489, %v4491
        %v4493 = vrot.slane %v4479, %v4492
        %v4494 = vcombine.high %v4486, %v4486
        %v4495 = vcombine.high %v4493, %v4493
        %v4497 = vunpack.c.l.s4 1966171168
        %v4498 = vunpack.c.0.s8 %v4497
        %v4499 = vlaneseq
        %v4500 = vshrl.u32 %v4499, 7
        %v4501 = vsub.s32 %v4498, %v4500
        %v4502 = vrot.slane %v4486, %v4501
        %v4504 = vunpack.c.l.s4 1966171168
        %v4505 = vunpack.c.0.s8 %v4504
        %v4506 = vlaneseq
        %v4507 = vshrl.u32 %v4506, 7
        %v4508 = vsub.s32 %v4505, %v4507
        %v4509 = vrot.slane %v4493, %v4508
        %v4511 = vunpack.c.l.s4 1966171168
        %v4512 = vunpack.c.0.s8 %v4511
        %v4513 = vlaneseq
        %v4514 = vshrl.u32 %v4513, 7
        %v4515 = vsub.s32 %v4512, %v4514
        %v4516 = vrot.slane %v4494, %v4515
        %v4518 = vunpack.c.l.s4 1966171168
        %v4519 = vunpack.c.0.s8 %v4518
        %v4520 = vlaneseq
        %v4521 = vshrl.u32 %v4520, 7
        %v4522 = vsub.s32 %v4519, %v4521
        %v4523 = vrot.slane %v4495, %v4522
        %v4524 = vcombine.high %v4502, %v4502
        %v4525 = vcombine.high %v4509, %v4509
        %v4526 = vcombine.high %v4516, %v4516
        %v4527 = vcombine.high %v4523, %v4523
        %v4528 = vcombine.high %v3674, %v3674
        %v4530 = vunpack.c.l.s4 1966171168
        %v4531 = vunpack.c.0.s8 %v4530
        %v4532 = vlaneseq
        %v4533 = vshrl.u32 %v4532, 7
        %v4534 = vsub.s32 %v4531, %v4533
        %v4535 = vrot.slane %v3674, %v4534
        %v4537 = vunpack.c.l.s4 1966171168
        %v4538 = vunpack.c.0.s8 %v4537
        %v4539 = vlaneseq
        %v4540 = vshrl.u32 %v4539, 7
        %v4541 = vsub.s32 %v4538, %v4540
        %v4542 = vrot.slane %v4528, %v4541
        %v4543 = vcombine.high %v4535, %v4535
        %v4544 = vcombine.high %v4542, %v4542
        %v4546 = vunpack.c.l.s4 1966171168
        %v4547 = vunpack.c.0.s8 %v4546
        %v4548 = vlaneseq
        %v4549 = vshrl.u32 %v4548, 7
        %v4550 = vsub.s32 %v4547, %v4549
        %v4551 = vrot.slane %v4535, %v4550
        %v4553 = vunpack.c.l.s4 1966171168
        %v4554 = vunpack.c.0.s8 %v4553
        %v4555 = vlaneseq
        %v4556 = vshrl.u32 %v4555, 7
        %v4557 = vsub.s32 %v4554, %v4556
        %v4558 = vrot.slane %v4542, %v4557
        %v4560 = vunpack.c.l.s4 1966171168
        %v4561 = vunpack.c.0.s8 %v4560
        %v4562 = vlaneseq
        %v4563 = vshrl.u32 %v4562, 7
        %v4564 = vsub.s32 %v4561, %v4563
        %v4565 = vrot.slane %v4543, %v4564
        %v4567 = vunpack.c.l.s4 1966171168
        %v4568 = vunpack.c.0.s8 %v4567
        %v4569 = vlaneseq
        %v4570 = vshrl.u32 %v4569, 7
        %v4571 = vsub.s32 %v4568, %v4570
        %v4572 = vrot.slane %v4544, %v4571
        %v4573 = vcombine.high %v4551, %v4551
        %v4574 = vcombine.high %v4558, %v4558
        %v4575 = vcombine.high %v4565, %v4565
        %v4576 = vcombine.high %v4572, %v4572
        %v4577 = vcombine.low %v3718, %v3732
        %v4579 = vunpack.c.l.s4 1966171168
        %v4580 = vunpack.c.0.s8 %v4579
        %v4581 = vlaneseq
        %v4582 = vshrl.u32 %v4581, 7
        %v4583 = vsub.s32 %v4580, %v4582
        %v4584 = vrot.slane %v4577, %v4583
        %v4586 = vunpack.c.l.s4 1966171168
        %v4587 = vunpack.c.0.s8 %v4586
        %v4588 = vlaneseq
        %v4589 = vshrl.u32 %v4588, 7
        %v4590 = vsub.s32 %v4587, %v4589
        %v4591 = vrot.slane %v3740, %v4590
        %v4592 = vcombine.low %v4584, %v4591
        %v4594 = vunpack.c.l.s4 1966171168
        %v4595 = vunpack.c.0.s8 %v4594
        %v4596 = vlaneseq
        %v4597 = vshrl.u32 %v4596, 7
        %v4598 = vsub.s32 %v4595, %v4597
        %v4599 = vrot.slane %v4592, %v4598
        %v4600 = vcombine.low %v3742, %v3725
        %v4602 = vunpack.c.l.s4 1966171168
        %v4603 = vunpack.c.0.s8 %v4602
        %v4604 = vlaneseq
        %v4605 = vshrl.u32 %v4604, 7
        %v4606 = vsub.s32 %v4603, %v4605
        %v4607 = vrot.slane %v4600, %v4606
        %v4609 = vunpack.c.l.s4 1966171168
        %v4610 = vunpack.c.0.s8 %v4609
        %v4611 = vlaneseq
        %v4612 = vshrl.u32 %v4611, 7
        %v4613 = vsub.s32 %v4610, %v4612
        %v4614 = vrot.slane %v3739, %v4613
        %v4615 = vcombine.low %v4607, %v4614
        %v4617 = vunpack.c.l.s4 1966171168
        %v4618 = vunpack.c.0.s8 %v4617
        %v4619 = vlaneseq
        %v4620 = vshrl.u32 %v4619, 7
        %v4621 = vsub.s32 %v4618, %v4620
        %v4622 = vrot.slane %v4615, %v4621
        %v4623 = vcombine.low %v3741, %v3743
        %v4625 = vunpack.c.l.s4 1966171168
        %v4626 = vunpack.c.0.s8 %v4625
        %v4627 = vlaneseq
        %v4628 = vshrl.u32 %v4627, 7
        %v4629 = vsub.s32 %v4626, %v4628
        %v4630 = vrot.slane %v4623, %v4629
        %v4632 = vunpack.c.l.s4 1966171168
        %v4633 = vunpack.c.0.s8 %v4632
        %v4634 = vlaneseq
        %v4635 = vshrl.u32 %v4634, 7
        %v4636 = vsub.s32 %v4633, %v4635
        %v4637 = vrot.slane %v3767, %v4636
        %v4638 = vcombine.low %v4630, %v4637
        %v4640 = vunpack.c.l.s4 1966171168
        %v4641 = vunpack.c.0.s8 %v4640
        %v4642 = vlaneseq
        %v4643 = vshrl.u32 %v4642, 7
        %v4644 = vsub.s32 %v4641, %v4643
        %v4645 = vrot.slane %v4638, %v4644
        %v4646 = vcombine.low %v3781, %v3789
        %v4648 = vunpack.c.l.s4 1966171168
        %v4649 = vunpack.c.0.s8 %v4648
        %v4650 = vlaneseq
        %v4651 = vshrl.u32 %v4650, 7
        %v4652 = vsub.s32 %v4649, %v4651
        %v4653 = vrot.slane %v4646, %v4652
        %v4655 = vunpack.c.l.s4 1966171168
        %v4656 = vunpack.c.0.s8 %v4655
        %v4657 = vlaneseq
        %v4658 = vshrl.u32 %v4657, 7
        %v4659 = vsub.s32 %v4656, %v4658
        %v4660 = vrot.slane %v3791, %v4659
        %v4661 = vcombine.low %v4653, %v4660
        %v4663 = vunpack.c.l.s4 1966171168
        %v4664 = vunpack.c.0.s8 %v4663
        %v4665 = vlaneseq
        %v4666 = vshrl.u32 %v4665, 7
        %v4667 = vsub.s32 %v4664, %v4666
        %v4668 = vrot.slane %v4661, %v4667
        %v4669 = vcombine.low %v3774, %v3788
        %v4671 = vunpack.c.l.s4 1966171168
        %v4672 = vunpack.c.0.s8 %v4671
        %v4673 = vlaneseq
        %v4674 = vshrl.u32 %v4673, 7
        %v4675 = vsub.s32 %v4672, %v4674
        %v4676 = vrot.slane %v4669, %v4675
        %v4678 = vunpack.c.l.s4 1966171168
        %v4679 = vunpack.c.0.s8 %v4678
        %v4680 = vlaneseq
        %v4681 = vshrl.u32 %v4680, 7
        %v4682 = vsub.s32 %v4679, %v4681
        %v4683 = vrot.slane %v3790, %v4682
        %v4684 = vcombine.low %v4676, %v4683
        %v4686 = vunpack.c.l.s4 1966171168
        %v4687 = vunpack.c.0.s8 %v4686
        %v4688 = vlaneseq
        %v4689 = vshrl.u32 %v4688, 7
        %v4690 = vsub.s32 %v4687, %v4689
        %v4691 = vrot.slane %v4684, %v4690
        %v4692 = vcombine.low %v3792, %v3816
        %v4694 = vunpack.c.l.s4 1966171168
        %v4695 = vunpack.c.0.s8 %v4694
        %v4696 = vlaneseq
        %v4697 = vshrl.u32 %v4696, 7
        %v4698 = vsub.s32 %v4695, %v4697
        %v4699 = vrot.slane %v4692, %v4698
        %v4701 = vunpack.c.l.s4 1966171168
        %v4702 = vunpack.c.0.s8 %v4701
        %v4703 = vlaneseq
        %v4704 = vshrl.u32 %v4703, 7
        %v4705 = vsub.s32 %v4702, %v4704
        %v4706 = vrot.slane %v3830, %v4705
        %v4707 = vcombine.low %v4699, %v4706
        %v4709 = vunpack.c.l.s4 1966171168
        %v4710 = vunpack.c.0.s8 %v4709
        %v4711 = vlaneseq
        %v4712 = vshrl.u32 %v4711, 7
        %v4713 = vsub.s32 %v4710, %v4712
        %v4714 = vrot.slane %v4707, %v4713
        %v4715 = vcombine.low %v3838, %v3840
        %v4717 = vunpack.c.l.s4 1966171168
        %v4718 = vunpack.c.0.s8 %v4717
        %v4719 = vlaneseq
        %v4720 = vshrl.u32 %v4719, 7
        %v4721 = vsub.s32 %v4718, %v4720
        %v4722 = vrot.slane %v4715, %v4721
        %v4724 = vunpack.c.l.s4 1966171168
        %v4725 = vunpack.c.0.s8 %v4724
        %v4726 = vlaneseq
        %v4727 = vshrl.u32 %v4726, 7
        %v4728 = vsub.s32 %v4725, %v4727
        %v4729 = vrot.slane %v3823, %v4728
        %v4730 = vcombine.low %v4722, %v4729
        %v4732 = vunpack.c.l.s4 1966171168
        %v4733 = vunpack.c.0.s8 %v4732
        %v4734 = vlaneseq
        %v4735 = vshrl.u32 %v4734, 7
        %v4736 = vsub.s32 %v4733, %v4735
        %v4737 = vrot.slane %v4730, %v4736
        %v4738 = vcombine.low %v3837, %v3839
        %v4740 = vunpack.c.l.s4 1966171168
        %v4741 = vunpack.c.0.s8 %v4740
        %v4742 = vlaneseq
        %v4743 = vshrl.u32 %v4742, 7
        %v4744 = vsub.s32 %v4741, %v4743
        %v4745 = vrot.slane %v4738, %v4744
        %v4747 = vunpack.c.l.s4 1966171168
        %v4748 = vunpack.c.0.s8 %v4747
        %v4749 = vlaneseq
        %v4750 = vshrl.u32 %v4749, 7
        %v4751 = vsub.s32 %v4748, %v4750
        %v4752 = vrot.slane %v3841, %v4751
        %v4753 = vcombine.low %v4745, %v4752
        %v4755 = vunpack.c.l.s4 1966171168
        %v4756 = vunpack.c.0.s8 %v4755
        %v4757 = vlaneseq
        %v4758 = vshrl.u32 %v4757, 7
        %v4759 = vsub.s32 %v4756, %v4758
        %v4760 = vrot.slane %v4753, %v4759
        %v4761 = vcombine.low %v3865, %v3879
        %v4763 = vunpack.c.l.s4 1966171168
        %v4764 = vunpack.c.0.s8 %v4763
        %v4765 = vlaneseq
        %v4766 = vshrl.u32 %v4765, 7
        %v4767 = vsub.s32 %v4764, %v4766
        %v4768 = vrot.slane %v4761, %v4767
        %v4770 = vunpack.c.l.s4 1966171168
        %v4771 = vunpack.c.0.s8 %v4770
        %v4772 = vlaneseq
        %v4773 = vshrl.u32 %v4772, 7
        %v4774 = vsub.s32 %v4771, %v4773
        %v4775 = vrot.slane %v3887, %v4774
        %v4776 = vcombine.low %v4768, %v4775
        %v4778 = vunpack.c.l.s4 1966171168
        %v4779 = vunpack.c.0.s8 %v4778
        %v4780 = vlaneseq
        %v4781 = vshrl.u32 %v4780, 7
        %v4782 = vsub.s32 %v4779, %v4781
        %v4783 = vrot.slane %v4776, %v4782
        %v4784 = vcombine.low %v3889, %v3872
        %v4786 = vunpack.c.l.s4 1966171168
        %v4787 = vunpack.c.0.s8 %v4786
        %v4788 = vlaneseq
        %v4789 = vshrl.u32 %v4788, 7
        %v4790 = vsub.s32 %v4787, %v4789
        %v4791 = vrot.slane %v4784, %v4790
        %v4793 = vunpack.c.l.s4 1966171168
        %v4794 = vunpack.c.0.s8 %v4793
        %v4795 = vlaneseq
        %v4796 = vshrl.u32 %v4795, 7
        %v4797 = vsub.s32 %v4794, %v4796
        %v4798 = vrot.slane %v3886, %v4797
        %v4799 = vcombine.low %v4791, %v4798
        %v4801 = vunpack.c.l.s4 1966171168
        %v4802 = vunpack.c.0.s8 %v4801
        %v4803 = vlaneseq
        %v4804 = vshrl.u32 %v4803, 7
        %v4805 = vsub.s32 %v4802, %v4804
        %v4806 = vrot.slane %v4799, %v4805
        %v4807 = vcombine.low %v3888, %v3890
        %v4809 = vunpack.c.l.s4 1966171168
        %v4810 = vunpack.c.0.s8 %v4809
        %v4811 = vlaneseq
        %v4812 = vshrl.u32 %v4811, 7
        %v4813 = vsub.s32 %v4810, %v4812
        %v4814 = vrot.slane %v4807, %v4813
        %v4816 = vunpack.c.l.s4 1966171168
        %v4817 = vunpack.c.0.s8 %v4816
        %v4818 = vlaneseq
        %v4819 = vshrl.u32 %v4818, 7
        %v4820 = vsub.s32 %v4817, %v4819
        %v4821 = vrot.slane %v3914, %v4820
        %v4822 = vcombine.low %v4814, %v4821
        %v4824 = vunpack.c.l.s4 1966171168
        %v4825 = vunpack.c.0.s8 %v4824
        %v4826 = vlaneseq
        %v4827 = vshrl.u32 %v4826, 7
        %v4828 = vsub.s32 %v4825, %v4827
        %v4829 = vrot.slane %v4822, %v4828
        %v4830 = vcombine.low %v3928, %v3936
        %v4832 = vunpack.c.l.s4 1966171168
        %v4833 = vunpack.c.0.s8 %v4832
        %v4834 = vlaneseq
        %v4835 = vshrl.u32 %v4834, 7
        %v4836 = vsub.s32 %v4833, %v4835
        %v4837 = vrot.slane %v4830, %v4836
        %v4839 = vunpack.c.l.s4 1966171168
        %v4840 = vunpack.c.0.s8 %v4839
        %v4841 = vlaneseq
        %v4842 = vshrl.u32 %v4841, 7
        %v4843 = vsub.s32 %v4840, %v4842
        %v4844 = vrot.slane %v3938, %v4843
        %v4845 = vcombine.low %v4837, %v4844
        %v4847 = vunpack.c.l.s4 1966171168
        %v4848 = vunpack.c.0.s8 %v4847
        %v4849 = vlaneseq
        %v4850 = vshrl.u32 %v4849, 7
        %v4851 = vsub.s32 %v4848, %v4850
        %v4852 = vrot.slane %v4845, %v4851
        %v4853 = vcombine.low %v3921, %v3935
        %v4855 = vunpack.c.l.s4 1966171168
        %v4856 = vunpack.c.0.s8 %v4855
        %v4857 = vlaneseq
        %v4858 = vshrl.u32 %v4857, 7
        %v4859 = vsub.s32 %v4856, %v4858
        %v4860 = vrot.slane %v4853, %v4859
        %v4862 = vunpack.c.l.s4 1966171168
        %v4863 = vunpack.c.0.s8 %v4862
        %v4864 = vlaneseq
        %v4865 = vshrl.u32 %v4864, 7
        %v4866 = vsub.s32 %v4863, %v4865
        %v4867 = vrot.slane %v3937, %v4866
        %v4868 = vcombine.low %v4860, %v4867
        %v4870 = vunpack.c.l.s4 1966171168
        %v4871 = vunpack.c.0.s8 %v4870
        %v4872 = vlaneseq
        %v4873 = vshrl.u32 %v4872, 7
        %v4874 = vsub.s32 %v4871, %v4873
        %v4875 = vrot.slane %v4868, %v4874
        %v4876 = vcombine.low %v3939, %v3963
        %v4878 = vunpack.c.l.s4 1966171168
        %v4879 = vunpack.c.0.s8 %v4878
        %v4880 = vlaneseq
        %v4881 = vshrl.u32 %v4880, 7
        %v4882 = vsub.s32 %v4879, %v4881
        %v4883 = vrot.slane %v4876, %v4882
        %v4885 = vunpack.c.l.s4 1966171168
        %v4886 = vunpack.c.0.s8 %v4885
        %v4887 = vlaneseq
        %v4888 = vshrl.u32 %v4887, 7
        %v4889 = vsub.s32 %v4886, %v4888
        %v4890 = vrot.slane %v3977, %v4889
        %v4891 = vcombine.low %v4883, %v4890
        %v4893 = vunpack.c.l.s4 1966171168
        %v4894 = vunpack.c.0.s8 %v4893
        %v4895 = vlaneseq
        %v4896 = vshrl.u32 %v4895, 7
        %v4897 = vsub.s32 %v4894, %v4896
        %v4898 = vrot.slane %v4891, %v4897
        %v4899 = vcombine.low %v3985, %v3987
        %v4901 = vunpack.c.l.s4 1966171168
        %v4902 = vunpack.c.0.s8 %v4901
        %v4903 = vlaneseq
        %v4904 = vshrl.u32 %v4903, 7
        %v4905 = vsub.s32 %v4902, %v4904
        %v4906 = vrot.slane %v4899, %v4905
        %v4908 = vunpack.c.l.s4 1966171168
        %v4909 = vunpack.c.0.s8 %v4908
        %v4910 = vlaneseq
        %v4911 = vshrl.u32 %v4910, 7
        %v4912 = vsub.s32 %v4909, %v4911
        %v4913 = vrot.slane %v3970, %v4912
        %v4914 = vcombine.low %v4906, %v4913
        %v4916 = vunpack.c.l.s4 1966171168
        %v4917 = vunpack.c.0.s8 %v4916
        %v4918 = vlaneseq
        %v4919 = vshrl.u32 %v4918, 7
        %v4920 = vsub.s32 %v4917, %v4919
        %v4921 = vrot.slane %v4914, %v4920
        %v4922 = vcombine.low %v3984, %v3986
        %v4924 = vunpack.c.l.s4 1966171168
        %v4925 = vunpack.c.0.s8 %v4924
        %v4926 = vlaneseq
        %v4927 = vshrl.u32 %v4926, 7
        %v4928 = vsub.s32 %v4925, %v4927
        %v4929 = vrot.slane %v4922, %v4928
        %v4931 = vunpack.c.l.s4 1966171168
        %v4932 = vunpack.c.0.s8 %v4931
        %v4933 = vlaneseq
        %v4934 = vshrl.u32 %v4933, 7
        %v4935 = vsub.s32 %v4932, %v4934
        %v4936 = vrot.slane %v3988, %v4935
        %v4937 = vcombine.low %v4929, %v4936
        %v4939 = vunpack.c.l.s4 1966171168
        %v4940 = vunpack.c.0.s8 %v4939
        %v4941 = vlaneseq
        %v4942 = vshrl.u32 %v4941, 7
        %v4943 = vsub.s32 %v4940, %v4942
        %v4944 = vrot.slane %v4937, %v4943
        %v4945 = vcombine.low %v4012, %v4026
        %v4947 = vunpack.c.l.s4 1966171168
        %v4948 = vunpack.c.0.s8 %v4947
        %v4949 = vlaneseq
        %v4950 = vshrl.u32 %v4949, 7
        %v4951 = vsub.s32 %v4948, %v4950
        %v4952 = vrot.slane %v4945, %v4951
        %v4954 = vunpack.c.l.s4 1966171168
        %v4955 = vunpack.c.0.s8 %v4954
        %v4956 = vlaneseq
        %v4957 = vshrl.u32 %v4956, 7
        %v4958 = vsub.s32 %v4955, %v4957
        %v4959 = vrot.slane %v4034, %v4958
        %v4960 = vcombine.low %v4952, %v4959
        %v4962 = vunpack.c.l.s4 1966171168
        %v4963 = vunpack.c.0.s8 %v4962
        %v4964 = vlaneseq
        %v4965 = vshrl.u32 %v4964, 7
        %v4966 = vsub.s32 %v4963, %v4965
        %v4967 = vrot.slane %v4960, %v4966
        %v4968 = vcombine.low %v4036, %v4019
        %v4970 = vunpack.c.l.s4 1966171168
        %v4971 = vunpack.c.0.s8 %v4970
        %v4972 = vlaneseq
        %v4973 = vshrl.u32 %v4972, 7
        %v4974 = vsub.s32 %v4971, %v4973
        %v4975 = vrot.slane %v4968, %v4974
        %v4977 = vunpack.c.l.s4 1966171168
        %v4978 = vunpack.c.0.s8 %v4977
        %v4979 = vlaneseq
        %v4980 = vshrl.u32 %v4979, 7
        %v4981 = vsub.s32 %v4978, %v4980
        %v4982 = vrot.slane %v4033, %v4981
        %v4983 = vcombine.low %v4975, %v4982
        %v4985 = vunpack.c.l.s4 1966171168
        %v4986 = vunpack.c.0.s8 %v4985
        %v4987 = vlaneseq
        %v4988 = vshrl.u32 %v4987, 7
        %v4989 = vsub.s32 %v4986, %v4988
        %v4990 = vrot.slane %v4983, %v4989
        %v4991 = vcombine.low %v4035, %v4037
        %v4993 = vunpack.c.l.s4 1966171168
        %v4994 = vunpack.c.0.s8 %v4993
        %v4995 = vlaneseq
        %v4996 = vshrl.u32 %v4995, 7
        %v4997 = vsub.s32 %v4994, %v4996
        %v4998 = vrot.slane %v4991, %v4997
        %v5000 = vunpack.c.l.s4 1966171168
        %v5001 = vunpack.c.0.s8 %v5000
        %v5002 = vlaneseq
        %v5003 = vshrl.u32 %v5002, 7
        %v5004 = vsub.s32 %v5001, %v5003
        %v5005 = vrot.slane %v4061, %v5004
        %v5006 = vcombine.low %v4998, %v5005
        %v5008 = vunpack.c.l.s4 1966171168
        %v5009 = vunpack.c.0.s8 %v5008
        %v5010 = vlaneseq
        %v5011 = vshrl.u32 %v5010, 7
        %v5012 = vsub.s32 %v5009, %v5011
        %v5013 = vrot.slane %v5006, %v5012
        %v5014 = vcombine.low %v4075, %v4083
        %v5016 = vunpack.c.l.s4 1966171168
        %v5017 = vunpack.c.0.s8 %v5016
        %v5018 = vlaneseq
        %v5019 = vshrl.u32 %v5018, 7
        %v5020 = vsub.s32 %v5017, %v5019
        %v5021 = vrot.slane %v5014, %v5020
        %v5023 = vunpack.c.l.s4 1966171168
        %v5024 = vunpack.c.0.s8 %v5023
        %v5025 = vlaneseq
        %v5026 = vshrl.u32 %v5025, 7
        %v5027 = vsub.s32 %v5024, %v5026
        %v5028 = vrot.slane %v4085, %v5027
        %v5029 = vcombine.low %v5021, %v5028
        %v5031 = vunpack.c.l.s4 1966171168
        %v5032 = vunpack.c.0.s8 %v5031
        %v5033 = vlaneseq
        %v5034 = vshrl.u32 %v5033, 7
        %v5035 = vsub.s32 %v5032, %v5034
        %v5036 = vrot.slane %v5029, %v5035
        %v5037 = vcombine.low %v4068, %v4082
        %v5039 = vunpack.c.l.s4 1966171168
        %v5040 = vunpack.c.0.s8 %v5039
        %v5041 = vlaneseq
        %v5042 = vshrl.u32 %v5041, 7
        %v5043 = vsub.s32 %v5040, %v5042
        %v5044 = vrot.slane %v5037, %v5043
        %v5046 = vunpack.c.l.s4 1966171168
        %v5047 = vunpack.c.0.s8 %v5046
        %v5048 = vlaneseq
        %v5049 = vshrl.u32 %v5048, 7
        %v5050 = vsub.s32 %v5047, %v5049
        %v5051 = vrot.slane %v4084, %v5050
        %v5052 = vcombine.low %v5044, %v5051
        %v5054 = vunpack.c.l.s4 1966171168
        %v5055 = vunpack.c.0.s8 %v5054
        %v5056 = vlaneseq
        %v5057 = vshrl.u32 %v5056, 7
        %v5058 = vsub.s32 %v5055, %v5057
        %v5059 = vrot.slane %v5052, %v5058
        %v5060 = vcombine.low %v4086, %v4110
        %v5062 = vunpack.c.l.s4 1966171168
        %v5063 = vunpack.c.0.s8 %v5062
        %v5064 = vlaneseq
        %v5065 = vshrl.u32 %v5064, 7
        %v5066 = vsub.s32 %v5063, %v5065
        %v5067 = vrot.slane %v5060, %v5066
        %v5069 = vunpack.c.l.s4 1966171168
        %v5070 = vunpack.c.0.s8 %v5069
        %v5071 = vlaneseq
        %v5072 = vshrl.u32 %v5071, 7
        %v5073 = vsub.s32 %v5070, %v5072
        %v5074 = vrot.slane %v4124, %v5073
        %v5075 = vcombine.low %v5067, %v5074
        %v5077 = vunpack.c.l.s4 1966171168
        %v5078 = vunpack.c.0.s8 %v5077
        %v5079 = vlaneseq
        %v5080 = vshrl.u32 %v5079, 7
        %v5081 = vsub.s32 %v5078, %v5080
        %v5082 = vrot.slane %v5075, %v5081
        %v5083 = vcombine.low %v4132, %v4134
        %v5085 = vunpack.c.l.s4 1966171168
        %v5086 = vunpack.c.0.s8 %v5085
        %v5087 = vlaneseq
        %v5088 = vshrl.u32 %v5087, 7
        %v5089 = vsub.s32 %v5086, %v5088
        %v5090 = vrot.slane %v5083, %v5089
        %v5092 = vunpack.c.l.s4 1966171168
        %v5093 = vunpack.c.0.s8 %v5092
        %v5094 = vlaneseq
        %v5095 = vshrl.u32 %v5094, 7
        %v5096 = vsub.s32 %v5093, %v5095
        %v5097 = vrot.slane %v4117, %v5096
        %v5098 = vcombine.low %v5090, %v5097
        %v5100 = vunpack.c.l.s4 1966171168
        %v5101 = vunpack.c.0.s8 %v5100
        %v5102 = vlaneseq
        %v5103 = vshrl.u32 %v5102, 7
        %v5104 = vsub.s32 %v5101, %v5103
        %v5105 = vrot.slane %v5098, %v5104
        %v5106 = vcombine.low %v4131, %v4133
        %v5108 = vunpack.c.l.s4 1966171168
        %v5109 = vunpack.c.0.s8 %v5108
        %v5110 = vlaneseq
        %v5111 = vshrl.u32 %v5110, 7
        %v5112 = vsub.s32 %v5109, %v5111
        %v5113 = vrot.slane %v5106, %v5112
        %v5115 = vunpack.c.l.s4 1966171168
        %v5116 = vunpack.c.0.s8 %v5115
        %v5117 = vlaneseq
        %v5118 = vshrl.u32 %v5117, 7
        %v5119 = vsub.s32 %v5116, %v5118
        %v5120 = vrot.slane %v4135, %v5119
        %v5121 = vcombine.low %v5113, %v5120
        %v5123 = vunpack.c.l.s4 1966171168
        %v5124 = vunpack.c.0.s8 %v5123
        %v5125 = vlaneseq
        %v5126 = vshrl.u32 %v5125, 7
        %v5127 = vsub.s32 %v5124, %v5126
        %v5128 = vrot.slane %v5121, %v5127
        %v5129 = vcombine.low %v4159, %v4173
        %v5131 = vunpack.c.l.s4 1966171168
        %v5132 = vunpack.c.0.s8 %v5131
        %v5133 = vlaneseq
        %v5134 = vshrl.u32 %v5133, 7
        %v5135 = vsub.s32 %v5132, %v5134
        %v5136 = vrot.slane %v5129, %v5135
        %v5138 = vunpack.c.l.s4 1966171168
        %v5139 = vunpack.c.0.s8 %v5138
        %v5140 = vlaneseq
        %v5141 = vshrl.u32 %v5140, 7
        %v5142 = vsub.s32 %v5139, %v5141
        %v5143 = vrot.slane %v4181, %v5142
        %v5144 = vcombine.low %v5136, %v5143
        %v5146 = vunpack.c.l.s4 1966171168
        %v5147 = vunpack.c.0.s8 %v5146
        %v5148 = vlaneseq
        %v5149 = vshrl.u32 %v5148, 7
        %v5150 = vsub.s32 %v5147, %v5149
        %v5151 = vrot.slane %v5144, %v5150
        %v5152 = vcombine.low %v4183, %v4166
        %v5154 = vunpack.c.l.s4 1966171168
        %v5155 = vunpack.c.0.s8 %v5154
        %v5156 = vlaneseq
        %v5157 = vshrl.u32 %v5156, 7
        %v5158 = vsub.s32 %v5155, %v5157
        %v5159 = vrot.slane %v5152, %v5158
        %v5161 = vunpack.c.l.s4 1966171168
        %v5162 = vunpack.c.0.s8 %v5161
        %v5163 = vlaneseq
        %v5164 = vshrl.u32 %v5163, 7
        %v5165 = vsub.s32 %v5162, %v5164
        %v5166 = vrot.slane %v4180, %v5165
        %v5167 = vcombine.low %v5159, %v5166
        %v5169 = vunpack.c.l.s4 1966171168
        %v5170 = vunpack.c.0.s8 %v5169
        %v5171 = vlaneseq
        %v5172 = vshrl.u32 %v5171, 7
        %v5173 = vsub.s32 %v5170, %v5172
        %v5174 = vrot.slane %v5167, %v5173
        %v5175 = vcombine.low %v4182, %v4184
        %v5177 = vunpack.c.l.s4 1966171168
        %v5178 = vunpack.c.0.s8 %v5177
        %v5179 = vlaneseq
        %v5180 = vshrl.u32 %v5179, 7
        %v5181 = vsub.s32 %v5178, %v5180
        %v5182 = vrot.slane %v5175, %v5181
        %v5184 = vunpack.c.l.s4 1966171168
        %v5185 = vunpack.c.0.s8 %v5184
        %v5186 = vlaneseq
        %v5187 = vshrl.u32 %v5186, 7
        %v5188 = vsub.s32 %v5185, %v5187
        %v5189 = vrot.slane %v4208, %v5188
        %v5190 = vcombine.low %v5182, %v5189
        %v5192 = vunpack.c.l.s4 1966171168
        %v5193 = vunpack.c.0.s8 %v5192
        %v5194 = vlaneseq
        %v5195 = vshrl.u32 %v5194, 7
        %v5196 = vsub.s32 %v5193, %v5195
        %v5197 = vrot.slane %v5190, %v5196
        %v5198 = vcombine.low %v4222, %v4230
        %v5200 = vunpack.c.l.s4 1966171168
        %v5201 = vunpack.c.0.s8 %v5200
        %v5202 = vlaneseq
        %v5203 = vshrl.u32 %v5202, 7
        %v5204 = vsub.s32 %v5201, %v5203
        %v5205 = vrot.slane %v5198, %v5204
        %v5207 = vunpack.c.l.s4 1966171168
        %v5208 = vunpack.c.0.s8 %v5207
        %v5209 = vlaneseq
        %v5210 = vshrl.u32 %v5209, 7
        %v5211 = vsub.s32 %v5208, %v5210
        %v5212 = vrot.slane %v4232, %v5211
        %v5213 = vcombine.low %v5205, %v5212
        %v5215 = vunpack.c.l.s4 1966171168
        %v5216 = vunpack.c.0.s8 %v5215
        %v5217 = vlaneseq
        %v5218 = vshrl.u32 %v5217, 7
        %v5219 = vsub.s32 %v5216, %v5218
        %v5220 = vrot.slane %v5213, %v5219
        %v5221 = vcombine.low %v4215, %v4229
        %v5223 = vunpack.c.l.s4 1966171168
        %v5224 = vunpack.c.0.s8 %v5223
        %v5225 = vlaneseq
        %v5226 = vshrl.u32 %v5225, 7
        %v5227 = vsub.s32 %v5224, %v5226
        %v5228 = vrot.slane %v5221, %v5227
        %v5230 = vunpack.c.l.s4 1966171168
        %v5231 = vunpack.c.0.s8 %v5230
        %v5232 = vlaneseq
        %v5233 = vshrl.u32 %v5232, 7
        %v5234 = vsub.s32 %v5231, %v5233
        %v5235 = vrot.slane %v4231, %v5234
        %v5236 = vcombine.low %v5228, %v5235
        %v5238 = vunpack.c.l.s4 1966171168
        %v5239 = vunpack.c.0.s8 %v5238
        %v5240 = vlaneseq
        %v5241 = vshrl.u32 %v5240, 7
        %v5242 = vsub.s32 %v5239, %v5241
        %v5243 = vrot.slane %v5236, %v5242
        %v5244 = vcombine.low %v4233, %v4257
        %v5246 = vunpack.c.l.s4 1966171168
        %v5247 = vunpack.c.0.s8 %v5246
        %v5248 = vlaneseq
        %v5249 = vshrl.u32 %v5248, 7
        %v5250 = vsub.s32 %v5247, %v5249
        %v5251 = vrot.slane %v5244, %v5250
        %v5253 = vunpack.c.l.s4 1966171168
        %v5254 = vunpack.c.0.s8 %v5253
        %v5255 = vlaneseq
        %v5256 = vshrl.u32 %v5255, 7
        %v5257 = vsub.s32 %v5254, %v5256
        %v5258 = vrot.slane %v4271, %v5257
        %v5259 = vcombine.low %v5251, %v5258
        %v5261 = vunpack.c.l.s4 1966171168
        %v5262 = vunpack.c.0.s8 %v5261
        %v5263 = vlaneseq
        %v5264 = vshrl.u32 %v5263, 7
        %v5265 = vsub.s32 %v5262, %v5264
        %v5266 = vrot.slane %v5259, %v5265
        %v5267 = vcombine.low %v4279, %v4281
        %v5269 = vunpack.c.l.s4 1966171168
        %v5270 = vunpack.c.0.s8 %v5269
        %v5271 = vlaneseq
        %v5272 = vshrl.u32 %v5271, 7
        %v5273 = vsub.s32 %v5270, %v5272
        %v5274 = vrot.slane %v5267, %v5273
        %v5276 = vunpack.c.l.s4 1966171168
        %v5277 = vunpack.c.0.s8 %v5276
        %v5278 = vlaneseq
        %v5279 = vshrl.u32 %v5278, 7
        %v5280 = vsub.s32 %v5277, %v5279
        %v5281 = vrot.slane %v4264, %v5280
        %v5282 = vcombine.low %v5274, %v5281
        %v5284 = vunpack.c.l.s4 1966171168
        %v5285 = vunpack.c.0.s8 %v5284
        %v5286 = vlaneseq
        %v5287 = vshrl.u32 %v5286, 7
        %v5288 = vsub.s32 %v5285, %v5287
        %v5289 = vrot.slane %v5282, %v5288
        %v5290 = vcombine.low %v4278, %v4280
        %v5292 = vunpack.c.l.s4 1966171168
        %v5293 = vunpack.c.0.s8 %v5292
        %v5294 = vlaneseq
        %v5295 = vshrl.u32 %v5294, 7
        %v5296 = vsub.s32 %v5293, %v5295
        %v5297 = vrot.slane %v5290, %v5296
        %v5299 = vunpack.c.l.s4 1966171168
        %v5300 = vunpack.c.0.s8 %v5299
        %v5301 = vlaneseq
        %v5302 = vshrl.u32 %v5301, 7
        %v5303 = vsub.s32 %v5300, %v5302
        %v5304 = vrot.slane %v4282, %v5303
        %v5305 = vcombine.low %v5297, %v5304
        %v5307 = vunpack.c.l.s4 1966171168
        %v5308 = vunpack.c.0.s8 %v5307
        %v5309 = vlaneseq
        %v5310 = vshrl.u32 %v5309, 7
        %v5311 = vsub.s32 %v5308, %v5310
        %v5312 = vrot.slane %v5305, %v5311
        %v5313 = vcombine.low %v4306, %v4320
        %v5315 = vunpack.c.l.s4 1966171168
        %v5316 = vunpack.c.0.s8 %v5315
        %v5317 = vlaneseq
        %v5318 = vshrl.u32 %v5317, 7
        %v5319 = vsub.s32 %v5316, %v5318
        %v5320 = vrot.slane %v5313, %v5319
        %v5322 = vunpack.c.l.s4 1966171168
        %v5323 = vunpack.c.0.s8 %v5322
        %v5324 = vlaneseq
        %v5325 = vshrl.u32 %v5324, 7
        %v5326 = vsub.s32 %v5323, %v5325
        %v5327 = vrot.slane %v4328, %v5326
        %v5328 = vcombine.low %v5320, %v5327
        %v5330 = vunpack.c.l.s4 1966171168
        %v5331 = vunpack.c.0.s8 %v5330
        %v5332 = vlaneseq
        %v5333 = vshrl.u32 %v5332, 7
        %v5334 = vsub.s32 %v5331, %v5333
        %v5335 = vrot.slane %v5328, %v5334
        %v5336 = vcombine.low %v4330, %v4313
        %v5338 = vunpack.c.l.s4 1966171168
        %v5339 = vunpack.c.0.s8 %v5338
        %v5340 = vlaneseq
        %v5341 = vshrl.u32 %v5340, 7
        %v5342 = vsub.s32 %v5339, %v5341
        %v5343 = vrot.slane %v5336, %v5342
        %v5345 = vunpack.c.l.s4 1966171168
        %v5346 = vunpack.c.0.s8 %v5345
        %v5347 = vlaneseq
        %v5348 = vshrl.u32 %v5347, 7
        %v5349 = vsub.s32 %v5346, %v5348
        %v5350 = vrot.slane %v4327, %v5349
        %v5351 = vcombine.low %v5343, %v5350
        %v5353 = vunpack.c.l.s4 1966171168
        %v5354 = vunpack.c.0.s8 %v5353
        %v5355 = vlaneseq
        %v5356 = vshrl.u32 %v5355, 7
        %v5357 = vsub.s32 %v5354, %v5356
        %v5358 = vrot.slane %v5351, %v5357
        %v5359 = vcombine.low %v4329, %v4331
        %v5361 = vunpack.c.l.s4 1966171168
        %v5362 = vunpack.c.0.s8 %v5361
        %v5363 = vlaneseq
        %v5364 = vshrl.u32 %v5363, 7
        %v5365 = vsub.s32 %v5362, %v5364
        %v5366 = vrot.slane %v5359, %v5365
        %v5368 = vunpack.c.l.s4 1966171168
        %v5369 = vunpack.c.0.s8 %v5368
        %v5370 = vlaneseq
        %v5371 = vshrl.u32 %v5370, 7
        %v5372 = vsub.s32 %v5369, %v5371
        %v5373 = vrot.slane %v4355, %v5372
        %v5374 = vcombine.low %v5366, %v5373
        %v5376 = vunpack.c.l.s4 1966171168
        %v5377 = vunpack.c.0.s8 %v5376
        %v5378 = vlaneseq
        %v5379 = vshrl.u32 %v5378, 7
        %v5380 = vsub.s32 %v5377, %v5379
        %v5381 = vrot.slane %v5374, %v5380
        %v5382 = vcombine.low %v4369, %v4377
        %v5384 = vunpack.c.l.s4 1966171168
        %v5385 = vunpack.c.0.s8 %v5384
        %v5386 = vlaneseq
        %v5387 = vshrl.u32 %v5386, 7
        %v5388 = vsub.s32 %v5385, %v5387
        %v5389 = vrot.slane %v5382, %v5388
        %v5391 = vunpack.c.l.s4 1966171168
        %v5392 = vunpack.c.0.s8 %v5391
        %v5393 = vlaneseq
        %v5394 = vshrl.u32 %v5393, 7
        %v5395 = vsub.s32 %v5392, %v5394
        %v5396 = vrot.slane %v4379, %v5395
        %v5397 = vcombine.low %v5389, %v5396
        %v5399 = vunpack.c.l.s4 1966171168
        %v5400 = vunpack.c.0.s8 %v5399
        %v5401 = vlaneseq
        %v5402 = vshrl.u32 %v5401, 7
        %v5403 = vsub.s32 %v5400, %v5402
        %v5404 = vrot.slane %v5397, %v5403
        %v5405 = vcombine.low %v4362, %v4376
        %v5407 = vunpack.c.l.s4 1966171168
        %v5408 = vunpack.c.0.s8 %v5407
        %v5409 = vlaneseq
        %v5410 = vshrl.u32 %v5409, 7
        %v5411 = vsub.s32 %v5408, %v5410
        %v5412 = vrot.slane %v5405, %v5411
        %v5414 = vunpack.c.l.s4 1966171168
        %v5415 = vunpack.c.0.s8 %v5414
        %v5416 = vlaneseq
        %v5417 = vshrl.u32 %v5416, 7
        %v5418 = vsub.s32 %v5415, %v5417
        %v5419 = vrot.slane %v4378, %v5418
        %v5420 = vcombine.low %v5412, %v5419
        %v5422 = vunpack.c.l.s4 1966171168
        %v5423 = vunpack.c.0.s8 %v5422
        %v5424 = vlaneseq
        %v5425 = vshrl.u32 %v5424, 7
        %v5426 = vsub.s32 %v5423, %v5425
        %v5427 = vrot.slane %v5420, %v5426
        %v5428 = vcombine.low %v4380, %v4404
        %v5430 = vunpack.c.l.s4 1966171168
        %v5431 = vunpack.c.0.s8 %v5430
        %v5432 = vlaneseq
        %v5433 = vshrl.u32 %v5432, 7
        %v5434 = vsub.s32 %v5431, %v5433
        %v5435 = vrot.slane %v5428, %v5434
        %v5437 = vunpack.c.l.s4 1966171168
        %v5438 = vunpack.c.0.s8 %v5437
        %v5439 = vlaneseq
        %v5440 = vshrl.u32 %v5439, 7
        %v5441 = vsub.s32 %v5438, %v5440
        %v5442 = vrot.slane %v4418, %v5441
        %v5443 = vcombine.low %v5435, %v5442
        %v5445 = vunpack.c.l.s4 1966171168
        %v5446 = vunpack.c.0.s8 %v5445
        %v5447 = vlaneseq
        %v5448 = vshrl.u32 %v5447, 7
        %v5449 = vsub.s32 %v5446, %v5448
        %v5450 = vrot.slane %v5443, %v5449
        %v5451 = vcombine.low %v4426, %v4428
        %v5453 = vunpack.c.l.s4 1966171168
        %v5454 = vunpack.c.0.s8 %v5453
        %v5455 = vlaneseq
        %v5456 = vshrl.u32 %v5455, 7
        %v5457 = vsub.s32 %v5454, %v5456
        %v5458 = vrot.slane %v5451, %v5457
        %v5460 = vunpack.c.l.s4 1966171168
        %v5461 = vunpack.c.0.s8 %v5460
        %v5462 = vlaneseq
        %v5463 = vshrl.u32 %v5462, 7
        %v5464 = vsub.s32 %v5461, %v5463
        %v5465 = vrot.slane %v4411, %v5464
        %v5466 = vcombine.low %v5458, %v5465
        %v5468 = vunpack.c.l.s4 1966171168
        %v5469 = vunpack.c.0.s8 %v5468
        %v5470 = vlaneseq
        %v5471 = vshrl.u32 %v5470, 7
        %v5472 = vsub.s32 %v5469, %v5471
        %v5473 = vrot.slane %v5466, %v5472
        %v5474 = vcombine.low %v4425, %v4427
        %v5476 = vunpack.c.l.s4 1966171168
        %v5477 = vunpack.c.0.s8 %v5476
        %v5478 = vlaneseq
        %v5479 = vshrl.u32 %v5478, 7
        %v5480 = vsub.s32 %v5477, %v5479
        %v5481 = vrot.slane %v5474, %v5480
        %v5483 = vunpack.c.l.s4 1966171168
        %v5484 = vunpack.c.0.s8 %v5483
        %v5485 = vlaneseq
        %v5486 = vshrl.u32 %v5485, 7
        %v5487 = vsub.s32 %v5484, %v5486
        %v5488 = vrot.slane %v4429, %v5487
        %v5489 = vcombine.low %v5481, %v5488
        %v5491 = vunpack.c.l.s4 1966171168
        %v5492 = vunpack.c.0.s8 %v5491
        %v5493 = vlaneseq
        %v5494 = vshrl.u32 %v5493, 7
        %v5495 = vsub.s32 %v5492, %v5494
        %v5496 = vrot.slane %v5489, %v5495
        %v5497 = vcombine.low %v4453, %v4467
        %v5499 = vunpack.c.l.s4 1966171168
        %v5500 = vunpack.c.0.s8 %v5499
        %v5501 = vlaneseq
        %v5502 = vshrl.u32 %v5501, 7
        %v5503 = vsub.s32 %v5500, %v5502
        %v5504 = vrot.slane %v5497, %v5503
        %v5506 = vunpack.c.l.s4 1966171168
        %v5507 = vunpack.c.0.s8 %v5506
        %v5508 = vlaneseq
        %v5509 = vshrl.u32 %v5508, 7
        %v5510 = vsub.s32 %v5507, %v5509
        %v5511 = vrot.slane %v4475, %v5510
        %v5512 = vcombine.low %v5504, %v5511
        %v5514 = vunpack.c.l.s4 1966171168
        %v5515 = vunpack.c.0.s8 %v5514
        %v5516 = vlaneseq
        %v5517 = vshrl.u32 %v5516, 7
        %v5518 = vsub.s32 %v5515, %v5517
        %v5519 = vrot.slane %v5512, %v5518
        %v5520 = vcombine.low %v4477, %v4460
        %v5522 = vunpack.c.l.s4 1966171168
        %v5523 = vunpack.c.0.s8 %v5522
        %v5524 = vlaneseq
        %v5525 = vshrl.u32 %v5524, 7
        %v5526 = vsub.s32 %v5523, %v5525
        %v5527 = vrot.slane %v5520, %v5526
        %v5529 = vunpack.c.l.s4 1966171168
        %v5530 = vunpack.c.0.s8 %v5529
        %v5531 = vlaneseq
        %v5532 = vshrl.u32 %v5531, 7
        %v5533 = vsub.s32 %v5530, %v5532
        %v5534 = vrot.slane %v4474, %v5533
        %v5535 = vcombine.low %v5527, %v5534
        %v5537 = vunpack.c.l.s4 1966171168
        %v5538 = vunpack.c.0.s8 %v5537
        %v5539 = vlaneseq
        %v5540 = vshrl.u32 %v5539, 7
        %v5541 = vsub.s32 %v5538, %v5540
        %v5542 = vrot.slane %v5535, %v5541
        %v5543 = vcombine.low %v4476, %v4478
        %v5545 = vunpack.c.l.s4 1966171168
        %v5546 = vunpack.c.0.s8 %v5545
        %v5547 = vlaneseq
        %v5548 = vshrl.u32 %v5547, 7
        %v5549 = vsub.s32 %v5546, %v5548
        %v5550 = vrot.slane %v5543, %v5549
        %v5552 = vunpack.c.l.s4 1966171168
        %v5553 = vunpack.c.0.s8 %v5552
        %v5554 = vlaneseq
        %v5555 = vshrl.u32 %v5554, 7
        %v5556 = vsub.s32 %v5553, %v5555
        %v5557 = vrot.slane %v4502, %v5556
        %v5558 = vcombine.low %v5550, %v5557
        %v5560 = vunpack.c.l.s4 1966171168
        %v5561 = vunpack.c.0.s8 %v5560
        %v5562 = vlaneseq
        %v5563 = vshrl.u32 %v5562, 7
        %v5564 = vsub.s32 %v5561, %v5563
        %v5565 = vrot.slane %v5558, %v5564
        %v5566 = vcombine.low %v4516, %v4524
        %v5568 = vunpack.c.l.s4 1966171168
        %v5569 = vunpack.c.0.s8 %v5568
        %v5570 = vlaneseq
        %v5571 = vshrl.u32 %v5570, 7
        %v5572 = vsub.s32 %v5569, %v5571
        %v5573 = vrot.slane %v5566, %v5572
        %v5575 = vunpack.c.l.s4 1966171168
        %v5576 = vunpack.c.0.s8 %v5575
        %v5577 = vlaneseq
        %v5578 = vshrl.u32 %v5577, 7
        %v5579 = vsub.s32 %v5576, %v5578
        %v5580 = vrot.slane %v4526, %v5579
        %v5581 = vcombine.low %v5573, %v5580
        %v5583 = vunpack.c.l.s4 1966171168
        %v5584 = vunpack.c.0.s8 %v5583
        %v5585 = vlaneseq
        %v5586 = vshrl.u32 %v5585, 7
        %v5587 = vsub.s32 %v5584, %v5586
        %v5588 = vrot.slane %v5581, %v5587
        %v5589 = vcombine.low %v4509, %v4523
        %v5591 = vunpack.c.l.s4 1966171168
        %v5592 = vunpack.c.0.s8 %v5591
        %v5593 = vlaneseq
        %v5594 = vshrl.u32 %v5593, 7
        %v5595 = vsub.s32 %v5592, %v5594
        %v5596 = vrot.slane %v5589, %v5595
        %v5598 = vunpack.c.l.s4 1966171168
        %v5599 = vunpack.c.0.s8 %v5598
        %v5600 = vlaneseq
        %v5601 = vshrl.u32 %v5600, 7
        %v5602 = vsub.s32 %v5599, %v5601
        %v5603 = vrot.slane %v4525, %v5602
        %v5604 = vcombine.low %v5596, %v5603
        %v5606 = vunpack.c.l.s4 1966171168
        %v5607 = vunpack.c.0.s8 %v5606
        %v5608 = vlaneseq
        %v5609 = vshrl.u32 %v5608, 7
        %v5610 = vsub.s32 %v5607, %v5609
        %v5611 = vrot.slane %v5604, %v5610
        %v5612 = vcombine.low %v4527, %v4551
        %v5614 = vunpack.c.l.s4 1966171168
        %v5615 = vunpack.c.0.s8 %v5614
        %v5616 = vlaneseq
        %v5617 = vshrl.u32 %v5616, 7
        %v5618 = vsub.s32 %v5615, %v5617
        %v5619 = vrot.slane %v5612, %v5618
        %v5621 = vunpack.c.l.s4 1966171168
        %v5622 = vunpack.c.0.s8 %v5621
        %v5623 = vlaneseq
        %v5624 = vshrl.u32 %v5623, 7
        %v5625 = vsub.s32 %v5622, %v5624
        %v5626 = vrot.slane %v4565, %v5625
        %v5627 = vcombine.low %v5619, %v5626
        %v5629 = vunpack.c.l.s4 1966171168
        %v5630 = vunpack.c.0.s8 %v5629
        %v5631 = vlaneseq
        %v5632 = vshrl.u32 %v5631, 7
        %v5633 = vsub.s32 %v5630, %v5632
        %v5634 = vrot.slane %v5627, %v5633
        %v5635 = vcombine.low %v4573, %v4575
        %v5637 = vunpack.c.l.s4 1966171168
        %v5638 = vunpack.c.0.s8 %v5637
        %v5639 = vlaneseq
        %v5640 = vshrl.u32 %v5639, 7
        %v5641 = vsub.s32 %v5638, %v5640
        %v5642 = vrot.slane %v5635, %v5641
        %v5644 = vunpack.c.l.s4 1966171168
        %v5645 = vunpack.c.0.s8 %v5644
        %v5646 = vlaneseq
        %v5647 = vshrl.u32 %v5646, 7
        %v5648 = vsub.s32 %v5645, %v5647
        %v5649 = vrot.slane %v4558, %v5648
        %v5650 = vcombine.low %v5642, %v5649
        %v5652 = vunpack.c.l.s4 1966171168
        %v5653 = vunpack.c.0.s8 %v5652
        %v5654 = vlaneseq
        %v5655 = vshrl.u32 %v5654, 7
        %v5656 = vsub.s32 %v5653, %v5655
        %v5657 = vrot.slane %v5650, %v5656
        %v5658 = vcombine.low %v4572, %v4574
        %v5660 = vunpack.c.l.s4 1966171168
        %v5661 = vunpack.c.0.s8 %v5660
        %v5662 = vlaneseq
        %v5663 = vshrl.u32 %v5662, 7
        %v5664 = vsub.s32 %v5661, %v5663
        %v5665 = vrot.slane %v5658, %v5664
        %v5667 = vunpack.c.l.s4 1966171168
        %v5668 = vunpack.c.0.s8 %v5667
        %v5669 = vlaneseq
        %v5670 = vshrl.u32 %v5669, 7
        %v5671 = vsub.s32 %v5668, %v5670
        %v5672 = vrot.slane %v4576, %v5671
        %v5673 = vcombine.low %v5665, %v5672
        %v5675 = vunpack.c.l.s4 1966171168
        %v5676 = vunpack.c.0.s8 %v5675
        %v5677 = vlaneseq
        %v5678 = vshrl.u32 %v5677, 7
        %v5679 = vsub.s32 %v5676, %v5678
        %v5680 = vrot.slane %v5673, %v5679
        %vm5729 = vcmask 124928
        %v5730 = vsel %vm5729, %v4599, -inf
        %v5731 = vrot.slane %v5730, 4
        %v5732 = vmax.f32 %v5730, %v5731
        %v5733 = vrot.slane %v5732, 2
        %v5734 = vmax.f32 %v5732, %v5733
        %v5735 = vrot.slane %v5734, 1
        %v5736 = vmax.f32 %v5734, %v5735
        %v5737 = vsel %vm5729, %v4622, -inf
        %v5738 = vrot.slane %v5737, 4
        %v5739 = vmax.f32 %v5737, %v5738
        %v5740 = vrot.slane %v5739, 2
        %v5741 = vmax.f32 %v5739, %v5740
        %v5742 = vrot.slane %v5741, 1
        %v5743 = vmax.f32 %v5741, %v5742
        %v5744 = vsel %vm5729, %v4645, -inf
        %v5745 = vrot.slane %v5744, 4
        %v5746 = vmax.f32 %v5744, %v5745
        %v5747 = vrot.slane %v5746, 2
        %v5748 = vmax.f32 %v5746, %v5747
        %v5749 = vrot.slane %v5748, 1
        %v5750 = vmax.f32 %v5748, %v5749
        %v5751 = vsel %vm5729, %v4668, -inf
        %v5752 = vrot.slane %v5751, 4
        %v5753 = vmax.f32 %v5751, %v5752
        %v5754 = vrot.slane %v5753, 2
        %v5755 = vmax.f32 %v5753, %v5754
        %v5756 = vrot.slane %v5755, 1
        %v5757 = vmax.f32 %v5755, %v5756
        %v5758 = vsel %vm5729, %v4691, -inf
        %v5759 = vrot.slane %v5758, 4
        %v5760 = vmax.f32 %v5758, %v5759
        %v5761 = vrot.slane %v5760, 2
        %v5762 = vmax.f32 %v5760, %v5761
        %v5763 = vrot.slane %v5762, 1
        %v5764 = vmax.f32 %v5762, %v5763
        %v5765 = vsel %vm5729, %v4714, -inf
        %v5766 = vrot.slane %v5765, 4
        %v5767 = vmax.f32 %v5765, %v5766
        %v5768 = vrot.slane %v5767, 2
        %v5769 = vmax.f32 %v5767, %v5768
        %v5770 = vrot.slane %v5769, 1
        %v5771 = vmax.f32 %v5769, %v5770
        %v5772 = vsel %vm5729, %v4737, -inf
        %v5773 = vrot.slane %v5772, 4
        %v5774 = vmax.f32 %v5772, %v5773
        %v5775 = vrot.slane %v5774, 2
        %v5776 = vmax.f32 %v5774, %v5775
        %v5777 = vrot.slane %v5776, 1
        %v5778 = vmax.f32 %v5776, %v5777
        %v5779 = vsel %vm5729, %v4760, -inf
        %v5780 = vrot.slane %v5779, 4
        %v5781 = vmax.f32 %v5779, %v5780
        %v5782 = vrot.slane %v5781, 2
        %v5783 = vmax.f32 %v5781, %v5782
        %v5784 = vrot.slane %v5783, 1
        %v5785 = vmax.f32 %v5783, %v5784
        %v5786 = vsel %vm5729, %v4783, -inf
        %v5787 = vrot.slane %v5786, 4
        %v5788 = vmax.f32 %v5786, %v5787
        %v5789 = vrot.slane %v5788, 2
        %v5790 = vmax.f32 %v5788, %v5789
        %v5791 = vrot.slane %v5790, 1
        %v5792 = vmax.f32 %v5790, %v5791
        %v5793 = vsel %vm5729, %v4806, -inf
        %v5794 = vrot.slane %v5793, 4
        %v5795 = vmax.f32 %v5793, %v5794
        %v5796 = vrot.slane %v5795, 2
        %v5797 = vmax.f32 %v5795, %v5796
        %v5798 = vrot.slane %v5797, 1
        %v5799 = vmax.f32 %v5797, %v5798
        %v5800 = vsel %vm5729, %v4829, -inf
        %v5801 = vrot.slane %v5800, 4
        %v5802 = vmax.f32 %v5800, %v5801
        %v5803 = vrot.slane %v5802, 2
        %v5804 = vmax.f32 %v5802, %v5803
        %v5805 = vrot.slane %v5804, 1
        %v5806 = vmax.f32 %v5804, %v5805
        %v5807 = vsel %vm5729, %v4852, -inf
        %v5808 = vrot.slane %v5807, 4
        %v5809 = vmax.f32 %v5807, %v5808
        %v5810 = vrot.slane %v5809, 2
        %v5811 = vmax.f32 %v5809, %v5810
        %v5812 = vrot.slane %v5811, 1
        %v5813 = vmax.f32 %v5811, %v5812
        %v5814 = vsel %vm5729, %v4875, -inf
        %v5815 = vrot.slane %v5814, 4
        %v5816 = vmax.f32 %v5814, %v5815
        %v5817 = vrot.slane %v5816, 2
        %v5818 = vmax.f32 %v5816, %v5817
        %v5819 = vrot.slane %v5818, 1
        %v5820 = vmax.f32 %v5818, %v5819
        %v5821 = vsel %vm5729, %v4898, -inf
        %v5822 = vrot.slane %v5821, 4
        %v5823 = vmax.f32 %v5821, %v5822
        %v5824 = vrot.slane %v5823, 2
        %v5825 = vmax.f32 %v5823, %v5824
        %v5826 = vrot.slane %v5825, 1
        %v5827 = vmax.f32 %v5825, %v5826
        %v5828 = vsel %vm5729, %v4921, -inf
        %v5829 = vrot.slane %v5828, 4
        %v5830 = vmax.f32 %v5828, %v5829
        %v5831 = vrot.slane %v5830, 2
        %v5832 = vmax.f32 %v5830, %v5831
        %v5833 = vrot.slane %v5832, 1
        %v5834 = vmax.f32 %v5832, %v5833
        %v5835 = vsel %vm5729, %v4944, -inf
        %v5836 = vrot.slane %v5835, 4
        %v5837 = vmax.f32 %v5835, %v5836
        %v5838 = vrot.slane %v5837, 2
        %v5839 = vmax.f32 %v5837, %v5838
        %v5840 = vrot.slane %v5839, 1
        %v5841 = vmax.f32 %v5839, %v5840
        %v5842 = vsel %vm5729, %v4967, -inf
        %v5843 = vrot.slane %v5842, 4
        %v5844 = vmax.f32 %v5842, %v5843
        %v5845 = vrot.slane %v5844, 2
        %v5846 = vmax.f32 %v5844, %v5845
        %v5847 = vrot.slane %v5846, 1
        %v5848 = vmax.f32 %v5846, %v5847
        %v5849 = vsel %vm5729, %v4990, -inf
        %v5850 = vrot.slane %v5849, 4
        %v5851 = vmax.f32 %v5849, %v5850
        %v5852 = vrot.slane %v5851, 2
        %v5853 = vmax.f32 %v5851, %v5852
        %v5854 = vrot.slane %v5853, 1
        %v5855 = vmax.f32 %v5853, %v5854
        %v5856 = vsel %vm5729, %v5013, -inf
        %v5857 = vrot.slane %v5856, 4
        %v5858 = vmax.f32 %v5856, %v5857
        %v5859 = vrot.slane %v5858, 2
        %v5860 = vmax.f32 %v5858, %v5859
        %v5861 = vrot.slane %v5860, 1
        %v5862 = vmax.f32 %v5860, %v5861
        %v5863 = vsel %vm5729, %v5036, -inf
        %v5864 = vrot.slane %v5863, 4
        %v5865 = vmax.f32 %v5863, %v5864
        %v5866 = vrot.slane %v5865, 2
        %v5867 = vmax.f32 %v5865, %v5866
        %v5868 = vrot.slane %v5867, 1
        %v5869 = vmax.f32 %v5867, %v5868
        %v5870 = vsel %vm5729, %v5059, -inf
        %v5871 = vrot.slane %v5870, 4
        %v5872 = vmax.f32 %v5870, %v5871
        %v5873 = vrot.slane %v5872, 2
        %v5874 = vmax.f32 %v5872, %v5873
        %v5875 = vrot.slane %v5874, 1
        %v5876 = vmax.f32 %v5874, %v5875
        %v5877 = vsel %vm5729, %v5082, -inf
        %v5878 = vrot.slane %v5877, 4
        %v5879 = vmax.f32 %v5877, %v5878
        %v5880 = vrot.slane %v5879, 2
        %v5881 = vmax.f32 %v5879, %v5880
        %v5882 = vrot.slane %v5881, 1
        %v5883 = vmax.f32 %v5881, %v5882
        %v5884 = vsel %vm5729, %v5105, -inf
        %v5885 = vrot.slane %v5884, 4
        %v5886 = vmax.f32 %v5884, %v5885
        %v5887 = vrot.slane %v5886, 2
        %v5888 = vmax.f32 %v5886, %v5887
        %v5889 = vrot.slane %v5888, 1
        %v5890 = vmax.f32 %v5888, %v5889
        %v5891 = vsel %vm5729, %v5128, -inf
        %v5892 = vrot.slane %v5891, 4
        %v5893 = vmax.f32 %v5891, %v5892
        %v5894 = vrot.slane %v5893, 2
        %v5895 = vmax.f32 %v5893, %v5894
        %v5896 = vrot.slane %v5895, 1
        %v5897 = vmax.f32 %v5895, %v5896
        %v5898 = vsel %vm5729, %v5151, -inf
        %v5899 = vrot.slane %v5898, 4
        %v5900 = vmax.f32 %v5898, %v5899
        %v5901 = vrot.slane %v5900, 2
        %v5902 = vmax.f32 %v5900, %v5901
        %v5903 = vrot.slane %v5902, 1
        %v5904 = vmax.f32 %v5902, %v5903
        %v5905 = vsel %vm5729, %v5174, -inf
        %v5906 = vrot.slane %v5905, 4
        %v5907 = vmax.f32 %v5905, %v5906
        %v5908 = vrot.slane %v5907, 2
        %v5909 = vmax.f32 %v5907, %v5908
        %v5910 = vrot.slane %v5909, 1
        %v5911 = vmax.f32 %v5909, %v5910
        %v5912 = vsel %vm5729, %v5197, -inf
        %v5913 = vrot.slane %v5912, 4
        %v5914 = vmax.f32 %v5912, %v5913
        %v5915 = vrot.slane %v5914, 2
        %v5916 = vmax.f32 %v5914, %v5915
        %v5917 = vrot.slane %v5916, 1
        %v5918 = vmax.f32 %v5916, %v5917
        %v5919 = vsel %vm5729, %v5220, -inf
        %v5920 = vrot.slane %v5919, 4
        %v5921 = vmax.f32 %v5919, %v5920
        %v5922 = vrot.slane %v5921, 2
        %v5923 = vmax.f32 %v5921, %v5922
        %v5924 = vrot.slane %v5923, 1
        %v5925 = vmax.f32 %v5923, %v5924
        %v5926 = vsel %vm5729, %v5243, -inf
        %v5927 = vrot.slane %v5926, 4
        %v5928 = vmax.f32 %v5926, %v5927
        %v5929 = vrot.slane %v5928, 2
        %v5930 = vmax.f32 %v5928, %v5929
        %v5931 = vrot.slane %v5930, 1
        %v5932 = vmax.f32 %v5930, %v5931
        %v5933 = vsel %vm5729, %v5266, -inf
        %v5934 = vrot.slane %v5933, 4
        %v5935 = vmax.f32 %v5933, %v5934
        %v5936 = vrot.slane %v5935, 2
        %v5937 = vmax.f32 %v5935, %v5936
        %v5938 = vrot.slane %v5937, 1
        %v5939 = vmax.f32 %v5937, %v5938
        %v5940 = vsel %vm5729, %v5289, -inf
        %v5941 = vrot.slane %v5940, 4
        %v5942 = vmax.f32 %v5940, %v5941
        %v5943 = vrot.slane %v5942, 2
        %v5944 = vmax.f32 %v5942, %v5943
        %v5945 = vrot.slane %v5944, 1
        %v5946 = vmax.f32 %v5944, %v5945
        %v5947 = vsel %vm5729, %v5312, -inf
        %v5948 = vrot.slane %v5947, 4
        %v5949 = vmax.f32 %v5947, %v5948
        %v5950 = vrot.slane %v5949, 2
        %v5951 = vmax.f32 %v5949, %v5950
        %v5952 = vrot.slane %v5951, 1
        %v5953 = vmax.f32 %v5951, %v5952
        %v5954 = vsel %vm5729, %v5335, -inf
        %v5955 = vrot.slane %v5954, 4
        %v5956 = vmax.f32 %v5954, %v5955
        %v5957 = vrot.slane %v5956, 2
        %v5958 = vmax.f32 %v5956, %v5957
        %v5959 = vrot.slane %v5958, 1
        %v5960 = vmax.f32 %v5958, %v5959
        %v5961 = vsel %vm5729, %v5358, -inf
        %v5962 = vrot.slane %v5961, 4
        %v5963 = vmax.f32 %v5961, %v5962
        %v5964 = vrot.slane %v5963, 2
        %v5965 = vmax.f32 %v5963, %v5964
        %v5966 = vrot.slane %v5965, 1
        %v5967 = vmax.f32 %v5965, %v5966
        %v5968 = vsel %vm5729, %v5381, -inf
        %v5969 = vrot.slane %v5968, 4
        %v5970 = vmax.f32 %v5968, %v5969
        %v5971 = vrot.slane %v5970, 2
        %v5972 = vmax.f32 %v5970, %v5971
        %v5973 = vrot.slane %v5972, 1
        %v5974 = vmax.f32 %v5972, %v5973
        %v5975 = vsel %vm5729, %v5404, -inf
        %v5976 = vrot.slane %v5975, 4
        %v5977 = vmax.f32 %v5975, %v5976
        %v5978 = vrot.slane %v5977, 2
        %v5979 = vmax.f32 %v5977, %v5978
        %v5980 = vrot.slane %v5979, 1
        %v5981 = vmax.f32 %v5979, %v5980
        %v5982 = vsel %vm5729, %v5427, -inf
        %v5983 = vrot.slane %v5982, 4
        %v5984 = vmax.f32 %v5982, %v5983
        %v5985 = vrot.slane %v5984, 2
        %v5986 = vmax.f32 %v5984, %v5985
        %v5987 = vrot.slane %v5986, 1
        %v5988 = vmax.f32 %v5986, %v5987
        %v5989 = vsel %vm5729, %v5450, -inf
        %v5990 = vrot.slane %v5989, 4
        %v5991 = vmax.f32 %v5989, %v5990
        %v5992 = vrot.slane %v5991, 2
        %v5993 = vmax.f32 %v5991, %v5992
        %v5994 = vrot.slane %v5993, 1
        %v5995 = vmax.f32 %v5993, %v5994
        %v5996 = vsel %vm5729, %v5473, -inf
        %v5997 = vrot.slane %v5996, 4
        %v5998 = vmax.f32 %v5996, %v5997
        %v5999 = vrot.slane %v5998, 2
        %v6000 = vmax.f32 %v5998, %v5999
        %v6001 = vrot.slane %v6000, 1
        %v6002 = vmax.f32 %v6000, %v6001
        %v6003 = vsel %vm5729, %v5496, -inf
        %v6004 = vrot.slane %v6003, 4
        %v6005 = vmax.f32 %v6003, %v6004
        %v6006 = vrot.slane %v6005, 2
        %v6007 = vmax.f32 %v6005, %v6006
        %v6008 = vrot.slane %v6007, 1
        %v6009 = vmax.f32 %v6007, %v6008
        %v6010 = vsel %vm5729, %v5519, -inf
        %v6011 = vrot.slane %v6010, 4
        %v6012 = vmax.f32 %v6010, %v6011
        %v6013 = vrot.slane %v6012, 2
        %v6014 = vmax.f32 %v6012, %v6013
        %v6015 = vrot.slane %v6014, 1
        %v6016 = vmax.f32 %v6014, %v6015
        %v6017 = vsel %vm5729, %v5542, -inf
        %v6018 = vrot.slane %v6017, 4
        %v6019 = vmax.f32 %v6017, %v6018
        %v6020 = vrot.slane %v6019, 2
        %v6021 = vmax.f32 %v6019, %v6020
        %v6022 = vrot.slane %v6021, 1
        %v6023 = vmax.f32 %v6021, %v6022
        %v6024 = vsel %vm5729, %v5565, -inf
        %v6025 = vrot.slane %v6024, 4
        %v6026 = vmax.f32 %v6024, %v6025
        %v6027 = vrot.slane %v6026, 2
        %v6028 = vmax.f32 %v6026, %v6027
        %v6029 = vrot.slane %v6028, 1
        %v6030 = vmax.f32 %v6028, %v6029
        %v6031 = vsel %vm5729, %v5588, -inf
        %v6032 = vrot.slane %v6031, 4
        %v6033 = vmax.f32 %v6031, %v6032
        %v6034 = vrot.slane %v6033, 2
        %v6035 = vmax.f32 %v6033, %v6034
        %v6036 = vrot.slane %v6035, 1
        %v6037 = vmax.f32 %v6035, %v6036
        %v6038 = vsel %vm5729, %v5611, -inf
        %v6039 = vrot.slane %v6038, 4
        %v6040 = vmax.f32 %v6038, %v6039
        %v6041 = vrot.slane %v6040, 2
        %v6042 = vmax.f32 %v6040, %v6041
        %v6043 = vrot.slane %v6042, 1
        %v6044 = vmax.f32 %v6042, %v6043
        %v6045 = vsel %vm5729, %v5634, -inf
        %v6046 = vrot.slane %v6045, 4
        %v6047 = vmax.f32 %v6045, %v6046
        %v6048 = vrot.slane %v6047, 2
        %v6049 = vmax.f32 %v6047, %v6048
        %v6050 = vrot.slane %v6049, 1
        %v6051 = vmax.f32 %v6049, %v6050
        %v6052 = vsel %vm5729, %v5657, -inf
        %v6053 = vrot.slane %v6052, 4
        %v6054 = vmax.f32 %v6052, %v6053
        %v6055 = vrot.slane %v6054, 2
        %v6056 = vmax.f32 %v6054, %v6055
        %v6057 = vrot.slane %v6056, 1
        %v6058 = vmax.f32 %v6056, %v6057
        %v6059 = vsel %vm5729, %v5680, -inf
        %v6060 = vrot.slane %v6059, 4
        %v6061 = vmax.f32 %v6059, %v6060
        %v6062 = vrot.slane %v6061, 2
        %v6063 = vmax.f32 %v6061, %v6062
        %v6064 = vrot.slane %v6063, 1
        %v6065 = vmax.f32 %v6063, %v6064
        %v6066 = vmax.f32 %v5736, %v5764
        %v6067 = vmax.f32 %v5743, %v5771
        %v6068 = vmax.f32 %v5750, %v5778
        %v6069 = vmax.f32 %v5757, %v5785
        %v6070 = vmax.f32 %v5820, %v5848
        %v6071 = vmax.f32 %v5827, %v5855
        %v6072 = vmax.f32 %v5834, %v5862
        %v6073 = vmax.f32 %v5841, %v5869
        %v6074 = vmax.f32 %v5904, %v5932
        %v6075 = vmax.f32 %v5911, %v5939
        %v6076 = vmax.f32 %v5918, %v5946
        %v6077 = vmax.f32 %v5925, %v5953
        %v6078 = vmax.f32 %v5988, %v6016
        %v6079 = vmax.f32 %v5995, %v6023
        %v6080 = vmax.f32 %v6002, %v6030
        %v6081 = vmax.f32 %v6009, %v6037
        %v6082 = vmax.f32 %v6066, %v5792
        %v6083 = vmax.f32 %v6067, %v5799
        %v6084 = vmax.f32 %v6068, %v5806
        %v6085 = vmax.f32 %v6069, %v5813
        %v6086 = vmax.f32 %v6070, %v5876
        %v6087 = vmax.f32 %v6071, %v5883
        %v6088 = vmax.f32 %v6072, %v5890
        %v6089 = vmax.f32 %v6073, %v5897
        %v6090 = vmax.f32 %v6074, %v5960
        %v6091 = vmax.f32 %v6075, %v5967
        %v6092 = vmax.f32 %v6076, %v5974
        %v6093 = vmax.f32 %v6077, %v5981
        %v6094 = vmax.f32 %v6078, %v6044
        %v6095 = vmax.f32 %v6079, %v6051
        %v6096 = vmax.f32 %v6080, %v6058
        %v6097 = vmax.f32 %v6081, %v6065
        %vm6098 = vcmask 128000
        %6099 = vst.msk [vmem:[#allocation4] sm:$0x3f] %vm6098, 0.0
        %s6100 = scalar_lea.vmem [#allocation4], 40
        %6101 = vst.msk [vmem:[%s6100] sm:$0x3f] %vm6098, 0.0
        %vm6102 = vcmask 122880
        %6103 = vst.msk [vmem:[#allocation4] sm:$0x1] %vm6102, 0.0
        %6104 = vst.msk [vmem:[#allocation4 + $0x8] sm:$0x1] %vm6102, 0.0
        %6105 = vst.msk [vmem:[#allocation4 + $0x10] sm:$0x1] %vm6102, 0.0
        %6106 = vst.msk [vmem:[#allocation4 + $0x18] sm:$0x1] %vm6102, 0.0
        %6107 = vst.msk [vmem:[#allocation4 + $0x20] sm:$0x1] %vm6102, 0.0
        %6108 = vst.msk [vmem:[#allocation4 + $0x28] sm:$0x1] %vm6102, 0.0
        %6109 = vst.msk [vmem:[#allocation4 + $0x5] sm:$0x1] %vm6102, 0.0
        %6110 = vst.msk [vmem:[#allocation4 + $0xd] sm:$0x1] %vm6102, 0.0
        %6111 = vst.msk [vmem:[#allocation4 + $0x15] sm:$0x1] %vm6102, 0.0
        %6112 = vst.msk [vmem:[#allocation4 + $0x1d] sm:$0x1] %vm6102, 0.0
        %6113 = vst.msk [vmem:[#allocation4 + $0x25] sm:$0x1] %vm6102, 0.0
        %6114 = vst.msk [vmem:[#allocation4 + $0x2d] sm:$0x1] %vm6102, 0.0
        %vm6131 = vcmask 1041409
        %v6132 = vsel %vm6131, %v6083, %v6082
        %vm6133 = vcmask 1042434
        %v6134 = vsel %vm6133, %v6084, %v6132
        %vm6135 = vcmask 1043459
        %v6136 = vsel %vm6135, %v6085, %v6134
        %v6137 = vsel %vm6131, %v6087, %v6086
        %v6138 = vsel %vm6133, %v6088, %v6137
        %v6139 = vsel %vm6135, %v6089, %v6138
        %v6140 = vsel %vm6131, %v6091, %v6090
        %v6141 = vsel %vm6133, %v6092, %v6140
        %v6142 = vsel %vm6135, %v6093, %v6141
        %v6143 = vsel %vm6131, %v6095, %v6094
        %v6144 = vsel %vm6133, %v6096, %v6143
        %v6145 = vsel %vm6135, %v6097, %v6144
        %s6150 = scalar_lea.vmem [#allocation4], 8
        %vm6151 = vcmask 125952
        %6152 = vst.msk [vmem:[%s6150 + $0x1] sm:$0xf] %vm6151, %v6136
        %6153 = vst.msk [vmem:[%s6150 + $0x9] sm:$0xf] %vm6151, %v6139
        %6154 = vst.msk [vmem:[%s6150 + $0x11] sm:$0xf] %vm6151, %v6142
        %6155 = vst.msk [vmem:[%s6150 + $0x19] sm:$0xf] %vm6151, %v6145
        %v6156 = vld [vmem:[#allocation4] sm:$0xf]
        %v6157 = vld [vmem:[#allocation4 + $0x8] sm:$0xf]
        %v6158 = vld [vmem:[#allocation4 + $0x10] sm:$0xf]
        %v6159 = vld [vmem:[#allocation4 + $0x18] sm:$0xf]
        %6160 = vst.msk [vmem:[#allocation7] sm:$0xf] %vm6151, %v6156
        %6161 = vst.msk [vmem:[#allocation7 + $0x8] sm:$0xf] %vm6151, %v6157
        %6162 = vst.msk [vmem:[#allocation7 + $0x10] sm:$0xf] %vm6151, %v6158
        %6163 = vst.msk [vmem:[#allocation7 + $0x18] sm:$0xf] %vm6151, %v6159
        %v6164 = vld [vmem:[#allocation4 + $0x1] sm:$0xf]
        %v6165 = vld [vmem:[#allocation4 + $0x9] sm:$0xf]
        %v6166 = vld [vmem:[#allocation4 + $0x11] sm:$0xf]
        %v6167 = vld [vmem:[#allocation4 + $0x19] sm:$0xf]
        %6172 = vrot.lane.b32.xlu0 %v6164, 16
        %v6173 = vpop.permute.xlu0 %6172
        %6174 = vrot.lane.b32.xlu0 %v6165, 16
        %v6175 = vpop.permute.xlu0 %6174
        %6176 = vrot.lane.b32.xlu0 %v6166, 16
        %v6177 = vpop.permute.xlu0 %6176
        %6178 = vrot.lane.b32.xlu0 %v6167, 16
        %v6179 = vpop.permute.xlu0 %6178
        %vm6184 = vcmask 257152
        %6185 = vst.msk [vmem:[#allocation7] sm:$0xf] %vm6184, %v6173
        %6186 = vst.msk [vmem:[#allocation7 + $0x8] sm:$0xf] %vm6184, %v6175
        %6187 = vst.msk [vmem:[#allocation7 + $0x10] sm:$0xf] %vm6184, %v6177
        %6188 = vst.msk [vmem:[#allocation7 + $0x18] sm:$0xf] %vm6184, %v6179
        %v6189 = vld [vmem:[#allocation4 + $0x2] sm:$0xf]
        %v6190 = vld [vmem:[#allocation4 + $0xa] sm:$0xf]
        %v6191 = vld [vmem:[#allocation4 + $0x12] sm:$0xf]
        %v6192 = vld [vmem:[#allocation4 + $0x1a] sm:$0xf]
        %6197 = vrot.lane.b32.xlu0 %v6189, 32
        %v6198 = vpop.permute.xlu0 %6197
        %6199 = vrot.lane.b32.xlu0 %v6190, 32
        %v6200 = vpop.permute.xlu0 %6199
        %6201 = vrot.lane.b32.xlu0 %v6191, 32
        %v6202 = vpop.permute.xlu0 %6201
        %6203 = vrot.lane.b32.xlu0 %v6192, 32
        %v6204 = vpop.permute.xlu0 %6203
        %vm6209 = vcmask 388352
        %6210 = vst.msk [vmem:[#allocation7] sm:$0xf] %vm6209, %v6198
        %6211 = vst.msk [vmem:[#allocation7 + $0x8] sm:$0xf] %vm6209, %v6200
        %6212 = vst.msk [vmem:[#allocation7 + $0x10] sm:$0xf] %vm6209, %v6202
        %6213 = vst.msk [vmem:[#allocation7 + $0x18] sm:$0xf] %vm6209, %v6204
        %v6214 = vld [vmem:[%s6150] sm:$0xf]
        %v6215 = vld [vmem:[%s6150 + $0x8] sm:$0xf]
        %v6216 = vld [vmem:[%s6150 + $0x10] sm:$0xf]
        %v6217 = vld [vmem:[%s6150 + $0x18] sm:$0xf]
        %6222 = vrot.lane.b32.xlu0 %v6214, 48
        %v6223 = vpop.permute.xlu0 %6222
        %6224 = vrot.lane.b32.xlu0 %v6215, 48
        %v6225 = vpop.permute.xlu0 %6224
        %6226 = vrot.lane.b32.xlu0 %v6216, 48
        %v6227 = vpop.permute.xlu0 %6226
        %6228 = vrot.lane.b32.xlu0 %v6217, 48
        %v6229 = vpop.permute.xlu0 %6228
        %vm6234 = vcmask 519552
        %6235 = vst.msk [vmem:[#allocation7] sm:$0xf] %vm6234, %v6223
        %6236 = vst.msk [vmem:[#allocation7 + $0x8] sm:$0xf] %vm6234, %v6225
        %6237 = vst.msk [vmem:[#allocation7 + $0x10] sm:$0xf] %vm6234, %v6227
        %6238 = vst.msk [vmem:[#allocation7 + $0x18] sm:$0xf] %vm6234, %v6229
        %v6239 = vld [vmem:[%s6150 + $0x1] sm:$0xf]
        %v6240 = vld [vmem:[%s6150 + $0x9] sm:$0xf]
        %v6241 = vld [vmem:[%s6150 + $0x11] sm:$0xf]
        %v6242 = vld [vmem:[%s6150 + $0x19] sm:$0xf]
        %6247 = vrot.lane.b32.xlu0 %v6239, 64
        %v6248 = vpop.permute.xlu0 %6247
        %6249 = vrot.lane.b32.xlu0 %v6240, 64
        %v6250 = vpop.permute.xlu0 %6249
        %6251 = vrot.lane.b32.xlu0 %v6241, 64
        %v6252 = vpop.permute.xlu0 %6251
        %6253 = vrot.lane.b32.xlu0 %v6242, 64
        %v6254 = vpop.permute.xlu0 %6253
        %vm6259 = vcmask 650752
        %6260 = vst.msk [vmem:[#allocation7] sm:$0xf] %vm6259, %v6248
        %6261 = vst.msk [vmem:[#allocation7 + $0x8] sm:$0xf] %vm6259, %v6250
        %6262 = vst.msk [vmem:[#allocation7 + $0x10] sm:$0xf] %vm6259, %v6252
        %6263 = vst.msk [vmem:[#allocation7 + $0x18] sm:$0xf] %vm6259, %v6254
        %v6264 = vld [vmem:[%s6150 + $0x2] sm:$0xf]
        %v6265 = vld [vmem:[%s6150 + $0xa] sm:$0xf]
        %v6266 = vld [vmem:[%s6150 + $0x12] sm:$0xf]
        %v6267 = vld [vmem:[%s6150 + $0x1a] sm:$0xf]
        %6272 = vrot.lane.b32.xlu0 %v6264, 80
        %v6273 = vpop.permute.xlu0 %6272
        %6274 = vrot.lane.b32.xlu0 %v6265, 80
        %v6275 = vpop.permute.xlu0 %6274
        %6276 = vrot.lane.b32.xlu0 %v6266, 80
        %v6277 = vpop.permute.xlu0 %6276
        %6278 = vrot.lane.b32.xlu0 %v6267, 80
        %v6279 = vpop.permute.xlu0 %6278
        %vm6284 = vcmask 781952
        %6285 = vst.msk [vmem:[#allocation7] sm:$0xf] %vm6284, %v6273
        %6286 = vst.msk [vmem:[#allocation7 + $0x8] sm:$0xf] %vm6284, %v6275
        %6287 = vst.msk [vmem:[#allocation7 + $0x10] sm:$0xf] %vm6284, %v6277
        %6288 = vst.msk [vmem:[#allocation7 + $0x18] sm:$0xf] %vm6284, %v6279
        %s6289 = scalar_lea.vmem [#allocation4], 16
        %v6290 = vld [vmem:[%s6289] sm:$0xf]
        %v6291 = vld [vmem:[%s6289 + $0x8] sm:$0xf]
        %v6292 = vld [vmem:[%s6289 + $0x10] sm:$0xf]
        %v6293 = vld [vmem:[%s6289 + $0x18] sm:$0xf]
        %6298 = vrot.lane.b32.xlu0 %v6290, 96
        %v6299 = vpop.permute.xlu0 %6298
        %6300 = vrot.lane.b32.xlu0 %v6291, 96
        %v6301 = vpop.permute.xlu0 %6300
        %6302 = vrot.lane.b32.xlu0 %v6292, 96
        %v6303 = vpop.permute.xlu0 %6302
        %6304 = vrot.lane.b32.xlu0 %v6293, 96
        %v6305 = vpop.permute.xlu0 %6304
        %vm6310 = vcmask 913152
        %6311 = vst.msk [vmem:[#allocation7] sm:$0xf] %vm6310, %v6299
        %6312 = vst.msk [vmem:[#allocation7 + $0x8] sm:$0xf] %vm6310, %v6301
        %6313 = vst.msk [vmem:[#allocation7 + $0x10] sm:$0xf] %vm6310, %v6303
        %6314 = vst.msk [vmem:[#allocation7 + $0x18] sm:$0xf] %vm6310, %v6305
        %v6315 = vld [vmem:[%s6289 + $0x1] sm:$0xf]
        %v6316 = vld [vmem:[%s6289 + $0x9] sm:$0xf]
        %v6317 = vld [vmem:[%s6289 + $0x11] sm:$0xf]
        %v6318 = vld [vmem:[%s6289 + $0x19] sm:$0xf]
        %6323 = vrot.lane.b32.xlu0 %v6315, 112
        %v6324 = vpop.permute.xlu0 %6323
        %6325 = vrot.lane.b32.xlu0 %v6316, 112
        %v6326 = vpop.permute.xlu0 %6325
        %6327 = vrot.lane.b32.xlu0 %v6317, 112
        %v6328 = vpop.permute.xlu0 %6327
        %6329 = vrot.lane.b32.xlu0 %v6318, 112
        %v6330 = vpop.permute.xlu0 %6329
        %vm6335 = vcmask 1044352
        %6336 = vst.msk [vmem:[#allocation7] sm:$0xf] %vm6335, %v6324
        %6337 = vst.msk [vmem:[#allocation7 + $0x8] sm:$0xf] %vm6335, %v6326
        %6338 = vst.msk [vmem:[#allocation7 + $0x10] sm:$0xf] %vm6335, %v6328
        %6339 = vst.msk [vmem:[#allocation7 + $0x18] sm:$0xf] %vm6335, %v6330
        %v6340 = vld [vmem:[%s6289 + $0x2] sm:$0xf]
        %v6341 = vld [vmem:[%s6289 + $0xa] sm:$0xf]
        %v6342 = vld [vmem:[%s6289 + $0x12] sm:$0xf]
        %v6343 = vld [vmem:[%s6289 + $0x1a] sm:$0xf]
        %6344 = vst.msk [vmem:[#allocation7 + $0x4] sm:$0xf] %vm6151, %v6340
        %6345 = vst.msk [vmem:[#allocation7 + $0xc] sm:$0xf] %vm6151, %v6341
        %6346 = vst.msk [vmem:[#allocation7 + $0x14] sm:$0xf] %vm6151, %v6342
        %6347 = vst.msk [vmem:[#allocation7 + $0x1c] sm:$0xf] %vm6151, %v6343
        %v6348 = vld [vmem:[#allocation7] sm:$0xff]
        %v6349 = vld [vmem:[#allocation7 + $0x8] sm:$0xff]
        %v6350 = vld [vmem:[#allocation7 + $0x10] sm:$0xff]
        %v6351 = vld [vmem:[#allocation7 + $0x18] sm:$0xff]
        %v6352 = vld [vmem:[#allocation18] sm:$0xff]
        %v6353 = vld [vmem:[#allocation18 + $0x8] sm:$0xff]
        %v6354 = vld [vmem:[#allocation18 + $0x10] sm:$0xff]
        %v6355 = vld [vmem:[#allocation18 + $0x18] sm:$0xff]
        %v6356 = vld [vmem:[#allocation18 + $0x20] sm:$0xff]
        %v6357 = vld [vmem:[#allocation18 + $0x28] sm:$0xff]
        %v6358 = vld [vmem:[#allocation18 + $0x30] sm:$0xff]
        %v6359 = vld [vmem:[#allocation18 + $0x38] sm:$0xff]
        %v6360 = vld [vmem:[#allocation18 + $0x40] sm:$0xff]
        %v6361 = vld [vmem:[#allocation18 + $0x48] sm:$0xff]
        %v6362 = vld [vmem:[#allocation18 + $0x50] sm:$0xff]
        %v6363 = vld [vmem:[#allocation18 + $0x58] sm:$0xff]
        %v6364 = vld [vmem:[#allocation18 + $0x60] sm:$0xff]
        %v6365 = vld [vmem:[#allocation18 + $0x68] sm:$0xff]
        %v6366 = vld [vmem:[#allocation18 + $0x70] sm:$0xff]
        %v6367 = vld [vmem:[#allocation18 + $0x78] sm:$0xff]
        %v6368 = vld [vmem:[#allocation18 + $0x80] sm:$0xff]
        %v6369 = vld [vmem:[#allocation18 + $0x88] sm:$0xff]
        %v6370 = vld [vmem:[#allocation20] sm:$0x1]
        %v6372 = vlaneseq
        %v6373 = vshrl.u32 %v6372, 7
        %v6374 = vsub.s32 0, %v6373
        %v6375 = vrot.slane %v6370, %v6374
        %v6381 = vcombine.low %v6348, %v6349
        %v6382 = vcombine.high %v6348, %v6349
        %v6383 = vcombine.low %v6350, %v6351
        %v6384 = vcombine.high %v6350, %v6351
        %vm6387 = vcmask 130048
        %v6388 = vsel %vm6387, %v6382, 0
        %v6390 = vsel %vm6387, %v6384, 0
        %6392 = vmatprep.subr.mxu0 0.0
        %6393 = vmatpush1.msra.mxu0 %v6352
        %6394 = vmatprep.subr.mxu0 0.0
        %6395 = vmatpush1.msra.mxu0 %v6353
        %6396 = vmatprep.subr.mxu0 0.0
        %6397 = vmatpush1.msra.mxu0 %v6354
        %6398 = vmatprep.subr.mxu0 0.0
        %6399 = vmatpush1.msra.mxu0 %v6355
        %6400 = vmatprep.subr.mxu0 0.0
        %6401 = vmatpush1.msra.mxu0 %v6356
        %6402 = vmatprep.subr.mxu0 0.0
        %6403 = vmatpush1.msra.mxu0 %v6357
        %6404 = vmatprep.subr.mxu0 0.0
        %6405 = vmatpush1.msra.mxu0 %v6358
        %6406 = vmatprep.subr.mxu0 0.0
        %6407 = vmatpush1.msra.mxu0 %v6359
        %6408 = vmatprep.subr.mxu0 0.0
        %6409 = vmatpush1.msra.mxu0 %v6360
        %6410 = vmatprep.subr.mxu0 0.0
        %6411 = vmatpush1.msra.mxu0 %v6361
        %6412 = vmatprep.subr.mxu0 0.0
        %6413 = vmatpush1.msra.mxu0 %v6362
        %6414 = vmatprep.subr.mxu0 0.0
        %6415 = vmatpush1.msra.mxu0 %v6363
        %6416 = vmatprep.subr.mxu0 0.0
        %6417 = vmatpush1.msra.mxu0 %v6364
        %6418 = vmatprep.subr.mxu0 0.0
        %6419 = vmatpush1.msra.mxu0 %v6365
        %6420 = vmatprep.subr.mxu0 0.0
        %6421 = vmatpush1.msra.mxu0 %v6366
        %6422 = vmatprep.subr.mxu0 0.0
        %6423 = vmatpush1.msra.mxu0 %v6367
        %6424 = vmatprep.subr.mxu0 0.0
        %6425 = vmatpush1.msra.mxu0 %v6368
        %6426 = vmatprep.subr.mxu0 0.0
        %6427 = vmatpush1.msra.mxu0 %v6369
        %6428 = vmatprep.subr.mxu0 0.0
        %6429 = vmatpush1.msra.mxu0 0.0
        %6430 = vmatprep.subr.mxu0 0.0
        %6431 = vmatpush1.msra.mxu0 0.0
        %6432 = vmatprep.subr.mxu0 0.0
        %6433 = vmatpush1.msra.mxu0 0.0
        %6434 = vmatprep.subr.mxu0 0.0
        %6435 = vmatpush1.msra.mxu0 0.0
        %6436 = vmatprep.subr.mxu0 0.0
        %6437 = vmatpush1.msra.mxu0 0.0
        %6438 = vmatprep.subr.mxu0 0.0
        %6439 = vmatpush1.msra.mxu0 0.0
        %6440 = vmatprep.subr.mxu0 0.0
        %6441 = vmatpush1.msra.mxu0 0.0
        %6442 = vmatprep.subr.mxu0 0.0
        %6443 = vmatpush1.msra.mxu0 0.0
        %6444 = vmatprep.subr.mxu0 0.0
        %6445 = vmatpush1.msra.mxu0 0.0
        %6446 = vmatprep.subr.mxu0 0.0
        %6447 = vmatpush1.msra.mxu0 0.0
        %6448 = vmatprep.subr.mxu0 0.0
        %6449 = vmatpush1.msra.mxu0 0.0
        %6450 = vmatprep.subr.mxu0 0.0
        %6451 = vmatpush1.msra.mxu0 0.0
        %6452 = vmatprep.subr.mxu0 0.0
        %6453 = vmatpush1.msra.mxu0 0.0
        %6454 = vmatprep.subr.mxu0 0.0
        %6455 = vmatpush1.msra.mxu0 0.0
        %6456 = vmatprep.mubr.f32.mxu0 %v6388
        %6457 = vmatmul.mubr.f32.gmra.mrb[0].mxu0 %v6381
        %v6458 = vpop.f32.mrb[0].mxu0
        %v6459 = vadd.f32 %v6375, %v6458
        %v6460 = vpop.f32.mrb[0].mxu0
        %6461 = vmatprep.mubr.f32.mxu0 %v6390
        %6462 = vmatmul.mubr.f32.gmra.mrb[0].mxu0 %v6383
        %v6463 = vpop.f32.mrb[0].mxu0
        %v6464 = vadd.f32 %v6375, %v6463
        %v6465 = vpop.f32.mrb[0].mxu0
        %6466 = vdwg.mxu0
        %v6467 = vlaneseq
        %vm6468 = vcmp.ge.s32.totalorder %v6467, 0
        %vm6469 = vcmp.lt.s32.totalorder %v6467, 16
        %vm6470 = vmand %vm6468, %vm6469
        %6471 = vst.msk [vmem:[#allocation8] sm:$0x1] %vm6470, %v6459
        %v6474 = vunpack.c.l.s4 1966171168
        %v6475 = vunpack.c.0.s8 %v6474
        %v6476 = vlaneseq
        %v6477 = vshrl.u32 %v6476, 7
        %v6478 = vsub.s32 %v6475, %v6477
        %v6479 = vrot.slane %v6459, %v6478
        %v6480 = vcombine.high %v6479, %v6479
        %v6482 = vunpack.c.l.s4 1966171168
        %v6483 = vunpack.c.0.s8 %v6482
        %v6484 = vlaneseq
        %v6485 = vshrl.u32 %v6484, 7
        %v6486 = vsub.s32 %v6483, %v6485
        %v6487 = vrot.slane %v6479, %v6486
        %v6489 = vunpack.c.l.s4 1966171168
        %v6490 = vunpack.c.0.s8 %v6489
        %v6491 = vlaneseq
        %v6492 = vshrl.u32 %v6491, 7
        %v6493 = vsub.s32 %v6490, %v6492
        %v6494 = vrot.slane %v6480, %v6493
        %6495 = vrot.lane.b32.xlu0 %v6494, 16
        %v6496 = vpop.permute.xlu0 %6495
        %vm6498 = vcmp.ge.s32.totalorder %v6467, 16
        %vm6499 = vcmp.lt.s32.totalorder %v6467, 32
        %vm6500 = vmand %vm6498, %vm6499
        %6501 = vst.msk [vmem:[#allocation8] sm:$0x1] %vm6500, %v6496
        %v6502 = vcombine.high %v6487, %v6487
        %6503 = vrot.lane.b32.xlu0 %v6502, 32
        %v6504 = vpop.permute.xlu0 %6503
        %vm6506 = vcmp.ge.s32.totalorder %v6467, 32
        %vm6507 = vcmp.lt.s32.totalorder %v6467, 48
        %vm6508 = vmand %vm6506, %vm6507
        %6509 = vst.msk [vmem:[#allocation8] sm:$0x1] %vm6508, %v6504
        %v6510 = vcombine.high %v6494, %v6494
        %6511 = vrot.lane.b32.xlu0 %v6510, 48
        %v6512 = vpop.permute.xlu0 %6511
        %vm6514 = vcmp.ge.s32.totalorder %v6467, 48
        %vm6515 = vcmp.lt.s32.totalorder %v6467, 64
        %vm6516 = vmand %vm6514, %vm6515
        %6517 = vst.msk [vmem:[#allocation8] sm:$0x1] %vm6516, %v6512
        %v6518 = vcombine.high %v6459, %v6459
        %v6520 = vunpack.c.l.s4 1966171168
        %v6521 = vunpack.c.0.s8 %v6520
        %v6522 = vlaneseq
        %v6523 = vshrl.u32 %v6522, 7
        %v6524 = vsub.s32 %v6521, %v6523
        %v6525 = vrot.slane %v6518, %v6524
        %v6527 = vunpack.c.l.s4 1966171168
        %v6528 = vunpack.c.0.s8 %v6527
        %v6529 = vlaneseq
        %v6530 = vshrl.u32 %v6529, 7
        %v6531 = vsub.s32 %v6528, %v6530
        %v6532 = vrot.slane %v6525, %v6531
        %6533 = vrot.lane.b32.xlu0 %v6532, 64
        %v6534 = vpop.permute.xlu0 %6533
        %vm6536 = vcmp.ge.s32.totalorder %v6467, 64
        %vm6537 = vcmp.lt.s32.totalorder %v6467, 80
        %vm6538 = vmand %vm6536, %vm6537
        %6539 = vst.msk [vmem:[#allocation8] sm:$0x1] %vm6538, %v6534
        %v6540 = vcombine.high %v6525, %v6525
        %v6542 = vunpack.c.l.s4 1966171168
        %v6543 = vunpack.c.0.s8 %v6542
        %v6544 = vlaneseq
        %v6545 = vshrl.u32 %v6544, 7
        %v6546 = vsub.s32 %v6543, %v6545
        %v6547 = vrot.slane %v6540, %v6546
        %6548 = vrot.lane.b32.xlu0 %v6547, 80
        %v6549 = vpop.permute.xlu0 %6548
        %vm6551 = vcmp.ge.s32.totalorder %v6467, 80
        %vm6552 = vcmp.lt.s32.totalorder %v6467, 96
        %vm6553 = vmand %vm6551, %vm6552
        %6554 = vst.msk [vmem:[#allocation8] sm:$0x1] %vm6553, %v6549
        %v6555 = vcombine.high %v6532, %v6532
        %6556 = vrot.lane.b32.xlu0 %v6555, 96
        %v6557 = vpop.permute.xlu0 %6556
        %vm6559 = vcmp.ge.s32.totalorder %v6467, 96
        %vm6560 = vcmp.lt.s32.totalorder %v6467, 112
        %vm6561 = vmand %vm6559, %vm6560
        %6562 = vst.msk [vmem:[#allocation8] sm:$0x1] %vm6561, %v6557
        %v6563 = vcombine.high %v6547, %v6547
        %6564 = vrot.lane.b32.xlu0 %v6563, 112
        %v6565 = vpop.permute.xlu0 %6564
        %vm6567 = vcmp.ge.s32.totalorder %v6467, 112
        %vm6568 = vcmp.lt.s32.totalorder %v6467, 128
        %vm6569 = vmand %vm6567, %vm6568
        %6570 = vst.msk [vmem:[#allocation8] sm:$0x1] %vm6569, %v6565
        %6571 = vst.msk [vmem:[#allocation8 + $0x1] sm:$0x1] %vm6470, %v6464
        %v6574 = vunpack.c.l.s4 1966171168
        %v6575 = vunpack.c.0.s8 %v6574
        %v6576 = vlaneseq
        %v6577 = vshrl.u32 %v6576, 7
        %v6578 = vsub.s32 %v6575, %v6577
        %v6579 = vrot.slane %v6464, %v6578
        %v6580 = vcombine.high %v6579, %v6579
        %v6582 = vunpack.c.l.s4 1966171168
        %v6583 = vunpack.c.0.s8 %v6582
        %v6584 = vlaneseq
        %v6585 = vshrl.u32 %v6584, 7
        %v6586 = vsub.s32 %v6583, %v6585
        %v6587 = vrot.slane %v6579, %v6586
        %v6589 = vunpack.c.l.s4 1966171168
        %v6590 = vunpack.c.0.s8 %v6589
        %v6591 = vlaneseq
        %v6592 = vshrl.u32 %v6591, 7
        %v6593 = vsub.s32 %v6590, %v6592
        %v6594 = vrot.slane %v6580, %v6593
        %6595 = vrot.lane.b32.xlu0 %v6594, 16
        %v6596 = vpop.permute.xlu0 %6595
        %6598 = vst.msk [vmem:[#allocation8 + $0x1] sm:$0x1] %vm6500, %v6596
        %v6599 = vcombine.high %v6587, %v6587
        %6600 = vrot.lane.b32.xlu0 %v6599, 32
        %v6601 = vpop.permute.xlu0 %6600
        %6603 = vst.msk [vmem:[#allocation8 + $0x1] sm:$0x1] %vm6508, %v6601
        %v6604 = vcombine.high %v6594, %v6594
        %6605 = vrot.lane.b32.xlu0 %v6604, 48
        %v6606 = vpop.permute.xlu0 %6605
        %6608 = vst.msk [vmem:[#allocation8 + $0x1] sm:$0x1] %vm6516, %v6606
        %v6609 = vcombine.high %v6464, %v6464
        %v6611 = vunpack.c.l.s4 1966171168
        %v6612 = vunpack.c.0.s8 %v6611
        %v6613 = vlaneseq
        %v6614 = vshrl.u32 %v6613, 7
        %v6615 = vsub.s32 %v6612, %v6614
        %v6616 = vrot.slane %v6609, %v6615
        %v6618 = vunpack.c.l.s4 1966171168
        %v6619 = vunpack.c.0.s8 %v6618
        %v6620 = vlaneseq
        %v6621 = vshrl.u32 %v6620, 7
        %v6622 = vsub.s32 %v6619, %v6621
        %v6623 = vrot.slane %v6616, %v6622
        %6624 = vrot.lane.b32.xlu0 %v6623, 64
        %v6625 = vpop.permute.xlu0 %6624
        %6627 = vst.msk [vmem:[#allocation8 + $0x1] sm:$0x1] %vm6538, %v6625
        %v6628 = vcombine.high %v6616, %v6616
        %v6630 = vunpack.c.l.s4 1966171168
        %v6631 = vunpack.c.0.s8 %v6630
        %v6632 = vlaneseq
        %v6633 = vshrl.u32 %v6632, 7
        %v6634 = vsub.s32 %v6631, %v6633
        %v6635 = vrot.slane %v6628, %v6634
        %6636 = vrot.lane.b32.xlu0 %v6635, 80
        %v6637 = vpop.permute.xlu0 %6636
        %6639 = vst.msk [vmem:[#allocation8 + $0x1] sm:$0x1] %vm6553, %v6637
        %v6640 = vcombine.high %v6623, %v6623
        %6641 = vrot.lane.b32.xlu0 %v6640, 96
        %v6642 = vpop.permute.xlu0 %6641
        %6644 = vst.msk [vmem:[#allocation8 + $0x1] sm:$0x1] %vm6561, %v6642
        %v6645 = vcombine.high %v6635, %v6635
        %6646 = vrot.lane.b32.xlu0 %v6645, 112
        %v6647 = vpop.permute.xlu0 %6646
        %6649 = vst.msk [vmem:[#allocation8 + $0x1] sm:$0x1] %vm6569, %v6647
        %v6650 = vld [vmem:[#allocation23] sm:$0x1]
        %v6651 = vld [vmem:[#allocation8] sm:$0x3]
        %v6652 = vld [vmem:[#allocation21] sm:$0xff]
        %v6653 = vld [vmem:[#allocation21 + $0x8] sm:$0xff]
        %v6654 = vld [vmem:[#allocation21 + $0x10] sm:$0xff]
        %v6655 = vld [vmem:[#allocation21 + $0x18] sm:$0xff]
        %v6656 = vld [vmem:[#allocation21 + $0x20] sm:$0xff]
        %v6657 = vld [vmem:[#allocation21 + $0x28] sm:$0xff]
        %v6658 = vld [vmem:[#allocation21 + $0x30] sm:$0xff]
        %v6659 = vld [vmem:[#allocation21 + $0x38] sm:$0xff]
        %v6660 = vld [vmem:[#allocation21 + $0x40] sm:$0xff]
        %v6661 = vld [vmem:[#allocation21 + $0x48] sm:$0xff]
        %v6662 = vld [vmem:[#allocation21 + $0x50] sm:$0xff]
        %v6663 = vld [vmem:[#allocation21 + $0x58] sm:$0xff]
        %v6664 = vld [vmem:[#allocation21 + $0x60] sm:$0xff]
        %v6665 = vld [vmem:[#allocation21 + $0x68] sm:$0xff]
        %v6666 = vld [vmem:[#allocation21 + $0x70] sm:$0xff]
        %v6667 = vld [vmem:[#allocation21 + $0x78] sm:$0xff]
        %v6668 = vld [vmem:[#allocation21 + $0x80] sm:$0xff]
        %v6669 = vld [vmem:[#allocation21 + $0x88] sm:$0xff]
        %v6670 = vld [vmem:[#allocation21 + $0x90] sm:$0xff]
        %v6671 = vld [vmem:[#allocation21 + $0x98] sm:$0xff]
        %v6672 = vld [vmem:[#allocation21 + $0xa0] sm:$0xff]
        %v6673 = vld [vmem:[#allocation21 + $0xa8] sm:$0xff]
        %v6674 = vld [vmem:[#allocation21 + $0xb0] sm:$0xff]
        %v6675 = vld [vmem:[#allocation21 + $0xb8] sm:$0xff]
        %v6676 = vld [vmem:[#allocation21 + $0xc0] sm:$0xff]
        %v6677 = vld [vmem:[#allocation21 + $0xc8] sm:$0xff]
        %v6678 = vld [vmem:[#allocation21 + $0xd0] sm:$0xff]
        %v6679 = vld [vmem:[#allocation21 + $0xd8] sm:$0xff]
        %v6680 = vld [vmem:[#allocation21 + $0xe0] sm:$0xff]
        %v6681 = vld [vmem:[#allocation21 + $0xe8] sm:$0xff]
        %v6682 = vld [vmem:[#allocation21 + $0xf0] sm:$0xff]
        %v6683 = vld [vmem:[#allocation21 + $0xf8] sm:$0xff]
        %v6685 = vlaneseq
        %v6686 = vshrl.u32 %v6685, 7
        %v6687 = vsub.s32 0, %v6686
        %v6688 = vrot.slane %v6651, %v6687
        %v6689 = vlaneseq
        %v6690 = vshrl.u32 %v6689, 7
        %v6691 = vsub.s32 1, %v6690
        %v6692 = vrot.slane %v6651, %v6691
        %6695 = vmatprep.subr.mxu0 0.0
        %6696 = vmatpush1.msra.mxu0 %v6652
        %6697 = vmatprep.subr.mxu0 0.0
        %6698 = vmatpush1.msra.mxu0 %v6653
        %6699 = vmatprep.subr.mxu0 0.0
        %6700 = vmatpush1.msra.mxu0 %v6654
        %6701 = vmatprep.subr.mxu0 0.0
        %6702 = vmatpush1.msra.mxu0 %v6655
        %6703 = vmatprep.subr.mxu0 0.0
        %6704 = vmatpush1.msra.mxu0 %v6656
        %6705 = vmatprep.subr.mxu0 0.0
        %6706 = vmatpush1.msra.mxu0 %v6657
        %6707 = vmatprep.subr.mxu0 0.0
        %6708 = vmatpush1.msra.mxu0 %v6658
        %6709 = vmatprep.subr.mxu0 0.0
        %6710 = vmatpush1.msra.mxu0 %v6659
        %6711 = vmatprep.subr.mxu0 0.0
        %6712 = vmatpush1.msra.mxu0 %v6660
        %6713 = vmatprep.subr.mxu0 0.0
        %6714 = vmatpush1.msra.mxu0 %v6661
        %6715 = vmatprep.subr.mxu0 0.0
        %6716 = vmatpush1.msra.mxu0 %v6662
        %6717 = vmatprep.subr.mxu0 0.0
        %6718 = vmatpush1.msra.mxu0 %v6663
        %6719 = vmatprep.subr.mxu0 0.0
        %6720 = vmatpush1.msra.mxu0 %v6664
        %6721 = vmatprep.subr.mxu0 0.0
        %6722 = vmatpush1.msra.mxu0 %v6665
        %6723 = vmatprep.subr.mxu0 0.0
        %6724 = vmatpush1.msra.mxu0 %v6666
        %6725 = vmatprep.subr.mxu0 0.0
        %6726 = vmatpush1.msra.mxu0 %v6667
        %6727 = vmatprep.subr.mxu0 0.0
        %6728 = vmatpush1.msra.mxu0 %v6668
        %6729 = vmatprep.subr.mxu0 0.0
        %6730 = vmatpush1.msra.mxu0 %v6669
        %6731 = vmatprep.subr.mxu0 0.0
        %6732 = vmatpush1.msra.mxu0 %v6670
        %6733 = vmatprep.subr.mxu0 0.0
        %6734 = vmatpush1.msra.mxu0 %v6671
        %6735 = vmatprep.subr.mxu0 0.0
        %6736 = vmatpush1.msra.mxu0 %v6672
        %6737 = vmatprep.subr.mxu0 0.0
        %6738 = vmatpush1.msra.mxu0 %v6673
        %6739 = vmatprep.subr.mxu0 0.0
        %6740 = vmatpush1.msra.mxu0 %v6674
        %6741 = vmatprep.subr.mxu0 0.0
        %6742 = vmatpush1.msra.mxu0 %v6675
        %6743 = vmatprep.subr.mxu0 0.0
        %6744 = vmatpush1.msra.mxu0 %v6676
        %6745 = vmatprep.subr.mxu0 0.0
        %6746 = vmatpush1.msra.mxu0 %v6677
        %6747 = vmatprep.subr.mxu0 0.0
        %6748 = vmatpush1.msra.mxu0 %v6678
        %6749 = vmatprep.subr.mxu0 0.0
        %6750 = vmatpush1.msra.mxu0 %v6679
        %6751 = vmatprep.subr.mxu0 0.0
        %6752 = vmatpush1.msra.mxu0 %v6680
        %6753 = vmatprep.subr.mxu0 0.0
        %6754 = vmatpush1.msra.mxu0 %v6681
        %6755 = vmatprep.subr.mxu0 0.0
        %6756 = vmatpush1.msra.mxu0 %v6682
        %6757 = vmatprep.subr.mxu0 0.0
        %6758 = vmatpush1.msra.mxu0 %v6683
        %6759 = vmatprep.mubr.f32.mxu0 %v6692
        %6760 = vmatmul.mubr.f32.gmra.mrb[0].mxu0 %v6688
        %v6761 = vpop.f32.mrb[0].mxu0
        %v6762 = vadd.f32 0.0, %v6761
        %v6763 = vpop.f32.mrb[0].mxu0
        %6764 = vdwg.mxu0
        %v6765 = vadd.f32 %v6650, %v6762
        %vm6766 = vcmask 73728
        %6767 = vst.msk [vmem:[%s457] sm:$0x1] %vm6766, %v6765
        %s6768 = sand.u32 %s232, 1
        %s6769 = scalar_lea.sflag [#allocation11], %s6768
        %s6770 = sand.u32 %s232, 1
        %s6771 = scalar_lea.vmem [#allocation24], %s6770
        // Predicated region
        $region93: #{tpu_custom_call.1} parent=55 // pred_check
          %p6772 = pneg %p242
        $region94: #{tpu_custom_call.1} parent=55 // pred_check_branch
          %6774 = sbr.rel (%p6772) target = $region96
        $region95: #{tpu_custom_call.1} parent=55 // pred_region
          %s6776 = ssub.s32 16, 16
          %6777 = vsyncadd %s6769, %s6776
          %s6778 = smul.addr %s30, 16
          %s6779 = scalar_lea.hbm %s9, %s6778
          %s6781 = sshll.u32 %s6771, 4
          %s6782 = int_to_ptr.vmem [resolvable:$true] %s6781
          %6784 = dma.vmem_to_hbm [thread:$0]  %s6782, 16, %s6779, %s6769
        $region96: #{tpu_custom_call.1} parent=55 // pred_fallthru
          _
      $region56: #{tpu_custom_call.1} parent=5 // pred_fallthru
        _
      %p6785 = scmp.le.s32.totalorder 2, %s25
      // Predicated region
      $region97: #{tpu_custom_call.1} parent=5 // pred_check
        %p6786 = pneg %p6785
      $region98: #{tpu_custom_call.1} parent=5 // pred_check_branch
        %6788 = sbr.rel (%p6786) target = $region100
      $region99: #{tpu_custom_call.1} parent=5 // pred_region
        %s6789 = ssub.s32 %s25, 2
        // Predicated region
        $region101: #{tpu_custom_call.1} parent=99 // pred_check
          %p6790 = pneg %p248
        $region102: #{tpu_custom_call.1} parent=99 // pred_check_branch
          %6792 = sbr.rel (%p6790) target = $region104
        $region103: #{tpu_custom_call.1} parent=99 // pred_region
          %s6793 = sand.u32 %s233, 1
          %s6794 = scalar_lea.sflag [#allocation11], %s6793
          %s6795 = sand.u32 %s233, 1
          %s6796 = scalar_lea.vmem [#allocation24], %s6795
          %6797 = dma.done %s6794, 16
        $region104: #{tpu_custom_call.1} parent=99 // pred_fallthru
          _
      $region100: #{tpu_custom_call.1} parent=5 // pred_fallthru
        _
    $region6: #{tpu_custom_call.1} parent=1 // loop_footer
      %s29 = sadd.s32 1, %s25
    $region7: #{tpu_custom_call.1} parent=1 // loop_footer_branch
      %24 = sbr.rel target = $region3
    $region8: #{tpu_custom_call.1} parent=1 // loop_exit
      _
    %6798 = vsyncpa [#allocation10], 1
    %s6799 = scalar_lea.sflag [#allocation10], 1
    %6800 = vsyncpa %s6799, 1
    %6801 = vsyncpa [#allocation13], 1
    %6802 = vsyncpa [#allocation16], 1
    %6803 = vsyncpa [#allocation19], 1
    %6804 = vsyncpa [#allocation22], 1
    %6805 = vsyncpa [#allocation11], 1
    %s6806 = scalar_lea.sflag [#allocation11], 1
    %6807 = vsyncpa %s6806, 1

</llo_original>
